<compile_context>
chip_gen: v5e
topology: v5e:2x2
jax: 0.10.0
libtpu: 0.0.40
codegen_flags: <defaults>
</compile_context>

<pallas_src>
import functools

import numpy as np
import jax
import jax.numpy as jnp
from jax import lax
from jax.experimental import pallas as pl
from jax.experimental.pallas import tpu as pltpu

BN_EPS = 1e-5
LANE = 128          # lane width / channel tile
SUB = 8             # sublane width
_VMEM_LIMIT = 48 * 1024 * 1024


def _rup(n, m):
    return ((n + m - 1) // m) * m


def _pad_dim(a, axis, n):
    pad = [(0, 0)] * a.ndim
    pad[axis] = (0, n - a.shape[axis])
    return jnp.pad(a, pad)


# ----------------------------- Pallas kernels ------------------------------

def _sep_bn_kernel(xp_ref, w3_ref, w1_ref, scale_ref, shift_ref, out_ref, acc_ref,
                   *, H, W, Wp, pre_relu, post_relu, fuse_vpool, fuse_gap):
    """[ReLU?] -> conv3x3(same) -> conv1x1 -> BN -> [ReLU?] (+ optional epilogue).

    xp_ref : (1, H+2, Wp, Cin)  bf16, zero-padded input (Wp >= W+2, Wp % 8 == 0)
    w3_ref : (3, 3, Cin, Cin)   bf16  3x3 conv weights (HWIO)
    w1_ref : (Cin, TC)          bf16  1x1 conv weights (Cout tile)
    scale_ref / shift_ref : (1, TC) f32  folded BatchNorm affine
    acc_ref: (H*Wp, Cin)        f32 VMEM scratch holding the 3x3 conv output
    """
    Cin = w3_ref.shape[2]
    M = H * Wp
    j = pl.program_id(1)

    # 3x3 conv into the f32 VMEM accumulator -- computed once per image and
    # reused for every Cout tile.
    @pl.when(j == 0)
    def _():
        x = xp_ref[0]                               # (H+2, Wp, Cin) bf16
        if pre_relu:
            x = jnp.maximum(x, 0)                   # hoisted: once per tile; relu(0)=0 keeps padding valid
        # Leading-axis slices + sublane-aligned reshapes only (Wp % 8 == 0).
        rows = [x[ky:ky + H].reshape(M, Cin) for ky in range(3)]
        for kx in range(3):
            part = jnp.dot(rows[0], w3_ref[0, kx], preferred_element_type=jnp.float32)
            for ky in (1, 2):
                part = part + jnp.dot(rows[ky], w3_ref[ky, kx],
                                      preferred_element_type=jnp.float32)
            # out[y, x] needs in[y+ky, x+kx]: fold the kx shift by accumulating
            # `part` kx rows earlier along the flattened (H*Wp) axis.  The rows
            # dropped at the tail only ever feed padded columns (x >= W).
            # TODO(synk): pltpu.roll(part, M - kx, axis=0) moves this shift to
            # the XLU slot instead of a relayout copy.
            if kx == 0:
                acc_ref[...] = part
            else:
                acc_ref[pl.ds(0, M - kx), :] += part[kx:, :]

    # 1x1 conv -> folded BN -> optional ReLU (per Cout tile), all f32 epilogue.
    y = jnp.dot(acc_ref[...].astype(jnp.bfloat16), w1_ref[...],
                preferred_element_type=jnp.float32)            # (M, TC)
    y = y * scale_ref[...] + shift_ref[...]
    if post_relu:
        y = jnp.maximum(y, 0.0)
    y3 = y.reshape(H, Wp, -1)

    if fuse_gap:
        # AdaptiveAvgPool2d((1, 1)) fused epilogue.
        g = jnp.sum(y3[:, :W, :], axis=(0, 1)) * (1.0 / (H * W))
        out_ref[0] = g.reshape(1, -1).astype(out_ref.dtype)
    elif fuse_vpool:
        # Vertical half of MaxPool2d(3, stride=2, padding=1): out-of-range rows
        # are the -inf padding, i.e. simply skipped.
        Ho = (H - 1) // 2 + 1
        vrows = []
        for oy in range(Ho):
            idx = [r for r in (2 * oy - 1, 2 * oy, 2 * oy + 1) if 0 <= r < H]
            m = y3[idx[0]]
            for r in idx[1:]:
                m = jnp.maximum(m, y3[r])
            vrows.append(m)
        vp = jnp.stack(vrows, axis=0)                          # (Ho, Wp, TC)
        out_ref[0] = vp[:, :W, :].astype(out_ref.dtype)
    else:
        out_ref[0] = y3[:, :W, :].astype(out_ref.dtype)


def _shortcut_pool_add_kernel(xs_ref, win_ref, w_ref, b_ref, scale_ref, shift_ref,
                              out_ref, *, Ho, Wo):
    """max(3 horizontal pool windows) + (1x1/s2 conv + bias -> BN) residual add."""
    Cin = xs_ref.shape[3]
    # Horizontal half of MaxPool(3, 2, 1): the 3 windows are pre-strided.
    res = jnp.maximum(jnp.maximum(win_ref[0, 0], win_ref[0, 1]), win_ref[0, 2])
    # 1x1 stride-2 conv (with bias) -> folded BN affine (f32).
    y = jnp.dot(xs_ref[0].reshape(Ho * Wo, Cin), w_ref[...],
                preferred_element_type=jnp.float32)
    y = (y + b_ref[...]) * scale_ref[...] + shift_ref[...]
    y = y.reshape(Ho, Wo, -1) + res.astype(jnp.float32)
    out_ref[0] = y.astype(out_ref.dtype)


# --------------------------- pallas_call wrappers ---------------------------

def sep_bn_block(x, w3, w1, scale, shift, *, pre_relu, post_relu,
                 fuse_vpool=False, fuse_gap=False):
    N, H, W, Cin = x.shape
    Cout = w1.shape[1]
    assert Cin % LANE == 0 and Cout % LANE == 0
    TC = LANE                       # lane-dense Cout tile
    Jc = Cout // TC
    Wp = _rup(W + 2, SUB)           # padded width keeps reshapes sublane-aligned
    xp = jnp.pad(x, ((0, 0), (1, 1), (1, Wp - W - 1), (0, 0)))

    if fuse_gap:
        out_shape = jax.ShapeDtypeStruct((N, 1, Cout), jnp.float32)
        out_spec = pl.BlockSpec((1, 1, TC), lambda b, j: (b, 0, j))
    elif fuse_vpool:
        Ho = (H - 1) // 2 + 1
        out_shape = jax.ShapeDtypeStruct((N, Ho, W, Cout), jnp.bfloat16)
        out_spec = pl.BlockSpec((1, Ho, W, TC), lambda b, j: (b, 0, 0, j))
    else:
        out_shape = jax.ShapeDtypeStruct((N, H, W, Cout), jnp.bfloat16)
        out_spec = pl.BlockSpec((1, H, W, TC), lambda b, j: (b, 0, 0, j))

    kern = functools.partial(_sep_bn_kernel, H=H, W=W, Wp=Wp,
                             pre_relu=pre_relu, post_relu=post_relu,
                             fuse_vpool=fuse_vpool, fuse_gap=fuse_gap)
    return pl.pallas_call(
        kern,
        out_shape=out_shape,
        grid=(N, Jc),
        in_specs=[
            pl.BlockSpec((1, H + 2, Wp, Cin), lambda b, j: (b, 0, 0, 0)),
            pl.BlockSpec((3, 3, Cin, Cin), lambda b, j: (0, 0, 0, 0)),
            pl.BlockSpec((Cin, TC), lambda b, j: (0, j)),
            pl.BlockSpec((1, TC), lambda b, j: (0, j)),
            pl.BlockSpec((1, TC), lambda b, j: (0, j)),
        ],
        out_specs=out_spec,
        scratch_shapes=[pltpu.VMEM((H * Wp, Cin), jnp.float32)],
        compiler_params=pltpu.CompilerParams(
            dimension_semantics=("parallel", "arbitrary"),
            vmem_limit_bytes=_VMEM_LIMIT),
    )(xp, w3, w1, scale, shift)


def shortcut_pool_add(x, rv, w, b, scale, shift):
    """x: (N,H,W,Cin) bf16; rv: (N,Ho,W,Cout) bf16 vertically max-pooled residual."""
    N, H, W, Cin = x.shape
    _, Ho, _, Cout = rv.shape
    Wo = (W - 1) // 2 + 1
    # TODO(synk): move these strided gathers in-kernel (pl.ds(..., stride=2)).
    xs = x[:, ::2, ::2, :]                                   # 1x1 conv, stride 2, pad 0
    rvp = jnp.pad(rv, ((0, 0), (0, 0), (1, 1), (0, 0)), constant_values=-jnp.inf)
    wins = jnp.stack(
        [rvp[:, :, kx:kx + 2 * (Wo - 1) + 1:2, :] for kx in range(3)],
        axis=1)                                              # (N, 3, Ho, Wo, Cout)

    kern = functools.partial(_shortcut_pool_add_kernel, Ho=Ho, Wo=Wo)
    return pl.pallas_call(
        kern,
        out_shape=jax.ShapeDtypeStruct((N, Ho, Wo, Cout), jnp.bfloat16),
        grid=(N,),
        in_specs=[
            pl.BlockSpec((1, Ho, Wo, Cin), lambda bi: (bi, 0, 0, 0)),
            pl.BlockSpec((1, 3, Ho, Wo, Cout), lambda bi: (bi, 0, 0, 0, 0)),
            pl.BlockSpec((Cin, Cout), lambda bi: (0, 0)),
            pl.BlockSpec((1, Cout), lambda bi: (0, 0)),
            pl.BlockSpec((1, Cout), lambda bi: (0, 0)),
            pl.BlockSpec((1, Cout), lambda bi: (0, 0)),
        ],
        out_specs=pl.BlockSpec((1, Ho, Wo, Cout), lambda bi: (bi, 0, 0, 0)),
        compiler_params=pltpu.CompilerParams(
            dimension_semantics=("parallel",),
            vmem_limit_bytes=_VMEM_LIMIT),
    )(xs, wins, w, b, scale, shift)


# ------------------------------- parameters --------------------------------

def make_params(key, cin, c1, ca, cb):
    it = iter(jax.random.split(key, 64))

    def conv_w(shape):                       # PyTorch OIHW layout
        fan_in = shape[1] * shape[2] * shape[3]
        return jax.random.normal(next(it), shape, jnp.float32) / np.sqrt(fan_in)

    def bn_p(c):
        return dict(
            gamma=1.0 + 0.1 * jax.random.normal(next(it), (c,), jnp.float32),
            beta=0.1 * jax.random.normal(next(it), (c,), jnp.float32),
            mean=0.1 * jax.random.normal(next(it), (c,), jnp.float32),
            var=1.0 + 0.1 * jnp.abs(jax.random.normal(next(it), (c,), jnp.float32)),
        )

    return dict(
        # conv1_residual
        w3a=conv_w((cin, cin, 3, 3)), w1a=conv_w((c1, cin, 1, 1)), bn1=bn_p(c1),
        w3b=conv_w((c1, c1, 3, 3)), w1b=conv_w((c1, c1, 1, 1)), bn2=bn_p(c1),
        # conv1_shortcut
        wsc=conv_w((c1, cin, 1, 1)),
        bsc=0.1 * jax.random.normal(next(it), (c1,), jnp.float32),
        bnsc=bn_p(c1),
        # conv2
        w3c=conv_w((c1, c1, 3, 3)), w1c=conv_w((ca, c1, 1, 1)), bn3=bn_p(ca),
        w3d=conv_w((ca, ca, 3, 3)), w1d=conv_w((cb, ca, 1, 1)), bn4=bn_p(cb),
    )


def _fold_bn(p):
    scale = p['gamma'] / jnp.sqrt(p['var'] + BN_EPS)
    shift = p['beta'] - p['mean'] * scale
    return scale[None, :].astype(jnp.float32), shift[None, :].astype(jnp.float32)


def _prep_sep(w3_oihw, w1_oihw, bn, cin_p, cout_p):
    """OIHW -> kernel layout, zero-padded channels, bf16 weights, folded f32 BN."""
    w3 = jnp.transpose(w3_oihw, (2, 3, 1, 0))                  # -> HWIO
    w3 = _pad_dim(_pad_dim(w3, 2, cin_p), 3, cin_p).astype(jnp.bfloat16)
    w1 = jnp.transpose(w1_oihw[:, :, 0, 0], (1, 0))            # -> (Cin, Cout)
    w1 = _pad_dim(_pad_dim(w1, 0, cin_p), 1, cout_p).astype(jnp.bfloat16)
    scale, shift = _fold_bn(bn)
    return w3, w1, _pad_dim(scale, 1, cout_p), _pad_dim(shift, 1, cout_p)


# --------------------------------- ExitFlow --------------------------------

@jax.jit
def exit_flow(x_nchw, P):
    cin = P['w3a'].shape[0]
    c1 = P['bn1']['gamma'].shape[0]
    ca = P['bn3']['gamma'].shape[0]
    cb = P['bn4']['gamma'].shape[0]
    cin_p, c1_p, ca_p, cb_p = (_rup(c, LANE) for c in (cin, c1, ca, cb))

    w3a, w1a, s1, t1 = _prep_sep(P['w3a'], P['w1a'], P['bn1'], cin_p, c1_p)
    w3b, w1b, s2, t2 = _prep_sep(P['w3b'], P['w1b'], P['bn2'], c1_p, c1_p)
    w3c, w1c, s3, t3 = _prep_sep(P['w3c'], P['w1c'], P['bn3'], c1_p, ca_p)
    w3d, w1d, s4, t4 = _prep_sep(P['w3d'], P['w1d'], P['bn4'], ca_p, cb_p)
    wsc = jnp.transpose(P['wsc'][:, :, 0, 0], (1, 0))
    wsc = _pad_dim(_pad_dim(wsc, 0, cin_p), 1, c1_p).astype(jnp.bfloat16)
    bsc = _pad_dim(P['bsc'][None, :], 1, c1_p).astype(jnp.float32)
    ssc, tsc = _fold_bn(P['bnsc'])
    ssc, tsc = _pad_dim(ssc, 1, c1_p), _pad_dim(tsc, 1, c1_p)

    x = jnp.transpose(x_nchw, (0, 2, 3, 1))                    # NCHW -> NHWC
    xb = _pad_dim(x, 3, cin_p).astype(jnp.bfloat16)            # lane-dense channels

    # conv1_residual: ReLU -> Sep -> BN -> ReLU -> Sep -> BN -> MaxPool(3,2,1)
    r = sep_bn_block(xb, w3a, w1a, s1, t1, pre_relu=True, post_relu=False)
    rv = sep_bn_block(r, w3b, w1b, s2, t2, pre_relu=True, post_relu=False,
                      fuse_vpool=True)                         # vertical half of pool

    # horizontal half of the pool + conv1_shortcut (1x1/s2 + bias -> BN) + add
    y = shortcut_pool_add(xb, rv, wsc, bsc, ssc, tsc)

    # conv2: Sep -> BN -> ReLU -> Sep -> BN -> ReLU, GAP fused into last block
    y = sep_bn_block(y, w3c, w1c, s3, t3, pre_relu=False, post_relu=True)
    g = sep_bn_block(y, w3d, w1d, s4, t4, pre_relu=False, post_relu=True,
                     fuse_gap=True)                            # (N, 1, cb_p) f32

    return g[:, 0, :cb][:, :, None, None]                      # NCHW (N, cb, 1, 1)


# ---------------------------- pure-JAX reference ----------------------------

def ref_exit_flow(x, P):
    """Reference with the same bf16 quantization points as the kernels."""
    bf = jnp.bfloat16

    def conv(xv, w, stride=1, pad=0):
        return lax.conv_general_dilated(
            xv.astype(bf), w.astype(bf), (stride, stride),
            [(pad, pad), (pad, pad)],
            dimension_numbers=('NCHW', 'OIHW', 'NCHW'),
            preferred_element_type=jnp.float32)

    def bn(y, p):
        scale, shift = _fold_bn(p)
        return y * scale[0][None, :, None, None] + shift[0][None, :, None, None]

    def sep(xv, w3, w1):
        return conv(conv(xv, w3, 1, 1), w1, 1, 0)

    r = jax.nn.relu(x)
    r = bn(sep(r, P['w3a'], P['w1a']), P['bn1'])
    r = jax.nn.relu(r)
    r = bn(sep(r, P['w3b'], P['w1b']), P['bn2'])
    r = r.astype(bf).astype(jnp.float32)                       # stored as bf16 activation
    r = lax.reduce_window(r, -jnp.inf, lax.max, (1, 1, 3, 3), (1, 1, 2, 2),
                          [(0, 0), (0, 0), (1, 1), (1, 1)])
    s = bn(conv(x, P['wsc'], 2, 0) + P['bsc'][None, :, None, None], P['bnsc'])
    y = r + s
    y = jax.nn.relu(bn(sep(y, P['w3c'], P['w1c']), P['bn3']))
    y = jax.nn.relu(bn(sep(y, P['w3d'], P['w1d']), P['bn4']))
    return jnp.mean(y, axis=(2, 3), keepdims=True)


# ----------------------------------- main -----------------------------------

if __name__ == "__main__":
    key = jax.random.PRNGKey(0)
    kx_, kp = jax.random.split(key)

    N, H, W = 2, 8, 8
    CIN, C1, CA, CB = 8, 16, 24, 32     # scaled-down (728, 1024, 1536, 2048)

    x = jax.random.normal(kx_, (N, CIN, H, W), jnp.float32)    # NCHW input
    P = make_params(kp, CIN, C1, CA, CB)

    out = exit_flow(x, P)
    out = jax.block_until_ready(out)
    assert out.shape == (N, CB, 1, 1)

    ref = ref_exit_flow(x, P)
    np.testing.assert_allclose(np.asarray(out), np.asarray(ref),
                               rtol=5e-3, atol=5e-3)
    print("KERNEL_OK")
</pallas_src>

<mosaic_0001>
module attributes {stable_mosaic.version = 11 : i64} {
  func.func @_sep_bn_kernel(%arg0: i32, %arg1: i32, %arg2: memref<1x10x16x128xbf16, #tpu.memory_space<vmem>>, %arg3: memref<3x3x128x128xbf16, #tpu.memory_space<vmem>>, %arg4: memref<128x128xbf16, #tpu.memory_space<vmem>>, %arg5: memref<1x128xf32, #tpu.memory_space<vmem>>, %arg6: memref<1x128xf32, #tpu.memory_space<vmem>>, %arg7: memref<1x4x8x128xbf16, #tpu.memory_space<vmem>>, %arg8: memref<128x128xf32, #tpu.memory_space<vmem>>) attributes {dimension_semantics = [#tpu.dimension_semantics<parallel>, #tpu.dimension_semantics<arbitrary>], iteration_bounds = array<i64: 2, 1>, scalar_prefetch = 0 : i64, scratch_operands = 1 : i64, tpu.core_type = #tpu.core_type<tc>, window_params = [{transform_indices = @transform_0, window_bounds = array<i64: 1, 10, 16, 128>}, {pipeline_mode = #tpu.pipeline_mode<synchronous>, transform_indices = @transform_1, window_bounds = array<i64: 3, 3, 128, 128>}, {transform_indices = @transform_2, window_bounds = array<i64: 128, 128>}, {transform_indices = @transform_3, window_bounds = array<i64: 1, 128>}, {transform_indices = @transform_4, window_bounds = array<i64: 1, 128>}, {transform_indices = @transform_5, window_bounds = array<i64: 1, 4, 8, 128>}]} {
    %c0_i32 = arith.constant 0 : i32
    %0 = arith.cmpi eq, %arg1, %c0_i32 : i32
    %1 = arith.extui %0 : i1 to i32
    %c0_i32_0 = arith.constant 0 : i32
    %2 = arith.cmpi ne, %1, %c0_i32_0 : i32
    scf.if %2 {
      %c0_12 = arith.constant 0 : index
      %c0_13 = arith.constant 0 : index
      %c0_14 = arith.constant 0 : index
      %c0_15 = arith.constant 0 : index
      %53 = vector.load %arg2[%c0_12, %c0_13, %c0_14, %c0_15] : memref<1x10x16x128xbf16, #tpu.memory_space<vmem>>, vector<1x10x16x128xbf16>
      %54 = vector.shape_cast %53 : vector<1x10x16x128xbf16> to vector<10x16x128xbf16>
      %cst_16 = arith.constant 0.000000e+00 : bf16
      %55 = vector.broadcast %cst_16 : bf16 to vector<10x16x128xbf16>
      %56 = arith.maximumf %54, %55 : vector<10x16x128xbf16>
      %57 = vector.extract_strided_slice %56 {offsets = [0, 0, 0], sizes = [8, 16, 128], strides = [1, 1, 1]} : vector<10x16x128xbf16> to vector<8x16x128xbf16>
      %58 = vector.shape_cast %57 : vector<8x16x128xbf16> to vector<128x128xbf16>
      %59 = vector.extract_strided_slice %56 {offsets = [1, 0, 0], sizes = [8, 16, 128], strides = [1, 1, 1]} : vector<10x16x128xbf16> to vector<8x16x128xbf16>
      %60 = vector.shape_cast %59 : vector<8x16x128xbf16> to vector<128x128xbf16>
      %61 = vector.extract_strided_slice %56 {offsets = [2, 0, 0], sizes = [8, 16, 128], strides = [1, 1, 1]} : vector<10x16x128xbf16> to vector<8x16x128xbf16>
      %62 = vector.shape_cast %61 : vector<8x16x128xbf16> to vector<128x128xbf16>
      %c0_17 = arith.constant 0 : index
      %c0_18 = arith.constant 0 : index
      %c0_19 = arith.constant 0 : index
      %c0_20 = arith.constant 0 : index
      %63 = vector.load %arg3[%c0_17, %c0_18, %c0_19, %c0_20] : memref<3x3x128x128xbf16, #tpu.memory_space<vmem>>, vector<1x1x128x128xbf16>
      %64 = vector.shape_cast %63 : vector<1x1x128x128xbf16> to vector<128x128xbf16>
      %cst_21 = arith.constant dense<0.000000e+00> : vector<128x128xf32>
      %65 = tpu.matmul %58, %64, %cst_21 {dimension_numbers = #tpu.dot_dimension_numbers<[1], [0], [0], [1], [0, 0, 1, 1], [], []>} : vector<128x128xbf16>, vector<128x128xbf16>, vector<128x128xf32> -> vector<128x128xf32>
      %c1 = arith.constant 1 : index
      %c0_22 = arith.constant 0 : index
      %c0_23 = arith.constant 0 : index
      %c0_24 = arith.constant 0 : index
      %66 = vector.load %arg3[%c1, %c0_22, %c0_23, %c0_24] : memref<3x3x128x128xbf16, #tpu.memory_space<vmem>>, vector<1x1x128x128xbf16>
      %67 = vector.shape_cast %66 : vector<1x1x128x128xbf16> to vector<128x128xbf16>
      %cst_25 = arith.constant dense<0.000000e+00> : vector<128x128xf32>
      %68 = tpu.matmul %60, %67, %cst_25 {dimension_numbers = #tpu.dot_dimension_numbers<[1], [0], [0], [1], [0, 0, 1, 1], [], []>} : vector<128x128xbf16>, vector<128x128xbf16>, vector<128x128xf32> -> vector<128x128xf32>
      %69 = arith.addf %65, %68 : vector<128x128xf32>
      %c2 = arith.constant 2 : index
      %c0_26 = arith.constant 0 : index
      %c0_27 = arith.constant 0 : index
      %c0_28 = arith.constant 0 : index
      %70 = vector.load %arg3[%c2, %c0_26, %c0_27, %c0_28] : memref<3x3x128x128xbf16, #tpu.memory_space<vmem>>, vector<1x1x128x128xbf16>
      %71 = vector.shape_cast %70 : vector<1x1x128x128xbf16> to vector<128x128xbf16>
      %cst_29 = arith.constant dense<0.000000e+00> : vector<128x128xf32>
      %72 = tpu.matmul %62, %71, %cst_29 {dimension_numbers = #tpu.dot_dimension_numbers<[1], [0], [0], [1], [0, 0, 1, 1], [], []>} : vector<128x128xbf16>, vector<128x128xbf16>, vector<128x128xf32> -> vector<128x128xf32>
      %73 = arith.addf %69, %72 : vector<128x128xf32>
      %c0_30 = arith.constant 0 : index
      %c0_31 = arith.constant 0 : index
      %74 = vector.load %arg8[%c0_30, %c0_31] : memref<128x128xf32, #tpu.memory_space<vmem>>, vector<128x128xf32>
      tpu.vector_store %arg8[%c0_30, %c0_31], %73 {strides = array<i32>} : memref<128x128xf32, #tpu.memory_space<vmem>>, vector<128x128xf32>,
      %c0_32 = arith.constant 0 : index
      %c1_33 = arith.constant 1 : index
      %c0_34 = arith.constant 0 : index
      %c0_35 = arith.constant 0 : index
      %75 = vector.load %arg3[%c0_32, %c1_33, %c0_34, %c0_35] : memref<3x3x128x128xbf16, #tpu.memory_space<vmem>>, vector<1x1x128x128xbf16>
      %76 = vector.shape_cast %75 : vector<1x1x128x128xbf16> to vector<128x128xbf16>
      %cst_36 = arith.constant dense<0.000000e+00> : vector<128x128xf32>
      %77 = tpu.matmul %58, %76, %cst_36 {dimension_numbers = #tpu.dot_dimension_numbers<[1], [0], [0], [1], [0, 0, 1, 1], [], []>} : vector<128x128xbf16>, vector<128x128xbf16>, vector<128x128xf32> -> vector<128x128xf32>
      %c1_37 = arith.constant 1 : index
      %c1_38 = arith.constant 1 : index
      %c0_39 = arith.constant 0 : index
      %c0_40 = arith.constant 0 : index
      %78 = vector.load %arg3[%c1_37, %c1_38, %c0_39, %c0_40] : memref<3x3x128x128xbf16, #tpu.memory_space<vmem>>, vector<1x1x128x128xbf16>
      %79 = vector.shape_cast %78 : vector<1x1x128x128xbf16> to vector<128x128xbf16>
      %cst_41 = arith.constant dense<0.000000e+00> : vector<128x128xf32>
      %80 = tpu.matmul %60, %79, %cst_41 {dimension_numbers = #tpu.dot_dimension_numbers<[1], [0], [0], [1], [0, 0, 1, 1], [], []>} : vector<128x128xbf16>, vector<128x128xbf16>, vector<128x128xf32> -> vector<128x128xf32>
      %81 = arith.addf %77, %80 : vector<128x128xf32>
      %c2_42 = arith.constant 2 : index
      %c1_43 = arith.constant 1 : index
      %c0_44 = arith.constant 0 : index
      %c0_45 = arith.constant 0 : index
      %82 = vector.load %arg3[%c2_42, %c1_43, %c0_44, %c0_45] : memref<3x3x128x128xbf16, #tpu.memory_space<vmem>>, vector<1x1x128x128xbf16>
      %83 = vector.shape_cast %82 : vector<1x1x128x128xbf16> to vector<128x128xbf16>
      %cst_46 = arith.constant dense<0.000000e+00> : vector<128x128xf32>
      %84 = tpu.matmul %62, %83, %cst_46 {dimension_numbers = #tpu.dot_dimension_numbers<[1], [0], [0], [1], [0, 0, 1, 1], [], []>} : vector<128x128xbf16>, vector<128x128xbf16>, vector<128x128xf32> -> vector<128x128xf32>
      %85 = arith.addf %81, %84 : vector<128x128xf32>
      %c0_47 = arith.constant 0 : index
      %c0_48 = arith.constant 0 : index
      %86 = vector.load %arg8[%c0_47, %c0_48] : memref<128x128xf32, #tpu.memory_space<vmem>>, vector<127x128xf32>
      %87 = vector.extract_strided_slice %85 {offsets = [1, 0], sizes = [127, 128], strides = [1, 1]} : vector<128x128xf32> to vector<127x128xf32>
      %88 = arith.addf %86, %87 : vector<127x128xf32>
      %c0_49 = arith.constant 0 : index
      %c0_50 = arith.constant 0 : index
      %89 = vector.load %arg8[%c0_49, %c0_50] : memref<128x128xf32, #tpu.memory_space<vmem>>, vector<127x128xf32>
      tpu.vector_store %arg8[%c0_49, %c0_50], %88 {strides = array<i32>} : memref<128x128xf32, #tpu.memory_space<vmem>>, vector<127x128xf32>,
      %c0_51 = arith.constant 0 : index
      %c2_52 = arith.constant 2 : index
      %c0_53 = arith.constant 0 : index
      %c0_54 = arith.constant 0 : index
      %90 = vector.load %arg3[%c0_51, %c2_52, %c0_53, %c0_54] : memref<3x3x128x128xbf16, #tpu.memory_space<vmem>>, vector<1x1x128x128xbf16>
      %91 = vector.shape_cast %90 : vector<1x1x128x128xbf16> to vector<128x128xbf16>
      %cst_55 = arith.constant dense<0.000000e+00> : vector<128x128xf32>
      %92 = tpu.matmul %58, %91, %cst_55 {dimension_numbers = #tpu.dot_dimension_numbers<[1], [0], [0], [1], [0, 0, 1, 1], [], []>} : vector<128x128xbf16>, vector<128x128xbf16>, vector<128x128xf32> -> vector<128x128xf32>
      %c1_56 = arith.constant 1 : index
      %c2_57 = arith.constant 2 : index
      %c0_58 = arith.constant 0 : index
      %c0_59 = arith.constant 0 : index
      %93 = vector.load %arg3[%c1_56, %c2_57, %c0_58, %c0_59] : memref<3x3x128x128xbf16, #tpu.memory_space<vmem>>, vector<1x1x128x128xbf16>
      %94 = vector.shape_cast %93 : vector<1x1x128x128xbf16> to vector<128x128xbf16>
      %cst_60 = arith.constant dense<0.000000e+00> : vector<128x128xf32>
      %95 = tpu.matmul %60, %94, %cst_60 {dimension_numbers = #tpu.dot_dimension_numbers<[1], [0], [0], [1], [0, 0, 1, 1], [], []>} : vector<128x128xbf16>, vector<128x128xbf16>, vector<128x128xf32> -> vector<128x128xf32>
      %96 = arith.addf %92, %95 : vector<128x128xf32>
      %c2_61 = arith.constant 2 : index
      %c2_62 = arith.constant 2 : index
      %c0_63 = arith.constant 0 : index
      %c0_64 = arith.constant 0 : index
      %97 = vector.load %arg3[%c2_61, %c2_62, %c0_63, %c0_64] : memref<3x3x128x128xbf16, #tpu.memory_space<vmem>>, vector<1x1x128x128xbf16>
      %98 = vector.shape_cast %97 : vector<1x1x128x128xbf16> to vector<128x128xbf16>
      %cst_65 = arith.constant dense<0.000000e+00> : vector<128x128xf32>
      %99 = tpu.matmul %62, %98, %cst_65 {dimension_numbers = #tpu.dot_dimension_numbers<[1], [0], [0], [1], [0, 0, 1, 1], [], []>} : vector<128x128xbf16>, vector<128x128xbf16>, vector<128x128xf32> -> vector<128x128xf32>
      %100 = arith.addf %96, %99 : vector<128x128xf32>
      %c0_66 = arith.constant 0 : index
      %c0_67 = arith.constant 0 : index
      %101 = vector.load %arg8[%c0_66, %c0_67] : memref<128x128xf32, #tpu.memory_space<vmem>>, vector<126x128xf32>
      %102 = vector.extract_strided_slice %100 {offsets = [2, 0], sizes = [126, 128], strides = [1, 1]} : vector<128x128xf32> to vector<126x128xf32>
      %103 = arith.addf %101, %102 : vector<126x128xf32>
      %c0_68 = arith.constant 0 : index
      %c0_69 = arith.constant 0 : index
      %104 = vector.load %arg8[%c0_68, %c0_69] : memref<128x128xf32, #tpu.memory_space<vmem>>, vector<126x128xf32>
      tpu.vector_store %arg8[%c0_68, %c0_69], %103 {strides = array<i32>} : memref<128x128xf32, #tpu.memory_space<vmem>>, vector<126x128xf32>,
    } else {
    }
    %c0 = arith.constant 0 : index
    %c0_1 = arith.constant 0 : index
    %3 = vector.load %arg8[%c0, %c0_1] : memref<128x128xf32, #tpu.memory_space<vmem>>, vector<128x128xf32>
    %4 = arith.truncf %3 : vector<128x128xf32> to vector<128x128xbf16>
    %c0_2 = arith.constant 0 : index
    %c0_3 = arith.constant 0 : index
    %5 = vector.load %arg4[%c0_2, %c0_3] : memref<128x128xbf16, #tpu.memory_space<vmem>>, vector<128x128xbf16>
    %cst = arith.constant dense<0.000000e+00> : vector<128x128xf32>
    %6 = tpu.matmul %4, %5, %cst {dimension_numbers = #tpu.dot_dimension_numbers<[1], [0], [0], [1], [0, 0, 1, 1], [], []>} : vector<128x128xbf16>, vector<128x128xbf16>, vector<128x128xf32> -> vector<128x128xf32>
    %c0_4 = arith.constant 0 : index
    %c0_5 = arith.constant 0 : index
    %7 = vector.load %arg5[%c0_4, %c0_5] : memref<1x128xf32, #tpu.memory_space<vmem>>, vector<1x128xf32>
    %8 = vector.broadcast %7 : vector<1x128xf32> to vector<128x128xf32>
    %9 = arith.mulf %6, %8 : vector<128x128xf32>
    %c0_6 = arith.constant 0 : index
    %c0_7 = arith.constant 0 : index
    %10 = vector.load %arg6[%c0_6, %c0_7] : memref<1x128xf32, #tpu.memory_space<vmem>>, vector<1x128xf32>
    %11 = vector.broadcast %10 : vector<1x128xf32> to vector<128x128xf32>
    %12 = arith.addf %9, %11 : vector<128x128xf32>
    %13 = vector.shape_cast %12 : vector<128x128xf32> to vector<8x16x128xf32>
    %14 = vector.extract_strided_slice %13 {offsets = [0, 0, 0], sizes = [1, 16, 128], strides = [1, 1, 1]} : vector<8x16x128xf32> to vector<1x16x128xf32>
    %15 = vector.shape_cast %14 : vector<1x16x128xf32> to vector<16x128xf32>
    %16 = vector.extract_strided_slice %13 {offsets = [1, 0, 0], sizes = [1, 16, 128], strides = [1, 1, 1]} : vector<8x16x128xf32> to vector<1x16x128xf32>
    %17 = vector.shape_cast %16 : vector<1x16x128xf32> to vector<16x128xf32>
    %18 = arith.maximumf %15, %17 : vector<16x128xf32>
    %19 = vector.extract_strided_slice %13 {offsets = [1, 0, 0], sizes = [1, 16, 128], strides = [1, 1, 1]} : vector<8x16x128xf32> to vector<1x16x128xf32>
    %20 = vector.shape_cast %19 : vector<1x16x128xf32> to vector<16x128xf32>
    %21 = vector.extract_strided_slice %13 {offsets = [2, 0, 0], sizes = [1, 16, 128], strides = [1, 1, 1]} : vector<8x16x128xf32> to vector<1x16x128xf32>
    %22 = vector.shape_cast %21 : vector<1x16x128xf32> to vector<16x128xf32>
    %23 = arith.maximumf %20, %22 : vector<16x128xf32>
    %24 = vector.extract_strided_slice %13 {offsets = [3, 0, 0], sizes = [1, 16, 128], strides = [1, 1, 1]} : vector<8x16x128xf32> to vector<1x16x128xf32>
    %25 = vector.shape_cast %24 : vector<1x16x128xf32> to vector<16x128xf32>
    %26 = arith.maximumf %23, %25 : vector<16x128xf32>
    %27 = vector.extract_strided_slice %13 {offsets = [3, 0, 0], sizes = [1, 16, 128], strides = [1, 1, 1]} : vector<8x16x128xf32> to vector<1x16x128xf32>
    %28 = vector.shape_cast %27 : vector<1x16x128xf32> to vector<16x128xf32>
    %29 = vector.extract_strided_slice %13 {offsets = [4, 0, 0], sizes = [1, 16, 128], strides = [1, 1, 1]} : vector<8x16x128xf32> to vector<1x16x128xf32>
    %30 = vector.shape_cast %29 : vector<1x16x128xf32> to vector<16x128xf32>
    %31 = arith.maximumf %28, %30 : vector<16x128xf32>
    %32 = vector.extract_strided_slice %13 {offsets = [5, 0, 0], sizes = [1, 16, 128], strides = [1, 1, 1]} : vector<8x16x128xf32> to vector<1x16x128xf32>
    %33 = vector.shape_cast %32 : vector<1x16x128xf32> to vector<16x128xf32>
    %34 = arith.maximumf %31, %33 : vector<16x128xf32>
    %35 = vector.extract_strided_slice %13 {offsets = [5, 0, 0], sizes = [1, 16, 128], strides = [1, 1, 1]} : vector<8x16x128xf32> to vector<1x16x128xf32>
    %36 = vector.shape_cast %35 : vector<1x16x128xf32> to vector<16x128xf32>
    %37 = vector.extract_strided_slice %13 {offsets = [6, 0, 0], sizes = [1, 16, 128], strides = [1, 1, 1]} : vector<8x16x128xf32> to vector<1x16x128xf32>
    %38 = vector.shape_cast %37 : vector<1x16x128xf32> to vector<16x128xf32>
    %39 = arith.maximumf %36, %38 : vector<16x128xf32>
    %40 = vector.extract_strided_slice %13 {offsets = [7, 0, 0], sizes = [1, 16, 128], strides = [1, 1, 1]} : vector<8x16x128xf32> to vector<1x16x128xf32>
    %41 = vector.shape_cast %40 : vector<1x16x128xf32> to vector<16x128xf32>
    %42 = arith.maximumf %39, %41 : vector<16x128xf32>
    %43 = vector.shape_cast %18 : vector<16x128xf32> to vector<1x16x128xf32>
    %44 = vector.shape_cast %26 : vector<16x128xf32> to vector<1x16x128xf32>
    %45 = vector.shape_cast %34 : vector<16x128xf32> to vector<1x16x128xf32>
    %46 = vector.shape_cast %42 : vector<16x128xf32> to vector<1x16x128xf32>
    %47 = tpu.concatenate %43, %44, %45, %46 in 0 : vector<1x16x128xf32>, vector<1x16x128xf32>, vector<1x16x128xf32>, vector<1x16x128xf32> -> vector<4x16x128xf32>
    %48 = vector.extract_strided_slice %47 {offsets = [0, 0, 0], sizes = [4, 8, 128], strides = [1, 1, 1]} : vector<4x16x128xf32> to vector<4x8x128xf32>
    %49 = arith.truncf %48 : vector<4x8x128xf32> to vector<4x8x128xbf16>
    %c0_8 = arith.constant 0 : index
    %c0_9 = arith.constant 0 : index
    %c0_10 = arith.constant 0 : index
    %c0_11 = arith.constant 0 : index
    %50 = vector.load %arg7[%c0_8, %c0_9, %c0_10, %c0_11] : memref<1x4x8x128xbf16, #tpu.memory_space<vmem>>, vector<1x4x8x128xbf16>
    %51 = vector.shape_cast %50 : vector<1x4x8x128xbf16> to vector<4x8x128xbf16>
    %52 = vector.shape_cast %49 : vector<4x8x128xbf16> to vector<1x4x8x128xbf16>
    tpu.vector_store %arg7[%c0_8, %c0_9, %c0_10, %c0_11], %52 {strides = array<i32>} : memref<1x4x8x128xbf16, #tpu.memory_space<vmem>>, vector<1x4x8x128xbf16>,
    return
  }
  func.func @transform_0(%arg0: i32, %arg1: i32) -> (i32, i32, i32, i32) {
    %c0_i32 = arith.constant 0 : i32
    %c0_i32_0 = arith.constant 0 : i32
    %c0_i32_1 = arith.constant 0 : i32
    %c0_i32_2 = arith.constant 0 : i32
    return %arg0, %c0_i32, %c0_i32_0, %c0_i32_1 : i32, i32, i32, i32
  }
  func.func @transform_1(%arg0: i32, %arg1: i32) -> (i32, i32, i32, i32) {
    %c0_i32 = arith.constant 0 : i32
    %c0_i32_0 = arith.constant 0 : i32
    %c0_i32_1 = arith.constant 0 : i32
    %c0_i32_2 = arith.constant 0 : i32
    %c0_i32_3 = arith.constant 0 : i32
    return %c0_i32, %c0_i32_0, %c0_i32_1, %c0_i32_2 : i32, i32, i32, i32
  }
  func.func @transform_2(%arg0: i32, %arg1: i32) -> (i32, i32) {
    %c0_i32 = arith.constant 0 : i32
    %c0_i32_0 = arith.constant 0 : i32
    return %c0_i32, %arg1 : i32, i32
  }
  func.func @transform_3(%arg0: i32, %arg1: i32) -> (i32, i32) {
    %c0_i32 = arith.constant 0 : i32
    %c0_i32_0 = arith.constant 0 : i32
    return %c0_i32, %arg1 : i32, i32
  }
  func.func @transform_4(%arg0: i32, %arg1: i32) -> (i32, i32) {
    %c0_i32 = arith.constant 0 : i32
    %c0_i32_0 = arith.constant 0 : i32
    return %c0_i32, %arg1 : i32, i32
  }
  func.func @transform_5(%arg0: i32, %arg1: i32) -> (i32, i32, i32, i32) {
    %c0_i32 = arith.constant 0 : i32
    %c0_i32_0 = arith.constant 0 : i32
    %c0_i32_1 = arith.constant 0 : i32
    return %arg0, %c0_i32, %c0_i32_0, %arg1 : i32, i32, i32, i32
  }
}

module attributes {stable_mosaic.version = 11 : i64} {
  func.func @_sep_bn_kernel(%arg0: i32, %arg1: i32, %arg2: memref<1x10x16x128xbf16, #tpu.memory_space<vmem>>, %arg3: memref<3x3x128x128xbf16, #tpu.memory_space<vmem>>, %arg4: memref<128x128xbf16, #tpu.memory_space<vmem>>, %arg5: memref<1x128xf32, #tpu.memory_space<vmem>>, %arg6: memref<1x128xf32, #tpu.memory_space<vmem>>, %arg7: memref<1x8x8x128xbf16, #tpu.memory_space<vmem>>, %arg8: memref<128x128xf32, #tpu.memory_space<vmem>>) attributes {dimension_semantics = [#tpu.dimension_semantics<parallel>, #tpu.dimension_semantics<arbitrary>], iteration_bounds = array<i64: 2, 1>, scalar_prefetch = 0 : i64, scratch_operands = 1 : i64, tpu.core_type = #tpu.core_type<tc>, window_params = [{transform_indices = @transform_0, window_bounds = array<i64: 1, 10, 16, 128>}, {pipeline_mode = #tpu.pipeline_mode<synchronous>, transform_indices = @transform_1, window_bounds = array<i64: 3, 3, 128, 128>}, {transform_indices = @transform_2, window_bounds = array<i64: 128, 128>}, {transform_indices = @transform_3, window_bounds = array<i64: 1, 128>}, {transform_indices = @transform_4, window_bounds = array<i64: 1, 128>}, {transform_indices = @transform_5, window_bounds = array<i64: 1, 8, 8, 128>}]} {
    %c0_i32 = arith.constant 0 : i32
    %0 = arith.cmpi eq, %arg1, %c0_i32 : i32
    %1 = arith.extui %0 : i1 to i32
    %c0_i32_0 = arith.constant 0 : i32
    %2 = arith.cmpi ne, %1, %c0_i32_0 : i32
    scf.if %2 {
      %c0_12 = arith.constant 0 : index
      %c0_13 = arith.constant 0 : index
      %c0_14 = arith.constant 0 : index
      %c0_15 = arith.constant 0 : index
      %19 = vector.load %arg2[%c0_12, %c0_13, %c0_14, %c0_15] : memref<1x10x16x128xbf16, #tpu.memory_space<vmem>>, vector<1x10x16x128xbf16>
      %20 = vector.shape_cast %19 : vector<1x10x16x128xbf16> to vector<10x16x128xbf16>
      %cst_16 = arith.constant 0.000000e+00 : bf16
      %21 = vector.broadcast %cst_16 : bf16 to vector<10x16x128xbf16>
      %22 = arith.maximumf %20, %21 : vector<10x16x128xbf16>
      %23 = vector.extract_strided_slice %22 {offsets = [0, 0, 0], sizes = [8, 16, 128], strides = [1, 1, 1]} : vector<10x16x128xbf16> to vector<8x16x128xbf16>
      %24 = vector.shape_cast %23 : vector<8x16x128xbf16> to vector<128x128xbf16>
      %25 = vector.extract_strided_slice %22 {offsets = [1, 0, 0], sizes = [8, 16, 128], strides = [1, 1, 1]} : vector<10x16x128xbf16> to vector<8x16x128xbf16>
      %26 = vector.shape_cast %25 : vector<8x16x128xbf16> to vector<128x128xbf16>
      %27 = vector.extract_strided_slice %22 {offsets = [2, 0, 0], sizes = [8, 16, 128], strides = [1, 1, 1]} : vector<10x16x128xbf16> to vector<8x16x128xbf16>
      %28 = vector.shape_cast %27 : vector<8x16x128xbf16> to vector<128x128xbf16>
      %c0_17 = arith.constant 0 : index
      %c0_18 = arith.constant 0 : index
      %c0_19 = arith.constant 0 : index
      %c0_20 = arith.constant 0 : index
      %29 = vector.load %arg3[%c0_17, %c0_18, %c0_19, %c0_20] : memref<3x3x128x128xbf16, #tpu.memory_space<vmem>>, vector<1x1x128x128xbf16>
      %30 = vector.shape_cast %29 : vector<1x1x128x128xbf16> to vector<128x128xbf16>
      %cst_21 = arith.constant dense<0.000000e+00> : vector<128x128xf32>
      %31 = tpu.matmul %24, %30, %cst_21 {dimension_numbers = #tpu.dot_dimension_numbers<[1], [0], [0], [1], [0, 0, 1, 1], [], []>} : vector<128x128xbf16>, vector<128x128xbf16>, vector<128x128xf32> -> vector<128x128xf32>
      %c1 = arith.constant 1 : index
      %c0_22 = arith.constant 0 : index
      %c0_23 = arith.constant 0 : index
      %c0_24 = arith.constant 0 : index
      %32 = vector.load %arg3[%c1, %c0_22, %c0_23, %c0_24] : memref<3x3x128x128xbf16, #tpu.memory_space<vmem>>, vector<1x1x128x128xbf16>
      %33 = vector.shape_cast %32 : vector<1x1x128x128xbf16> to vector<128x128xbf16>
      %cst_25 = arith.constant dense<0.000000e+00> : vector<128x128xf32>
      %34 = tpu.matmul %26, %33, %cst_25 {dimension_numbers = #tpu.dot_dimension_numbers<[1], [0], [0], [1], [0, 0, 1, 1], [], []>} : vector<128x128xbf16>, vector<128x128xbf16>, vector<128x128xf32> -> vector<128x128xf32>
      %35 = arith.addf %31, %34 : vector<128x128xf32>
      %c2 = arith.constant 2 : index
      %c0_26 = arith.constant 0 : index
      %c0_27 = arith.constant 0 : index
      %c0_28 = arith.constant 0 : index
      %36 = vector.load %arg3[%c2, %c0_26, %c0_27, %c0_28] : memref<3x3x128x128xbf16, #tpu.memory_space<vmem>>, vector<1x1x128x128xbf16>
      %37 = vector.shape_cast %36 : vector<1x1x128x128xbf16> to vector<128x128xbf16>
      %cst_29 = arith.constant dense<0.000000e+00> : vector<128x128xf32>
      %38 = tpu.matmul %28, %37, %cst_29 {dimension_numbers = #tpu.dot_dimension_numbers<[1], [0], [0], [1], [0, 0, 1, 1], [], []>} : vector<128x128xbf16>, vector<128x128xbf16>, vector<128x128xf32> -> vector<128x128xf32>
      %39 = arith.addf %35, %38 : vector<128x128xf32>
      %c0_30 = arith.constant 0 : index
      %c0_31 = arith.constant 0 : index
      %40 = vector.load %arg8[%c0_30, %c0_31] : memref<128x128xf32, #tpu.memory_space<vmem>>, vector<128x128xf32>
      tpu.vector_store %arg8[%c0_30, %c0_31], %39 {strides = array<i32>} : memref<128x128xf32, #tpu.memory_space<vmem>>, vector<128x128xf32>,
      %c0_32 = arith.constant 0 : index
      %c1_33 = arith.constant 1 : index
      %c0_34 = arith.constant 0 : index
      %c0_35 = arith.constant 0 : index
      %41 = vector.load %arg3[%c0_32, %c1_33, %c0_34, %c0_35] : memref<3x3x128x128xbf16, #tpu.memory_space<vmem>>, vector<1x1x128x128xbf16>
      %42 = vector.shape_cast %41 : vector<1x1x128x128xbf16> to vector<128x128xbf16>
      %cst_36 = arith.constant dense<0.000000e+00> : vector<128x128xf32>
      %43 = tpu.matmul %24, %42, %cst_36 {dimension_numbers = #tpu.dot_dimension_numbers<[1], [0], [0], [1], [0, 0, 1, 1], [], []>} : vector<128x128xbf16>, vector<128x128xbf16>, vector<128x128xf32> -> vector<128x128xf32>
      %c1_37 = arith.constant 1 : index
      %c1_38 = arith.constant 1 : index
      %c0_39 = arith.constant 0 : index
      %c0_40 = arith.constant 0 : index
      %44 = vector.load %arg3[%c1_37, %c1_38, %c0_39, %c0_40] : memref<3x3x128x128xbf16, #tpu.memory_space<vmem>>, vector<1x1x128x128xbf16>
      %45 = vector.shape_cast %44 : vector<1x1x128x128xbf16> to vector<128x128xbf16>
      %cst_41 = arith.constant dense<0.000000e+00> : vector<128x128xf32>
      %46 = tpu.matmul %26, %45, %cst_41 {dimension_numbers = #tpu.dot_dimension_numbers<[1], [0], [0], [1], [0, 0, 1, 1], [], []>} : vector<128x128xbf16>, vector<128x128xbf16>, vector<128x128xf32> -> vector<128x128xf32>
      %47 = arith.addf %43, %46 : vector<128x128xf32>
      %c2_42 = arith.constant 2 : index
      %c1_43 = arith.constant 1 : index
      %c0_44 = arith.constant 0 : index
      %c0_45 = arith.constant 0 : index
      %48 = vector.load %arg3[%c2_42, %c1_43, %c0_44, %c0_45] : memref<3x3x128x128xbf16, #tpu.memory_space<vmem>>, vector<1x1x128x128xbf16>
      %49 = vector.shape_cast %48 : vector<1x1x128x128xbf16> to vector<128x128xbf16>
      %cst_46 = arith.constant dense<0.000000e+00> : vector<128x128xf32>
      %50 = tpu.matmul %28, %49, %cst_46 {dimension_numbers = #tpu.dot_dimension_numbers<[1], [0], [0], [1], [0, 0, 1, 1], [], []>} : vector<128x128xbf16>, vector<128x128xbf16>, vector<128x128xf32> -> vector<128x128xf32>
      %51 = arith.addf %47, %50 : vector<128x128xf32>
      %c0_47 = arith.constant 0 : index
      %c0_48 = arith.constant 0 : index
      %52 = vector.load %arg8[%c0_47, %c0_48] : memref<128x128xf32, #tpu.memory_space<vmem>>, vector<127x128xf32>
      %53 = vector.extract_strided_slice %51 {offsets = [1, 0], sizes = [127, 128], strides = [1, 1]} : vector<128x128xf32> to vector<127x128xf32>
      %54 = arith.addf %52, %53 : vector<127x128xf32>
      %c0_49 = arith.constant 0 : index
      %c0_50 = arith.constant 0 : index
      %55 = vector.load %arg8[%c0_49, %c0_50] : memref<128x128xf32, #tpu.memory_space<vmem>>, vector<127x128xf32>
      tpu.vector_store %arg8[%c0_49, %c0_50], %54 {strides = array<i32>} : memref<128x128xf32, #tpu.memory_space<vmem>>, vector<127x128xf32>,
      %c0_51 = arith.constant 0 : index
      %c2_52 = arith.constant 2 : index
      %c0_53 = arith.constant 0 : index
      %c0_54 = arith.constant 0 : index
      %56 = vector.load %arg3[%c0_51, %c2_52, %c0_53, %c0_54] : memref<3x3x128x128xbf16, #tpu.memory_space<vmem>>, vector<1x1x128x128xbf16>
      %57 = vector.shape_cast %56 : vector<1x1x128x128xbf16> to vector<128x128xbf16>
      %cst_55 = arith.constant dense<0.000000e+00> : vector<128x128xf32>
      %58 = tpu.matmul %24, %57, %cst_55 {dimension_numbers = #tpu.dot_dimension_numbers<[1], [0], [0], [1], [0, 0, 1, 1], [], []>} : vector<128x128xbf16>, vector<128x128xbf16>, vector<128x128xf32> -> vector<128x128xf32>
      %c1_56 = arith.constant 1 : index
      %c2_57 = arith.constant 2 : index
      %c0_58 = arith.constant 0 : index
      %c0_59 = arith.constant 0 : index
      %59 = vector.load %arg3[%c1_56, %c2_57, %c0_58, %c0_59] : memref<3x3x128x128xbf16, #tpu.memory_space<vmem>>, vector<1x1x128x128xbf16>
      %60 = vector.shape_cast %59 : vector<1x1x128x128xbf16> to vector<128x128xbf16>
      %cst_60 = arith.constant dense<0.000000e+00> : vector<128x128xf32>
      %61 = tpu.matmul %26, %60, %cst_60 {dimension_numbers = #tpu.dot_dimension_numbers<[1], [0], [0], [1], [0, 0, 1, 1], [], []>} : vector<128x128xbf16>, vector<128x128xbf16>, vector<128x128xf32> -> vector<128x128xf32>
      %62 = arith.addf %58, %61 : vector<128x128xf32>
      %c2_61 = arith.constant 2 : index
      %c2_62 = arith.constant 2 : index
      %c0_63 = arith.constant 0 : index
      %c0_64 = arith.constant 0 : index
      %63 = vector.load %arg3[%c2_61, %c2_62, %c0_63, %c0_64] : memref<3x3x128x128xbf16, #tpu.memory_space<vmem>>, vector<1x1x128x128xbf16>
      %64 = vector.shape_cast %63 : vector<1x1x128x128xbf16> to vector<128x128xbf16>
      %cst_65 = arith.constant dense<0.000000e+00> : vector<128x128xf32>
      %65 = tpu.matmul %28, %64, %cst_65 {dimension_numbers = #tpu.dot_dimension_numbers<[1], [0], [0], [1], [0, 0, 1, 1], [], []>} : vector<128x128xbf16>, vector<128x128xbf16>, vector<128x128xf32> -> vector<128x128xf32>
      %66 = arith.addf %62, %65 : vector<128x128xf32>
      %c0_66 = arith.constant 0 : index
      %c0_67 = arith.constant 0 : index
      %67 = vector.load %arg8[%c0_66, %c0_67] : memref<128x128xf32, #tpu.memory_space<vmem>>, vector<126x128xf32>
      %68 = vector.extract_strided_slice %66 {offsets = [2, 0], sizes = [126, 128], strides = [1, 1]} : vector<128x128xf32> to vector<126x128xf32>
      %69 = arith.addf %67, %68 : vector<126x128xf32>
      %c0_68 = arith.constant 0 : index
      %c0_69 = arith.constant 0 : index
      %70 = vector.load %arg8[%c0_68, %c0_69] : memref<128x128xf32, #tpu.memory_space<vmem>>, vector<126x128xf32>
      tpu.vector_store %arg8[%c0_68, %c0_69], %69 {strides = array<i32>} : memref<128x128xf32, #tpu.memory_space<vmem>>, vector<126x128xf32>,
    } else {
    }
    %c0 = arith.constant 0 : index
    %c0_1 = arith.constant 0 : index
    %3 = vector.load %arg8[%c0, %c0_1] : memref<128x128xf32, #tpu.memory_space<vmem>>, vector<128x128xf32>
    %4 = arith.truncf %3 : vector<128x128xf32> to vector<128x128xbf16>
    %c0_2 = arith.constant 0 : index
    %c0_3 = arith.constant 0 : index
    %5 = vector.load %arg4[%c0_2, %c0_3] : memref<128x128xbf16, #tpu.memory_space<vmem>>, vector<128x128xbf16>
    %cst = arith.constant dense<0.000000e+00> : vector<128x128xf32>
    %6 = tpu.matmul %4, %5, %cst {dimension_numbers = #tpu.dot_dimension_numbers<[1], [0], [0], [1], [0, 0, 1, 1], [], []>} : vector<128x128xbf16>, vector<128x128xbf16>, vector<128x128xf32> -> vector<128x128xf32>
    %c0_4 = arith.constant 0 : index
    %c0_5 = arith.constant 0 : index
    %7 = vector.load %arg5[%c0_4, %c0_5] : memref<1x128xf32, #tpu.memory_space<vmem>>, vector<1x128xf32>
    %8 = vector.broadcast %7 : vector<1x128xf32> to vector<128x128xf32>
    %9 = arith.mulf %6, %8 : vector<128x128xf32>
    %c0_6 = arith.constant 0 : index
    %c0_7 = arith.constant 0 : index
    %10 = vector.load %arg6[%c0_6, %c0_7] : memref<1x128xf32, #tpu.memory_space<vmem>>, vector<1x128xf32>
    %11 = vector.broadcast %10 : vector<1x128xf32> to vector<128x128xf32>
    %12 = arith.addf %9, %11 : vector<128x128xf32>
    %13 = vector.shape_cast %12 : vector<128x128xf32> to vector<8x16x128xf32>
    %14 = vector.extract_strided_slice %13 {offsets = [0, 0, 0], sizes = [8, 8, 128], strides = [1, 1, 1]} : vector<8x16x128xf32> to vector<8x8x128xf32>
    %15 = arith.truncf %14 : vector<8x8x128xf32> to vector<8x8x128xbf16>
    %c0_8 = arith.constant 0 : index
    %c0_9 = arith.constant 0 : index
    %c0_10 = arith.constant 0 : index
    %c0_11 = arith.constant 0 : index
    %16 = vector.load %arg7[%c0_8, %c0_9, %c0_10, %c0_11] : memref<1x8x8x128xbf16, #tpu.memory_space<vmem>>, vector<1x8x8x128xbf16>
    %17 = vector.shape_cast %16 : vector<1x8x8x128xbf16> to vector<8x8x128xbf16>
    %18 = vector.shape_cast %15 : vector<8x8x128xbf16> to vector<1x8x8x128xbf16>
    tpu.vector_store %arg7[%c0_8, %c0_9, %c0_10, %c0_11], %18 {strides = array<i32>} : memref<1x8x8x128xbf16, #tpu.memory_space<vmem>>, vector<1x8x8x128xbf16>,
    return
  }
  func.func @transform_0(%arg0: i32, %arg1: i32) -> (i32, i32, i32, i32) {
    %c0_i32 = arith.constant 0 : i32
    %c0_i32_0 = arith.constant 0 : i32
    %c0_i32_1 = arith.constant 0 : i32
    %c0_i32_2 = arith.constant 0 : i32
    return %arg0, %c0_i32, %c0_i32_0, %c0_i32_1 : i32, i32, i32, i32
  }
  func.func @transform_1(%arg0: i32, %arg1: i32) -> (i32, i32, i32, i32) {
    %c0_i32 = arith.constant 0 : i32
    %c0_i32_0 = arith.constant 0 : i32
    %c0_i32_1 = arith.constant 0 : i32
    %c0_i32_2 = arith.constant 0 : i32
    %c0_i32_3 = arith.constant 0 : i32
    return %c0_i32, %c0_i32_0, %c0_i32_1, %c0_i32_2 : i32, i32, i32, i32
  }
  func.func @transform_2(%arg0: i32, %arg1: i32) -> (i32, i32) {
    %c0_i32 = arith.constant 0 : i32
    %c0_i32_0 = arith.constant 0 : i32
    return %c0_i32, %arg1 : i32, i32
  }
  func.func @transform_3(%arg0: i32, %arg1: i32) -> (i32, i32) {
    %c0_i32 = arith.constant 0 : i32
    %c0_i32_0 = arith.constant 0 : i32
    return %c0_i32, %arg1 : i32, i32
  }
  func.func @transform_4(%arg0: i32, %arg1: i32) -> (i32, i32) {
    %c0_i32 = arith.constant 0 : i32
    %c0_i32_0 = arith.constant 0 : i32
    return %c0_i32, %arg1 : i32, i32
  }
  func.func @transform_5(%arg0: i32, %arg1: i32) -> (i32, i32, i32, i32) {
    %c0_i32 = arith.constant 0 : i32
    %c0_i32_0 = arith.constant 0 : i32
    %c0_i32_1 = arith.constant 0 : i32
    return %arg0, %c0_i32, %c0_i32_0, %arg1 : i32, i32, i32, i32
  }
}

module attributes {stable_mosaic.version = 11 : i64} {
  func.func @_shortcut_pool_add_kernel(%arg0: i32, %arg1: memref<1x4x4x128xbf16, #tpu.memory_space<vmem>>, %arg2: memref<1x3x4x4x128xbf16, #tpu.memory_space<vmem>>, %arg3: memref<128x128xbf16, #tpu.memory_space<vmem>>, %arg4: memref<1x128xf32, #tpu.memory_space<vmem>>, %arg5: memref<1x128xf32, #tpu.memory_space<vmem>>, %arg6: memref<1x128xf32, #tpu.memory_space<vmem>>, %arg7: memref<1x4x4x128xbf16, #tpu.memory_space<vmem>>) attributes {dimension_semantics = [#tpu.dimension_semantics<parallel>], iteration_bounds = array<i64: 2>, scalar_prefetch = 0 : i64, scratch_operands = 0 : i64, tpu.core_type = #tpu.core_type<tc>, window_params = [{transform_indices = @transform_0, window_bounds = array<i64: 1, 4, 4, 128>}, {transform_indices = @transform_1, window_bounds = array<i64: 1, 3, 4, 4, 128>}, {pipeline_mode = #tpu.pipeline_mode<synchronous>, transform_indices = @transform_2, window_bounds = array<i64: 128, 128>}, {pipeline_mode = #tpu.pipeline_mode<synchronous>, transform_indices = @transform_3, window_bounds = array<i64: 1, 128>}, {pipeline_mode = #tpu.pipeline_mode<synchronous>, transform_indices = @transform_4, window_bounds = array<i64: 1, 128>}, {pipeline_mode = #tpu.pipeline_mode<synchronous>, transform_indices = @transform_5, window_bounds = array<i64: 1, 128>}, {transform_indices = @transform_6, window_bounds = array<i64: 1, 4, 4, 128>}]} {
    %c0 = arith.constant 0 : index
    %c0_0 = arith.constant 0 : index
    %c0_1 = arith.constant 0 : index
    %c0_2 = arith.constant 0 : index
    %c0_3 = arith.constant 0 : index
    %0 = vector.load %arg2[%c0, %c0_0, %c0_1, %c0_2, %c0_3] : memref<1x3x4x4x128xbf16, #tpu.memory_space<vmem>>, vector<1x1x4x4x128xbf16>
    %1 = vector.shape_cast %0 : vector<1x1x4x4x128xbf16> to vector<4x4x128xbf16>
    %c0_4 = arith.constant 0 : index
    %c1 = arith.constant 1 : index
    %c0_5 = arith.constant 0 : index
    %c0_6 = arith.constant 0 : index
    %c0_7 = arith.constant 0 : index
    %2 = vector.load %arg2[%c0_4, %c1, %c0_5, %c0_6, %c0_7] : memref<1x3x4x4x128xbf16, #tpu.memory_space<vmem>>, vector<1x1x4x4x128xbf16>
    %3 = vector.shape_cast %2 : vector<1x1x4x4x128xbf16> to vector<4x4x128xbf16>
    %4 = arith.maximumf %1, %3 : vector<4x4x128xbf16>
    %c0_8 = arith.constant 0 : index
    %c2 = arith.constant 2 : index
    %c0_9 = arith.constant 0 : index
    %c0_10 = arith.constant 0 : index
    %c0_11 = arith.constant 0 : index
    %5 = vector.load %arg2[%c0_8, %c2, %c0_9, %c0_10, %c0_11] : memref<1x3x4x4x128xbf16, #tpu.memory_space<vmem>>, vector<1x1x4x4x128xbf16>
    %6 = vector.shape_cast %5 : vector<1x1x4x4x128xbf16> to vector<4x4x128xbf16>
    %7 = arith.maximumf %4, %6 : vector<4x4x128xbf16>
    %c0_12 = arith.constant 0 : index
    %c0_13 = arith.constant 0 : index
    %c0_14 = arith.constant 0 : index
    %c0_15 = arith.constant 0 : index
    %8 = vector.load %arg1[%c0_12, %c0_13, %c0_14, %c0_15] : memref<1x4x4x128xbf16, #tpu.memory_space<vmem>>, vector<1x4x4x128xbf16>
    %9 = vector.shape_cast %8 : vector<1x4x4x128xbf16> to vector<4x4x128xbf16>
    %10 = vector.shape_cast %9 : vector<4x4x128xbf16> to vector<16x128xbf16>
    %c0_16 = arith.constant 0 : index
    %c0_17 = arith.constant 0 : index
    %11 = vector.load %arg3[%c0_16, %c0_17] : memref<128x128xbf16, #tpu.memory_space<vmem>>, vector<128x128xbf16>
    %cst = arith.constant dense<0.000000e+00> : vector<16x128xf32>
    %12 = tpu.matmul %10, %11, %cst {dimension_numbers = #tpu.dot_dimension_numbers<[1], [0], [0], [1], [0, 0, 1, 1], [], []>} : vector<16x128xbf16>, vector<128x128xbf16>, vector<16x128xf32> -> vector<16x128xf32>
    %c0_18 = arith.constant 0 : index
    %c0_19 = arith.constant 0 : index
    %13 = vector.load %arg4[%c0_18, %c0_19] : memref<1x128xf32, #tpu.memory_space<vmem>>, vector<1x128xf32>
    %14 = vector.broadcast %13 : vector<1x128xf32> to vector<16x128xf32>
    %15 = arith.addf %12, %14 : vector<16x128xf32>
    %c0_20 = arith.constant 0 : index
    %c0_21 = arith.constant 0 : index
    %16 = vector.load %arg5[%c0_20, %c0_21] : memref<1x128xf32, #tpu.memory_space<vmem>>, vector<1x128xf32>
    %17 = vector.broadcast %16 : vector<1x128xf32> to vector<16x128xf32>
    %18 = arith.mulf %15, %17 : vector<16x128xf32>
    %c0_22 = arith.constant 0 : index
    %c0_23 = arith.constant 0 : index
    %19 = vector.load %arg6[%c0_22, %c0_23] : memref<1x128xf32, #tpu.memory_space<vmem>>, vector<1x128xf32>
    %20 = vector.broadcast %19 : vector<1x128xf32> to vector<16x128xf32>
    %21 = arith.addf %18, %20 : vector<16x128xf32>
    %22 = vector.shape_cast %21 : vector<16x128xf32> to vector<4x4x128xf32>
    %23 = arith.extf %7 : vector<4x4x128xbf16> to vector<4x4x128xf32>
    %24 = arith.addf %22, %23 : vector<4x4x128xf32>
    %25 = arith.truncf %24 : vector<4x4x128xf32> to vector<4x4x128xbf16>
    %c0_24 = arith.constant 0 : index
    %c0_25 = arith.constant 0 : index
    %c0_26 = arith.constant 0 : index
    %c0_27 = arith.constant 0 : index
    %26 = vector.load %arg7[%c0_24, %c0_25, %c0_26, %c0_27] : memref<1x4x4x128xbf16, #tpu.memory_space<vmem>>, vector<1x4x4x128xbf16>
    %27 = vector.shape_cast %26 : vector<1x4x4x128xbf16> to vector<4x4x128xbf16>
    %28 = vector.shape_cast %25 : vector<4x4x128xbf16> to vector<1x4x4x128xbf16>
    tpu.vector_store %arg7[%c0_24, %c0_25, %c0_26, %c0_27], %28 {strides = array<i32>} : memref<1x4x4x128xbf16, #tpu.memory_space<vmem>>, vector<1x4x4x128xbf16>,
    return
  }
  func.func @transform_0(%arg0: i32) -> (i32, i32, i32, i32) {
    %c0_i32 = arith.constant 0 : i32
    %c0_i32_0 = arith.constant 0 : i32
    %c0_i32_1 = arith.constant 0 : i32
    %c0_i32_2 = arith.constant 0 : i32
    return %arg0, %c0_i32, %c0_i32_0, %c0_i32_1 : i32, i32, i32, i32
  }
  func.func @transform_1(%arg0: i32) -> (i32, i32, i32, i32, i32) {
    %c0_i32 = arith.constant 0 : i32
    %c0_i32_0 = arith.constant 0 : i32
    %c0_i32_1 = arith.constant 0 : i32
    %c0_i32_2 = arith.constant 0 : i32
    %c0_i32_3 = arith.constant 0 : i32
    return %arg0, %c0_i32, %c0_i32_0, %c0_i32_1, %c0_i32_2 : i32, i32, i32, i32, i32
  }
  func.func @transform_2(%arg0: i32) -> (i32, i32) {
    %c0_i32 = arith.constant 0 : i32
    %c0_i32_0 = arith.constant 0 : i32
    %c0_i32_1 = arith.constant 0 : i32
    return %c0_i32, %c0_i32_0 : i32, i32
  }
  func.func @transform_3(%arg0: i32) -> (i32, i32) {
    %c0_i32 = arith.constant 0 : i32
    %c0_i32_0 = arith.constant 0 : i32
    %c0_i32_1 = arith.constant 0 : i32
    return %c0_i32, %c0_i32_0 : i32, i32
  }
  func.func @transform_4(%arg0: i32) -> (i32, i32) {
    %c0_i32 = arith.constant 0 : i32
    %c0_i32_0 = arith.constant 0 : i32
    %c0_i32_1 = arith.constant 0 : i32
    return %c0_i32, %c0_i32_0 : i32, i32
  }
  func.func @transform_5(%arg0: i32) -> (i32, i32) {
    %c0_i32 = arith.constant 0 : i32
    %c0_i32_0 = arith.constant 0 : i32
    %c0_i32_1 = arith.constant 0 : i32
    return %c0_i32, %c0_i32_0 : i32, i32
  }
  func.func @transform_6(%arg0: i32) -> (i32, i32, i32, i32) {
    %c0_i32 = arith.constant 0 : i32
    %c0_i32_0 = arith.constant 0 : i32
    %c0_i32_1 = arith.constant 0 : i32
    %c0_i32_2 = arith.constant 0 : i32
    return %arg0, %c0_i32, %c0_i32_0, %c0_i32_1 : i32, i32, i32, i32
  }
}

module attributes {stable_mosaic.version = 11 : i64} {
  func.func @_sep_bn_kernel(%arg0: i32, %arg1: i32, %arg2: memref<1x6x8x128xbf16, #tpu.memory_space<vmem>>, %arg3: memref<3x3x128x128xbf16, #tpu.memory_space<vmem>>, %arg4: memref<128x128xbf16, #tpu.memory_space<vmem>>, %arg5: memref<1x128xf32, #tpu.memory_space<vmem>>, %arg6: memref<1x128xf32, #tpu.memory_space<vmem>>, %arg7: memref<1x4x4x128xbf16, #tpu.memory_space<vmem>>, %arg8: memref<32x128xf32, #tpu.memory_space<vmem>>) attributes {dimension_semantics = [#tpu.dimension_semantics<parallel>, #tpu.dimension_semantics<arbitrary>], iteration_bounds = array<i64: 2, 1>, scalar_prefetch = 0 : i64, scratch_operands = 1 : i64, tpu.core_type = #tpu.core_type<tc>, window_params = [{transform_indices = @transform_0, window_bounds = array<i64: 1, 6, 8, 128>}, {pipeline_mode = #tpu.pipeline_mode<synchronous>, transform_indices = @transform_1, window_bounds = array<i64: 3, 3, 128, 128>}, {transform_indices = @transform_2, window_bounds = array<i64: 128, 128>}, {transform_indices = @transform_3, window_bounds = array<i64: 1, 128>}, {transform_indices = @transform_4, window_bounds = array<i64: 1, 128>}, {transform_indices = @transform_5, window_bounds = array<i64: 1, 4, 4, 128>}]} {
    %c0_i32 = arith.constant 0 : i32
    %0 = arith.cmpi eq, %arg1, %c0_i32 : i32
    %1 = arith.extui %0 : i1 to i32
    %c0_i32_0 = arith.constant 0 : i32
    %2 = arith.cmpi ne, %1, %c0_i32_0 : i32
    scf.if %2 {
      %c0_13 = arith.constant 0 : index
      %c0_14 = arith.constant 0 : index
      %c0_15 = arith.constant 0 : index
      %c0_16 = arith.constant 0 : index
      %21 = vector.load %arg2[%c0_13, %c0_14, %c0_15, %c0_16] : memref<1x6x8x128xbf16, #tpu.memory_space<vmem>>, vector<1x6x8x128xbf16>
      %22 = vector.shape_cast %21 : vector<1x6x8x128xbf16> to vector<6x8x128xbf16>
      %23 = vector.extract_strided_slice %22 {offsets = [0, 0, 0], sizes = [4, 8, 128], strides = [1, 1, 1]} : vector<6x8x128xbf16> to vector<4x8x128xbf16>
      %24 = vector.shape_cast %23 : vector<4x8x128xbf16> to vector<32x128xbf16>
      %25 = vector.extract_strided_slice %22 {offsets = [1, 0, 0], sizes = [4, 8, 128], strides = [1, 1, 1]} : vector<6x8x128xbf16> to vector<4x8x128xbf16>
      %26 = vector.shape_cast %25 : vector<4x8x128xbf16> to vector<32x128xbf16>
      %27 = vector.extract_strided_slice %22 {offsets = [2, 0, 0], sizes = [4, 8, 128], strides = [1, 1, 1]} : vector<6x8x128xbf16> to vector<4x8x128xbf16>
      %28 = vector.shape_cast %27 : vector<4x8x128xbf16> to vector<32x128xbf16>
      %c0_17 = arith.constant 0 : index
      %c0_18 = arith.constant 0 : index
      %c0_19 = arith.constant 0 : index
      %c0_20 = arith.constant 0 : index
      %29 = vector.load %arg3[%c0_17, %c0_18, %c0_19, %c0_20] : memref<3x3x128x128xbf16, #tpu.memory_space<vmem>>, vector<1x1x128x128xbf16>
      %30 = vector.shape_cast %29 : vector<1x1x128x128xbf16> to vector<128x128xbf16>
      %cst_21 = arith.constant dense<0.000000e+00> : vector<32x128xf32>
      %31 = tpu.matmul %24, %30, %cst_21 {dimension_numbers = #tpu.dot_dimension_numbers<[1], [0], [0], [1], [0, 0, 1, 1], [], []>} : vector<32x128xbf16>, vector<128x128xbf16>, vector<32x128xf32> -> vector<32x128xf32>
      %c1 = arith.constant 1 : index
      %c0_22 = arith.constant 0 : index
      %c0_23 = arith.constant 0 : index
      %c0_24 = arith.constant 0 : index
      %32 = vector.load %arg3[%c1, %c0_22, %c0_23, %c0_24] : memref<3x3x128x128xbf16, #tpu.memory_space<vmem>>, vector<1x1x128x128xbf16>
      %33 = vector.shape_cast %32 : vector<1x1x128x128xbf16> to vector<128x128xbf16>
      %cst_25 = arith.constant dense<0.000000e+00> : vector<32x128xf32>
      %34 = tpu.matmul %26, %33, %cst_25 {dimension_numbers = #tpu.dot_dimension_numbers<[1], [0], [0], [1], [0, 0, 1, 1], [], []>} : vector<32x128xbf16>, vector<128x128xbf16>, vector<32x128xf32> -> vector<32x128xf32>
      %35 = arith.addf %31, %34 : vector<32x128xf32>
      %c2 = arith.constant 2 : index
      %c0_26 = arith.constant 0 : index
      %c0_27 = arith.constant 0 : index
      %c0_28 = arith.constant 0 : index
      %36 = vector.load %arg3[%c2, %c0_26, %c0_27, %c0_28] : memref<3x3x128x128xbf16, #tpu.memory_space<vmem>>, vector<1x1x128x128xbf16>
      %37 = vector.shape_cast %36 : vector<1x1x128x128xbf16> to vector<128x128xbf16>
      %cst_29 = arith.constant dense<0.000000e+00> : vector<32x128xf32>
      %38 = tpu.matmul %28, %37, %cst_29 {dimension_numbers = #tpu.dot_dimension_numbers<[1], [0], [0], [1], [0, 0, 1, 1], [], []>} : vector<32x128xbf16>, vector<128x128xbf16>, vector<32x128xf32> -> vector<32x128xf32>
      %39 = arith.addf %35, %38 : vector<32x128xf32>
      %c0_30 = arith.constant 0 : index
      %c0_31 = arith.constant 0 : index
      %40 = vector.load %arg8[%c0_30, %c0_31] : memref<32x128xf32, #tpu.memory_space<vmem>>, vector<32x128xf32>
      tpu.vector_store %arg8[%c0_30, %c0_31], %39 {strides = array<i32>} : memref<32x128xf32, #tpu.memory_space<vmem>>, vector<32x128xf32>,
      %c0_32 = arith.constant 0 : index
      %c1_33 = arith.constant 1 : index
      %c0_34 = arith.constant 0 : index
      %c0_35 = arith.constant 0 : index
      %41 = vector.load %arg3[%c0_32, %c1_33, %c0_34, %c0_35] : memref<3x3x128x128xbf16, #tpu.memory_space<vmem>>, vector<1x1x128x128xbf16>
      %42 = vector.shape_cast %41 : vector<1x1x128x128xbf16> to vector<128x128xbf16>
      %cst_36 = arith.constant dense<0.000000e+00> : vector<32x128xf32>
      %43 = tpu.matmul %24, %42, %cst_36 {dimension_numbers = #tpu.dot_dimension_numbers<[1], [0], [0], [1], [0, 0, 1, 1], [], []>} : vector<32x128xbf16>, vector<128x128xbf16>, vector<32x128xf32> -> vector<32x128xf32>
      %c1_37 = arith.constant 1 : index
      %c1_38 = arith.constant 1 : index
      %c0_39 = arith.constant 0 : index
      %c0_40 = arith.constant 0 : index
      %44 = vector.load %arg3[%c1_37, %c1_38, %c0_39, %c0_40] : memref<3x3x128x128xbf16, #tpu.memory_space<vmem>>, vector<1x1x128x128xbf16>
      %45 = vector.shape_cast %44 : vector<1x1x128x128xbf16> to vector<128x128xbf16>
      %cst_41 = arith.constant dense<0.000000e+00> : vector<32x128xf32>
      %46 = tpu.matmul %26, %45, %cst_41 {dimension_numbers = #tpu.dot_dimension_numbers<[1], [0], [0], [1], [0, 0, 1, 1], [], []>} : vector<32x128xbf16>, vector<128x128xbf16>, vector<32x128xf32> -> vector<32x128xf32>
      %47 = arith.addf %43, %46 : vector<32x128xf32>
      %c2_42 = arith.constant 2 : index
      %c1_43 = arith.constant 1 : index
      %c0_44 = arith.constant 0 : index
      %c0_45 = arith.constant 0 : index
      %48 = vector.load %arg3[%c2_42, %c1_43, %c0_44, %c0_45] : memref<3x3x128x128xbf16, #tpu.memory_space<vmem>>, vector<1x1x128x128xbf16>
      %49 = vector.shape_cast %48 : vector<1x1x128x128xbf16> to vector<128x128xbf16>
      %cst_46 = arith.constant dense<0.000000e+00> : vector<32x128xf32>
      %50 = tpu.matmul %28, %49, %cst_46 {dimension_numbers = #tpu.dot_dimension_numbers<[1], [0], [0], [1], [0, 0, 1, 1], [], []>} : vector<32x128xbf16>, vector<128x128xbf16>, vector<32x128xf32> -> vector<32x128xf32>
      %51 = arith.addf %47, %50 : vector<32x128xf32>
      %c0_47 = arith.constant 0 : index
      %c0_48 = arith.constant 0 : index
      %52 = vector.load %arg8[%c0_47, %c0_48] : memref<32x128xf32, #tpu.memory_space<vmem>>, vector<31x128xf32>
      %53 = vector.extract_strided_slice %51 {offsets = [1, 0], sizes = [31, 128], strides = [1, 1]} : vector<32x128xf32> to vector<31x128xf32>
      %54 = arith.addf %52, %53 : vector<31x128xf32>
      %c0_49 = arith.constant 0 : index
      %c0_50 = arith.constant 0 : index
      %55 = vector.load %arg8[%c0_49, %c0_50] : memref<32x128xf32, #tpu.memory_space<vmem>>, vector<31x128xf32>
      tpu.vector_store %arg8[%c0_49, %c0_50], %54 {strides = array<i32>} : memref<32x128xf32, #tpu.memory_space<vmem>>, vector<31x128xf32>,
      %c0_51 = arith.constant 0 : index
      %c2_52 = arith.constant 2 : index
      %c0_53 = arith.constant 0 : index
      %c0_54 = arith.constant 0 : index
      %56 = vector.load %arg3[%c0_51, %c2_52, %c0_53, %c0_54] : memref<3x3x128x128xbf16, #tpu.memory_space<vmem>>, vector<1x1x128x128xbf16>
      %57 = vector.shape_cast %56 : vector<1x1x128x128xbf16> to vector<128x128xbf16>
      %cst_55 = arith.constant dense<0.000000e+00> : vector<32x128xf32>
      %58 = tpu.matmul %24, %57, %cst_55 {dimension_numbers = #tpu.dot_dimension_numbers<[1], [0], [0], [1], [0, 0, 1, 1], [], []>} : vector<32x128xbf16>, vector<128x128xbf16>, vector<32x128xf32> -> vector<32x128xf32>
      %c1_56 = arith.constant 1 : index
      %c2_57 = arith.constant 2 : index
      %c0_58 = arith.constant 0 : index
      %c0_59 = arith.constant 0 : index
      %59 = vector.load %arg3[%c1_56, %c2_57, %c0_58, %c0_59] : memref<3x3x128x128xbf16, #tpu.memory_space<vmem>>, vector<1x1x128x128xbf16>
      %60 = vector.shape_cast %59 : vector<1x1x128x128xbf16> to vector<128x128xbf16>
      %cst_60 = arith.constant dense<0.000000e+00> : vector<32x128xf32>
      %61 = tpu.matmul %26, %60, %cst_60 {dimension_numbers = #tpu.dot_dimension_numbers<[1], [0], [0], [1], [0, 0, 1, 1], [], []>} : vector<32x128xbf16>, vector<128x128xbf16>, vector<32x128xf32> -> vector<32x128xf32>
      %62 = arith.addf %58, %61 : vector<32x128xf32>
      %c2_61 = arith.constant 2 : index
      %c2_62 = arith.constant 2 : index
      %c0_63 = arith.constant 0 : index
      %c0_64 = arith.constant 0 : index
      %63 = vector.load %arg3[%c2_61, %c2_62, %c0_63, %c0_64] : memref<3x3x128x128xbf16, #tpu.memory_space<vmem>>, vector<1x1x128x128xbf16>
      %64 = vector.shape_cast %63 : vector<1x1x128x128xbf16> to vector<128x128xbf16>
      %cst_65 = arith.constant dense<0.000000e+00> : vector<32x128xf32>
      %65 = tpu.matmul %28, %64, %cst_65 {dimension_numbers = #tpu.dot_dimension_numbers<[1], [0], [0], [1], [0, 0, 1, 1], [], []>} : vector<32x128xbf16>, vector<128x128xbf16>, vector<32x128xf32> -> vector<32x128xf32>
      %66 = arith.addf %62, %65 : vector<32x128xf32>
      %c0_66 = arith.constant 0 : index
      %c0_67 = arith.constant 0 : index
      %67 = vector.load %arg8[%c0_66, %c0_67] : memref<32x128xf32, #tpu.memory_space<vmem>>, vector<30x128xf32>
      %68 = vector.extract_strided_slice %66 {offsets = [2, 0], sizes = [30, 128], strides = [1, 1]} : vector<32x128xf32> to vector<30x128xf32>
      %69 = arith.addf %67, %68 : vector<30x128xf32>
      %c0_68 = arith.constant 0 : index
      %c0_69 = arith.constant 0 : index
      %70 = vector.load %arg8[%c0_68, %c0_69] : memref<32x128xf32, #tpu.memory_space<vmem>>, vector<30x128xf32>
      tpu.vector_store %arg8[%c0_68, %c0_69], %69 {strides = array<i32>} : memref<32x128xf32, #tpu.memory_space<vmem>>, vector<30x128xf32>,
    } else {
    }
    %c0 = arith.constant 0 : index
    %c0_1 = arith.constant 0 : index
    %3 = vector.load %arg8[%c0, %c0_1] : memref<32x128xf32, #tpu.memory_space<vmem>>, vector<32x128xf32>
    %4 = arith.truncf %3 : vector<32x128xf32> to vector<32x128xbf16>
    %c0_2 = arith.constant 0 : index
    %c0_3 = arith.constant 0 : index
    %5 = vector.load %arg4[%c0_2, %c0_3] : memref<128x128xbf16, #tpu.memory_space<vmem>>, vector<128x128xbf16>
    %cst = arith.constant dense<0.000000e+00> : vector<32x128xf32>
    %6 = tpu.matmul %4, %5, %cst {dimension_numbers = #tpu.dot_dimension_numbers<[1], [0], [0], [1], [0, 0, 1, 1], [], []>} : vector<32x128xbf16>, vector<128x128xbf16>, vector<32x128xf32> -> vector<32x128xf32>
    %c0_4 = arith.constant 0 : index
    %c0_5 = arith.constant 0 : index
    %7 = vector.load %arg5[%c0_4, %c0_5] : memref<1x128xf32, #tpu.memory_space<vmem>>, vector<1x128xf32>
    %8 = vector.broadcast %7 : vector<1x128xf32> to vector<32x128xf32>
    %9 = arith.mulf %6, %8 : vector<32x128xf32>
    %c0_6 = arith.constant 0 : index
    %c0_7 = arith.constant 0 : index
    %10 = vector.load %arg6[%c0_6, %c0_7] : memref<1x128xf32, #tpu.memory_space<vmem>>, vector<1x128xf32>
    %11 = vector.broadcast %10 : vector<1x128xf32> to vector<32x128xf32>
    %12 = arith.addf %9, %11 : vector<32x128xf32>
    %cst_8 = arith.constant 0.000000e+00 : f32
    %13 = vector.broadcast %cst_8 : f32 to vector<32x128xf32>
    %14 = arith.maximumf %12, %13 : vector<32x128xf32>
    %15 = vector.shape_cast %14 : vector<32x128xf32> to vector<4x8x128xf32>
    %16 = vector.extract_strided_slice %15 {offsets = [0, 0, 0], sizes = [4, 4, 128], strides = [1, 1, 1]} : vector<4x8x128xf32> to vector<4x4x128xf32>
    %17 = arith.truncf %16 : vector<4x4x128xf32> to vector<4x4x128xbf16>
    %c0_9 = arith.constant 0 : index
    %c0_10 = arith.constant 0 : index
    %c0_11 = arith.constant 0 : index
    %c0_12 = arith.constant 0 : index
    %18 = vector.load %arg7[%c0_9, %c0_10, %c0_11, %c0_12] : memref<1x4x4x128xbf16, #tpu.memory_space<vmem>>, vector<1x4x4x128xbf16>
    %19 = vector.shape_cast %18 : vector<1x4x4x128xbf16> to vector<4x4x128xbf16>
    %20 = vector.shape_cast %17 : vector<4x4x128xbf16> to vector<1x4x4x128xbf16>
    tpu.vector_store %arg7[%c0_9, %c0_10, %c0_11, %c0_12], %20 {strides = array<i32>} : memref<1x4x4x128xbf16, #tpu.memory_space<vmem>>, vector<1x4x4x128xbf16>,
    return
  }
  func.func @transform_0(%arg0: i32, %arg1: i32) -> (i32, i32, i32, i32) {
    %c0_i32 = arith.constant 0 : i32
    %c0_i32_0 = arith.constant 0 : i32
    %c0_i32_1 = arith.constant 0 : i32
    %c0_i32_2 = arith.constant 0 : i32
    return %arg0, %c0_i32, %c0_i32_0, %c0_i32_1 : i32, i32, i32, i32
  }
  func.func @transform_1(%arg0: i32, %arg1: i32) -> (i32, i32, i32, i32) {
    %c0_i32 = arith.constant 0 : i32
    %c0_i32_0 = arith.constant 0 : i32
    %c0_i32_1 = arith.constant 0 : i32
    %c0_i32_2 = arith.constant 0 : i32
    %c0_i32_3 = arith.constant 0 : i32
    return %c0_i32, %c0_i32_0, %c0_i32_1, %c0_i32_2 : i32, i32, i32, i32
  }
  func.func @transform_2(%arg0: i32, %arg1: i32) -> (i32, i32) {
    %c0_i32 = arith.constant 0 : i32
    %c0_i32_0 = arith.constant 0 : i32
    return %c0_i32, %arg1 : i32, i32
  }
  func.func @transform_3(%arg0: i32, %arg1: i32) -> (i32, i32) {
    %c0_i32 = arith.constant 0 : i32
    %c0_i32_0 = arith.constant 0 : i32
    return %c0_i32, %arg1 : i32, i32
  }
  func.func @transform_4(%arg0: i32, %arg1: i32) -> (i32, i32) {
    %c0_i32 = arith.constant 0 : i32
    %c0_i32_0 = arith.constant 0 : i32
    return %c0_i32, %arg1 : i32, i32
  }
  func.func @transform_5(%arg0: i32, %arg1: i32) -> (i32, i32, i32, i32) {
    %c0_i32 = arith.constant 0 : i32
    %c0_i32_0 = arith.constant 0 : i32
    %c0_i32_1 = arith.constant 0 : i32
    return %arg0, %c0_i32, %c0_i32_0, %arg1 : i32, i32, i32, i32
  }
}

module attributes {stable_mosaic.version = 11 : i64} {
  func.func @_sep_bn_kernel(%arg0: i32, %arg1: i32, %arg2: memref<1x6x8x128xbf16, #tpu.memory_space<vmem>>, %arg3: memref<3x3x128x128xbf16, #tpu.memory_space<vmem>>, %arg4: memref<128x128xbf16, #tpu.memory_space<vmem>>, %arg5: memref<1x128xf32, #tpu.memory_space<vmem>>, %arg6: memref<1x128xf32, #tpu.memory_space<vmem>>, %arg7: memref<1x1x128xf32, #tpu.memory_space<vmem>>, %arg8: memref<32x128xf32, #tpu.memory_space<vmem>>) attributes {dimension_semantics = [#tpu.dimension_semantics<parallel>, #tpu.dimension_semantics<arbitrary>], iteration_bounds = array<i64: 2, 1>, scalar_prefetch = 0 : i64, scratch_operands = 1 : i64, tpu.core_type = #tpu.core_type<tc>, window_params = [{transform_indices = @transform_0, window_bounds = array<i64: 1, 6, 8, 128>}, {pipeline_mode = #tpu.pipeline_mode<synchronous>, transform_indices = @transform_1, window_bounds = array<i64: 3, 3, 128, 128>}, {transform_indices = @transform_2, window_bounds = array<i64: 128, 128>}, {transform_indices = @transform_3, window_bounds = array<i64: 1, 128>}, {transform_indices = @transform_4, window_bounds = array<i64: 1, 128>}, {transform_indices = @transform_5, window_bounds = array<i64: 1, 1, 128>}]} {
    %c0_i32 = arith.constant 0 : i32
    %0 = arith.cmpi eq, %arg1, %c0_i32 : i32
    %1 = arith.extui %0 : i1 to i32
    %c0_i32_0 = arith.constant 0 : i32
    %2 = arith.cmpi ne, %1, %c0_i32_0 : i32
    scf.if %2 {
      %c0_14 = arith.constant 0 : index
      %c0_15 = arith.constant 0 : index
      %c0_16 = arith.constant 0 : index
      %c0_17 = arith.constant 0 : index
      %24 = vector.load %arg2[%c0_14, %c0_15, %c0_16, %c0_17] : memref<1x6x8x128xbf16, #tpu.memory_space<vmem>>, vector<1x6x8x128xbf16>
      %25 = vector.shape_cast %24 : vector<1x6x8x128xbf16> to vector<6x8x128xbf16>
      %26 = vector.extract_strided_slice %25 {offsets = [0, 0, 0], sizes = [4, 8, 128], strides = [1, 1, 1]} : vector<6x8x128xbf16> to vector<4x8x128xbf16>
      %27 = vector.shape_cast %26 : vector<4x8x128xbf16> to vector<32x128xbf16>
      %28 = vector.extract_strided_slice %25 {offsets = [1, 0, 0], sizes = [4, 8, 128], strides = [1, 1, 1]} : vector<6x8x128xbf16> to vector<4x8x128xbf16>
      %29 = vector.shape_cast %28 : vector<4x8x128xbf16> to vector<32x128xbf16>
      %30 = vector.extract_strided_slice %25 {offsets = [2, 0, 0], sizes = [4, 8, 128], strides = [1, 1, 1]} : vector<6x8x128xbf16> to vector<4x8x128xbf16>
      %31 = vector.shape_cast %30 : vector<4x8x128xbf16> to vector<32x128xbf16>
      %c0_18 = arith.constant 0 : index
      %c0_19 = arith.constant 0 : index
      %c0_20 = arith.constant 0 : index
      %c0_21 = arith.constant 0 : index
      %32 = vector.load %arg3[%c0_18, %c0_19, %c0_20, %c0_21] : memref<3x3x128x128xbf16, #tpu.memory_space<vmem>>, vector<1x1x128x128xbf16>
      %33 = vector.shape_cast %32 : vector<1x1x128x128xbf16> to vector<128x128xbf16>
      %cst_22 = arith.constant dense<0.000000e+00> : vector<32x128xf32>
      %34 = tpu.matmul %27, %33, %cst_22 {dimension_numbers = #tpu.dot_dimension_numbers<[1], [0], [0], [1], [0, 0, 1, 1], [], []>} : vector<32x128xbf16>, vector<128x128xbf16>, vector<32x128xf32> -> vector<32x128xf32>
      %c1 = arith.constant 1 : index
      %c0_23 = arith.constant 0 : index
      %c0_24 = arith.constant 0 : index
      %c0_25 = arith.constant 0 : index
      %35 = vector.load %arg3[%c1, %c0_23, %c0_24, %c0_25] : memref<3x3x128x128xbf16, #tpu.memory_space<vmem>>, vector<1x1x128x128xbf16>
      %36 = vector.shape_cast %35 : vector<1x1x128x128xbf16> to vector<128x128xbf16>
      %cst_26 = arith.constant dense<0.000000e+00> : vector<32x128xf32>
      %37 = tpu.matmul %29, %36, %cst_26 {dimension_numbers = #tpu.dot_dimension_numbers<[1], [0], [0], [1], [0, 0, 1, 1], [], []>} : vector<32x128xbf16>, vector<128x128xbf16>, vector<32x128xf32> -> vector<32x128xf32>
      %38 = arith.addf %34, %37 : vector<32x128xf32>
      %c2 = arith.constant 2 : index
      %c0_27 = arith.constant 0 : index
      %c0_28 = arith.constant 0 : index
      %c0_29 = arith.constant 0 : index
      %39 = vector.load %arg3[%c2, %c0_27, %c0_28, %c0_29] : memref<3x3x128x128xbf16, #tpu.memory_space<vmem>>, vector<1x1x128x128xbf16>
      %40 = vector.shape_cast %39 : vector<1x1x128x128xbf16> to vector<128x128xbf16>
      %cst_30 = arith.constant dense<0.000000e+00> : vector<32x128xf32>
      %41 = tpu.matmul %31, %40, %cst_30 {dimension_numbers = #tpu.dot_dimension_numbers<[1], [0], [0], [1], [0, 0, 1, 1], [], []>} : vector<32x128xbf16>, vector<128x128xbf16>, vector<32x128xf32> -> vector<32x128xf32>
      %42 = arith.addf %38, %41 : vector<32x128xf32>
      %c0_31 = arith.constant 0 : index
      %c0_32 = arith.constant 0 : index
      %43 = vector.load %arg8[%c0_31, %c0_32] : memref<32x128xf32, #tpu.memory_space<vmem>>, vector<32x128xf32>
      tpu.vector_store %arg8[%c0_31, %c0_32], %42 {strides = array<i32>} : memref<32x128xf32, #tpu.memory_space<vmem>>, vector<32x128xf32>,
      %c0_33 = arith.constant 0 : index
      %c1_34 = arith.constant 1 : index
      %c0_35 = arith.constant 0 : index
      %c0_36 = arith.constant 0 : index
      %44 = vector.load %arg3[%c0_33, %c1_34, %c0_35, %c0_36] : memref<3x3x128x128xbf16, #tpu.memory_space<vmem>>, vector<1x1x128x128xbf16>
      %45 = vector.shape_cast %44 : vector<1x1x128x128xbf16> to vector<128x128xbf16>
      %cst_37 = arith.constant dense<0.000000e+00> : vector<32x128xf32>
      %46 = tpu.matmul %27, %45, %cst_37 {dimension_numbers = #tpu.dot_dimension_numbers<[1], [0], [0], [1], [0, 0, 1, 1], [], []>} : vector<32x128xbf16>, vector<128x128xbf16>, vector<32x128xf32> -> vector<32x128xf32>
      %c1_38 = arith.constant 1 : index
      %c1_39 = arith.constant 1 : index
      %c0_40 = arith.constant 0 : index
      %c0_41 = arith.constant 0 : index
      %47 = vector.load %arg3[%c1_38, %c1_39, %c0_40, %c0_41] : memref<3x3x128x128xbf16, #tpu.memory_space<vmem>>, vector<1x1x128x128xbf16>
      %48 = vector.shape_cast %47 : vector<1x1x128x128xbf16> to vector<128x128xbf16>
      %cst_42 = arith.constant dense<0.000000e+00> : vector<32x128xf32>
      %49 = tpu.matmul %29, %48, %cst_42 {dimension_numbers = #tpu.dot_dimension_numbers<[1], [0], [0], [1], [0, 0, 1, 1], [], []>} : vector<32x128xbf16>, vector<128x128xbf16>, vector<32x128xf32> -> vector<32x128xf32>
      %50 = arith.addf %46, %49 : vector<32x128xf32>
      %c2_43 = arith.constant 2 : index
      %c1_44 = arith.constant 1 : index
      %c0_45 = arith.constant 0 : index
      %c0_46 = arith.constant 0 : index
      %51 = vector.load %arg3[%c2_43, %c1_44, %c0_45, %c0_46] : memref<3x3x128x128xbf16, #tpu.memory_space<vmem>>, vector<1x1x128x128xbf16>
      %52 = vector.shape_cast %51 : vector<1x1x128x128xbf16> to vector<128x128xbf16>
      %cst_47 = arith.constant dense<0.000000e+00> : vector<32x128xf32>
      %53 = tpu.matmul %31, %52, %cst_47 {dimension_numbers = #tpu.dot_dimension_numbers<[1], [0], [0], [1], [0, 0, 1, 1], [], []>} : vector<32x128xbf16>, vector<128x128xbf16>, vector<32x128xf32> -> vector<32x128xf32>
      %54 = arith.addf %50, %53 : vector<32x128xf32>
      %c0_48 = arith.constant 0 : index
      %c0_49 = arith.constant 0 : index
      %55 = vector.load %arg8[%c0_48, %c0_49] : memref<32x128xf32, #tpu.memory_space<vmem>>, vector<31x128xf32>
      %56 = vector.extract_strided_slice %54 {offsets = [1, 0], sizes = [31, 128], strides = [1, 1]} : vector<32x128xf32> to vector<31x128xf32>
      %57 = arith.addf %55, %56 : vector<31x128xf32>
      %c0_50 = arith.constant 0 : index
      %c0_51 = arith.constant 0 : index
      %58 = vector.load %arg8[%c0_50, %c0_51] : memref<32x128xf32, #tpu.memory_space<vmem>>, vector<31x128xf32>
      tpu.vector_store %arg8[%c0_50, %c0_51], %57 {strides = array<i32>} : memref<32x128xf32, #tpu.memory_space<vmem>>, vector<31x128xf32>,
      %c0_52 = arith.constant 0 : index
      %c2_53 = arith.constant 2 : index
      %c0_54 = arith.constant 0 : index
      %c0_55 = arith.constant 0 : index
      %59 = vector.load %arg3[%c0_52, %c2_53, %c0_54, %c0_55] : memref<3x3x128x128xbf16, #tpu.memory_space<vmem>>, vector<1x1x128x128xbf16>
      %60 = vector.shape_cast %59 : vector<1x1x128x128xbf16> to vector<128x128xbf16>
      %cst_56 = arith.constant dense<0.000000e+00> : vector<32x128xf32>
      %61 = tpu.matmul %27, %60, %cst_56 {dimension_numbers = #tpu.dot_dimension_numbers<[1], [0], [0], [1], [0, 0, 1, 1], [], []>} : vector<32x128xbf16>, vector<128x128xbf16>, vector<32x128xf32> -> vector<32x128xf32>
      %c1_57 = arith.constant 1 : index
      %c2_58 = arith.constant 2 : index
      %c0_59 = arith.constant 0 : index
      %c0_60 = arith.constant 0 : index
      %62 = vector.load %arg3[%c1_57, %c2_58, %c0_59, %c0_60] : memref<3x3x128x128xbf16, #tpu.memory_space<vmem>>, vector<1x1x128x128xbf16>
      %63 = vector.shape_cast %62 : vector<1x1x128x128xbf16> to vector<128x128xbf16>
      %cst_61 = arith.constant dense<0.000000e+00> : vector<32x128xf32>
      %64 = tpu.matmul %29, %63, %cst_61 {dimension_numbers = #tpu.dot_dimension_numbers<[1], [0], [0], [1], [0, 0, 1, 1], [], []>} : vector<32x128xbf16>, vector<128x128xbf16>, vector<32x128xf32> -> vector<32x128xf32>
      %65 = arith.addf %61, %64 : vector<32x128xf32>
      %c2_62 = arith.constant 2 : index
      %c2_63 = arith.constant 2 : index
      %c0_64 = arith.constant 0 : index
      %c0_65 = arith.constant 0 : index
      %66 = vector.load %arg3[%c2_62, %c2_63, %c0_64, %c0_65] : memref<3x3x128x128xbf16, #tpu.memory_space<vmem>>, vector<1x1x128x128xbf16>
      %67 = vector.shape_cast %66 : vector<1x1x128x128xbf16> to vector<128x128xbf16>
      %cst_66 = arith.constant dense<0.000000e+00> : vector<32x128xf32>
      %68 = tpu.matmul %31, %67, %cst_66 {dimension_numbers = #tpu.dot_dimension_numbers<[1], [0], [0], [1], [0, 0, 1, 1], [], []>} : vector<32x128xbf16>, vector<128x128xbf16>, vector<32x128xf32> -> vector<32x128xf32>
      %69 = arith.addf %65, %68 : vector<32x128xf32>
      %c0_67 = arith.constant 0 : index
      %c0_68 = arith.constant 0 : index
      %70 = vector.load %arg8[%c0_67, %c0_68] : memref<32x128xf32, #tpu.memory_space<vmem>>, vector<30x128xf32>
      %71 = vector.extract_strided_slice %69 {offsets = [2, 0], sizes = [30, 128], strides = [1, 1]} : vector<32x128xf32> to vector<30x128xf32>
      %72 = arith.addf %70, %71 : vector<30x128xf32>
      %c0_69 = arith.constant 0 : index
      %c0_70 = arith.constant 0 : index
      %73 = vector.load %arg8[%c0_69, %c0_70] : memref<32x128xf32, #tpu.memory_space<vmem>>, vector<30x128xf32>
      tpu.vector_store %arg8[%c0_69, %c0_70], %72 {strides = array<i32>} : memref<32x128xf32, #tpu.memory_space<vmem>>, vector<30x128xf32>,
    } else {
    }
    %c0 = arith.constant 0 : index
    %c0_1 = arith.constant 0 : index
    %3 = vector.load %arg8[%c0, %c0_1] : memref<32x128xf32, #tpu.memory_space<vmem>>, vector<32x128xf32>
    %4 = arith.truncf %3 : vector<32x128xf32> to vector<32x128xbf16>
    %c0_2 = arith.constant 0 : index
    %c0_3 = arith.constant 0 : index
    %5 = vector.load %arg4[%c0_2, %c0_3] : memref<128x128xbf16, #tpu.memory_space<vmem>>, vector<128x128xbf16>
    %cst = arith.constant dense<0.000000e+00> : vector<32x128xf32>
    %6 = tpu.matmul %4, %5, %cst {dimension_numbers = #tpu.dot_dimension_numbers<[1], [0], [0], [1], [0, 0, 1, 1], [], []>} : vector<32x128xbf16>, vector<128x128xbf16>, vector<32x128xf32> -> vector<32x128xf32>
    %c0_4 = arith.constant 0 : index
    %c0_5 = arith.constant 0 : index
    %7 = vector.load %arg5[%c0_4, %c0_5] : memref<1x128xf32, #tpu.memory_space<vmem>>, vector<1x128xf32>
    %8 = vector.broadcast %7 : vector<1x128xf32> to vector<32x128xf32>
    %9 = arith.mulf %6, %8 : vector<32x128xf32>
    %c0_6 = arith.constant 0 : index
    %c0_7 = arith.constant 0 : index
    %10 = vector.load %arg6[%c0_6, %c0_7] : memref<1x128xf32, #tpu.memory_space<vmem>>, vector<1x128xf32>
    %11 = vector.broadcast %10 : vector<1x128xf32> to vector<32x128xf32>
    %12 = arith.addf %9, %11 : vector<32x128xf32>
    %cst_8 = arith.constant 0.000000e+00 : f32
    %13 = vector.broadcast %cst_8 : f32 to vector<32x128xf32>
    %14 = arith.maximumf %12, %13 : vector<32x128xf32>
    %15 = vector.shape_cast %14 : vector<32x128xf32> to vector<4x8x128xf32>
    %16 = vector.extract_strided_slice %15 {offsets = [0, 0, 0], sizes = [4, 4, 128], strides = [1, 1, 1]} : vector<4x8x128xf32> to vector<4x4x128xf32>
    %cst_9 = arith.constant dense<0.000000e+00> : vector<128xf32>
    %17 = vector.multi_reduction <add>, %16, %cst_9 [0, 1] : vector<4x4x128xf32> to vector<128xf32>
    %cst_10 = arith.constant 6.250000e-02 : f32
    %18 = vector.broadcast %cst_10 : f32 to vector<128xf32>
    %19 = arith.mulf %17, %18 : vector<128xf32>
    %20 = vector.shape_cast %19 : vector<128xf32> to vector<1x128xf32>
    %c0_11 = arith.constant 0 : index
    %c0_12 = arith.constant 0 : index
    %c0_13 = arith.constant 0 : index
    %21 = vector.load %arg7[%c0_11, %c0_12, %c0_13] : memref<1x1x128xf32, #tpu.memory_space<vmem>>, vector<1x1x128xf32>
    %22 = vector.shape_cast %21 : vector<1x1x128xf32> to vector<1x128xf32>
    %23 = vector.shape_cast %20 : vector<1x128xf32> to vector<1x1x128xf32>
    tpu.vector_store %arg7[%c0_11, %c0_12, %c0_13], %23 {strides = array<i32>} : memref<1x1x128xf32, #tpu.memory_space<vmem>>, vector<1x1x128xf32>,
    return
  }
  func.func @transform_0(%arg0: i32, %arg1: i32) -> (i32, i32, i32, i32) {
    %c0_i32 = arith.constant 0 : i32
    %c0_i32_0 = arith.constant 0 : i32
    %c0_i32_1 = arith.constant 0 : i32
    %c0_i32_2 = arith.constant 0 : i32
    return %arg0, %c0_i32, %c0_i32_0, %c0_i32_1 : i32, i32, i32, i32
  }
  func.func @transform_1(%arg0: i32, %arg1: i32) -> (i32, i32, i32, i32) {
    %c0_i32 = arith.constant 0 : i32
    %c0_i32_0 = arith.constant 0 : i32
    %c0_i32_1 = arith.constant 0 : i32
    %c0_i32_2 = arith.constant 0 : i32
    %c0_i32_3 = arith.constant 0 : i32
    return %c0_i32, %c0_i32_0, %c0_i32_1, %c0_i32_2 : i32, i32, i32, i32
  }
  func.func @transform_2(%arg0: i32, %arg1: i32) -> (i32, i32) {
    %c0_i32 = arith.constant 0 : i32
    %c0_i32_0 = arith.constant 0 : i32
    return %c0_i32, %arg1 : i32, i32
  }
  func.func @transform_3(%arg0: i32, %arg1: i32) -> (i32, i32) {
    %c0_i32 = arith.constant 0 : i32
    %c0_i32_0 = arith.constant 0 : i32
    return %c0_i32, %arg1 : i32, i32
  }
  func.func @transform_4(%arg0: i32, %arg1: i32) -> (i32, i32) {
    %c0_i32 = arith.constant 0 : i32
    %c0_i32_0 = arith.constant 0 : i32
    return %c0_i32, %arg1 : i32, i32
  }
  func.func @transform_5(%arg0: i32, %arg1: i32) -> (i32, i32, i32) {
    %c0_i32 = arith.constant 0 : i32
    %c0_i32_0 = arith.constant 0 : i32
    return %arg0, %c0_i32, %arg1 : i32, i32, i32
  }
}

</mosaic_0001>

<llo_original>
// kernel: exit_flow.7
$region0: #{exit_flow.7}
  #allocation0 [shape = 'u32[]', space=smem, size = 0x4, offset = 0x4, fixed_abs, tag = 'smem constant byte address 0x4 - core index']
  #allocation1 [shape = 'u32[72,128]{1,0:T(1,128)}', space=vmem, size = 0x9000, scoped, tag = 'internal scratch']
  %s0 = inlined_call_operand.vmem [shape: bf16[2,4,4,128], index: 0, kind: input, shape index: {}]
  %s1 = inlined_call_operand.vmem [shape: bf16[2,3,4,4,128], index: 1, kind: input, shape index: {}]
  %s2 = inlined_call_operand.vmem [shape: bf16[128,128], index: 2, kind: input, shape index: {}]
  %s3 = inlined_call_operand.vmem [shape: f32[1,128], index: 3, kind: input, shape index: {}]
  %s4 = inlined_call_operand.vmem [shape: f32[1,128], index: 4, kind: input, shape index: {}]
  %s5 = inlined_call_operand.vmem [shape: f32[1,128], index: 5, kind: input, shape index: {}]
  %s6 = inlined_call_operand.vmem [shape: bf16[2,4,4,128], index: 6, kind: output, shape index: {}]
  %s7 = sld [smem:[#allocation0]]
  $region57: #{exit_flow.7} parent=0
    _
  %s9 = ssub.s32 1, %s7
  %s10 = scalar_select 0, %s9, %s7
  loop: start=0, step=1, limit=4
  $region2: #{exit_flow.7} parent=0 // loop_pre_header
    _
  $region3: #{exit_flow.7} parent=0 // loop_header
    %s12 = sphi 0, %s16
    %p13 = scmp.ge.s32.totalorder %s12, 4
    %s22 = sphi 0, %s24
    %s25 = sphi 0, %s22
    %s26 = sphi 0, %s25
    %s42 = sphi 0, %s26
    %s48 = sphi 0, %s50
    %s51 = sphi 0, %s48
    %s52 = sphi 0, %s51
    %s68 = sphi 0, %s52
    %s72 = sphi 0, %s72
    %s74 = sphi 0, %s72
    %s75 = sphi 0, %s74
    %s89 = sphi 0, %s75
    %s93 = sphi 0, %s93
    %s95 = sphi 0, %s93
    %s96 = sphi 0, %s95
    %s110 = sphi 0, %s96
    %s114 = sphi 0, %s114
    %s116 = sphi 0, %s114
    %s117 = sphi 0, %s116
    %s131 = sphi 0, %s117
    %s135 = sphi 0, %s135
    %s137 = sphi 0, %s135
    %s138 = sphi 0, %s137
    %s152 = sphi 0, %s138
    %s158 = sphi 0, %s160
    %s161 = sphi 0, %s158
    %s162 = sphi 0, %s161
    %s178 = sphi 0, %s162
  $region4: #{exit_flow.7} parent=0 // loop_header_branch
    %15 = sbr.rel (%p13) target = $region8
  $region5: #{exit_flow.7} parent=0 // loop_body
    %s17 = ssub.s32 %s12, 1
    %s18 = ssub.s32 %s12, 2
    %s19 = sadd.s32 %s12, 1
    %s20 = ssub.s32 %s12, %s19
    %p21 = scmp.eq.s32.totalorder %s20, 0
    %s23 = sadd.s32 %s22, 1
    %s24 = scalar_select %p21, %s22, %s23
    %p27 = pneg %p21
    %p28 = scmp.eq.s32.totalorder %s12, 1
    %p29 = por %p27, %p28
    %p30 = scmp.ne.s32.totalorder %s22, %s25
    %p31 = scmp.eq.s32.totalorder %s12, 0
    %p32 = por %p30, %p31
    %p33 = scmp.ne.s32.totalorder %s22, %s25
    %p34 = scmp.eq.s32.totalorder %s17, 1
    %p35 = por %p33, %p34
    %p36 = scmp.ne.s32.totalorder %s25, %s26
    %p37 = scmp.eq.s32.totalorder %s17, 0
    %p38 = por %p36, %p37
    %p39 = scmp.ne.s32.totalorder %s25, %s26
    %p40 = scmp.eq.s32.totalorder %s18, 1
    %p41 = por %p39, %p40
    %p43 = scmp.ne.s32.totalorder %s26, %s42
    %p44 = scmp.eq.s32.totalorder %s18, 0
    %p45 = por %p43, %p44
    %s46 = ssub.s32 %s12, %s19
    %p47 = scmp.eq.s32.totalorder %s46, 0
    %s49 = sadd.s32 %s48, 1
    %s50 = scalar_select %p47, %s48, %s49
    %p53 = pneg %p47
    %p54 = scmp.eq.s32.totalorder %s12, 1
    %p55 = por %p53, %p54
    %p56 = scmp.ne.s32.totalorder %s48, %s51
    %p57 = scmp.eq.s32.totalorder %s12, 0
    %p58 = por %p56, %p57
    %p59 = scmp.ne.s32.totalorder %s48, %s51
    %p60 = scmp.eq.s32.totalorder %s17, 1
    %p61 = por %p59, %p60
    %p62 = scmp.ne.s32.totalorder %s51, %s52
    %p63 = scmp.eq.s32.totalorder %s17, 0
    %p64 = por %p62, %p63
    %p65 = scmp.ne.s32.totalorder %s51, %s52
    %p66 = scmp.eq.s32.totalorder %s18, 1
    %p67 = por %p65, %p66
    %p69 = scmp.ne.s32.totalorder %s52, %s68
    %p70 = scmp.eq.s32.totalorder %s18, 0
    %p71 = por %p69, %p70
    %s73 = sadd.s32 %s72, 1
    %p76 = scmp.eq.s32.totalorder %s12, 1
    %p77 = scmp.ne.s32.totalorder %s72, %s74
    %p78 = scmp.eq.s32.totalorder %s12, 0
    %p79 = por %p77, %p78
    %p80 = scmp.ne.s32.totalorder %s72, %s74
    %p81 = scmp.eq.s32.totalorder %s17, 1
    %p82 = por %p80, %p81
    %p83 = scmp.ne.s32.totalorder %s74, %s75
    %p84 = scmp.eq.s32.totalorder %s17, 0
    %p85 = por %p83, %p84
    %p86 = scmp.ne.s32.totalorder %s74, %s75
    %p87 = scmp.eq.s32.totalorder %s18, 1
    %p88 = por %p86, %p87
    %p90 = scmp.ne.s32.totalorder %s75, %s89
    %p91 = scmp.eq.s32.totalorder %s18, 0
    %p92 = por %p90, %p91
    %s94 = sadd.s32 %s93, 1
    %p97 = scmp.eq.s32.totalorder %s12, 1
    %p98 = scmp.ne.s32.totalorder %s93, %s95
    %p99 = scmp.eq.s32.totalorder %s12, 0
    %p100 = por %p98, %p99
    %p101 = scmp.ne.s32.totalorder %s93, %s95
    %p102 = scmp.eq.s32.totalorder %s17, 1
    %p103 = por %p101, %p102
    %p104 = scmp.ne.s32.totalorder %s95, %s96
    %p105 = scmp.eq.s32.totalorder %s17, 0
    %p106 = por %p104, %p105
    %p107 = scmp.ne.s32.totalorder %s95, %s96
    %p108 = scmp.eq.s32.totalorder %s18, 1
    %p109 = por %p107, %p108
    %p111 = scmp.ne.s32.totalorder %s96, %s110
    %p112 = scmp.eq.s32.totalorder %s18, 0
    %p113 = por %p111, %p112
    %s115 = sadd.s32 %s114, 1
    %p118 = scmp.eq.s32.totalorder %s12, 1
    %p119 = scmp.ne.s32.totalorder %s114, %s116
    %p120 = scmp.eq.s32.totalorder %s12, 0
    %p121 = por %p119, %p120
    %p122 = scmp.ne.s32.totalorder %s114, %s116
    %p123 = scmp.eq.s32.totalorder %s17, 1
    %p124 = por %p122, %p123
    %p125 = scmp.ne.s32.totalorder %s116, %s117
    %p126 = scmp.eq.s32.totalorder %s17, 0
    %p127 = por %p125, %p126
    %p128 = scmp.ne.s32.totalorder %s116, %s117
    %p129 = scmp.eq.s32.totalorder %s18, 1
    %p130 = por %p128, %p129
    %p132 = scmp.ne.s32.totalorder %s117, %s131
    %p133 = scmp.eq.s32.totalorder %s18, 0
    %p134 = por %p132, %p133
    %s136 = sadd.s32 %s135, 1
    %p139 = scmp.eq.s32.totalorder %s12, 1
    %p140 = scmp.ne.s32.totalorder %s135, %s137
    %p141 = scmp.eq.s32.totalorder %s12, 0
    %p142 = por %p140, %p141
    %p143 = scmp.ne.s32.totalorder %s135, %s137
    %p144 = scmp.eq.s32.totalorder %s17, 1
    %p145 = por %p143, %p144
    %p146 = scmp.ne.s32.totalorder %s137, %s138
    %p147 = scmp.eq.s32.totalorder %s17, 0
    %p148 = por %p146, %p147
    %p149 = scmp.ne.s32.totalorder %s137, %s138
    %p150 = scmp.eq.s32.totalorder %s18, 1
    %p151 = por %p149, %p150
    %p153 = scmp.ne.s32.totalorder %s138, %s152
    %p154 = scmp.eq.s32.totalorder %s18, 0
    %p155 = por %p153, %p154
    %s156 = ssub.s32 %s12, %s19
    %p157 = scmp.eq.s32.totalorder %s156, 0
    %s159 = sadd.s32 %s158, 1
    %s160 = scalar_select %p157, %s158, %s159
    %p163 = pneg %p157
    %p164 = scmp.eq.s32.totalorder %s12, 1
    %p165 = por %p163, %p164
    %p166 = scmp.ne.s32.totalorder %s158, %s161
    %p167 = scmp.eq.s32.totalorder %s12, 0
    %p168 = por %p166, %p167
    %p169 = scmp.ne.s32.totalorder %s158, %s161
    %p170 = scmp.eq.s32.totalorder %s17, 1
    %p171 = por %p169, %p170
    %p172 = scmp.ne.s32.totalorder %s161, %s162
    %p173 = scmp.eq.s32.totalorder %s17, 0
    %p174 = por %p172, %p173
    %p175 = scmp.ne.s32.totalorder %s161, %s162
    %p176 = scmp.eq.s32.totalorder %s18, 1
    %p177 = por %p175, %p176
    %p179 = scmp.ne.s32.totalorder %s162, %s178
    %p180 = scmp.eq.s32.totalorder %s18, 0
    %p181 = por %p179, %p180
    %p182 = scmp.le.s32.totalorder 1, %s12
    %p183 = scmp.lt.s32.totalorder %s12, 3
    %p184 = pnand %p182, %p183
    %p185 = pneg %p184
    // Predicated region
    $region9: #{exit_flow.7} parent=5 // pred_check
      _
    $region10: #{exit_flow.7} parent=5 // pred_check_branch
      %187 = sbr.rel (%p184) target = $region12
    $region11: #{exit_flow.7} parent=5 // pred_region
      %s188 = ssub.s32 %s12, 1
      // Predicated region
      $region13: #{exit_flow.7} parent=11 // pred_check
        %p189 = pneg %p85
      $region14: #{exit_flow.7} parent=11 // pred_check_branch
        %191 = sbr.rel (%p189) target = $region16
      $region15: #{exit_flow.7} parent=11 // pred_region
        _
      $region16: #{exit_flow.7} parent=11 // pred_fallthru
        _
      // Predicated region
      $region17: #{exit_flow.7} parent=11 // pred_check
        %p192 = pneg %p106
      $region18: #{exit_flow.7} parent=11 // pred_check_branch
        %194 = sbr.rel (%p192) target = $region20
      $region19: #{exit_flow.7} parent=11 // pred_region
        _
      $region20: #{exit_flow.7} parent=11 // pred_fallthru
        _
      // Predicated region
      $region21: #{exit_flow.7} parent=11 // pred_check
        %p195 = pneg %p127
      $region22: #{exit_flow.7} parent=11 // pred_check_branch
        %197 = sbr.rel (%p195) target = $region24
      $region23: #{exit_flow.7} parent=11 // pred_region
        _
      $region24: #{exit_flow.7} parent=11 // pred_fallthru
        _
      // Predicated region
      $region25: #{exit_flow.7} parent=11 // pred_check
        %p198 = pneg %p148
      $region26: #{exit_flow.7} parent=11 // pred_check_branch
        %200 = sbr.rel (%p198) target = $region28
      $region27: #{exit_flow.7} parent=11 // pred_region
        _
      $region28: #{exit_flow.7} parent=11 // pred_fallthru
        _
    $region12: #{exit_flow.7} parent=5 // pred_fallthru
      _
    %p201 = scmp.lt.s32.totalorder %s12, 2
    // Predicated region
    $region29: #{exit_flow.7} parent=5 // pred_check
      %p202 = pneg %p201
    $region30: #{exit_flow.7} parent=5 // pred_check_branch
      %204 = sbr.rel (%p202) target = $region32
    $region31: #{exit_flow.7} parent=5 // pred_region
      // Predicated region
      $region33: #{exit_flow.7} parent=31 // pred_check
        %p205 = pneg %p32
      $region34: #{exit_flow.7} parent=31 // pred_check_branch
        %207 = sbr.rel (%p205) target = $region36
      $region35: #{exit_flow.7} parent=31 // pred_region
        %p208 = scmp.lt.s32.totalorder %s12, 1
        %s209 = scalar_select %p208, %s12, 1
        %s210 = smul.addr %s209, 4
        %s211 = smul.addr %s210, 2
        %s212 = scalar_lea.vmem %s0, %s211
      $region36: #{exit_flow.7} parent=31 // pred_fallthru
        _
      // Predicated region
      $region37: #{exit_flow.7} parent=31 // pred_check
        %p213 = pneg %p58
      $region38: #{exit_flow.7} parent=31 // pred_check_branch
        %215 = sbr.rel (%p213) target = $region40
      $region39: #{exit_flow.7} parent=31 // pred_region
        %p216 = scmp.lt.s32.totalorder %s12, 1
        %s217 = scalar_select %p216, %s12, 1
        %s218 = smul.addr %s217, 12
        %s219 = smul.addr %s218, 2
        %s220 = scalar_lea.vmem %s1, %s219
      $region40: #{exit_flow.7} parent=31 // pred_fallthru
        _
    $region32: #{exit_flow.7} parent=5 // pred_fallthru
      _
    %p221 = scmp.le.s32.totalorder 1, %s12
    %p222 = scmp.lt.s32.totalorder %s12, 3
    %p223 = pnand %p221, %p222
    %p224 = pneg %p223
    // Predicated region
    $region41: #{exit_flow.7} parent=5 // pred_check
      _
    $region42: #{exit_flow.7} parent=5 // pred_check_branch
      %226 = sbr.rel (%p223) target = $region44
    $region43: #{exit_flow.7} parent=5 // pred_region
      %s227 = ssub.s32 %s12, 1
      %p228 = scmp.lt.s32.totalorder %s17, 1
      %s229 = scalar_select %p228, %s17, 1
      %s230 = smul.addr %s229, 4
      %s231 = smul.addr %s230, 2
      %s232 = scalar_lea.vmem %s0, %s231
      %p233 = pneg %p38
      %p234 = pneg %p35
      %p235 = scmp.lt.s32.totalorder %s17, 1
      %s236 = scalar_select %p235, %s17, 1
      %s237 = smul.addr %s236, 12
      %s238 = smul.addr %s237, 2
      %s239 = scalar_lea.vmem %s1, %s238
      %p240 = pneg %p64
      %p241 = pneg %p61
      %p242 = pneg %p85
      %p243 = pneg %p82
      %p244 = pneg %p106
      %p245 = pneg %p103
      %p246 = pneg %p127
      %p247 = pneg %p124
      %p248 = pneg %p148
      %p249 = pneg %p145
      %p250 = pneg %p174
      %p251 = pneg %p171
      %p252 = scmp.lt.s32.totalorder %s17, 1
      %s253 = scalar_select %p252, %s17, 1
      %s254 = smul.addr %s253, 4
      %s255 = smul.addr %s254, 2
      %s256 = scalar_lea.vmem %s6, %s255
      %p257 = scmp.lt.s32.totalorder %s17, 1
      %s258 = scalar_select %p257, %s17, 1
      %s259 = smul.addr %s258, 4
      %s260 = smul.addr %s259, 2
      %s261 = scalar_lea.vmem %s0, %s260
      %p262 = scmp.lt.s32.totalorder %s17, 1
      %s263 = scalar_select %p262, %s17, 1
      %s264 = smul.addr %s263, 12
      %s265 = smul.addr %s264, 2
      %s266 = scalar_lea.vmem %s1, %s265
      %p267 = scmp.lt.s32.totalorder %s17, 1
      %s268 = scalar_select %p267, %s17, 1
      %s269 = smul.addr %s268, 4
      %s270 = smul.addr %s269, 2
      %s271 = scalar_lea.vmem %s6, %s270
      %v272 = vld [vmem:[%s266] sm:$0x3]
      %v273 = vld [vmem:[%s266 + $0x2] sm:$0x3]
      %v274 = vld [vmem:[%s266 + $0x4] sm:$0x3]
      %v275 = vld [vmem:[%s266 + $0x6] sm:$0x3]
      %s276 = scalar_lea.vmem %s266, 8
      %v277 = vld [vmem:[%s276] sm:$0x3]
      %v278 = vld [vmem:[%s276 + $0x2] sm:$0x3]
      %v279 = vld [vmem:[%s276 + $0x4] sm:$0x3]
      %v280 = vld [vmem:[%s276 + $0x6] sm:$0x3]
      %v281 = vunpack.c.l.bf16 %v272
      %v282 = vunpack.c.l.bf16 %v273
      %v283 = vunpack.c.l.bf16 %v274
      %v284 = vunpack.c.l.bf16 %v275
      %v285 = vunpack.c.l.bf16 %v277
      %v286 = vunpack.c.l.bf16 %v278
      %v287 = vunpack.c.l.bf16 %v279
      %v288 = vunpack.c.l.bf16 %v280
      %v289 = vmax.f32 %v281, %v285
      %v290 = vmax.f32 %v282, %v286
      %v291 = vmax.f32 %v283, %v287
      %v292 = vmax.f32 %v284, %v288
      %v293 = vpack.c.bf16 %v289, %v289
      %v294 = vpack.c.bf16 %v290, %v290
      %v295 = vpack.c.bf16 %v291, %v291
      %v296 = vpack.c.bf16 %v292, %v292
      %s297 = scalar_lea.vmem %s266, 16
      %v298 = vld [vmem:[%s297] sm:$0x3]
      %v299 = vld [vmem:[%s297 + $0x2] sm:$0x3]
      %v300 = vld [vmem:[%s297 + $0x4] sm:$0x3]
      %v301 = vld [vmem:[%s297 + $0x6] sm:$0x3]
      %v302 = vunpack.c.l.bf16 %v293
      %v303 = vunpack.c.l.bf16 %v294
      %v304 = vunpack.c.l.bf16 %v295
      %v305 = vunpack.c.l.bf16 %v296
      %v306 = vunpack.c.l.bf16 %v298
      %v307 = vunpack.c.l.bf16 %v299
      %v308 = vunpack.c.l.bf16 %v300
      %v309 = vunpack.c.l.bf16 %v301
      %v310 = vmax.f32 %v302, %v306
      %v311 = vmax.f32 %v303, %v307
      %v312 = vmax.f32 %v304, %v308
      %v313 = vmax.f32 %v305, %v309
      %v314 = vpack.c.bf16 %v310, %v310
      %v315 = vpack.c.bf16 %v311, %v311
      %v316 = vpack.c.bf16 %v312, %v312
      %v317 = vpack.c.bf16 %v313, %v313
      %v318 = vld [vmem:[%s261] sm:$0x3]
      %v319 = vld [vmem:[%s261 + $0x2] sm:$0x3]
      %v320 = vld [vmem:[%s261 + $0x4] sm:$0x3]
      %v321 = vld [vmem:[%s261 + $0x6] sm:$0x3]
      %v322 = vld [vmem:[%s2] sm:$0xf]
      %v323 = vld [vmem:[%s2 + $0x4] sm:$0xf]
      %v324 = vld [vmem:[%s2 + $0x8] sm:$0xf]
      %v325 = vld [vmem:[%s2 + $0xc] sm:$0xf]
      %v326 = vld [vmem:[%s2 + $0x10] sm:$0xf]
      %v327 = vld [vmem:[%s2 + $0x14] sm:$0xf]
      %v328 = vld [vmem:[%s2 + $0x18] sm:$0xf]
      %v329 = vld [vmem:[%s2 + $0x1c] sm:$0xf]
      %v330 = vld [vmem:[%s2 + $0x20] sm:$0xf]
      %v331 = vld [vmem:[%s2 + $0x24] sm:$0xf]
      %v332 = vld [vmem:[%s2 + $0x28] sm:$0xf]
      %v333 = vld [vmem:[%s2 + $0x2c] sm:$0xf]
      %v334 = vld [vmem:[%s2 + $0x30] sm:$0xf]
      %v335 = vld [vmem:[%s2 + $0x34] sm:$0xf]
      %v336 = vld [vmem:[%s2 + $0x38] sm:$0xf]
      %v337 = vld [vmem:[%s2 + $0x3c] sm:$0xf]
      %v338 = vld [vmem:[%s3] sm:$0x1]
      %v340 = vperm.slane %v338, 0
      %343 = vst [vmem:[#allocation1] ss:$4 sm:$0xff] %v318
      %s345 = scalar_lea.vmem [#allocation1], 1
      %346 = vst [vmem:[%s345] ss:$4 sm:$0xff] %v319
      %s348 = scalar_lea.vmem [#allocation1], 2
      %349 = vst [vmem:[%s348] ss:$4 sm:$0xff] %v320
      %s351 = scalar_lea.vmem [#allocation1], 3
      %352 = vst [vmem:[%s351] ss:$4 sm:$0xff] %v321
      %v353 = vld.sshfl [vmem:[#allocation1] sm:$0xff pattern:$0x73625140]
      %v371 = vunpack.c.l.b16 %v322
      %v372 = vunpack.c.l.b16 %v323
      %v373 = vunpack.c.l.b16 %v324
      %v374 = vunpack.c.l.b16 %v325
      %v375 = vunpack.c.l.b16 %v326
      %v376 = vunpack.c.l.b16 %v327
      %v377 = vunpack.c.l.b16 %v328
      %v378 = vunpack.c.l.b16 %v329
      %v379 = vunpack.c.l.b16 %v330
      %v380 = vunpack.c.l.b16 %v331
      %v381 = vunpack.c.l.b16 %v332
      %v382 = vunpack.c.l.b16 %v333
      %v383 = vunpack.c.l.b16 %v334
      %v384 = vunpack.c.l.b16 %v335
      %v385 = vunpack.c.l.b16 %v336
      %v386 = vunpack.c.l.b16 %v337
      %v387 = vpack.c.b16 %v372, %v371
      %v388 = vpack.c.b16 %v374, %v373
      %v389 = vpack.c.b16 %v376, %v375
      %v390 = vpack.c.b16 %v378, %v377
      %v391 = vpack.c.b16 %v380, %v379
      %v392 = vpack.c.b16 %v382, %v381
      %v393 = vpack.c.b16 %v384, %v383
      %v394 = vpack.c.b16 %v386, %v385
      %403 = vmatpush.bf16.msra.mxu0 %v394
      %404 = vmatpush.bf16.msra.mxu0 %v393
      %405 = vmatpush.bf16.msra.mxu0 %v392
      %406 = vmatpush.bf16.msra.mxu0 %v391
      %407 = vmatpush.bf16.msra.mxu0 %v390
      %408 = vmatpush.bf16.msra.mxu0 %v389
      %409 = vmatpush.bf16.msra.mxu0 %v388
      %410 = vmatpush.bf16.msra.mxu0 %v387
      %411 = vmatmul.bf16.gmra.mxu0 %v353
      %v412 = vpop.f32.mrf.mxu0
      %v413 = vadd.f32 %v340, %v412
      %v414 = vpop.f32.mrf.mxu0
      %v415 = vadd.f32 %v340, %v414
      %416 = vdwg.mxu0
      %v417 = vld [vmem:[%s4] sm:$0x1]
      %v419 = vperm.slane %v417, 0
      %v421 = vmul.f32 %v413, %v419
      %v422 = vmul.f32 %v415, %v419
      %v423 = vld [vmem:[%s5] sm:$0x1]
      %v425 = vperm.slane %v423, 0
      %v427 = vadd.f32 %v421, %v425
      %v428 = vadd.f32 %v422, %v425
      %v431 = vrot.slane %v427, 4
      %v432 = vrot.slane %v428, 4
      %v435 = vunpack.c.l.bf16 %v314
      %v436 = vunpack.c.l.bf16 %v315
      %v437 = vunpack.c.l.bf16 %v316
      %v438 = vunpack.c.l.bf16 %v317
      %v439 = vadd.f32 %v427, %v435
      %v440 = vadd.f32 %v431, %v436
      %v441 = vadd.f32 %v428, %v437
      %v442 = vadd.f32 %v432, %v438
      %v443 = vpack.c.bf16 %v439, %v439
      %v444 = vpack.c.bf16 %v440, %v440
      %v445 = vpack.c.bf16 %v441, %v441
      %v446 = vpack.c.bf16 %v442, %v442
      %447 = vst [vmem:[%s271] sm:$0x3] %v443
      %448 = vst [vmem:[%s271 + $0x2] sm:$0x3] %v444
      %449 = vst [vmem:[%s271 + $0x4] sm:$0x3] %v445
      %450 = vst [vmem:[%s271 + $0x6] sm:$0x3] %v446
      %p451 = scmp.lt.s32.totalorder %s17, 1
      %s452 = scalar_select %p451, %s17, 1
      %s453 = smul.addr %s452, 4
      %s454 = smul.addr %s453, 2
      %s455 = scalar_lea.vmem %s6, %s454
      // Predicated region
      $region45: #{exit_flow.7} parent=43 // pred_check
        %p456 = pneg %p171
      $region46: #{exit_flow.7} parent=43 // pred_check_branch
        %458 = sbr.rel (%p456) target = $region48
      $region47: #{exit_flow.7} parent=43 // pred_region
        _
      $region48: #{exit_flow.7} parent=43 // pred_fallthru
        _
    $region44: #{exit_flow.7} parent=5 // pred_fallthru
      _
    %p459 = scmp.le.s32.totalorder 2, %s12
    // Predicated region
    $region49: #{exit_flow.7} parent=5 // pred_check
      %p460 = pneg %p459
    $region50: #{exit_flow.7} parent=5 // pred_check_branch
      %462 = sbr.rel (%p460) target = $region52
    $region51: #{exit_flow.7} parent=5 // pred_region
      %s463 = ssub.s32 %s12, 2
      // Predicated region
      $region53: #{exit_flow.7} parent=51 // pred_check
        %p464 = pneg %p177
      $region54: #{exit_flow.7} parent=51 // pred_check_branch
        %466 = sbr.rel (%p464) target = $region56
      $region55: #{exit_flow.7} parent=51 // pred_region
        %p467 = scmp.lt.s32.totalorder %s18, 1
        %s468 = scalar_select %p467, %s18, 1
        %s469 = smul.addr %s468, 4
        %s470 = smul.addr %s469, 2
        %s471 = scalar_lea.vmem %s6, %s470
      $region56: #{exit_flow.7} parent=51 // pred_fallthru
        _
    $region52: #{exit_flow.7} parent=5 // pred_fallthru
      _
  $region6: #{exit_flow.7} parent=0 // loop_footer
    %s16 = sadd.s32 1, %s12
  $region7: #{exit_flow.7} parent=0 // loop_footer_branch
    %11 = sbr.rel target = $region3
  $region8: #{exit_flow.7} parent=0 // loop_exit
    _

// kernel: exit_flow.6
$region0: #{exit_flow.6}
  #allocation0 [shape = 'u32[]', space=smem, size = 0x4, offset = 0x4, fixed_abs, tag = 'smem constant byte address 0x4 - core index']
  #allocation1 [shape = 'u32[72,128]{1,0:T(1,128)}', space=vmem, size = 0x9000, scoped, tag = 'internal scratch']
  #allocation2 [shape = 'f32[128,128]{1,0:T(8,128)}', space=vmem, size = 0x10000, scoped, tag = 'scratch operand']
  %s0 = inlined_call_operand.vmem [shape: bf16[2,10,16,128], index: 0, kind: input, shape index: {}]
  %s1 = inlined_call_operand.vmem [shape: bf16[3,3,128,128], index: 1, kind: input, shape index: {}]
  %s2 = inlined_call_operand.vmem [shape: bf16[128,128], index: 2, kind: input, shape index: {}]
  %s3 = inlined_call_operand.vmem [shape: f32[1,128], index: 3, kind: input, shape index: {}]
  %s4 = inlined_call_operand.vmem [shape: f32[1,128], index: 4, kind: input, shape index: {}]
  %s5 = inlined_call_operand.vmem [shape: bf16[2,4,8,128], index: 5, kind: output, shape index: {}]
  %s6 = sld [smem:[#allocation0]]
  $region57: #{exit_flow.6} parent=0
    _
  %s8 = ssub.s32 1, %s6
  %s9 = scalar_select 0, %s8, %s6
  loop: start=0, step=1, limit=4
  $region2: #{exit_flow.6} parent=0 // loop_pre_header
    _
  $region3: #{exit_flow.6} parent=0 // loop_header
    %s11 = sphi 0, %s15
    %p12 = scmp.ge.s32.totalorder %s11, 4
    %s18 = sphi 0, %s30
    %s19 = sphi 0, %s26
    %s20 = sphi 0, %s18
    %s21 = sphi 0, %s19
    %s22 = sphi 0, %s20
    %s23 = sphi 0, %s21
    %s33 = sphi 0, %s35
    %s36 = sphi 0, %s33
    %s37 = sphi 0, %s36
    %s53 = sphi 0, %s37
    %s57 = sphi 0, %s57
    %s59 = sphi 0, %s57
    %s60 = sphi 0, %s59
    %s74 = sphi 0, %s60
    %s80 = sphi 0, %s82
    %s83 = sphi 0, %s80
    %s84 = sphi 0, %s83
    %s100 = sphi 0, %s84
    %s106 = sphi 0, %s108
    %s109 = sphi 0, %s106
    %s110 = sphi 0, %s109
    %s126 = sphi 0, %s110
    %s132 = sphi 0, %s134
    %s135 = sphi 0, %s132
    %s136 = sphi 0, %s135
    %s152 = sphi 0, %s136
    %s160 = sphi 0, %s162
    %s163 = sphi 0, %s160
    %s164 = sphi 0, %s163
    %s180 = sphi 0, %s164
  $region4: #{exit_flow.6} parent=0 // loop_header_branch
    %14 = sbr.rel (%p12) target = $region8
  $region5: #{exit_flow.6} parent=0 // loop_body
    %s16 = ssub.s32 %s11, 1
    %s17 = ssub.s32 %s11, 2
    %s24 = sadd.s32 1, %s19
    %p25 = scmp.ge.s32.totalorder %s24, 1
    %s26 = scalar_select %p25, 0, %s24
    %s27 = sadd.s32 1, %s18
    %s28 = scalar_select %p25, %s27, %s18
    %p29 = scmp.ge.s32.totalorder %s28, 2
    %s30 = scalar_select %p29, 0, %s28
    %s31 = ssub.s32 %s18, %s30
    %p32 = scmp.eq.s32.totalorder %s31, 0
    %s34 = sadd.s32 %s33, 1
    %s35 = scalar_select %p32, %s33, %s34
    %p38 = pneg %p32
    %p39 = scmp.eq.s32.totalorder %s11, 1
    %p40 = por %p38, %p39
    %p41 = scmp.ne.s32.totalorder %s33, %s36
    %p42 = scmp.eq.s32.totalorder %s11, 0
    %p43 = por %p41, %p42
    %p44 = scmp.ne.s32.totalorder %s33, %s36
    %p45 = scmp.eq.s32.totalorder %s16, 1
    %p46 = por %p44, %p45
    %p47 = scmp.ne.s32.totalorder %s36, %s37
    %p48 = scmp.eq.s32.totalorder %s16, 0
    %p49 = por %p47, %p48
    %p50 = scmp.ne.s32.totalorder %s36, %s37
    %p51 = scmp.eq.s32.totalorder %s17, 1
    %p52 = por %p50, %p51
    %p54 = scmp.ne.s32.totalorder %s37, %s53
    %p55 = scmp.eq.s32.totalorder %s17, 0
    %p56 = por %p54, %p55
    %s58 = sadd.s32 %s57, 1
    %p61 = scmp.eq.s32.totalorder %s11, 1
    %p62 = scmp.ne.s32.totalorder %s57, %s59
    %p63 = scmp.eq.s32.totalorder %s11, 0
    %p64 = por %p62, %p63
    %p65 = scmp.ne.s32.totalorder %s57, %s59
    %p66 = scmp.eq.s32.totalorder %s16, 1
    %p67 = por %p65, %p66
    %p68 = scmp.ne.s32.totalorder %s59, %s60
    %p69 = scmp.eq.s32.totalorder %s16, 0
    %p70 = por %p68, %p69
    %p71 = scmp.ne.s32.totalorder %s59, %s60
    %p72 = scmp.eq.s32.totalorder %s17, 1
    %p73 = por %p71, %p72
    %p75 = scmp.ne.s32.totalorder %s60, %s74
    %p76 = scmp.eq.s32.totalorder %s17, 0
    %p77 = por %p75, %p76
    %s78 = ssub.s32 %s19, %s26
    %p79 = scmp.eq.s32.totalorder %s78, 0
    %s81 = sadd.s32 %s80, 1
    %s82 = scalar_select %p79, %s80, %s81
    %p85 = pneg %p79
    %p86 = scmp.eq.s32.totalorder %s11, 1
    %p87 = por %p85, %p86
    %p88 = scmp.ne.s32.totalorder %s80, %s83
    %p89 = scmp.eq.s32.totalorder %s11, 0
    %p90 = por %p88, %p89
    %p91 = scmp.ne.s32.totalorder %s80, %s83
    %p92 = scmp.eq.s32.totalorder %s16, 1
    %p93 = por %p91, %p92
    %p94 = scmp.ne.s32.totalorder %s83, %s84
    %p95 = scmp.eq.s32.totalorder %s16, 0
    %p96 = por %p94, %p95
    %p97 = scmp.ne.s32.totalorder %s83, %s84
    %p98 = scmp.eq.s32.totalorder %s17, 1
    %p99 = por %p97, %p98
    %p101 = scmp.ne.s32.totalorder %s84, %s100
    %p102 = scmp.eq.s32.totalorder %s17, 0
    %p103 = por %p101, %p102
    %s104 = ssub.s32 %s19, %s26
    %p105 = scmp.eq.s32.totalorder %s104, 0
    %s107 = sadd.s32 %s106, 1
    %s108 = scalar_select %p105, %s106, %s107
    %p111 = pneg %p105
    %p112 = scmp.eq.s32.totalorder %s11, 1
    %p113 = por %p111, %p112
    %p114 = scmp.ne.s32.totalorder %s106, %s109
    %p115 = scmp.eq.s32.totalorder %s11, 0
    %p116 = por %p114, %p115
    %p117 = scmp.ne.s32.totalorder %s106, %s109
    %p118 = scmp.eq.s32.totalorder %s16, 1
    %p119 = por %p117, %p118
    %p120 = scmp.ne.s32.totalorder %s109, %s110
    %p121 = scmp.eq.s32.totalorder %s16, 0
    %p122 = por %p120, %p121
    %p123 = scmp.ne.s32.totalorder %s109, %s110
    %p124 = scmp.eq.s32.totalorder %s17, 1
    %p125 = por %p123, %p124
    %p127 = scmp.ne.s32.totalorder %s110, %s126
    %p128 = scmp.eq.s32.totalorder %s17, 0
    %p129 = por %p127, %p128
    %s130 = ssub.s32 %s19, %s26
    %p131 = scmp.eq.s32.totalorder %s130, 0
    %s133 = sadd.s32 %s132, 1
    %s134 = scalar_select %p131, %s132, %s133
    %p137 = pneg %p131
    %p138 = scmp.eq.s32.totalorder %s11, 1
    %p139 = por %p137, %p138
    %p140 = scmp.ne.s32.totalorder %s132, %s135
    %p141 = scmp.eq.s32.totalorder %s11, 0
    %p142 = por %p140, %p141
    %p143 = scmp.ne.s32.totalorder %s132, %s135
    %p144 = scmp.eq.s32.totalorder %s16, 1
    %p145 = por %p143, %p144
    %p146 = scmp.ne.s32.totalorder %s135, %s136
    %p147 = scmp.eq.s32.totalorder %s16, 0
    %p148 = por %p146, %p147
    %p149 = scmp.ne.s32.totalorder %s135, %s136
    %p150 = scmp.eq.s32.totalorder %s17, 1
    %p151 = por %p149, %p150
    %p153 = scmp.ne.s32.totalorder %s136, %s152
    %p154 = scmp.eq.s32.totalorder %s17, 0
    %p155 = por %p153, %p154
    %s156 = ssub.s32 %s18, %s30
    %s157 = ssub.s32 %s19, %s26
    %s158 = sor.u32 %s156, %s157
    %p159 = scmp.eq.s32.totalorder %s158, 0
    %s161 = sadd.s32 %s160, 1
    %s162 = scalar_select %p159, %s160, %s161
    %p165 = pneg %p159
    %p166 = scmp.eq.s32.totalorder %s11, 1
    %p167 = por %p165, %p166
    %p168 = scmp.ne.s32.totalorder %s160, %s163
    %p169 = scmp.eq.s32.totalorder %s11, 0
    %p170 = por %p168, %p169
    %p171 = scmp.ne.s32.totalorder %s160, %s163
    %p172 = scmp.eq.s32.totalorder %s16, 1
    %p173 = por %p171, %p172
    %p174 = scmp.ne.s32.totalorder %s163, %s164
    %p175 = scmp.eq.s32.totalorder %s16, 0
    %p176 = por %p174, %p175
    %p177 = scmp.ne.s32.totalorder %s163, %s164
    %p178 = scmp.eq.s32.totalorder %s17, 1
    %p179 = por %p177, %p178
    %p181 = scmp.ne.s32.totalorder %s164, %s180
    %p182 = scmp.eq.s32.totalorder %s17, 0
    %p183 = por %p181, %p182
    %p184 = scmp.le.s32.totalorder 1, %s11
    %p185 = scmp.lt.s32.totalorder %s11, 3
    %p186 = pnand %p184, %p185
    %p187 = pneg %p186
    // Predicated region
    $region9: #{exit_flow.6} parent=5 // pred_check
      _
    $region10: #{exit_flow.6} parent=5 // pred_check_branch
      %189 = sbr.rel (%p186) target = $region12
    $region11: #{exit_flow.6} parent=5 // pred_region
      %s190 = ssub.s32 %s11, 1
      // Predicated region
      $region13: #{exit_flow.6} parent=11 // pred_check
        %p191 = pneg %p70
      $region14: #{exit_flow.6} parent=11 // pred_check_branch
        %193 = sbr.rel (%p191) target = $region16
      $region15: #{exit_flow.6} parent=11 // pred_region
        _
      $region16: #{exit_flow.6} parent=11 // pred_fallthru
        _
      // Predicated region
      $region17: #{exit_flow.6} parent=11 // pred_check
        %p194 = pneg %p96
      $region18: #{exit_flow.6} parent=11 // pred_check_branch
        %196 = sbr.rel (%p194) target = $region20
      $region19: #{exit_flow.6} parent=11 // pred_region
        %p197 = scmp.lt.s32.totalorder %s21, 0
        %s198 = scalar_select %p197, %s21, 0
        %s199 = smul.addr %s198, 4
        %s200 = scalar_lea.vmem %s2, %s199
      $region20: #{exit_flow.6} parent=11 // pred_fallthru
        _
      // Predicated region
      $region21: #{exit_flow.6} parent=11 // pred_check
        %p201 = pneg %p122
      $region22: #{exit_flow.6} parent=11 // pred_check_branch
        %203 = sbr.rel (%p201) target = $region24
      $region23: #{exit_flow.6} parent=11 // pred_region
        %p204 = scmp.lt.s32.totalorder %s21, 0
        %s205 = scalar_select %p204, %s21, 0
        %s206 = scalar_lea.vmem %s3, %s205
      $region24: #{exit_flow.6} parent=11 // pred_fallthru
        _
      // Predicated region
      $region25: #{exit_flow.6} parent=11 // pred_check
        %p207 = pneg %p148
      $region26: #{exit_flow.6} parent=11 // pred_check_branch
        %209 = sbr.rel (%p207) target = $region28
      $region27: #{exit_flow.6} parent=11 // pred_region
        %p210 = scmp.lt.s32.totalorder %s21, 0
        %s211 = scalar_select %p210, %s21, 0
        %s212 = scalar_lea.vmem %s4, %s211
      $region28: #{exit_flow.6} parent=11 // pred_fallthru
        _
    $region12: #{exit_flow.6} parent=5 // pred_fallthru
      _
    %p213 = scmp.lt.s32.totalorder %s11, 2
    // Predicated region
    $region29: #{exit_flow.6} parent=5 // pred_check
      %p214 = pneg %p213
    $region30: #{exit_flow.6} parent=5 // pred_check_branch
      %216 = sbr.rel (%p214) target = $region32
    $region31: #{exit_flow.6} parent=5 // pred_region
      // Predicated region
      $region33: #{exit_flow.6} parent=31 // pred_check
        %p217 = pneg %p43
      $region34: #{exit_flow.6} parent=31 // pred_check_branch
        %219 = sbr.rel (%p217) target = $region36
      $region35: #{exit_flow.6} parent=31 // pred_region
        %p220 = scmp.lt.s32.totalorder %s18, 1
        %s221 = scalar_select %p220, %s18, 1
        %s222 = smul.addr %s221, 20
        %s223 = smul.addr %s222, 4
        %s224 = scalar_lea.vmem %s0, %s223
      $region36: #{exit_flow.6} parent=31 // pred_fallthru
        _
    $region32: #{exit_flow.6} parent=5 // pred_fallthru
      _
    %p225 = scmp.le.s32.totalorder 1, %s11
    %p226 = scmp.lt.s32.totalorder %s11, 3
    %p227 = pnand %p225, %p226
    %p228 = pneg %p227
    // Predicated region
    $region37: #{exit_flow.6} parent=5 // pred_check
      _
    $region38: #{exit_flow.6} parent=5 // pred_check_branch
      %230 = sbr.rel (%p227) target = $region40
    $region39: #{exit_flow.6} parent=5 // pred_region
      %s231 = ssub.s32 %s11, 1
      %p232 = scmp.lt.s32.totalorder %s20, 1
      %s233 = scalar_select %p232, %s20, 1
      %s234 = smul.addr %s233, 20
      %s235 = smul.addr %s234, 4
      %s236 = scalar_lea.vmem %s0, %s235
      %p237 = pneg %p49
      %p238 = pneg %p46
      %p239 = pneg %p70
      %p240 = pneg %p67
      %p241 = scmp.lt.s32.totalorder %s21, 0
      %s242 = scalar_select %p241, %s21, 0
      %s243 = smul.addr %s242, 4
      %s244 = scalar_lea.vmem %s2, %s243
      %p245 = pneg %p96
      %p246 = pneg %p93
      %p247 = scmp.lt.s32.totalorder %s21, 0
      %s248 = scalar_select %p247, %s21, 0
      %s249 = scalar_lea.vmem %s3, %s248
      %p250 = pneg %p122
      %p251 = pneg %p119
      %p252 = scmp.lt.s32.totalorder %s21, 0
      %s253 = scalar_select %p252, %s21, 0
      %s254 = scalar_lea.vmem %s4, %s253
      %p255 = pneg %p148
      %p256 = pneg %p145
      %p257 = pneg %p176
      %p258 = pneg %p173
      %p259 = scmp.lt.s32.totalorder %s20, 1
      %s260 = scalar_select %p259, %s20, 1
      %p261 = scmp.lt.s32.totalorder %s21, 0
      %s262 = scalar_select %p261, %s21, 0
      %s263 = smul.addr %s260, 4
      %s264 = sadd.s32 %s262, %s263
      %s265 = smul.addr %s264, 4
      %s266 = scalar_lea.vmem %s5, %s265
      %p267 = scmp.lt.s32.totalorder %s20, 1
      %s268 = scalar_select %p267, %s20, 1
      %s269 = smul.addr %s268, 20
      %s270 = smul.addr %s269, 4
      %s271 = scalar_lea.vmem %s0, %s270
      %p272 = scmp.lt.s32.totalorder %s21, 0
      %s273 = scalar_select %p272, %s21, 0
      %s274 = smul.addr %s273, 4
      %s275 = scalar_lea.vmem %s2, %s274
      %p276 = scmp.lt.s32.totalorder %s21, 0
      %s277 = scalar_select %p276, %s21, 0
      %s278 = scalar_lea.vmem %s3, %s277
      %p279 = scmp.lt.s32.totalorder %s21, 0
      %s280 = scalar_select %p279, %s21, 0
      %s281 = scalar_lea.vmem %s4, %s280
      %p282 = scmp.lt.s32.totalorder %s20, 1
      %s283 = scalar_select %p282, %s20, 1
      %p284 = scmp.lt.s32.totalorder %s21, 0
      %s285 = scalar_select %p284, %s21, 0
      %s286 = smul.addr %s283, 4
      %s287 = sadd.s32 %s285, %s286
      %s288 = smul.addr %s287, 4
      %s289 = scalar_lea.vmem %s5, %s288
      %p290 = scmp.eq.s32.totalorder %s21, 0
      // Predicated region
      $region41: #{exit_flow.6} parent=39 // pred_check
        %p291 = pneg %p290
      $region42: #{exit_flow.6} parent=39 // pred_check_branch
        %293 = sbr.rel (%p291) target = $region44
      $region43: #{exit_flow.6} parent=39 // pred_region
        %v294 = vld [vmem:[%s271] sm:$0xf]
        %v295 = vld [vmem:[%s271 + $0x4] sm:$0xf]
        %v296 = vld [vmem:[%s271 + $0x8] sm:$0xf]
        %v297 = vld [vmem:[%s271 + $0xc] sm:$0xf]
        %v298 = vld [vmem:[%s271 + $0x10] sm:$0xf]
        %v299 = vld [vmem:[%s271 + $0x14] sm:$0xf]
        %v300 = vld [vmem:[%s271 + $0x18] sm:$0xf]
        %v301 = vld [vmem:[%s271 + $0x1c] sm:$0xf]
        %v302 = vld [vmem:[%s271 + $0x20] sm:$0xf]
        %v303 = vld [vmem:[%s271 + $0x24] sm:$0xf]
        %v304 = vld [vmem:[%s271 + $0x28] sm:$0xf]
        %v305 = vld [vmem:[%s271 + $0x2c] sm:$0xf]
        %v306 = vld [vmem:[%s271 + $0x30] sm:$0xf]
        %v307 = vld [vmem:[%s271 + $0x34] sm:$0xf]
        %v308 = vld [vmem:[%s271 + $0x38] sm:$0xf]
        %v309 = vld [vmem:[%s271 + $0x3c] sm:$0xf]
        %v310 = vld [vmem:[%s271 + $0x40] sm:$0xf]
        %v311 = vld [vmem:[%s271 + $0x44] sm:$0xf]
        %v312 = vld [vmem:[%s271 + $0x48] sm:$0xf]
        %v313 = vld [vmem:[%s271 + $0x4c] sm:$0xf]
        %v314 = vunpack.c.l.bf16 %v294
        %v315 = vunpack.c.l.bf16 %v295
        %v316 = vunpack.c.l.bf16 %v296
        %v317 = vunpack.c.l.bf16 %v297
        %v318 = vunpack.c.l.bf16 %v298
        %v319 = vunpack.c.l.bf16 %v299
        %v320 = vunpack.c.l.bf16 %v300
        %v321 = vunpack.c.l.bf16 %v301
        %v322 = vunpack.c.l.bf16 %v302
        %v323 = vunpack.c.l.bf16 %v303
        %v324 = vunpack.c.l.bf16 %v304
        %v325 = vunpack.c.l.bf16 %v305
        %v326 = vunpack.c.l.bf16 %v306
        %v327 = vunpack.c.l.bf16 %v307
        %v328 = vunpack.c.l.bf16 %v308
        %v329 = vunpack.c.l.bf16 %v309
        %v330 = vunpack.c.l.bf16 %v310
        %v331 = vunpack.c.l.bf16 %v311
        %v332 = vunpack.c.l.bf16 %v312
        %v333 = vunpack.c.l.bf16 %v313
        %v334 = vmax.f32 %v314, 0.0
        %v335 = vmax.f32 %v315, 0.0
        %v336 = vmax.f32 %v316, 0.0
        %v337 = vmax.f32 %v317, 0.0
        %v338 = vmax.f32 %v318, 0.0
        %v339 = vmax.f32 %v319, 0.0
        %v340 = vmax.f32 %v320, 0.0
        %v341 = vmax.f32 %v321, 0.0
        %v342 = vmax.f32 %v322, 0.0
        %v343 = vmax.f32 %v323, 0.0
        %v344 = vmax.f32 %v324, 0.0
        %v345 = vmax.f32 %v325, 0.0
        %v346 = vmax.f32 %v326, 0.0
        %v347 = vmax.f32 %v327, 0.0
        %v348 = vmax.f32 %v328, 0.0
        %v349 = vmax.f32 %v329, 0.0
        %v350 = vmax.f32 %v330, 0.0
        %v351 = vmax.f32 %v331, 0.0
        %v352 = vmax.f32 %v332, 0.0
        %v353 = vmax.f32 %v333, 0.0
        %v354 = vpack.c.bf16 %v334, %v334
        %v355 = vpack.c.bf16 %v335, %v335
        %v356 = vpack.c.bf16 %v336, %v336
        %v357 = vpack.c.bf16 %v337, %v337
        %v358 = vpack.c.bf16 %v338, %v338
        %v359 = vpack.c.bf16 %v339, %v339
        %v360 = vpack.c.bf16 %v340, %v340
        %v361 = vpack.c.bf16 %v341, %v341
        %v362 = vpack.c.bf16 %v342, %v342
        %v363 = vpack.c.bf16 %v343, %v343
        %v364 = vpack.c.bf16 %v344, %v344
        %v365 = vpack.c.bf16 %v345, %v345
        %v366 = vpack.c.bf16 %v346, %v346
        %v367 = vpack.c.bf16 %v347, %v347
        %v368 = vpack.c.bf16 %v348, %v348
        %v369 = vpack.c.bf16 %v349, %v349
        %v370 = vpack.c.bf16 %v350, %v350
        %v371 = vpack.c.bf16 %v351, %v351
        %v372 = vpack.c.bf16 %v352, %v352
        %v373 = vpack.c.bf16 %v353, %v353
        %v374 = vld [vmem:[%s1] sm:$0xf]
        %v375 = vld [vmem:[%s1 + $0x4] sm:$0xf]
        %v376 = vld [vmem:[%s1 + $0x8] sm:$0xf]
        %v377 = vld [vmem:[%s1 + $0xc] sm:$0xf]
        %v378 = vld [vmem:[%s1 + $0x10] sm:$0xf]
        %v379 = vld [vmem:[%s1 + $0x14] sm:$0xf]
        %v380 = vld [vmem:[%s1 + $0x18] sm:$0xf]
        %v381 = vld [vmem:[%s1 + $0x1c] sm:$0xf]
        %v382 = vld [vmem:[%s1 + $0x20] sm:$0xf]
        %v383 = vld [vmem:[%s1 + $0x24] sm:$0xf]
        %v384 = vld [vmem:[%s1 + $0x28] sm:$0xf]
        %v385 = vld [vmem:[%s1 + $0x2c] sm:$0xf]
        %v386 = vld [vmem:[%s1 + $0x30] sm:$0xf]
        %v387 = vld [vmem:[%s1 + $0x34] sm:$0xf]
        %v388 = vld [vmem:[%s1 + $0x38] sm:$0xf]
        %v389 = vld [vmem:[%s1 + $0x3c] sm:$0xf]
        %s390 = scalar_lea.vmem %s1, 192
        %v391 = vld [vmem:[%s390] sm:$0xf]
        %v392 = vld [vmem:[%s390 + $0x4] sm:$0xf]
        %v393 = vld [vmem:[%s390 + $0x8] sm:$0xf]
        %v394 = vld [vmem:[%s390 + $0xc] sm:$0xf]
        %v395 = vld [vmem:[%s390 + $0x10] sm:$0xf]
        %v396 = vld [vmem:[%s390 + $0x14] sm:$0xf]
        %v397 = vld [vmem:[%s390 + $0x18] sm:$0xf]
        %v398 = vld [vmem:[%s390 + $0x1c] sm:$0xf]
        %v399 = vld [vmem:[%s390 + $0x20] sm:$0xf]
        %v400 = vld [vmem:[%s390 + $0x24] sm:$0xf]
        %v401 = vld [vmem:[%s390 + $0x28] sm:$0xf]
        %v402 = vld [vmem:[%s390 + $0x2c] sm:$0xf]
        %v403 = vld [vmem:[%s390 + $0x30] sm:$0xf]
        %v404 = vld [vmem:[%s390 + $0x34] sm:$0xf]
        %v405 = vld [vmem:[%s390 + $0x38] sm:$0xf]
        %v406 = vld [vmem:[%s390 + $0x3c] sm:$0xf]
        %v423 = vunpack.c.l.b16 %v356
        %v424 = vunpack.c.l.b16 %v357
        %v425 = vunpack.c.l.b16 %v358
        %v426 = vunpack.c.l.b16 %v359
        %v427 = vunpack.c.l.b16 %v360
        %v428 = vunpack.c.l.b16 %v361
        %v429 = vunpack.c.l.b16 %v362
        %v430 = vunpack.c.l.b16 %v363
        %v431 = vunpack.c.l.b16 %v364
        %v432 = vunpack.c.l.b16 %v365
        %v433 = vunpack.c.l.b16 %v366
        %v434 = vunpack.c.l.b16 %v367
        %v435 = vunpack.c.l.b16 %v368
        %v436 = vunpack.c.l.b16 %v369
        %v437 = vunpack.c.l.b16 %v370
        %v438 = vunpack.c.l.b16 %v371
        %v439 = vpack.c.b16 %v424, %v423
        %v440 = vpack.c.b16 %v426, %v425
        %v441 = vpack.c.b16 %v428, %v427
        %v442 = vpack.c.b16 %v430, %v429
        %v443 = vpack.c.b16 %v432, %v431
        %v444 = vpack.c.b16 %v434, %v433
        %v445 = vpack.c.b16 %v436, %v435
        %v446 = vpack.c.b16 %v438, %v437
        %v471 = vunpack.c.l.b16 %v391
        %v472 = vunpack.c.l.b16 %v392
        %v473 = vunpack.c.l.b16 %v393
        %v474 = vunpack.c.l.b16 %v394
        %v475 = vunpack.c.l.b16 %v395
        %v476 = vunpack.c.l.b16 %v396
        %v477 = vunpack.c.l.b16 %v397
        %v478 = vunpack.c.l.b16 %v398
        %v479 = vunpack.c.l.b16 %v399
        %v480 = vunpack.c.l.b16 %v400
        %v481 = vunpack.c.l.b16 %v401
        %v482 = vunpack.c.l.b16 %v402
        %v483 = vunpack.c.l.b16 %v403
        %v484 = vunpack.c.l.b16 %v404
        %v485 = vunpack.c.l.b16 %v405
        %v486 = vunpack.c.l.b16 %v406
        %v487 = vpack.c.b16 %v472, %v471
        %v488 = vpack.c.b16 %v474, %v473
        %v489 = vpack.c.b16 %v476, %v475
        %v490 = vpack.c.b16 %v478, %v477
        %v491 = vpack.c.b16 %v480, %v479
        %v492 = vpack.c.b16 %v482, %v481
        %v493 = vpack.c.b16 %v484, %v483
        %v494 = vpack.c.b16 %v486, %v485
        %503 = vmatpush.bf16.msra.mxu0 %v494
        %504 = vmatpush.bf16.msra.mxu0 %v493
        %505 = vmatpush.bf16.msra.mxu0 %v492
        %506 = vmatpush.bf16.msra.mxu0 %v491
        %507 = vmatpush.bf16.msra.mxu0 %v490
        %508 = vmatpush.bf16.msra.mxu0 %v489
        %509 = vmatpush.bf16.msra.mxu0 %v488
        %510 = vmatpush.bf16.msra.mxu0 %v487
        %511 = vmatmul.bf16.gmra.mxu0 %v439
        %v512 = vpop.f32.mrf.mxu0
        %v513 = vadd.f32 0.0, %v512
        %v514 = vpop.f32.mrf.mxu0
        %v515 = vadd.f32 0.0, %v514
        %516 = vmatmul.bf16.gmra.mxu0 %v440
        %v517 = vpop.f32.mrf.mxu0
        %v518 = vadd.f32 0.0, %v517
        %v519 = vpop.f32.mrf.mxu0
        %v520 = vadd.f32 0.0, %v519
        %521 = vmatmul.bf16.gmra.mxu0 %v441
        %v522 = vpop.f32.mrf.mxu0
        %v523 = vadd.f32 0.0, %v522
        %v524 = vpop.f32.mrf.mxu0
        %v525 = vadd.f32 0.0, %v524
        %526 = vmatmul.bf16.gmra.mxu0 %v442
        %v527 = vpop.f32.mrf.mxu0
        %v528 = vadd.f32 0.0, %v527
        %v529 = vpop.f32.mrf.mxu0
        %v530 = vadd.f32 0.0, %v529
        %531 = vmatmul.bf16.gmra.mxu0 %v443
        %v532 = vpop.f32.mrf.mxu0
        %v533 = vadd.f32 0.0, %v532
        %v534 = vpop.f32.mrf.mxu0
        %v535 = vadd.f32 0.0, %v534
        %536 = vmatmul.bf16.gmra.mxu0 %v444
        %v537 = vpop.f32.mrf.mxu0
        %v538 = vadd.f32 0.0, %v537
        %v539 = vpop.f32.mrf.mxu0
        %v540 = vadd.f32 0.0, %v539
        %541 = vmatmul.bf16.gmra.mxu0 %v445
        %v542 = vpop.f32.mrf.mxu0
        %v543 = vadd.f32 0.0, %v542
        %v544 = vpop.f32.mrf.mxu0
        %v545 = vadd.f32 0.0, %v544
        %546 = vmatmul.bf16.gmra.mxu0 %v446
        %v547 = vpop.f32.mrf.mxu0
        %v548 = vadd.f32 0.0, %v547
        %v549 = vpop.f32.mrf.mxu0
        %v550 = vadd.f32 0.0, %v549
        %551 = vdwg.mxu0
        %v554 = vunpack.c.l.b16 %v354
        %v555 = vunpack.c.l.b16 %v355
        %v556 = vpack.c.b16 %v555, %v554
        %v574 = vunpack.c.l.b16 %v374
        %v575 = vunpack.c.l.b16 %v375
        %v576 = vunpack.c.l.b16 %v376
        %v577 = vunpack.c.l.b16 %v377
        %v578 = vunpack.c.l.b16 %v378
        %v579 = vunpack.c.l.b16 %v379
        %v580 = vunpack.c.l.b16 %v380
        %v581 = vunpack.c.l.b16 %v381
        %v582 = vunpack.c.l.b16 %v382
        %v583 = vunpack.c.l.b16 %v383
        %v584 = vunpack.c.l.b16 %v384
        %v585 = vunpack.c.l.b16 %v385
        %v586 = vunpack.c.l.b16 %v386
        %v587 = vunpack.c.l.b16 %v387
        %v588 = vunpack.c.l.b16 %v388
        %v589 = vunpack.c.l.b16 %v389
        %v590 = vpack.c.b16 %v575, %v574
        %v591 = vpack.c.b16 %v577, %v576
        %v592 = vpack.c.b16 %v579, %v578
        %v593 = vpack.c.b16 %v581, %v580
        %v594 = vpack.c.b16 %v583, %v582
        %v595 = vpack.c.b16 %v585, %v584
        %v596 = vpack.c.b16 %v587, %v586
        %v597 = vpack.c.b16 %v589, %v588
        %606 = vmatpush.bf16.msra.mxu0 %v597
        %607 = vmatpush.bf16.msra.mxu0 %v596
        %608 = vmatpush.bf16.msra.mxu0 %v595
        %609 = vmatpush.bf16.msra.mxu0 %v594
        %610 = vmatpush.bf16.msra.mxu0 %v593
        %611 = vmatpush.bf16.msra.mxu0 %v592
        %612 = vmatpush.bf16.msra.mxu0 %v591
        %613 = vmatpush.bf16.msra.mxu0 %v590
        %614 = vmatmul.bf16.gmra.mxu0 %v556
        %v615 = vpop.f32.mrf.mxu0
        %v616 = vadd.f32 %v513, %v615
        %v617 = vpop.f32.mrf.mxu0
        %v618 = vadd.f32 %v515, %v617
        %619 = vmatmul.bf16.gmra.mxu0 %v439
        %v620 = vpop.f32.mrf.mxu0
        %v621 = vadd.f32 %v518, %v620
        %v622 = vpop.f32.mrf.mxu0
        %v623 = vadd.f32 %v520, %v622
        %624 = vmatmul.bf16.gmra.mxu0 %v440
        %v625 = vpop.f32.mrf.mxu0
        %v626 = vadd.f32 %v523, %v625
        %v627 = vpop.f32.mrf.mxu0
        %v628 = vadd.f32 %v525, %v627
        %629 = vmatmul.bf16.gmra.mxu0 %v441
        %v630 = vpop.f32.mrf.mxu0
        %v631 = vadd.f32 %v528, %v630
        %v632 = vpop.f32.mrf.mxu0
        %v633 = vadd.f32 %v530, %v632
        %634 = vmatmul.bf16.gmra.mxu0 %v442
        %v635 = vpop.f32.mrf.mxu0
        %v636 = vadd.f32 %v533, %v635
        %v637 = vpop.f32.mrf.mxu0
        %v638 = vadd.f32 %v535, %v637
        %639 = vmatmul.bf16.gmra.mxu0 %v443
        %v640 = vpop.f32.mrf.mxu0
        %v641 = vadd.f32 %v538, %v640
        %v642 = vpop.f32.mrf.mxu0
        %v643 = vadd.f32 %v540, %v642
        %644 = vmatmul.bf16.gmra.mxu0 %v444
        %v645 = vpop.f32.mrf.mxu0
        %v646 = vadd.f32 %v543, %v645
        %v647 = vpop.f32.mrf.mxu0
        %v648 = vadd.f32 %v545, %v647
        %649 = vmatmul.bf16.gmra.mxu0 %v445
        %v650 = vpop.f32.mrf.mxu0
        %v651 = vadd.f32 %v548, %v650
        %v652 = vpop.f32.mrf.mxu0
        %v653 = vadd.f32 %v550, %v652
        %654 = vdwg.mxu0
        %s655 = scalar_lea.vmem %s1, 384
        %v656 = vld [vmem:[%s655] sm:$0xf]
        %v657 = vld [vmem:[%s655 + $0x4] sm:$0xf]
        %v658 = vld [vmem:[%s655 + $0x8] sm:$0xf]
        %v659 = vld [vmem:[%s655 + $0xc] sm:$0xf]
        %v660 = vld [vmem:[%s655 + $0x10] sm:$0xf]
        %v661 = vld [vmem:[%s655 + $0x14] sm:$0xf]
        %v662 = vld [vmem:[%s655 + $0x18] sm:$0xf]
        %v663 = vld [vmem:[%s655 + $0x1c] sm:$0xf]
        %v664 = vld [vmem:[%s655 + $0x20] sm:$0xf]
        %v665 = vld [vmem:[%s655 + $0x24] sm:$0xf]
        %v666 = vld [vmem:[%s655 + $0x28] sm:$0xf]
        %v667 = vld [vmem:[%s655 + $0x2c] sm:$0xf]
        %v668 = vld [vmem:[%s655 + $0x30] sm:$0xf]
        %v669 = vld [vmem:[%s655 + $0x34] sm:$0xf]
        %v670 = vld [vmem:[%s655 + $0x38] sm:$0xf]
        %v671 = vld [vmem:[%s655 + $0x3c] sm:$0xf]
        %v674 = vunpack.c.l.b16 %v372
        %v675 = vunpack.c.l.b16 %v373
        %v676 = vpack.c.b16 %v675, %v674
        %v694 = vunpack.c.l.b16 %v656
        %v695 = vunpack.c.l.b16 %v657
        %v696 = vunpack.c.l.b16 %v658
        %v697 = vunpack.c.l.b16 %v659
        %v698 = vunpack.c.l.b16 %v660
        %v699 = vunpack.c.l.b16 %v661
        %v700 = vunpack.c.l.b16 %v662
        %v701 = vunpack.c.l.b16 %v663
        %v702 = vunpack.c.l.b16 %v664
        %v703 = vunpack.c.l.b16 %v665
        %v704 = vunpack.c.l.b16 %v666
        %v705 = vunpack.c.l.b16 %v667
        %v706 = vunpack.c.l.b16 %v668
        %v707 = vunpack.c.l.b16 %v669
        %v708 = vunpack.c.l.b16 %v670
        %v709 = vunpack.c.l.b16 %v671
        %v710 = vpack.c.b16 %v695, %v694
        %v711 = vpack.c.b16 %v697, %v696
        %v712 = vpack.c.b16 %v699, %v698
        %v713 = vpack.c.b16 %v701, %v700
        %v714 = vpack.c.b16 %v703, %v702
        %v715 = vpack.c.b16 %v705, %v704
        %v716 = vpack.c.b16 %v707, %v706
        %v717 = vpack.c.b16 %v709, %v708
        %726 = vmatpush.bf16.msra.mxu0 %v717
        %727 = vmatpush.bf16.msra.mxu0 %v716
        %728 = vmatpush.bf16.msra.mxu0 %v715
        %729 = vmatpush.bf16.msra.mxu0 %v714
        %730 = vmatpush.bf16.msra.mxu0 %v713
        %731 = vmatpush.bf16.msra.mxu0 %v712
        %732 = vmatpush.bf16.msra.mxu0 %v711
        %733 = vmatpush.bf16.msra.mxu0 %v710
        %734 = vmatmul.bf16.gmra.mxu0 %v440
        %v735 = vpop.f32.mrf.mxu0
        %v736 = vadd.f32 0.0, %v735
        %v737 = vpop.f32.mrf.mxu0
        %v738 = vadd.f32 0.0, %v737
        %739 = vmatmul.bf16.gmra.mxu0 %v441
        %v740 = vpop.f32.mrf.mxu0
        %v741 = vadd.f32 0.0, %v740
        %v742 = vpop.f32.mrf.mxu0
        %v743 = vadd.f32 0.0, %v742
        %744 = vmatmul.bf16.gmra.mxu0 %v442
        %v745 = vpop.f32.mrf.mxu0
        %v746 = vadd.f32 0.0, %v745
        %v747 = vpop.f32.mrf.mxu0
        %v748 = vadd.f32 0.0, %v747
        %749 = vmatmul.bf16.gmra.mxu0 %v443
        %v750 = vpop.f32.mrf.mxu0
        %v751 = vadd.f32 0.0, %v750
        %v752 = vpop.f32.mrf.mxu0
        %v753 = vadd.f32 0.0, %v752
        %754 = vmatmul.bf16.gmra.mxu0 %v444
        %v755 = vpop.f32.mrf.mxu0
        %v756 = vadd.f32 0.0, %v755
        %v757 = vpop.f32.mrf.mxu0
        %v758 = vadd.f32 0.0, %v757
        %759 = vmatmul.bf16.gmra.mxu0 %v445
        %v760 = vpop.f32.mrf.mxu0
        %v761 = vadd.f32 0.0, %v760
        %v762 = vpop.f32.mrf.mxu0
        %v763 = vadd.f32 0.0, %v762
        %764 = vmatmul.bf16.gmra.mxu0 %v446
        %v765 = vpop.f32.mrf.mxu0
        %v766 = vadd.f32 0.0, %v765
        %v767 = vpop.f32.mrf.mxu0
        %v768 = vadd.f32 0.0, %v767
        %769 = vmatmul.bf16.gmra.mxu0 %v676
        %v770 = vpop.f32.mrf.mxu0
        %v771 = vadd.f32 0.0, %v770
        %v772 = vpop.f32.mrf.mxu0
        %v773 = vadd.f32 0.0, %v772
        %774 = vdwg.mxu0
        %v775 = vadd.f32 %v616, %v736
        %v776 = vadd.f32 %v618, %v738
        %v777 = vadd.f32 %v621, %v741
        %v778 = vadd.f32 %v623, %v743
        %v779 = vadd.f32 %v626, %v746
        %v780 = vadd.f32 %v628, %v748
        %v781 = vadd.f32 %v631, %v751
        %v782 = vadd.f32 %v633, %v753
        %v783 = vadd.f32 %v636, %v756
        %v784 = vadd.f32 %v638, %v758
        %v785 = vadd.f32 %v641, %v761
        %v786 = vadd.f32 %v643, %v763
        %v787 = vadd.f32 %v646, %v766
        %v788 = vadd.f32 %v648, %v768
        %v789 = vadd.f32 %v651, %v771
        %v790 = vadd.f32 %v653, %v773
        %791 = vst [vmem:[#allocation2] sm:$0xff] %v775
        %792 = vst [vmem:[#allocation2 + $0x8] sm:$0xff] %v776
        %793 = vst [vmem:[#allocation2 + $0x10] sm:$0xff] %v777
        %794 = vst [vmem:[#allocation2 + $0x18] sm:$0xff] %v778
        %795 = vst [vmem:[#allocation2 + $0x20] sm:$0xff] %v779
        %796 = vst [vmem:[#allocation2 + $0x28] sm:$0xff] %v780
        %797 = vst [vmem:[#allocation2 + $0x30] sm:$0xff] %v781
        %798 = vst [vmem:[#allocation2 + $0x38] sm:$0xff] %v782
        %799 = vst [vmem:[#allocation2 + $0x40] sm:$0xff] %v783
        %800 = vst [vmem:[#allocation2 + $0x48] sm:$0xff] %v784
        %801 = vst [vmem:[#allocation2 + $0x50] sm:$0xff] %v785
        %802 = vst [vmem:[#allocation2 + $0x58] sm:$0xff] %v786
        %803 = vst [vmem:[#allocation2 + $0x60] sm:$0xff] %v787
        %804 = vst [vmem:[#allocation2 + $0x68] sm:$0xff] %v788
        %805 = vst [vmem:[#allocation2 + $0x70] sm:$0xff] %v789
        %806 = vst [vmem:[#allocation2 + $0x78] sm:$0xff] %v790
        %s807 = scalar_lea.vmem %s1, 64
        %v808 = vld [vmem:[%s807] sm:$0xf]
        %v809 = vld [vmem:[%s807 + $0x4] sm:$0xf]
        %v810 = vld [vmem:[%s807 + $0x8] sm:$0xf]
        %v811 = vld [vmem:[%s807 + $0xc] sm:$0xf]
        %v812 = vld [vmem:[%s807 + $0x10] sm:$0xf]
        %v813 = vld [vmem:[%s807 + $0x14] sm:$0xf]
        %v814 = vld [vmem:[%s807 + $0x18] sm:$0xf]
        %v815 = vld [vmem:[%s807 + $0x1c] sm:$0xf]
        %v816 = vld [vmem:[%s807 + $0x20] sm:$0xf]
        %v817 = vld [vmem:[%s807 + $0x24] sm:$0xf]
        %v818 = vld [vmem:[%s807 + $0x28] sm:$0xf]
        %v819 = vld [vmem:[%s807 + $0x2c] sm:$0xf]
        %v820 = vld [vmem:[%s807 + $0x30] sm:$0xf]
        %v821 = vld [vmem:[%s807 + $0x34] sm:$0xf]
        %v822 = vld [vmem:[%s807 + $0x38] sm:$0xf]
        %v823 = vld [vmem:[%s807 + $0x3c] sm:$0xf]
        %s824 = scalar_lea.vmem %s1, 256
        %v825 = vld [vmem:[%s824] sm:$0xf]
        %v826 = vld [vmem:[%s824 + $0x4] sm:$0xf]
        %v827 = vld [vmem:[%s824 + $0x8] sm:$0xf]
        %v828 = vld [vmem:[%s824 + $0xc] sm:$0xf]
        %v829 = vld [vmem:[%s824 + $0x10] sm:$0xf]
        %v830 = vld [vmem:[%s824 + $0x14] sm:$0xf]
        %v831 = vld [vmem:[%s824 + $0x18] sm:$0xf]
        %v832 = vld [vmem:[%s824 + $0x1c] sm:$0xf]
        %v833 = vld [vmem:[%s824 + $0x20] sm:$0xf]
        %v834 = vld [vmem:[%s824 + $0x24] sm:$0xf]
        %v835 = vld [vmem:[%s824 + $0x28] sm:$0xf]
        %v836 = vld [vmem:[%s824 + $0x2c] sm:$0xf]
        %v837 = vld [vmem:[%s824 + $0x30] sm:$0xf]
        %v838 = vld [vmem:[%s824 + $0x34] sm:$0xf]
        %v839 = vld [vmem:[%s824 + $0x38] sm:$0xf]
        %v840 = vld [vmem:[%s824 + $0x3c] sm:$0xf]
        %v857 = vunpack.c.l.b16 %v825
        %v858 = vunpack.c.l.b16 %v826
        %v859 = vunpack.c.l.b16 %v827
        %v860 = vunpack.c.l.b16 %v828
        %v861 = vunpack.c.l.b16 %v829
        %v862 = vunpack.c.l.b16 %v830
        %v863 = vunpack.c.l.b16 %v831
        %v864 = vunpack.c.l.b16 %v832
        %v865 = vunpack.c.l.b16 %v833
        %v866 = vunpack.c.l.b16 %v834
        %v867 = vunpack.c.l.b16 %v835
        %v868 = vunpack.c.l.b16 %v836
        %v869 = vunpack.c.l.b16 %v837
        %v870 = vunpack.c.l.b16 %v838
        %v871 = vunpack.c.l.b16 %v839
        %v872 = vunpack.c.l.b16 %v840
        %v873 = vpack.c.b16 %v858, %v857
        %v874 = vpack.c.b16 %v860, %v859
        %v875 = vpack.c.b16 %v862, %v861
        %v876 = vpack.c.b16 %v864, %v863
        %v877 = vpack.c.b16 %v866, %v865
        %v878 = vpack.c.b16 %v868, %v867
        %v879 = vpack.c.b16 %v870, %v869
        %v880 = vpack.c.b16 %v872, %v871
        %889 = vmatpush.bf16.msra.mxu0 %v880
        %890 = vmatpush.bf16.msra.mxu0 %v879
        %891 = vmatpush.bf16.msra.mxu0 %v878
        %892 = vmatpush.bf16.msra.mxu0 %v877
        %893 = vmatpush.bf16.msra.mxu0 %v876
        %894 = vmatpush.bf16.msra.mxu0 %v875
        %895 = vmatpush.bf16.msra.mxu0 %v874
        %896 = vmatpush.bf16.msra.mxu0 %v873
        %897 = vmatmul.bf16.gmra.mxu0 %v439
        %v898 = vpop.f32.mrf.mxu0
        %v899 = vadd.f32 0.0, %v898
        %v900 = vpop.f32.mrf.mxu0
        %v901 = vadd.f32 0.0, %v900
        %902 = vmatmul.bf16.gmra.mxu0 %v440
        %v903 = vpop.f32.mrf.mxu0
        %v904 = vadd.f32 0.0, %v903
        %v905 = vpop.f32.mrf.mxu0
        %v906 = vadd.f32 0.0, %v905
        %907 = vmatmul.bf16.gmra.mxu0 %v441
        %v908 = vpop.f32.mrf.mxu0
        %v909 = vadd.f32 0.0, %v908
        %v910 = vpop.f32.mrf.mxu0
        %v911 = vadd.f32 0.0, %v910
        %912 = vmatmul.bf16.gmra.mxu0 %v442
        %v913 = vpop.f32.mrf.mxu0
        %v914 = vadd.f32 0.0, %v913
        %v915 = vpop.f32.mrf.mxu0
        %v916 = vadd.f32 0.0, %v915
        %917 = vmatmul.bf16.gmra.mxu0 %v443
        %v918 = vpop.f32.mrf.mxu0
        %v919 = vadd.f32 0.0, %v918
        %v920 = vpop.f32.mrf.mxu0
        %v921 = vadd.f32 0.0, %v920
        %922 = vmatmul.bf16.gmra.mxu0 %v444
        %v923 = vpop.f32.mrf.mxu0
        %v924 = vadd.f32 0.0, %v923
        %v925 = vpop.f32.mrf.mxu0
        %v926 = vadd.f32 0.0, %v925
        %927 = vmatmul.bf16.gmra.mxu0 %v445
        %v928 = vpop.f32.mrf.mxu0
        %v929 = vadd.f32 0.0, %v928
        %v930 = vpop.f32.mrf.mxu0
        %v931 = vadd.f32 0.0, %v930
        %932 = vmatmul.bf16.gmra.mxu0 %v446
        %v933 = vpop.f32.mrf.mxu0
        %v934 = vadd.f32 0.0, %v933
        %v935 = vpop.f32.mrf.mxu0
        %v936 = vadd.f32 0.0, %v935
        %937 = vdwg.mxu0
        %v954 = vunpack.c.l.b16 %v808
        %v955 = vunpack.c.l.b16 %v809
        %v956 = vunpack.c.l.b16 %v810
        %v957 = vunpack.c.l.b16 %v811
        %v958 = vunpack.c.l.b16 %v812
        %v959 = vunpack.c.l.b16 %v813
        %v960 = vunpack.c.l.b16 %v814
        %v961 = vunpack.c.l.b16 %v815
        %v962 = vunpack.c.l.b16 %v816
        %v963 = vunpack.c.l.b16 %v817
        %v964 = vunpack.c.l.b16 %v818
        %v965 = vunpack.c.l.b16 %v819
        %v966 = vunpack.c.l.b16 %v820
        %v967 = vunpack.c.l.b16 %v821
        %v968 = vunpack.c.l.b16 %v822
        %v969 = vunpack.c.l.b16 %v823
        %v970 = vpack.c.b16 %v955, %v954
        %v971 = vpack.c.b16 %v957, %v956
        %v972 = vpack.c.b16 %v959, %v958
        %v973 = vpack.c.b16 %v961, %v960
        %v974 = vpack.c.b16 %v963, %v962
        %v975 = vpack.c.b16 %v965, %v964
        %v976 = vpack.c.b16 %v967, %v966
        %v977 = vpack.c.b16 %v969, %v968
        %986 = vmatpush.bf16.msra.mxu0 %v977
        %987 = vmatpush.bf16.msra.mxu0 %v976
        %988 = vmatpush.bf16.msra.mxu0 %v975
        %989 = vmatpush.bf16.msra.mxu0 %v974
        %990 = vmatpush.bf16.msra.mxu0 %v973
        %991 = vmatpush.bf16.msra.mxu0 %v972
        %992 = vmatpush.bf16.msra.mxu0 %v971
        %993 = vmatpush.bf16.msra.mxu0 %v970
        %994 = vmatmul.bf16.gmra.mxu0 %v556
        %v995 = vpop.f32.mrf.mxu0
        %v996 = vadd.f32 %v899, %v995
        %v997 = vpop.f32.mrf.mxu0
        %v998 = vadd.f32 %v901, %v997
        %999 = vmatmul.bf16.gmra.mxu0 %v439
        %v1000 = vpop.f32.mrf.mxu0
        %v1001 = vadd.f32 %v904, %v1000
        %v1002 = vpop.f32.mrf.mxu0
        %v1003 = vadd.f32 %v906, %v1002
        %1004 = vmatmul.bf16.gmra.mxu0 %v440
        %v1005 = vpop.f32.mrf.mxu0
        %v1006 = vadd.f32 %v909, %v1005
        %v1007 = vpop.f32.mrf.mxu0
        %v1008 = vadd.f32 %v911, %v1007
        %1009 = vmatmul.bf16.gmra.mxu0 %v441
        %v1010 = vpop.f32.mrf.mxu0
        %v1011 = vadd.f32 %v914, %v1010
        %v1012 = vpop.f32.mrf.mxu0
        %v1013 = vadd.f32 %v916, %v1012
        %1014 = vmatmul.bf16.gmra.mxu0 %v442
        %v1015 = vpop.f32.mrf.mxu0
        %v1016 = vadd.f32 %v919, %v1015
        %v1017 = vpop.f32.mrf.mxu0
        %v1018 = vadd.f32 %v921, %v1017
        %1019 = vmatmul.bf16.gmra.mxu0 %v443
        %v1020 = vpop.f32.mrf.mxu0
        %v1021 = vadd.f32 %v924, %v1020
        %v1022 = vpop.f32.mrf.mxu0
        %v1023 = vadd.f32 %v926, %v1022
        %1024 = vmatmul.bf16.gmra.mxu0 %v444
        %v1025 = vpop.f32.mrf.mxu0
        %v1026 = vadd.f32 %v929, %v1025
        %v1027 = vpop.f32.mrf.mxu0
        %v1028 = vadd.f32 %v931, %v1027
        %1029 = vmatmul.bf16.gmra.mxu0 %v445
        %v1030 = vpop.f32.mrf.mxu0
        %v1031 = vadd.f32 %v934, %v1030
        %v1032 = vpop.f32.mrf.mxu0
        %v1033 = vadd.f32 %v936, %v1032
        %1034 = vdwg.mxu0
        %s1035 = scalar_lea.vmem %s1, 448
        %v1036 = vld [vmem:[%s1035] sm:$0xf]
        %v1037 = vld [vmem:[%s1035 + $0x4] sm:$0xf]
        %v1038 = vld [vmem:[%s1035 + $0x8] sm:$0xf]
        %v1039 = vld [vmem:[%s1035 + $0xc] sm:$0xf]
        %v1040 = vld [vmem:[%s1035 + $0x10] sm:$0xf]
        %v1041 = vld [vmem:[%s1035 + $0x14] sm:$0xf]
        %v1042 = vld [vmem:[%s1035 + $0x18] sm:$0xf]
        %v1043 = vld [vmem:[%s1035 + $0x1c] sm:$0xf]
        %v1044 = vld [vmem:[%s1035 + $0x20] sm:$0xf]
        %v1045 = vld [vmem:[%s1035 + $0x24] sm:$0xf]
        %v1046 = vld [vmem:[%s1035 + $0x28] sm:$0xf]
        %v1047 = vld [vmem:[%s1035 + $0x2c] sm:$0xf]
        %v1048 = vld [vmem:[%s1035 + $0x30] sm:$0xf]
        %v1049 = vld [vmem:[%s1035 + $0x34] sm:$0xf]
        %v1050 = vld [vmem:[%s1035 + $0x38] sm:$0xf]
        %v1051 = vld [vmem:[%s1035 + $0x3c] sm:$0xf]
        %v1068 = vunpack.c.l.b16 %v1036
        %v1069 = vunpack.c.l.b16 %v1037
        %v1070 = vunpack.c.l.b16 %v1038
        %v1071 = vunpack.c.l.b16 %v1039
        %v1072 = vunpack.c.l.b16 %v1040
        %v1073 = vunpack.c.l.b16 %v1041
        %v1074 = vunpack.c.l.b16 %v1042
        %v1075 = vunpack.c.l.b16 %v1043
        %v1076 = vunpack.c.l.b16 %v1044
        %v1077 = vunpack.c.l.b16 %v1045
        %v1078 = vunpack.c.l.b16 %v1046
        %v1079 = vunpack.c.l.b16 %v1047
        %v1080 = vunpack.c.l.b16 %v1048
        %v1081 = vunpack.c.l.b16 %v1049
        %v1082 = vunpack.c.l.b16 %v1050
        %v1083 = vunpack.c.l.b16 %v1051
        %v1084 = vpack.c.b16 %v1069, %v1068
        %v1085 = vpack.c.b16 %v1071, %v1070
        %v1086 = vpack.c.b16 %v1073, %v1072
        %v1087 = vpack.c.b16 %v1075, %v1074
        %v1088 = vpack.c.b16 %v1077, %v1076
        %v1089 = vpack.c.b16 %v1079, %v1078
        %v1090 = vpack.c.b16 %v1081, %v1080
        %v1091 = vpack.c.b16 %v1083, %v1082
        %1100 = vmatpush.bf16.msra.mxu0 %v1091
        %1101 = vmatpush.bf16.msra.mxu0 %v1090
        %1102 = vmatpush.bf16.msra.mxu0 %v1089
        %1103 = vmatpush.bf16.msra.mxu0 %v1088
        %1104 = vmatpush.bf16.msra.mxu0 %v1087
        %1105 = vmatpush.bf16.msra.mxu0 %v1086
        %1106 = vmatpush.bf16.msra.mxu0 %v1085
        %1107 = vmatpush.bf16.msra.mxu0 %v1084
        %1108 = vmatmul.bf16.gmra.mxu0 %v440
        %v1109 = vpop.f32.mrf.mxu0
        %v1110 = vadd.f32 0.0, %v1109
        %v1111 = vpop.f32.mrf.mxu0
        %v1112 = vadd.f32 0.0, %v1111
        %1113 = vmatmul.bf16.gmra.mxu0 %v441
        %v1114 = vpop.f32.mrf.mxu0
        %v1115 = vadd.f32 0.0, %v1114
        %v1116 = vpop.f32.mrf.mxu0
        %v1117 = vadd.f32 0.0, %v1116
        %1118 = vmatmul.bf16.gmra.mxu0 %v442
        %v1119 = vpop.f32.mrf.mxu0
        %v1120 = vadd.f32 0.0, %v1119
        %v1121 = vpop.f32.mrf.mxu0
        %v1122 = vadd.f32 0.0, %v1121
        %1123 = vmatmul.bf16.gmra.mxu0 %v443
        %v1124 = vpop.f32.mrf.mxu0
        %v1125 = vadd.f32 0.0, %v1124
        %v1126 = vpop.f32.mrf.mxu0
        %v1127 = vadd.f32 0.0, %v1126
        %1128 = vmatmul.bf16.gmra.mxu0 %v444
        %v1129 = vpop.f32.mrf.mxu0
        %v1130 = vadd.f32 0.0, %v1129
        %v1131 = vpop.f32.mrf.mxu0
        %v1132 = vadd.f32 0.0, %v1131
        %1133 = vmatmul.bf16.gmra.mxu0 %v445
        %v1134 = vpop.f32.mrf.mxu0
        %v1135 = vadd.f32 0.0, %v1134
        %v1136 = vpop.f32.mrf.mxu0
        %v1137 = vadd.f32 0.0, %v1136
        %1138 = vmatmul.bf16.gmra.mxu0 %v446
        %v1139 = vpop.f32.mrf.mxu0
        %v1140 = vadd.f32 0.0, %v1139
        %v1141 = vpop.f32.mrf.mxu0
        %v1142 = vadd.f32 0.0, %v1141
        %1143 = vmatmul.bf16.gmra.mxu0 %v676
        %v1144 = vpop.f32.mrf.mxu0
        %v1145 = vadd.f32 0.0, %v1144
        %v1146 = vpop.f32.mrf.mxu0
        %v1147 = vadd.f32 0.0, %v1146
        %1148 = vdwg.mxu0
        %v1149 = vadd.f32 %v996, %v1110
        %v1150 = vadd.f32 %v998, %v1112
        %v1151 = vadd.f32 %v1001, %v1115
        %v1152 = vadd.f32 %v1003, %v1117
        %v1153 = vadd.f32 %v1006, %v1120
        %v1154 = vadd.f32 %v1008, %v1122
        %v1155 = vadd.f32 %v1011, %v1125
        %v1156 = vadd.f32 %v1013, %v1127
        %v1157 = vadd.f32 %v1016, %v1130
        %v1158 = vadd.f32 %v1018, %v1132
        %v1159 = vadd.f32 %v1021, %v1135
        %v1160 = vadd.f32 %v1023, %v1137
        %v1161 = vadd.f32 %v1026, %v1140
        %v1162 = vadd.f32 %v1028, %v1142
        %v1163 = vadd.f32 %v1031, %v1145
        %v1164 = vadd.f32 %v1033, %v1147
        %v1165 = vld [vmem:[#allocation2] sm:$0xff]
        %v1166 = vld [vmem:[#allocation2 + $0x8] sm:$0xff]
        %v1167 = vld [vmem:[#allocation2 + $0x10] sm:$0xff]
        %v1168 = vld [vmem:[#allocation2 + $0x18] sm:$0xff]
        %v1169 = vld [vmem:[#allocation2 + $0x20] sm:$0xff]
        %v1170 = vld [vmem:[#allocation2 + $0x28] sm:$0xff]
        %v1171 = vld [vmem:[#allocation2 + $0x30] sm:$0xff]
        %v1172 = vld [vmem:[#allocation2 + $0x38] sm:$0xff]
        %v1173 = vld [vmem:[#allocation2 + $0x40] sm:$0xff]
        %v1174 = vld [vmem:[#allocation2 + $0x48] sm:$0xff]
        %v1175 = vld [vmem:[#allocation2 + $0x50] sm:$0xff]
        %v1176 = vld [vmem:[#allocation2 + $0x58] sm:$0xff]
        %v1177 = vld [vmem:[#allocation2 + $0x60] sm:$0xff]
        %v1178 = vld [vmem:[#allocation2 + $0x68] sm:$0xff]
        %v1179 = vld [vmem:[#allocation2 + $0x70] sm:$0xff]
        %v1180 = vld [vmem:[#allocation2 + $0x78] sm:$0x7f]
        %vm1197 = vcmask 1046528
        %v1198 = vrot.slane %v1149, 1
        %v1199 = vrot.slane %v1150, 1
        %v1200 = vsel %vm1197, %v1198, %v1199
        %v1201 = vrot.slane %v1151, 1
        %v1202 = vsel %vm1197, %v1199, %v1201
        %v1203 = vrot.slane %v1152, 1
        %v1204 = vsel %vm1197, %v1201, %v1203
        %v1205 = vrot.slane %v1153, 1
        %v1206 = vsel %vm1197, %v1203, %v1205
        %v1207 = vrot.slane %v1154, 1
        %v1208 = vsel %vm1197, %v1205, %v1207
        %v1209 = vrot.slane %v1155, 1
        %v1210 = vsel %vm1197, %v1207, %v1209
        %v1211 = vrot.slane %v1156, 1
        %v1212 = vsel %vm1197, %v1209, %v1211
        %v1213 = vrot.slane %v1157, 1
        %v1214 = vsel %vm1197, %v1211, %v1213
        %v1215 = vrot.slane %v1158, 1
        %v1216 = vsel %vm1197, %v1213, %v1215
        %v1217 = vrot.slane %v1159, 1
        %v1218 = vsel %vm1197, %v1215, %v1217
        %v1219 = vrot.slane %v1160, 1
        %v1220 = vsel %vm1197, %v1217, %v1219
        %v1221 = vrot.slane %v1161, 1
        %v1222 = vsel %vm1197, %v1219, %v1221
        %v1223 = vrot.slane %v1162, 1
        %v1224 = vsel %vm1197, %v1221, %v1223
        %v1225 = vrot.slane %v1163, 1
        %v1226 = vsel %vm1197, %v1223, %v1225
        %v1227 = vrot.slane %v1164, 1
        %v1228 = vsel %vm1197, %v1225, %v1227
        %v1245 = vadd.f32 %v1165, %v1200
        %v1246 = vadd.f32 %v1166, %v1202
        %v1247 = vadd.f32 %v1167, %v1204
        %v1248 = vadd.f32 %v1168, %v1206
        %v1249 = vadd.f32 %v1169, %v1208
        %v1250 = vadd.f32 %v1170, %v1210
        %v1251 = vadd.f32 %v1171, %v1212
        %v1252 = vadd.f32 %v1172, %v1214
        %v1253 = vadd.f32 %v1173, %v1216
        %v1254 = vadd.f32 %v1174, %v1218
        %v1255 = vadd.f32 %v1175, %v1220
        %v1256 = vadd.f32 %v1176, %v1222
        %v1257 = vadd.f32 %v1177, %v1224
        %v1258 = vadd.f32 %v1178, %v1226
        %v1259 = vadd.f32 %v1179, %v1228
        %v1260 = vadd.f32 %v1180, %v1227
        %1261 = vst [vmem:[#allocation2] sm:$0xff] %v1245
        %1262 = vst [vmem:[#allocation2 + $0x8] sm:$0xff] %v1246
        %1263 = vst [vmem:[#allocation2 + $0x10] sm:$0xff] %v1247
        %1264 = vst [vmem:[#allocation2 + $0x18] sm:$0xff] %v1248
        %1265 = vst [vmem:[#allocation2 + $0x20] sm:$0xff] %v1249
        %1266 = vst [vmem:[#allocation2 + $0x28] sm:$0xff] %v1250
        %1267 = vst [vmem:[#allocation2 + $0x30] sm:$0xff] %v1251
        %1268 = vst [vmem:[#allocation2 + $0x38] sm:$0xff] %v1252
        %1269 = vst [vmem:[#allocation2 + $0x40] sm:$0xff] %v1253
        %1270 = vst [vmem:[#allocation2 + $0x48] sm:$0xff] %v1254
        %1271 = vst [vmem:[#allocation2 + $0x50] sm:$0xff] %v1255
        %1272 = vst [vmem:[#allocation2 + $0x58] sm:$0xff] %v1256
        %1273 = vst [vmem:[#allocation2 + $0x60] sm:$0xff] %v1257
        %1274 = vst [vmem:[#allocation2 + $0x68] sm:$0xff] %v1258
        %1275 = vst [vmem:[#allocation2 + $0x70] sm:$0xff] %v1259
        %1276 = vst [vmem:[#allocation2 + $0x78] sm:$0x7f] %v1260
        %s1277 = scalar_lea.vmem %s1, 128
        %v1278 = vld [vmem:[%s1277] sm:$0xf]
        %v1279 = vld [vmem:[%s1277 + $0x4] sm:$0xf]
        %v1280 = vld [vmem:[%s1277 + $0x8] sm:$0xf]
        %v1281 = vld [vmem:[%s1277 + $0xc] sm:$0xf]
        %v1282 = vld [vmem:[%s1277 + $0x10] sm:$0xf]
        %v1283 = vld [vmem:[%s1277 + $0x14] sm:$0xf]
        %v1284 = vld [vmem:[%s1277 + $0x18] sm:$0xf]
        %v1285 = vld [vmem:[%s1277 + $0x1c] sm:$0xf]
        %v1286 = vld [vmem:[%s1277 + $0x20] sm:$0xf]
        %v1287 = vld [vmem:[%s1277 + $0x24] sm:$0xf]
        %v1288 = vld [vmem:[%s1277 + $0x28] sm:$0xf]
        %v1289 = vld [vmem:[%s1277 + $0x2c] sm:$0xf]
        %v1290 = vld [vmem:[%s1277 + $0x30] sm:$0xf]
        %v1291 = vld [vmem:[%s1277 + $0x34] sm:$0xf]
        %v1292 = vld [vmem:[%s1277 + $0x38] sm:$0xf]
        %v1293 = vld [vmem:[%s1277 + $0x3c] sm:$0xf]
        %s1294 = scalar_lea.vmem %s1, 320
        %v1295 = vld [vmem:[%s1294] sm:$0xf]
        %v1296 = vld [vmem:[%s1294 + $0x4] sm:$0xf]
        %v1297 = vld [vmem:[%s1294 + $0x8] sm:$0xf]
        %v1298 = vld [vmem:[%s1294 + $0xc] sm:$0xf]
        %v1299 = vld [vmem:[%s1294 + $0x10] sm:$0xf]
        %v1300 = vld [vmem:[%s1294 + $0x14] sm:$0xf]
        %v1301 = vld [vmem:[%s1294 + $0x18] sm:$0xf]
        %v1302 = vld [vmem:[%s1294 + $0x1c] sm:$0xf]
        %v1303 = vld [vmem:[%s1294 + $0x20] sm:$0xf]
        %v1304 = vld [vmem:[%s1294 + $0x24] sm:$0xf]
        %v1305 = vld [vmem:[%s1294 + $0x28] sm:$0xf]
        %v1306 = vld [vmem:[%s1294 + $0x2c] sm:$0xf]
        %v1307 = vld [vmem:[%s1294 + $0x30] sm:$0xf]
        %v1308 = vld [vmem:[%s1294 + $0x34] sm:$0xf]
        %v1309 = vld [vmem:[%s1294 + $0x38] sm:$0xf]
        %v1310 = vld [vmem:[%s1294 + $0x3c] sm:$0xf]
        %v1327 = vunpack.c.l.b16 %v1295
        %v1328 = vunpack.c.l.b16 %v1296
        %v1329 = vunpack.c.l.b16 %v1297
        %v1330 = vunpack.c.l.b16 %v1298
        %v1331 = vunpack.c.l.b16 %v1299
        %v1332 = vunpack.c.l.b16 %v1300
        %v1333 = vunpack.c.l.b16 %v1301
        %v1334 = vunpack.c.l.b16 %v1302
        %v1335 = vunpack.c.l.b16 %v1303
        %v1336 = vunpack.c.l.b16 %v1304
        %v1337 = vunpack.c.l.b16 %v1305
        %v1338 = vunpack.c.l.b16 %v1306
        %v1339 = vunpack.c.l.b16 %v1307
        %v1340 = vunpack.c.l.b16 %v1308
        %v1341 = vunpack.c.l.b16 %v1309
        %v1342 = vunpack.c.l.b16 %v1310
        %v1343 = vpack.c.b16 %v1328, %v1327
        %v1344 = vpack.c.b16 %v1330, %v1329
        %v1345 = vpack.c.b16 %v1332, %v1331
        %v1346 = vpack.c.b16 %v1334, %v1333
        %v1347 = vpack.c.b16 %v1336, %v1335
        %v1348 = vpack.c.b16 %v1338, %v1337
        %v1349 = vpack.c.b16 %v1340, %v1339
        %v1350 = vpack.c.b16 %v1342, %v1341
        %1359 = vmatpush.bf16.msra.mxu0 %v1350
        %1360 = vmatpush.bf16.msra.mxu0 %v1349
        %1361 = vmatpush.bf16.msra.mxu0 %v1348
        %1362 = vmatpush.bf16.msra.mxu0 %v1347
        %1363 = vmatpush.bf16.msra.mxu0 %v1346
        %1364 = vmatpush.bf16.msra.mxu0 %v1345
        %1365 = vmatpush.bf16.msra.mxu0 %v1344
        %1366 = vmatpush.bf16.msra.mxu0 %v1343
        %1367 = vmatmul.bf16.gmra.mxu0 %v439
        %v1368 = vpop.f32.mrf.mxu0
        %v1369 = vadd.f32 0.0, %v1368
        %v1370 = vpop.f32.mrf.mxu0
        %v1371 = vadd.f32 0.0, %v1370
        %1372 = vmatmul.bf16.gmra.mxu0 %v440
        %v1373 = vpop.f32.mrf.mxu0
        %v1374 = vadd.f32 0.0, %v1373
        %v1375 = vpop.f32.mrf.mxu0
        %v1376 = vadd.f32 0.0, %v1375
        %1377 = vmatmul.bf16.gmra.mxu0 %v441
        %v1378 = vpop.f32.mrf.mxu0
        %v1379 = vadd.f32 0.0, %v1378
        %v1380 = vpop.f32.mrf.mxu0
        %v1381 = vadd.f32 0.0, %v1380
        %1382 = vmatmul.bf16.gmra.mxu0 %v442
        %v1383 = vpop.f32.mrf.mxu0
        %v1384 = vadd.f32 0.0, %v1383
        %v1385 = vpop.f32.mrf.mxu0
        %v1386 = vadd.f32 0.0, %v1385
        %1387 = vmatmul.bf16.gmra.mxu0 %v443
        %v1388 = vpop.f32.mrf.mxu0
        %v1389 = vadd.f32 0.0, %v1388
        %v1390 = vpop.f32.mrf.mxu0
        %v1391 = vadd.f32 0.0, %v1390
        %1392 = vmatmul.bf16.gmra.mxu0 %v444
        %v1393 = vpop.f32.mrf.mxu0
        %v1394 = vadd.f32 0.0, %v1393
        %v1395 = vpop.f32.mrf.mxu0
        %v1396 = vadd.f32 0.0, %v1395
        %1397 = vmatmul.bf16.gmra.mxu0 %v445
        %v1398 = vpop.f32.mrf.mxu0
        %v1399 = vadd.f32 0.0, %v1398
        %v1400 = vpop.f32.mrf.mxu0
        %v1401 = vadd.f32 0.0, %v1400
        %1402 = vmatmul.bf16.gmra.mxu0 %v446
        %v1403 = vpop.f32.mrf.mxu0
        %v1404 = vadd.f32 0.0, %v1403
        %v1405 = vpop.f32.mrf.mxu0
        %v1406 = vadd.f32 0.0, %v1405
        %1407 = vdwg.mxu0
        %v1424 = vunpack.c.l.b16 %v1278
        %v1425 = vunpack.c.l.b16 %v1279
        %v1426 = vunpack.c.l.b16 %v1280
        %v1427 = vunpack.c.l.b16 %v1281
        %v1428 = vunpack.c.l.b16 %v1282
        %v1429 = vunpack.c.l.b16 %v1283
        %v1430 = vunpack.c.l.b16 %v1284
        %v1431 = vunpack.c.l.b16 %v1285
        %v1432 = vunpack.c.l.b16 %v1286
        %v1433 = vunpack.c.l.b16 %v1287
        %v1434 = vunpack.c.l.b16 %v1288
        %v1435 = vunpack.c.l.b16 %v1289
        %v1436 = vunpack.c.l.b16 %v1290
        %v1437 = vunpack.c.l.b16 %v1291
        %v1438 = vunpack.c.l.b16 %v1292
        %v1439 = vunpack.c.l.b16 %v1293
        %v1440 = vpack.c.b16 %v1425, %v1424
        %v1441 = vpack.c.b16 %v1427, %v1426
        %v1442 = vpack.c.b16 %v1429, %v1428
        %v1443 = vpack.c.b16 %v1431, %v1430
        %v1444 = vpack.c.b16 %v1433, %v1432
        %v1445 = vpack.c.b16 %v1435, %v1434
        %v1446 = vpack.c.b16 %v1437, %v1436
        %v1447 = vpack.c.b16 %v1439, %v1438
        %1456 = vmatpush.bf16.msra.mxu0 %v1447
        %1457 = vmatpush.bf16.msra.mxu0 %v1446
        %1458 = vmatpush.bf16.msra.mxu0 %v1445
        %1459 = vmatpush.bf16.msra.mxu0 %v1444
        %1460 = vmatpush.bf16.msra.mxu0 %v1443
        %1461 = vmatpush.bf16.msra.mxu0 %v1442
        %1462 = vmatpush.bf16.msra.mxu0 %v1441
        %1463 = vmatpush.bf16.msra.mxu0 %v1440
        %1464 = vmatmul.bf16.gmra.mxu0 %v556
        %v1465 = vpop.f32.mrf.mxu0
        %v1466 = vadd.f32 %v1369, %v1465
        %v1467 = vpop.f32.mrf.mxu0
        %v1468 = vadd.f32 %v1371, %v1467
        %1469 = vmatmul.bf16.gmra.mxu0 %v439
        %v1470 = vpop.f32.mrf.mxu0
        %v1471 = vadd.f32 %v1374, %v1470
        %v1472 = vpop.f32.mrf.mxu0
        %v1473 = vadd.f32 %v1376, %v1472
        %1474 = vmatmul.bf16.gmra.mxu0 %v440
        %v1475 = vpop.f32.mrf.mxu0
        %v1476 = vadd.f32 %v1379, %v1475
        %v1477 = vpop.f32.mrf.mxu0
        %v1478 = vadd.f32 %v1381, %v1477
        %1479 = vmatmul.bf16.gmra.mxu0 %v441
        %v1480 = vpop.f32.mrf.mxu0
        %v1481 = vadd.f32 %v1384, %v1480
        %v1482 = vpop.f32.mrf.mxu0
        %v1483 = vadd.f32 %v1386, %v1482
        %1484 = vmatmul.bf16.gmra.mxu0 %v442
        %v1485 = vpop.f32.mrf.mxu0
        %v1486 = vadd.f32 %v1389, %v1485
        %v1487 = vpop.f32.mrf.mxu0
        %v1488 = vadd.f32 %v1391, %v1487
        %1489 = vmatmul.bf16.gmra.mxu0 %v443
        %v1490 = vpop.f32.mrf.mxu0
        %v1491 = vadd.f32 %v1394, %v1490
        %v1492 = vpop.f32.mrf.mxu0
        %v1493 = vadd.f32 %v1396, %v1492
        %1494 = vmatmul.bf16.gmra.mxu0 %v444
        %v1495 = vpop.f32.mrf.mxu0
        %v1496 = vadd.f32 %v1399, %v1495
        %v1497 = vpop.f32.mrf.mxu0
        %v1498 = vadd.f32 %v1401, %v1497
        %1499 = vmatmul.bf16.gmra.mxu0 %v445
        %v1500 = vpop.f32.mrf.mxu0
        %v1501 = vadd.f32 %v1404, %v1500
        %v1502 = vpop.f32.mrf.mxu0
        %v1503 = vadd.f32 %v1406, %v1502
        %1504 = vdwg.mxu0
        %s1505 = scalar_lea.vmem %s1, 512
        %v1506 = vld [vmem:[%s1505] sm:$0xf]
        %v1507 = vld [vmem:[%s1505 + $0x4] sm:$0xf]
        %v1508 = vld [vmem:[%s1505 + $0x8] sm:$0xf]
        %v1509 = vld [vmem:[%s1505 + $0xc] sm:$0xf]
        %v1510 = vld [vmem:[%s1505 + $0x10] sm:$0xf]
        %v1511 = vld [vmem:[%s1505 + $0x14] sm:$0xf]
        %v1512 = vld [vmem:[%s1505 + $0x18] sm:$0xf]
        %v1513 = vld [vmem:[%s1505 + $0x1c] sm:$0xf]
        %v1514 = vld [vmem:[%s1505 + $0x20] sm:$0xf]
        %v1515 = vld [vmem:[%s1505 + $0x24] sm:$0xf]
        %v1516 = vld [vmem:[%s1505 + $0x28] sm:$0xf]
        %v1517 = vld [vmem:[%s1505 + $0x2c] sm:$0xf]
        %v1518 = vld [vmem:[%s1505 + $0x30] sm:$0xf]
        %v1519 = vld [vmem:[%s1505 + $0x34] sm:$0xf]
        %v1520 = vld [vmem:[%s1505 + $0x38] sm:$0xf]
        %v1521 = vld [vmem:[%s1505 + $0x3c] sm:$0xf]
        %v1538 = vunpack.c.l.b16 %v1506
        %v1539 = vunpack.c.l.b16 %v1507
        %v1540 = vunpack.c.l.b16 %v1508
        %v1541 = vunpack.c.l.b16 %v1509
        %v1542 = vunpack.c.l.b16 %v1510
        %v1543 = vunpack.c.l.b16 %v1511
        %v1544 = vunpack.c.l.b16 %v1512
        %v1545 = vunpack.c.l.b16 %v1513
        %v1546 = vunpack.c.l.b16 %v1514
        %v1547 = vunpack.c.l.b16 %v1515
        %v1548 = vunpack.c.l.b16 %v1516
        %v1549 = vunpack.c.l.b16 %v1517
        %v1550 = vunpack.c.l.b16 %v1518
        %v1551 = vunpack.c.l.b16 %v1519
        %v1552 = vunpack.c.l.b16 %v1520
        %v1553 = vunpack.c.l.b16 %v1521
        %v1554 = vpack.c.b16 %v1539, %v1538
        %v1555 = vpack.c.b16 %v1541, %v1540
        %v1556 = vpack.c.b16 %v1543, %v1542
        %v1557 = vpack.c.b16 %v1545, %v1544
        %v1558 = vpack.c.b16 %v1547, %v1546
        %v1559 = vpack.c.b16 %v1549, %v1548
        %v1560 = vpack.c.b16 %v1551, %v1550
        %v1561 = vpack.c.b16 %v1553, %v1552
        %1570 = vmatpush.bf16.msra.mxu0 %v1561
        %1571 = vmatpush.bf16.msra.mxu0 %v1560
        %1572 = vmatpush.bf16.msra.mxu0 %v1559
        %1573 = vmatpush.bf16.msra.mxu0 %v1558
        %1574 = vmatpush.bf16.msra.mxu0 %v1557
        %1575 = vmatpush.bf16.msra.mxu0 %v1556
        %1576 = vmatpush.bf16.msra.mxu0 %v1555
        %1577 = vmatpush.bf16.msra.mxu0 %v1554
        %1578 = vmatmul.bf16.gmra.mxu0 %v440
        %v1579 = vpop.f32.mrf.mxu0
        %v1580 = vadd.f32 0.0, %v1579
        %v1581 = vpop.f32.mrf.mxu0
        %v1582 = vadd.f32 0.0, %v1581
        %1583 = vmatmul.bf16.gmra.mxu0 %v441
        %v1584 = vpop.f32.mrf.mxu0
        %v1585 = vadd.f32 0.0, %v1584
        %v1586 = vpop.f32.mrf.mxu0
        %v1587 = vadd.f32 0.0, %v1586
        %1588 = vmatmul.bf16.gmra.mxu0 %v442
        %v1589 = vpop.f32.mrf.mxu0
        %v1590 = vadd.f32 0.0, %v1589
        %v1591 = vpop.f32.mrf.mxu0
        %v1592 = vadd.f32 0.0, %v1591
        %1593 = vmatmul.bf16.gmra.mxu0 %v443
        %v1594 = vpop.f32.mrf.mxu0
        %v1595 = vadd.f32 0.0, %v1594
        %v1596 = vpop.f32.mrf.mxu0
        %v1597 = vadd.f32 0.0, %v1596
        %1598 = vmatmul.bf16.gmra.mxu0 %v444
        %v1599 = vpop.f32.mrf.mxu0
        %v1600 = vadd.f32 0.0, %v1599
        %v1601 = vpop.f32.mrf.mxu0
        %v1602 = vadd.f32 0.0, %v1601
        %1603 = vmatmul.bf16.gmra.mxu0 %v445
        %v1604 = vpop.f32.mrf.mxu0
        %v1605 = vadd.f32 0.0, %v1604
        %v1606 = vpop.f32.mrf.mxu0
        %v1607 = vadd.f32 0.0, %v1606
        %1608 = vmatmul.bf16.gmra.mxu0 %v446
        %v1609 = vpop.f32.mrf.mxu0
        %v1610 = vadd.f32 0.0, %v1609
        %v1611 = vpop.f32.mrf.mxu0
        %v1612 = vadd.f32 0.0, %v1611
        %1613 = vmatmul.bf16.gmra.mxu0 %v676
        %v1614 = vpop.f32.mrf.mxu0
        %v1615 = vadd.f32 0.0, %v1614
        %v1616 = vpop.f32.mrf.mxu0
        %v1617 = vadd.f32 0.0, %v1616
        %1618 = vdwg.mxu0
        %v1619 = vadd.f32 %v1466, %v1580
        %v1620 = vadd.f32 %v1468, %v1582
        %v1621 = vadd.f32 %v1471, %v1585
        %v1622 = vadd.f32 %v1473, %v1587
        %v1623 = vadd.f32 %v1476, %v1590
        %v1624 = vadd.f32 %v1478, %v1592
        %v1625 = vadd.f32 %v1481, %v1595
        %v1626 = vadd.f32 %v1483, %v1597
        %v1627 = vadd.f32 %v1486, %v1600
        %v1628 = vadd.f32 %v1488, %v1602
        %v1629 = vadd.f32 %v1491, %v1605
        %v1630 = vadd.f32 %v1493, %v1607
        %v1631 = vadd.f32 %v1496, %v1610
        %v1632 = vadd.f32 %v1498, %v1612
        %v1633 = vadd.f32 %v1501, %v1615
        %v1634 = vadd.f32 %v1503, %v1617
        %v1635 = vld [vmem:[#allocation2] sm:$0xff]
        %v1636 = vld [vmem:[#allocation2 + $0x8] sm:$0xff]
        %v1637 = vld [vmem:[#allocation2 + $0x10] sm:$0xff]
        %v1638 = vld [vmem:[#allocation2 + $0x18] sm:$0xff]
        %v1639 = vld [vmem:[#allocation2 + $0x20] sm:$0xff]
        %v1640 = vld [vmem:[#allocation2 + $0x28] sm:$0xff]
        %v1641 = vld [vmem:[#allocation2 + $0x30] sm:$0xff]
        %v1642 = vld [vmem:[#allocation2 + $0x38] sm:$0xff]
        %v1643 = vld [vmem:[#allocation2 + $0x40] sm:$0xff]
        %v1644 = vld [vmem:[#allocation2 + $0x48] sm:$0xff]
        %v1645 = vld [vmem:[#allocation2 + $0x50] sm:$0xff]
        %v1646 = vld [vmem:[#allocation2 + $0x58] sm:$0xff]
        %v1647 = vld [vmem:[#allocation2 + $0x60] sm:$0xff]
        %v1648 = vld [vmem:[#allocation2 + $0x68] sm:$0xff]
        %v1649 = vld [vmem:[#allocation2 + $0x70] sm:$0xff]
        %v1650 = vld [vmem:[#allocation2 + $0x78] sm:$0x3f]
        %vm1667 = vcmask 1045504
        %v1668 = vrot.slane %v1619, 2
        %v1669 = vrot.slane %v1620, 2
        %v1670 = vsel %vm1667, %v1668, %v1669
        %v1671 = vrot.slane %v1621, 2
        %v1672 = vsel %vm1667, %v1669, %v1671
        %v1673 = vrot.slane %v1622, 2
        %v1674 = vsel %vm1667, %v1671, %v1673
        %v1675 = vrot.slane %v1623, 2
        %v1676 = vsel %vm1667, %v1673, %v1675
        %v1677 = vrot.slane %v1624, 2
        %v1678 = vsel %vm1667, %v1675, %v1677
        %v1679 = vrot.slane %v1625, 2
        %v1680 = vsel %vm1667, %v1677, %v1679
        %v1681 = vrot.slane %v1626, 2
        %v1682 = vsel %vm1667, %v1679, %v1681
        %v1683 = vrot.slane %v1627, 2
        %v1684 = vsel %vm1667, %v1681, %v1683
        %v1685 = vrot.slane %v1628, 2
        %v1686 = vsel %vm1667, %v1683, %v1685
        %v1687 = vrot.slane %v1629, 2
        %v1688 = vsel %vm1667, %v1685, %v1687
        %v1689 = vrot.slane %v1630, 2
        %v1690 = vsel %vm1667, %v1687, %v1689
        %v1691 = vrot.slane %v1631, 2
        %v1692 = vsel %vm1667, %v1689, %v1691
        %v1693 = vrot.slane %v1632, 2
        %v1694 = vsel %vm1667, %v1691, %v1693
        %v1695 = vrot.slane %v1633, 2
        %v1696 = vsel %vm1667, %v1693, %v1695
        %v1697 = vrot.slane %v1634, 2
        %v1698 = vsel %vm1667, %v1695, %v1697
        %v1715 = vadd.f32 %v1635, %v1670
        %v1716 = vadd.f32 %v1636, %v1672
        %v1717 = vadd.f32 %v1637, %v1674
        %v1718 = vadd.f32 %v1638, %v1676
        %v1719 = vadd.f32 %v1639, %v1678
        %v1720 = vadd.f32 %v1640, %v1680
        %v1721 = vadd.f32 %v1641, %v1682
        %v1722 = vadd.f32 %v1642, %v1684
        %v1723 = vadd.f32 %v1643, %v1686
        %v1724 = vadd.f32 %v1644, %v1688
        %v1725 = vadd.f32 %v1645, %v1690
        %v1726 = vadd.f32 %v1646, %v1692
        %v1727 = vadd.f32 %v1647, %v1694
        %v1728 = vadd.f32 %v1648, %v1696
        %v1729 = vadd.f32 %v1649, %v1698
        %v1730 = vadd.f32 %v1650, %v1697
        %1731 = vst [vmem:[#allocation2] sm:$0xff] %v1715
        %1732 = vst [vmem:[#allocation2 + $0x8] sm:$0xff] %v1716
        %1733 = vst [vmem:[#allocation2 + $0x10] sm:$0xff] %v1717
        %1734 = vst [vmem:[#allocation2 + $0x18] sm:$0xff] %v1718
        %1735 = vst [vmem:[#allocation2 + $0x20] sm:$0xff] %v1719
        %1736 = vst [vmem:[#allocation2 + $0x28] sm:$0xff] %v1720
        %1737 = vst [vmem:[#allocation2 + $0x30] sm:$0xff] %v1721
        %1738 = vst [vmem:[#allocation2 + $0x38] sm:$0xff] %v1722
        %1739 = vst [vmem:[#allocation2 + $0x40] sm:$0xff] %v1723
        %1740 = vst [vmem:[#allocation2 + $0x48] sm:$0xff] %v1724
        %1741 = vst [vmem:[#allocation2 + $0x50] sm:$0xff] %v1725
        %1742 = vst [vmem:[#allocation2 + $0x58] sm:$0xff] %v1726
        %1743 = vst [vmem:[#allocation2 + $0x60] sm:$0xff] %v1727
        %1744 = vst [vmem:[#allocation2 + $0x68] sm:$0xff] %v1728
        %1745 = vst [vmem:[#allocation2 + $0x70] sm:$0xff] %v1729
        %1746 = vst [vmem:[#allocation2 + $0x78] sm:$0x3f] %v1730
      $region44: #{exit_flow.6} parent=39 // pred_fallthru
        _
      %v1747 = vld [vmem:[#allocation2] sm:$0xff]
      %v1748 = vld [vmem:[#allocation2 + $0x8] sm:$0xff]
      %v1749 = vld [vmem:[#allocation2 + $0x10] sm:$0xff]
      %v1750 = vld [vmem:[#allocation2 + $0x18] sm:$0xff]
      %v1751 = vld [vmem:[#allocation2 + $0x20] sm:$0xff]
      %v1752 = vld [vmem:[#allocation2 + $0x28] sm:$0xff]
      %v1753 = vld [vmem:[#allocation2 + $0x30] sm:$0xff]
      %v1754 = vld [vmem:[#allocation2 + $0x38] sm:$0xff]
      %v1755 = vld [vmem:[#allocation2 + $0x40] sm:$0xff]
      %v1756 = vld [vmem:[#allocation2 + $0x48] sm:$0xff]
      %v1757 = vld [vmem:[#allocation2 + $0x50] sm:$0xff]
      %v1758 = vld [vmem:[#allocation2 + $0x58] sm:$0xff]
      %v1759 = vld [vmem:[#allocation2 + $0x60] sm:$0xff]
      %v1760 = vld [vmem:[#allocation2 + $0x68] sm:$0xff]
      %v1761 = vld [vmem:[#allocation2 + $0x70] sm:$0xff]
      %v1762 = vld [vmem:[#allocation2 + $0x78] sm:$0xff]
      %v1763 = vpack.c.bf16 %v1748, %v1747
      %v1764 = vpack.c.bf16 %v1750, %v1749
      %v1765 = vpack.c.bf16 %v1752, %v1751
      %v1766 = vpack.c.bf16 %v1754, %v1753
      %v1767 = vpack.c.bf16 %v1756, %v1755
      %v1768 = vpack.c.bf16 %v1758, %v1757
      %v1769 = vpack.c.bf16 %v1760, %v1759
      %v1770 = vpack.c.bf16 %v1762, %v1761
      %v1771 = vld [vmem:[%s275] sm:$0xf]
      %v1772 = vld [vmem:[%s275 + $0x4] sm:$0xf]
      %v1773 = vld [vmem:[%s275 + $0x8] sm:$0xf]
      %v1774 = vld [vmem:[%s275 + $0xc] sm:$0xf]
      %v1775 = vld [vmem:[%s275 + $0x10] sm:$0xf]
      %v1776 = vld [vmem:[%s275 + $0x14] sm:$0xf]
      %v1777 = vld [vmem:[%s275 + $0x18] sm:$0xf]
      %v1778 = vld [vmem:[%s275 + $0x1c] sm:$0xf]
      %v1779 = vld [vmem:[%s275 + $0x20] sm:$0xf]
      %v1780 = vld [vmem:[%s275 + $0x24] sm:$0xf]
      %v1781 = vld [vmem:[%s275 + $0x28] sm:$0xf]
      %v1782 = vld [vmem:[%s275 + $0x2c] sm:$0xf]
      %v1783 = vld [vmem:[%s275 + $0x30] sm:$0xf]
      %v1784 = vld [vmem:[%s275 + $0x34] sm:$0xf]
      %v1785 = vld [vmem:[%s275 + $0x38] sm:$0xf]
      %v1786 = vld [vmem:[%s275 + $0x3c] sm:$0xf]
      %v1803 = vunpack.c.l.b16 %v1771
      %v1804 = vunpack.c.l.b16 %v1772
      %v1805 = vunpack.c.l.b16 %v1773
      %v1806 = vunpack.c.l.b16 %v1774
      %v1807 = vunpack.c.l.b16 %v1775
      %v1808 = vunpack.c.l.b16 %v1776
      %v1809 = vunpack.c.l.b16 %v1777
      %v1810 = vunpack.c.l.b16 %v1778
      %v1811 = vunpack.c.l.b16 %v1779
      %v1812 = vunpack.c.l.b16 %v1780
      %v1813 = vunpack.c.l.b16 %v1781
      %v1814 = vunpack.c.l.b16 %v1782
      %v1815 = vunpack.c.l.b16 %v1783
      %v1816 = vunpack.c.l.b16 %v1784
      %v1817 = vunpack.c.l.b16 %v1785
      %v1818 = vunpack.c.l.b16 %v1786
      %v1819 = vpack.c.b16 %v1804, %v1803
      %v1820 = vpack.c.b16 %v1806, %v1805
      %v1821 = vpack.c.b16 %v1808, %v1807
      %v1822 = vpack.c.b16 %v1810, %v1809
      %v1823 = vpack.c.b16 %v1812, %v1811
      %v1824 = vpack.c.b16 %v1814, %v1813
      %v1825 = vpack.c.b16 %v1816, %v1815
      %v1826 = vpack.c.b16 %v1818, %v1817
      %1835 = vmatpush.bf16.msra.mxu0 %v1826
      %1836 = vmatpush.bf16.msra.mxu0 %v1825
      %1837 = vmatpush.bf16.msra.mxu0 %v1824
      %1838 = vmatpush.bf16.msra.mxu0 %v1823
      %1839 = vmatpush.bf16.msra.mxu0 %v1822
      %1840 = vmatpush.bf16.msra.mxu0 %v1821
      %1841 = vmatpush.bf16.msra.mxu0 %v1820
      %1842 = vmatpush.bf16.msra.mxu0 %v1819
      %1843 = vmatmul.bf16.gmra.mxu0 %v1763
      %v1844 = vpop.f32.mrf.mxu0
      %v1845 = vadd.f32 0.0, %v1844
      %v1846 = vpop.f32.mrf.mxu0
      %1847 = vmatmul.bf16.gmra.mxu0 %v1764
      %v1848 = vpop.f32.mrf.mxu0
      %v1849 = vadd.f32 0.0, %v1848
      %v1850 = vpop.f32.mrf.mxu0
      %1851 = vmatmul.bf16.gmra.mxu0 %v1765
      %v1852 = vpop.f32.mrf.mxu0
      %v1853 = vadd.f32 0.0, %v1852
      %v1854 = vpop.f32.mrf.mxu0
      %1855 = vmatmul.bf16.gmra.mxu0 %v1766
      %v1856 = vpop.f32.mrf.mxu0
      %v1857 = vadd.f32 0.0, %v1856
      %v1858 = vpop.f32.mrf.mxu0
      %1859 = vmatmul.bf16.gmra.mxu0 %v1767
      %v1860 = vpop.f32.mrf.mxu0
      %v1861 = vadd.f32 0.0, %v1860
      %v1862 = vpop.f32.mrf.mxu0
      %1863 = vmatmul.bf16.gmra.mxu0 %v1768
      %v1864 = vpop.f32.mrf.mxu0
      %v1865 = vadd.f32 0.0, %v1864
      %v1866 = vpop.f32.mrf.mxu0
      %1867 = vmatmul.bf16.gmra.mxu0 %v1769
      %v1868 = vpop.f32.mrf.mxu0
      %v1869 = vadd.f32 0.0, %v1868
      %v1870 = vpop.f32.mrf.mxu0
      %1871 = vmatmul.bf16.gmra.mxu0 %v1770
      %v1872 = vpop.f32.mrf.mxu0
      %v1873 = vadd.f32 0.0, %v1872
      %v1874 = vpop.f32.mrf.mxu0
      %1875 = vdwg.mxu0
      %v1876 = vld [vmem:[%s278] sm:$0x1]
      %v1878 = vperm.slane %v1876, 0
      %v1880 = vmul.f32 %v1845, %v1878
      %v1881 = vmul.f32 %v1849, %v1878
      %v1882 = vmul.f32 %v1853, %v1878
      %v1883 = vmul.f32 %v1857, %v1878
      %v1884 = vmul.f32 %v1861, %v1878
      %v1885 = vmul.f32 %v1865, %v1878
      %v1886 = vmul.f32 %v1869, %v1878
      %v1887 = vmul.f32 %v1873, %v1878
      %v1888 = vld [vmem:[%s281] sm:$0x1]
      %v1890 = vperm.slane %v1888, 0
      %v1892 = vadd.f32 %v1880, %v1890
      %v1893 = vadd.f32 %v1881, %v1890
      %v1894 = vadd.f32 %v1882, %v1890
      %v1895 = vadd.f32 %v1883, %v1890
      %v1896 = vadd.f32 %v1884, %v1890
      %v1897 = vadd.f32 %v1885, %v1890
      %v1898 = vadd.f32 %v1886, %v1890
      %v1899 = vadd.f32 %v1887, %v1890
      %v1900 = vmax.f32 %v1892, %v1893
      %v1901 = vmax.f32 %v1893, %v1894
      %v1902 = vmax.f32 %v1901, %v1895
      %v1903 = vmax.f32 %v1895, %v1896
      %v1904 = vmax.f32 %v1903, %v1897
      %v1905 = vmax.f32 %v1897, %v1898
      %v1906 = vmax.f32 %v1905, %v1899
      %v1907 = vpack.c.bf16 %v1900, %v1900
      %v1908 = vpack.c.bf16 %v1902, %v1902
      %v1909 = vpack.c.bf16 %v1904, %v1904
      %v1910 = vpack.c.bf16 %v1906, %v1906
      %1911 = vst [vmem:[%s289] sm:$0xf] %v1907
      %1912 = vst [vmem:[%s289 + $0x4] sm:$0xf] %v1908
      %1913 = vst [vmem:[%s289 + $0x8] sm:$0xf] %v1909
      %1914 = vst [vmem:[%s289 + $0xc] sm:$0xf] %v1910
      %p1915 = scmp.lt.s32.totalorder %s20, 1
      %s1916 = scalar_select %p1915, %s20, 1
      %p1917 = scmp.lt.s32.totalorder %s21, 0
      %s1918 = scalar_select %p1917, %s21, 0
      %s1919 = smul.addr %s1916, 4
      %s1920 = sadd.s32 %s1918, %s1919
      %s1921 = smul.addr %s1920, 4
      %s1922 = scalar_lea.vmem %s5, %s1921
      // Predicated region
      $region45: #{exit_flow.6} parent=39 // pred_check
        %p1923 = pneg %p173
      $region46: #{exit_flow.6} parent=39 // pred_check_branch
        %1925 = sbr.rel (%p1923) target = $region48
      $region47: #{exit_flow.6} parent=39 // pred_region
        _
      $region48: #{exit_flow.6} parent=39 // pred_fallthru
        _
    $region40: #{exit_flow.6} parent=5 // pred_fallthru
      _
    %p1926 = scmp.le.s32.totalorder 2, %s11
    // Predicated region
    $region49: #{exit_flow.6} parent=5 // pred_check
      %p1927 = pneg %p1926
    $region50: #{exit_flow.6} parent=5 // pred_check_branch
      %1929 = sbr.rel (%p1927) target = $region52
    $region51: #{exit_flow.6} parent=5 // pred_region
      %s1930 = ssub.s32 %s11, 2
      // Predicated region
      $region53: #{exit_flow.6} parent=51 // pred_check
        %p1931 = pneg %p179
      $region54: #{exit_flow.6} parent=51 // pred_check_branch
        %1933 = sbr.rel (%p1931) target = $region56
      $region55: #{exit_flow.6} parent=51 // pred_region
        %p1934 = scmp.lt.s32.totalorder %s22, 1
        %s1935 = scalar_select %p1934, %s22, 1
        %p1936 = scmp.lt.s32.totalorder %s23, 0
        %s1937 = scalar_select %p1936, %s23, 0
        %s1938 = smul.addr %s1935, 4
        %s1939 = sadd.s32 %s1937, %s1938
        %s1940 = smul.addr %s1939, 4
        %s1941 = scalar_lea.vmem %s5, %s1940
      $region56: #{exit_flow.6} parent=51 // pred_fallthru
        _
    $region52: #{exit_flow.6} parent=5 // pred_fallthru
      _
  $region6: #{exit_flow.6} parent=0 // loop_footer
    %s15 = sadd.s32 1, %s11
  $region7: #{exit_flow.6} parent=0 // loop_footer_branch
    %10 = sbr.rel target = $region3
  $region8: #{exit_flow.6} parent=0 // loop_exit
    _

// kernel: exit_flow.5
$region0: #{exit_flow.5}
  #allocation0 [shape = 'u32[]', space=smem, size = 0x4, offset = 0x4, fixed_abs, tag = 'smem constant byte address 0x4 - core index']
  #allocation1 [shape = 'u32[72,128]{1,0:T(1,128)}', space=vmem, size = 0x9000, scoped, tag = 'internal scratch']
  #allocation2 [shape = 'f32[128,128]{1,0:T(8,128)}', space=vmem, size = 0x10000, scoped, tag = 'scratch operand']
  %s0 = inlined_call_operand.vmem [shape: bf16[2,10,16,128], index: 0, kind: input, shape index: {}]
  %s1 = inlined_call_operand.vmem [shape: bf16[3,3,128,128], index: 1, kind: input, shape index: {}]
  %s2 = inlined_call_operand.vmem [shape: bf16[128,128], index: 2, kind: input, shape index: {}]
  %s3 = inlined_call_operand.vmem [shape: f32[1,128], index: 3, kind: input, shape index: {}]
  %s4 = inlined_call_operand.vmem [shape: f32[1,128], index: 4, kind: input, shape index: {}]
  %s5 = inlined_call_operand.vmem [shape: bf16[2,8,8,128], index: 5, kind: output, shape index: {}]
  %s6 = sld [smem:[#allocation0]]
  $region57: #{exit_flow.5} parent=0
    _
  %s8 = ssub.s32 1, %s6
  %s9 = scalar_select 0, %s8, %s6
  loop: start=0, step=1, limit=4
  $region2: #{exit_flow.5} parent=0 // loop_pre_header
    _
  $region3: #{exit_flow.5} parent=0 // loop_header
    %s11 = sphi 0, %s15
    %p12 = scmp.ge.s32.totalorder %s11, 4
    %s18 = sphi 0, %s30
    %s19 = sphi 0, %s26
    %s20 = sphi 0, %s18
    %s21 = sphi 0, %s19
    %s22 = sphi 0, %s20
    %s23 = sphi 0, %s21
    %s33 = sphi 0, %s35
    %s36 = sphi 0, %s33
    %s37 = sphi 0, %s36
    %s53 = sphi 0, %s37
    %s57 = sphi 0, %s57
    %s59 = sphi 0, %s57
    %s60 = sphi 0, %s59
    %s74 = sphi 0, %s60
    %s80 = sphi 0, %s82
    %s83 = sphi 0, %s80
    %s84 = sphi 0, %s83
    %s100 = sphi 0, %s84
    %s106 = sphi 0, %s108
    %s109 = sphi 0, %s106
    %s110 = sphi 0, %s109
    %s126 = sphi 0, %s110
    %s132 = sphi 0, %s134
    %s135 = sphi 0, %s132
    %s136 = sphi 0, %s135
    %s152 = sphi 0, %s136
    %s160 = sphi 0, %s162
    %s163 = sphi 0, %s160
    %s164 = sphi 0, %s163
    %s180 = sphi 0, %s164
  $region4: #{exit_flow.5} parent=0 // loop_header_branch
    %14 = sbr.rel (%p12) target = $region8
  $region5: #{exit_flow.5} parent=0 // loop_body
    %s16 = ssub.s32 %s11, 1
    %s17 = ssub.s32 %s11, 2
    %s24 = sadd.s32 1, %s19
    %p25 = scmp.ge.s32.totalorder %s24, 1
    %s26 = scalar_select %p25, 0, %s24
    %s27 = sadd.s32 1, %s18
    %s28 = scalar_select %p25, %s27, %s18
    %p29 = scmp.ge.s32.totalorder %s28, 2
    %s30 = scalar_select %p29, 0, %s28
    %s31 = ssub.s32 %s18, %s30
    %p32 = scmp.eq.s32.totalorder %s31, 0
    %s34 = sadd.s32 %s33, 1
    %s35 = scalar_select %p32, %s33, %s34
    %p38 = pneg %p32
    %p39 = scmp.eq.s32.totalorder %s11, 1
    %p40 = por %p38, %p39
    %p41 = scmp.ne.s32.totalorder %s33, %s36
    %p42 = scmp.eq.s32.totalorder %s11, 0
    %p43 = por %p41, %p42
    %p44 = scmp.ne.s32.totalorder %s33, %s36
    %p45 = scmp.eq.s32.totalorder %s16, 1
    %p46 = por %p44, %p45
    %p47 = scmp.ne.s32.totalorder %s36, %s37
    %p48 = scmp.eq.s32.totalorder %s16, 0
    %p49 = por %p47, %p48
    %p50 = scmp.ne.s32.totalorder %s36, %s37
    %p51 = scmp.eq.s32.totalorder %s17, 1
    %p52 = por %p50, %p51
    %p54 = scmp.ne.s32.totalorder %s37, %s53
    %p55 = scmp.eq.s32.totalorder %s17, 0
    %p56 = por %p54, %p55
    %s58 = sadd.s32 %s57, 1
    %p61 = scmp.eq.s32.totalorder %s11, 1
    %p62 = scmp.ne.s32.totalorder %s57, %s59
    %p63 = scmp.eq.s32.totalorder %s11, 0
    %p64 = por %p62, %p63
    %p65 = scmp.ne.s32.totalorder %s57, %s59
    %p66 = scmp.eq.s32.totalorder %s16, 1
    %p67 = por %p65, %p66
    %p68 = scmp.ne.s32.totalorder %s59, %s60
    %p69 = scmp.eq.s32.totalorder %s16, 0
    %p70 = por %p68, %p69
    %p71 = scmp.ne.s32.totalorder %s59, %s60
    %p72 = scmp.eq.s32.totalorder %s17, 1
    %p73 = por %p71, %p72
    %p75 = scmp.ne.s32.totalorder %s60, %s74
    %p76 = scmp.eq.s32.totalorder %s17, 0
    %p77 = por %p75, %p76
    %s78 = ssub.s32 %s19, %s26
    %p79 = scmp.eq.s32.totalorder %s78, 0
    %s81 = sadd.s32 %s80, 1
    %s82 = scalar_select %p79, %s80, %s81
    %p85 = pneg %p79
    %p86 = scmp.eq.s32.totalorder %s11, 1
    %p87 = por %p85, %p86
    %p88 = scmp.ne.s32.totalorder %s80, %s83
    %p89 = scmp.eq.s32.totalorder %s11, 0
    %p90 = por %p88, %p89
    %p91 = scmp.ne.s32.totalorder %s80, %s83
    %p92 = scmp.eq.s32.totalorder %s16, 1
    %p93 = por %p91, %p92
    %p94 = scmp.ne.s32.totalorder %s83, %s84
    %p95 = scmp.eq.s32.totalorder %s16, 0
    %p96 = por %p94, %p95
    %p97 = scmp.ne.s32.totalorder %s83, %s84
    %p98 = scmp.eq.s32.totalorder %s17, 1
    %p99 = por %p97, %p98
    %p101 = scmp.ne.s32.totalorder %s84, %s100
    %p102 = scmp.eq.s32.totalorder %s17, 0
    %p103 = por %p101, %p102
    %s104 = ssub.s32 %s19, %s26
    %p105 = scmp.eq.s32.totalorder %s104, 0
    %s107 = sadd.s32 %s106, 1
    %s108 = scalar_select %p105, %s106, %s107
    %p111 = pneg %p105
    %p112 = scmp.eq.s32.totalorder %s11, 1
    %p113 = por %p111, %p112
    %p114 = scmp.ne.s32.totalorder %s106, %s109
    %p115 = scmp.eq.s32.totalorder %s11, 0
    %p116 = por %p114, %p115
    %p117 = scmp.ne.s32.totalorder %s106, %s109
    %p118 = scmp.eq.s32.totalorder %s16, 1
    %p119 = por %p117, %p118
    %p120 = scmp.ne.s32.totalorder %s109, %s110
    %p121 = scmp.eq.s32.totalorder %s16, 0
    %p122 = por %p120, %p121
    %p123 = scmp.ne.s32.totalorder %s109, %s110
    %p124 = scmp.eq.s32.totalorder %s17, 1
    %p125 = por %p123, %p124
    %p127 = scmp.ne.s32.totalorder %s110, %s126
    %p128 = scmp.eq.s32.totalorder %s17, 0
    %p129 = por %p127, %p128
    %s130 = ssub.s32 %s19, %s26
    %p131 = scmp.eq.s32.totalorder %s130, 0
    %s133 = sadd.s32 %s132, 1
    %s134 = scalar_select %p131, %s132, %s133
    %p137 = pneg %p131
    %p138 = scmp.eq.s32.totalorder %s11, 1
    %p139 = por %p137, %p138
    %p140 = scmp.ne.s32.totalorder %s132, %s135
    %p141 = scmp.eq.s32.totalorder %s11, 0
    %p142 = por %p140, %p141
    %p143 = scmp.ne.s32.totalorder %s132, %s135
    %p144 = scmp.eq.s32.totalorder %s16, 1
    %p145 = por %p143, %p144
    %p146 = scmp.ne.s32.totalorder %s135, %s136
    %p147 = scmp.eq.s32.totalorder %s16, 0
    %p148 = por %p146, %p147
    %p149 = scmp.ne.s32.totalorder %s135, %s136
    %p150 = scmp.eq.s32.totalorder %s17, 1
    %p151 = por %p149, %p150
    %p153 = scmp.ne.s32.totalorder %s136, %s152
    %p154 = scmp.eq.s32.totalorder %s17, 0
    %p155 = por %p153, %p154
    %s156 = ssub.s32 %s18, %s30
    %s157 = ssub.s32 %s19, %s26
    %s158 = sor.u32 %s156, %s157
    %p159 = scmp.eq.s32.totalorder %s158, 0
    %s161 = sadd.s32 %s160, 1
    %s162 = scalar_select %p159, %s160, %s161
    %p165 = pneg %p159
    %p166 = scmp.eq.s32.totalorder %s11, 1
    %p167 = por %p165, %p166
    %p168 = scmp.ne.s32.totalorder %s160, %s163
    %p169 = scmp.eq.s32.totalorder %s11, 0
    %p170 = por %p168, %p169
    %p171 = scmp.ne.s32.totalorder %s160, %s163
    %p172 = scmp.eq.s32.totalorder %s16, 1
    %p173 = por %p171, %p172
    %p174 = scmp.ne.s32.totalorder %s163, %s164
    %p175 = scmp.eq.s32.totalorder %s16, 0
    %p176 = por %p174, %p175
    %p177 = scmp.ne.s32.totalorder %s163, %s164
    %p178 = scmp.eq.s32.totalorder %s17, 1
    %p179 = por %p177, %p178
    %p181 = scmp.ne.s32.totalorder %s164, %s180
    %p182 = scmp.eq.s32.totalorder %s17, 0
    %p183 = por %p181, %p182
    %p184 = scmp.le.s32.totalorder 1, %s11
    %p185 = scmp.lt.s32.totalorder %s11, 3
    %p186 = pnand %p184, %p185
    %p187 = pneg %p186
    // Predicated region
    $region9: #{exit_flow.5} parent=5 // pred_check
      _
    $region10: #{exit_flow.5} parent=5 // pred_check_branch
      %189 = sbr.rel (%p186) target = $region12
    $region11: #{exit_flow.5} parent=5 // pred_region
      %s190 = ssub.s32 %s11, 1
      // Predicated region
      $region13: #{exit_flow.5} parent=11 // pred_check
        %p191 = pneg %p70
      $region14: #{exit_flow.5} parent=11 // pred_check_branch
        %193 = sbr.rel (%p191) target = $region16
      $region15: #{exit_flow.5} parent=11 // pred_region
        _
      $region16: #{exit_flow.5} parent=11 // pred_fallthru
        _
      // Predicated region
      $region17: #{exit_flow.5} parent=11 // pred_check
        %p194 = pneg %p96
      $region18: #{exit_flow.5} parent=11 // pred_check_branch
        %196 = sbr.rel (%p194) target = $region20
      $region19: #{exit_flow.5} parent=11 // pred_region
        %p197 = scmp.lt.s32.totalorder %s21, 0
        %s198 = scalar_select %p197, %s21, 0
        %s199 = smul.addr %s198, 4
        %s200 = scalar_lea.vmem %s2, %s199
      $region20: #{exit_flow.5} parent=11 // pred_fallthru
        _
      // Predicated region
      $region21: #{exit_flow.5} parent=11 // pred_check
        %p201 = pneg %p122
      $region22: #{exit_flow.5} parent=11 // pred_check_branch
        %203 = sbr.rel (%p201) target = $region24
      $region23: #{exit_flow.5} parent=11 // pred_region
        %p204 = scmp.lt.s32.totalorder %s21, 0
        %s205 = scalar_select %p204, %s21, 0
        %s206 = scalar_lea.vmem %s3, %s205
      $region24: #{exit_flow.5} parent=11 // pred_fallthru
        _
      // Predicated region
      $region25: #{exit_flow.5} parent=11 // pred_check
        %p207 = pneg %p148
      $region26: #{exit_flow.5} parent=11 // pred_check_branch
        %209 = sbr.rel (%p207) target = $region28
      $region27: #{exit_flow.5} parent=11 // pred_region
        %p210 = scmp.lt.s32.totalorder %s21, 0
        %s211 = scalar_select %p210, %s21, 0
        %s212 = scalar_lea.vmem %s4, %s211
      $region28: #{exit_flow.5} parent=11 // pred_fallthru
        _
    $region12: #{exit_flow.5} parent=5 // pred_fallthru
      _
    %p213 = scmp.lt.s32.totalorder %s11, 2
    // Predicated region
    $region29: #{exit_flow.5} parent=5 // pred_check
      %p214 = pneg %p213
    $region30: #{exit_flow.5} parent=5 // pred_check_branch
      %216 = sbr.rel (%p214) target = $region32
    $region31: #{exit_flow.5} parent=5 // pred_region
      // Predicated region
      $region33: #{exit_flow.5} parent=31 // pred_check
        %p217 = pneg %p43
      $region34: #{exit_flow.5} parent=31 // pred_check_branch
        %219 = sbr.rel (%p217) target = $region36
      $region35: #{exit_flow.5} parent=31 // pred_region
        %p220 = scmp.lt.s32.totalorder %s18, 1
        %s221 = scalar_select %p220, %s18, 1
        %s222 = smul.addr %s221, 20
        %s223 = smul.addr %s222, 4
        %s224 = scalar_lea.vmem %s0, %s223
      $region36: #{exit_flow.5} parent=31 // pred_fallthru
        _
    $region32: #{exit_flow.5} parent=5 // pred_fallthru
      _
    %p225 = scmp.le.s32.totalorder 1, %s11
    %p226 = scmp.lt.s32.totalorder %s11, 3
    %p227 = pnand %p225, %p226
    %p228 = pneg %p227
    // Predicated region
    $region37: #{exit_flow.5} parent=5 // pred_check
      _
    $region38: #{exit_flow.5} parent=5 // pred_check_branch
      %230 = sbr.rel (%p227) target = $region40
    $region39: #{exit_flow.5} parent=5 // pred_region
      %s231 = ssub.s32 %s11, 1
      %p232 = scmp.lt.s32.totalorder %s20, 1
      %s233 = scalar_select %p232, %s20, 1
      %s234 = smul.addr %s233, 20
      %s235 = smul.addr %s234, 4
      %s236 = scalar_lea.vmem %s0, %s235
      %p237 = pneg %p49
      %p238 = pneg %p46
      %p239 = pneg %p70
      %p240 = pneg %p67
      %p241 = scmp.lt.s32.totalorder %s21, 0
      %s242 = scalar_select %p241, %s21, 0
      %s243 = smul.addr %s242, 4
      %s244 = scalar_lea.vmem %s2, %s243
      %p245 = pneg %p96
      %p246 = pneg %p93
      %p247 = scmp.lt.s32.totalorder %s21, 0
      %s248 = scalar_select %p247, %s21, 0
      %s249 = scalar_lea.vmem %s3, %s248
      %p250 = pneg %p122
      %p251 = pneg %p119
      %p252 = scmp.lt.s32.totalorder %s21, 0
      %s253 = scalar_select %p252, %s21, 0
      %s254 = scalar_lea.vmem %s4, %s253
      %p255 = pneg %p148
      %p256 = pneg %p145
      %p257 = pneg %p176
      %p258 = pneg %p173
      %p259 = scmp.lt.s32.totalorder %s20, 1
      %s260 = scalar_select %p259, %s20, 1
      %p261 = scmp.lt.s32.totalorder %s21, 0
      %s262 = scalar_select %p261, %s21, 0
      %s263 = smul.addr %s260, 8
      %s264 = sadd.s32 %s262, %s263
      %s265 = smul.addr %s264, 4
      %s266 = scalar_lea.vmem %s5, %s265
      %p267 = scmp.lt.s32.totalorder %s20, 1
      %s268 = scalar_select %p267, %s20, 1
      %s269 = smul.addr %s268, 20
      %s270 = smul.addr %s269, 4
      %s271 = scalar_lea.vmem %s0, %s270
      %p272 = scmp.lt.s32.totalorder %s21, 0
      %s273 = scalar_select %p272, %s21, 0
      %s274 = smul.addr %s273, 4
      %s275 = scalar_lea.vmem %s2, %s274
      %p276 = scmp.lt.s32.totalorder %s21, 0
      %s277 = scalar_select %p276, %s21, 0
      %s278 = scalar_lea.vmem %s3, %s277
      %p279 = scmp.lt.s32.totalorder %s21, 0
      %s280 = scalar_select %p279, %s21, 0
      %s281 = scalar_lea.vmem %s4, %s280
      %p282 = scmp.lt.s32.totalorder %s20, 1
      %s283 = scalar_select %p282, %s20, 1
      %p284 = scmp.lt.s32.totalorder %s21, 0
      %s285 = scalar_select %p284, %s21, 0
      %s286 = smul.addr %s283, 8
      %s287 = sadd.s32 %s285, %s286
      %s288 = smul.addr %s287, 4
      %s289 = scalar_lea.vmem %s5, %s288
      %p290 = scmp.eq.s32.totalorder %s21, 0
      // Predicated region
      $region41: #{exit_flow.5} parent=39 // pred_check
        %p291 = pneg %p290
      $region42: #{exit_flow.5} parent=39 // pred_check_branch
        %293 = sbr.rel (%p291) target = $region44
      $region43: #{exit_flow.5} parent=39 // pred_region
        %v294 = vld [vmem:[%s271] sm:$0xf]
        %v295 = vld [vmem:[%s271 + $0x4] sm:$0xf]
        %v296 = vld [vmem:[%s271 + $0x8] sm:$0xf]
        %v297 = vld [vmem:[%s271 + $0xc] sm:$0xf]
        %v298 = vld [vmem:[%s271 + $0x10] sm:$0xf]
        %v299 = vld [vmem:[%s271 + $0x14] sm:$0xf]
        %v300 = vld [vmem:[%s271 + $0x18] sm:$0xf]
        %v301 = vld [vmem:[%s271 + $0x1c] sm:$0xf]
        %v302 = vld [vmem:[%s271 + $0x20] sm:$0xf]
        %v303 = vld [vmem:[%s271 + $0x24] sm:$0xf]
        %v304 = vld [vmem:[%s271 + $0x28] sm:$0xf]
        %v305 = vld [vmem:[%s271 + $0x2c] sm:$0xf]
        %v306 = vld [vmem:[%s271 + $0x30] sm:$0xf]
        %v307 = vld [vmem:[%s271 + $0x34] sm:$0xf]
        %v308 = vld [vmem:[%s271 + $0x38] sm:$0xf]
        %v309 = vld [vmem:[%s271 + $0x3c] sm:$0xf]
        %v310 = vld [vmem:[%s271 + $0x40] sm:$0xf]
        %v311 = vld [vmem:[%s271 + $0x44] sm:$0xf]
        %v312 = vld [vmem:[%s271 + $0x48] sm:$0xf]
        %v313 = vld [vmem:[%s271 + $0x4c] sm:$0xf]
        %v314 = vunpack.c.l.bf16 %v294
        %v315 = vunpack.c.l.bf16 %v295
        %v316 = vunpack.c.l.bf16 %v296
        %v317 = vunpack.c.l.bf16 %v297
        %v318 = vunpack.c.l.bf16 %v298
        %v319 = vunpack.c.l.bf16 %v299
        %v320 = vunpack.c.l.bf16 %v300
        %v321 = vunpack.c.l.bf16 %v301
        %v322 = vunpack.c.l.bf16 %v302
        %v323 = vunpack.c.l.bf16 %v303
        %v324 = vunpack.c.l.bf16 %v304
        %v325 = vunpack.c.l.bf16 %v305
        %v326 = vunpack.c.l.bf16 %v306
        %v327 = vunpack.c.l.bf16 %v307
        %v328 = vunpack.c.l.bf16 %v308
        %v329 = vunpack.c.l.bf16 %v309
        %v330 = vunpack.c.l.bf16 %v310
        %v331 = vunpack.c.l.bf16 %v311
        %v332 = vunpack.c.l.bf16 %v312
        %v333 = vunpack.c.l.bf16 %v313
        %v334 = vmax.f32 %v314, 0.0
        %v335 = vmax.f32 %v315, 0.0
        %v336 = vmax.f32 %v316, 0.0
        %v337 = vmax.f32 %v317, 0.0
        %v338 = vmax.f32 %v318, 0.0
        %v339 = vmax.f32 %v319, 0.0
        %v340 = vmax.f32 %v320, 0.0
        %v341 = vmax.f32 %v321, 0.0
        %v342 = vmax.f32 %v322, 0.0
        %v343 = vmax.f32 %v323, 0.0
        %v344 = vmax.f32 %v324, 0.0
        %v345 = vmax.f32 %v325, 0.0
        %v346 = vmax.f32 %v326, 0.0
        %v347 = vmax.f32 %v327, 0.0
        %v348 = vmax.f32 %v328, 0.0
        %v349 = vmax.f32 %v329, 0.0
        %v350 = vmax.f32 %v330, 0.0
        %v351 = vmax.f32 %v331, 0.0
        %v352 = vmax.f32 %v332, 0.0
        %v353 = vmax.f32 %v333, 0.0
        %v354 = vpack.c.bf16 %v334, %v334
        %v355 = vpack.c.bf16 %v335, %v335
        %v356 = vpack.c.bf16 %v336, %v336
        %v357 = vpack.c.bf16 %v337, %v337
        %v358 = vpack.c.bf16 %v338, %v338
        %v359 = vpack.c.bf16 %v339, %v339
        %v360 = vpack.c.bf16 %v340, %v340
        %v361 = vpack.c.bf16 %v341, %v341
        %v362 = vpack.c.bf16 %v342, %v342
        %v363 = vpack.c.bf16 %v343, %v343
        %v364 = vpack.c.bf16 %v344, %v344
        %v365 = vpack.c.bf16 %v345, %v345
        %v366 = vpack.c.bf16 %v346, %v346
        %v367 = vpack.c.bf16 %v347, %v347
        %v368 = vpack.c.bf16 %v348, %v348
        %v369 = vpack.c.bf16 %v349, %v349
        %v370 = vpack.c.bf16 %v350, %v350
        %v371 = vpack.c.bf16 %v351, %v351
        %v372 = vpack.c.bf16 %v352, %v352
        %v373 = vpack.c.bf16 %v353, %v353
        %v374 = vld [vmem:[%s1] sm:$0xf]
        %v375 = vld [vmem:[%s1 + $0x4] sm:$0xf]
        %v376 = vld [vmem:[%s1 + $0x8] sm:$0xf]
        %v377 = vld [vmem:[%s1 + $0xc] sm:$0xf]
        %v378 = vld [vmem:[%s1 + $0x10] sm:$0xf]
        %v379 = vld [vmem:[%s1 + $0x14] sm:$0xf]
        %v380 = vld [vmem:[%s1 + $0x18] sm:$0xf]
        %v381 = vld [vmem:[%s1 + $0x1c] sm:$0xf]
        %v382 = vld [vmem:[%s1 + $0x20] sm:$0xf]
        %v383 = vld [vmem:[%s1 + $0x24] sm:$0xf]
        %v384 = vld [vmem:[%s1 + $0x28] sm:$0xf]
        %v385 = vld [vmem:[%s1 + $0x2c] sm:$0xf]
        %v386 = vld [vmem:[%s1 + $0x30] sm:$0xf]
        %v387 = vld [vmem:[%s1 + $0x34] sm:$0xf]
        %v388 = vld [vmem:[%s1 + $0x38] sm:$0xf]
        %v389 = vld [vmem:[%s1 + $0x3c] sm:$0xf]
        %s390 = scalar_lea.vmem %s1, 192
        %v391 = vld [vmem:[%s390] sm:$0xf]
        %v392 = vld [vmem:[%s390 + $0x4] sm:$0xf]
        %v393 = vld [vmem:[%s390 + $0x8] sm:$0xf]
        %v394 = vld [vmem:[%s390 + $0xc] sm:$0xf]
        %v395 = vld [vmem:[%s390 + $0x10] sm:$0xf]
        %v396 = vld [vmem:[%s390 + $0x14] sm:$0xf]
        %v397 = vld [vmem:[%s390 + $0x18] sm:$0xf]
        %v398 = vld [vmem:[%s390 + $0x1c] sm:$0xf]
        %v399 = vld [vmem:[%s390 + $0x20] sm:$0xf]
        %v400 = vld [vmem:[%s390 + $0x24] sm:$0xf]
        %v401 = vld [vmem:[%s390 + $0x28] sm:$0xf]
        %v402 = vld [vmem:[%s390 + $0x2c] sm:$0xf]
        %v403 = vld [vmem:[%s390 + $0x30] sm:$0xf]
        %v404 = vld [vmem:[%s390 + $0x34] sm:$0xf]
        %v405 = vld [vmem:[%s390 + $0x38] sm:$0xf]
        %v406 = vld [vmem:[%s390 + $0x3c] sm:$0xf]
        %v423 = vunpack.c.l.b16 %v356
        %v424 = vunpack.c.l.b16 %v357
        %v425 = vunpack.c.l.b16 %v358
        %v426 = vunpack.c.l.b16 %v359
        %v427 = vunpack.c.l.b16 %v360
        %v428 = vunpack.c.l.b16 %v361
        %v429 = vunpack.c.l.b16 %v362
        %v430 = vunpack.c.l.b16 %v363
        %v431 = vunpack.c.l.b16 %v364
        %v432 = vunpack.c.l.b16 %v365
        %v433 = vunpack.c.l.b16 %v366
        %v434 = vunpack.c.l.b16 %v367
        %v435 = vunpack.c.l.b16 %v368
        %v436 = vunpack.c.l.b16 %v369
        %v437 = vunpack.c.l.b16 %v370
        %v438 = vunpack.c.l.b16 %v371
        %v439 = vpack.c.b16 %v424, %v423
        %v440 = vpack.c.b16 %v426, %v425
        %v441 = vpack.c.b16 %v428, %v427
        %v442 = vpack.c.b16 %v430, %v429
        %v443 = vpack.c.b16 %v432, %v431
        %v444 = vpack.c.b16 %v434, %v433
        %v445 = vpack.c.b16 %v436, %v435
        %v446 = vpack.c.b16 %v438, %v437
        %v471 = vunpack.c.l.b16 %v391
        %v472 = vunpack.c.l.b16 %v392
        %v473 = vunpack.c.l.b16 %v393
        %v474 = vunpack.c.l.b16 %v394
        %v475 = vunpack.c.l.b16 %v395
        %v476 = vunpack.c.l.b16 %v396
        %v477 = vunpack.c.l.b16 %v397
        %v478 = vunpack.c.l.b16 %v398
        %v479 = vunpack.c.l.b16 %v399
        %v480 = vunpack.c.l.b16 %v400
        %v481 = vunpack.c.l.b16 %v401
        %v482 = vunpack.c.l.b16 %v402
        %v483 = vunpack.c.l.b16 %v403
        %v484 = vunpack.c.l.b16 %v404
        %v485 = vunpack.c.l.b16 %v405
        %v486 = vunpack.c.l.b16 %v406
        %v487 = vpack.c.b16 %v472, %v471
        %v488 = vpack.c.b16 %v474, %v473
        %v489 = vpack.c.b16 %v476, %v475
        %v490 = vpack.c.b16 %v478, %v477
        %v491 = vpack.c.b16 %v480, %v479
        %v492 = vpack.c.b16 %v482, %v481
        %v493 = vpack.c.b16 %v484, %v483
        %v494 = vpack.c.b16 %v486, %v485
        %503 = vmatpush.bf16.msra.mxu0 %v494
        %504 = vmatpush.bf16.msra.mxu0 %v493
        %505 = vmatpush.bf16.msra.mxu0 %v492
        %506 = vmatpush.bf16.msra.mxu0 %v491
        %507 = vmatpush.bf16.msra.mxu0 %v490
        %508 = vmatpush.bf16.msra.mxu0 %v489
        %509 = vmatpush.bf16.msra.mxu0 %v488
        %510 = vmatpush.bf16.msra.mxu0 %v487
        %511 = vmatmul.bf16.gmra.mxu0 %v439
        %v512 = vpop.f32.mrf.mxu0
        %v513 = vadd.f32 0.0, %v512
        %v514 = vpop.f32.mrf.mxu0
        %v515 = vadd.f32 0.0, %v514
        %516 = vmatmul.bf16.gmra.mxu0 %v440
        %v517 = vpop.f32.mrf.mxu0
        %v518 = vadd.f32 0.0, %v517
        %v519 = vpop.f32.mrf.mxu0
        %v520 = vadd.f32 0.0, %v519
        %521 = vmatmul.bf16.gmra.mxu0 %v441
        %v522 = vpop.f32.mrf.mxu0
        %v523 = vadd.f32 0.0, %v522
        %v524 = vpop.f32.mrf.mxu0
        %v525 = vadd.f32 0.0, %v524
        %526 = vmatmul.bf16.gmra.mxu0 %v442
        %v527 = vpop.f32.mrf.mxu0
        %v528 = vadd.f32 0.0, %v527
        %v529 = vpop.f32.mrf.mxu0
        %v530 = vadd.f32 0.0, %v529
        %531 = vmatmul.bf16.gmra.mxu0 %v443
        %v532 = vpop.f32.mrf.mxu0
        %v533 = vadd.f32 0.0, %v532
        %v534 = vpop.f32.mrf.mxu0
        %v535 = vadd.f32 0.0, %v534
        %536 = vmatmul.bf16.gmra.mxu0 %v444
        %v537 = vpop.f32.mrf.mxu0
        %v538 = vadd.f32 0.0, %v537
        %v539 = vpop.f32.mrf.mxu0
        %v540 = vadd.f32 0.0, %v539
        %541 = vmatmul.bf16.gmra.mxu0 %v445
        %v542 = vpop.f32.mrf.mxu0
        %v543 = vadd.f32 0.0, %v542
        %v544 = vpop.f32.mrf.mxu0
        %v545 = vadd.f32 0.0, %v544
        %546 = vmatmul.bf16.gmra.mxu0 %v446
        %v547 = vpop.f32.mrf.mxu0
        %v548 = vadd.f32 0.0, %v547
        %v549 = vpop.f32.mrf.mxu0
        %v550 = vadd.f32 0.0, %v549
        %551 = vdwg.mxu0
        %v554 = vunpack.c.l.b16 %v354
        %v555 = vunpack.c.l.b16 %v355
        %v556 = vpack.c.b16 %v555, %v554
        %v574 = vunpack.c.l.b16 %v374
        %v575 = vunpack.c.l.b16 %v375
        %v576 = vunpack.c.l.b16 %v376
        %v577 = vunpack.c.l.b16 %v377
        %v578 = vunpack.c.l.b16 %v378
        %v579 = vunpack.c.l.b16 %v379
        %v580 = vunpack.c.l.b16 %v380
        %v581 = vunpack.c.l.b16 %v381
        %v582 = vunpack.c.l.b16 %v382
        %v583 = vunpack.c.l.b16 %v383
        %v584 = vunpack.c.l.b16 %v384
        %v585 = vunpack.c.l.b16 %v385
        %v586 = vunpack.c.l.b16 %v386
        %v587 = vunpack.c.l.b16 %v387
        %v588 = vunpack.c.l.b16 %v388
        %v589 = vunpack.c.l.b16 %v389
        %v590 = vpack.c.b16 %v575, %v574
        %v591 = vpack.c.b16 %v577, %v576
        %v592 = vpack.c.b16 %v579, %v578
        %v593 = vpack.c.b16 %v581, %v580
        %v594 = vpack.c.b16 %v583, %v582
        %v595 = vpack.c.b16 %v585, %v584
        %v596 = vpack.c.b16 %v587, %v586
        %v597 = vpack.c.b16 %v589, %v588
        %606 = vmatpush.bf16.msra.mxu0 %v597
        %607 = vmatpush.bf16.msra.mxu0 %v596
        %608 = vmatpush.bf16.msra.mxu0 %v595
        %609 = vmatpush.bf16.msra.mxu0 %v594
        %610 = vmatpush.bf16.msra.mxu0 %v593
        %611 = vmatpush.bf16.msra.mxu0 %v592
        %612 = vmatpush.bf16.msra.mxu0 %v591
        %613 = vmatpush.bf16.msra.mxu0 %v590
        %614 = vmatmul.bf16.gmra.mxu0 %v556
        %v615 = vpop.f32.mrf.mxu0
        %v616 = vadd.f32 %v513, %v615
        %v617 = vpop.f32.mrf.mxu0
        %v618 = vadd.f32 %v515, %v617
        %619 = vmatmul.bf16.gmra.mxu0 %v439
        %v620 = vpop.f32.mrf.mxu0
        %v621 = vadd.f32 %v518, %v620
        %v622 = vpop.f32.mrf.mxu0
        %v623 = vadd.f32 %v520, %v622
        %624 = vmatmul.bf16.gmra.mxu0 %v440
        %v625 = vpop.f32.mrf.mxu0
        %v626 = vadd.f32 %v523, %v625
        %v627 = vpop.f32.mrf.mxu0
        %v628 = vadd.f32 %v525, %v627
        %629 = vmatmul.bf16.gmra.mxu0 %v441
        %v630 = vpop.f32.mrf.mxu0
        %v631 = vadd.f32 %v528, %v630
        %v632 = vpop.f32.mrf.mxu0
        %v633 = vadd.f32 %v530, %v632
        %634 = vmatmul.bf16.gmra.mxu0 %v442
        %v635 = vpop.f32.mrf.mxu0
        %v636 = vadd.f32 %v533, %v635
        %v637 = vpop.f32.mrf.mxu0
        %v638 = vadd.f32 %v535, %v637
        %639 = vmatmul.bf16.gmra.mxu0 %v443
        %v640 = vpop.f32.mrf.mxu0
        %v641 = vadd.f32 %v538, %v640
        %v642 = vpop.f32.mrf.mxu0
        %v643 = vadd.f32 %v540, %v642
        %644 = vmatmul.bf16.gmra.mxu0 %v444
        %v645 = vpop.f32.mrf.mxu0
        %v646 = vadd.f32 %v543, %v645
        %v647 = vpop.f32.mrf.mxu0
        %v648 = vadd.f32 %v545, %v647
        %649 = vmatmul.bf16.gmra.mxu0 %v445
        %v650 = vpop.f32.mrf.mxu0
        %v651 = vadd.f32 %v548, %v650
        %v652 = vpop.f32.mrf.mxu0
        %v653 = vadd.f32 %v550, %v652
        %654 = vdwg.mxu0
        %s655 = scalar_lea.vmem %s1, 384
        %v656 = vld [vmem:[%s655] sm:$0xf]
        %v657 = vld [vmem:[%s655 + $0x4] sm:$0xf]
        %v658 = vld [vmem:[%s655 + $0x8] sm:$0xf]
        %v659 = vld [vmem:[%s655 + $0xc] sm:$0xf]
        %v660 = vld [vmem:[%s655 + $0x10] sm:$0xf]
        %v661 = vld [vmem:[%s655 + $0x14] sm:$0xf]
        %v662 = vld [vmem:[%s655 + $0x18] sm:$0xf]
        %v663 = vld [vmem:[%s655 + $0x1c] sm:$0xf]
        %v664 = vld [vmem:[%s655 + $0x20] sm:$0xf]
        %v665 = vld [vmem:[%s655 + $0x24] sm:$0xf]
        %v666 = vld [vmem:[%s655 + $0x28] sm:$0xf]
        %v667 = vld [vmem:[%s655 + $0x2c] sm:$0xf]
        %v668 = vld [vmem:[%s655 + $0x30] sm:$0xf]
        %v669 = vld [vmem:[%s655 + $0x34] sm:$0xf]
        %v670 = vld [vmem:[%s655 + $0x38] sm:$0xf]
        %v671 = vld [vmem:[%s655 + $0x3c] sm:$0xf]
        %v674 = vunpack.c.l.b16 %v372
        %v675 = vunpack.c.l.b16 %v373
        %v676 = vpack.c.b16 %v675, %v674
        %v694 = vunpack.c.l.b16 %v656
        %v695 = vunpack.c.l.b16 %v657
        %v696 = vunpack.c.l.b16 %v658
        %v697 = vunpack.c.l.b16 %v659
        %v698 = vunpack.c.l.b16 %v660
        %v699 = vunpack.c.l.b16 %v661
        %v700 = vunpack.c.l.b16 %v662
        %v701 = vunpack.c.l.b16 %v663
        %v702 = vunpack.c.l.b16 %v664
        %v703 = vunpack.c.l.b16 %v665
        %v704 = vunpack.c.l.b16 %v666
        %v705 = vunpack.c.l.b16 %v667
        %v706 = vunpack.c.l.b16 %v668
        %v707 = vunpack.c.l.b16 %v669
        %v708 = vunpack.c.l.b16 %v670
        %v709 = vunpack.c.l.b16 %v671
        %v710 = vpack.c.b16 %v695, %v694
        %v711 = vpack.c.b16 %v697, %v696
        %v712 = vpack.c.b16 %v699, %v698
        %v713 = vpack.c.b16 %v701, %v700
        %v714 = vpack.c.b16 %v703, %v702
        %v715 = vpack.c.b16 %v705, %v704
        %v716 = vpack.c.b16 %v707, %v706
        %v717 = vpack.c.b16 %v709, %v708
        %726 = vmatpush.bf16.msra.mxu0 %v717
        %727 = vmatpush.bf16.msra.mxu0 %v716
        %728 = vmatpush.bf16.msra.mxu0 %v715
        %729 = vmatpush.bf16.msra.mxu0 %v714
        %730 = vmatpush.bf16.msra.mxu0 %v713
        %731 = vmatpush.bf16.msra.mxu0 %v712
        %732 = vmatpush.bf16.msra.mxu0 %v711
        %733 = vmatpush.bf16.msra.mxu0 %v710
        %734 = vmatmul.bf16.gmra.mxu0 %v440
        %v735 = vpop.f32.mrf.mxu0
        %v736 = vadd.f32 0.0, %v735
        %v737 = vpop.f32.mrf.mxu0
        %v738 = vadd.f32 0.0, %v737
        %739 = vmatmul.bf16.gmra.mxu0 %v441
        %v740 = vpop.f32.mrf.mxu0
        %v741 = vadd.f32 0.0, %v740
        %v742 = vpop.f32.mrf.mxu0
        %v743 = vadd.f32 0.0, %v742
        %744 = vmatmul.bf16.gmra.mxu0 %v442
        %v745 = vpop.f32.mrf.mxu0
        %v746 = vadd.f32 0.0, %v745
        %v747 = vpop.f32.mrf.mxu0
        %v748 = vadd.f32 0.0, %v747
        %749 = vmatmul.bf16.gmra.mxu0 %v443
        %v750 = vpop.f32.mrf.mxu0
        %v751 = vadd.f32 0.0, %v750
        %v752 = vpop.f32.mrf.mxu0
        %v753 = vadd.f32 0.0, %v752
        %754 = vmatmul.bf16.gmra.mxu0 %v444
        %v755 = vpop.f32.mrf.mxu0
        %v756 = vadd.f32 0.0, %v755
        %v757 = vpop.f32.mrf.mxu0
        %v758 = vadd.f32 0.0, %v757
        %759 = vmatmul.bf16.gmra.mxu0 %v445
        %v760 = vpop.f32.mrf.mxu0
        %v761 = vadd.f32 0.0, %v760
        %v762 = vpop.f32.mrf.mxu0
        %v763 = vadd.f32 0.0, %v762
        %764 = vmatmul.bf16.gmra.mxu0 %v446
        %v765 = vpop.f32.mrf.mxu0
        %v766 = vadd.f32 0.0, %v765
        %v767 = vpop.f32.mrf.mxu0
        %v768 = vadd.f32 0.0, %v767
        %769 = vmatmul.bf16.gmra.mxu0 %v676
        %v770 = vpop.f32.mrf.mxu0
        %v771 = vadd.f32 0.0, %v770
        %v772 = vpop.f32.mrf.mxu0
        %v773 = vadd.f32 0.0, %v772
        %774 = vdwg.mxu0
        %v775 = vadd.f32 %v616, %v736
        %v776 = vadd.f32 %v618, %v738
        %v777 = vadd.f32 %v621, %v741
        %v778 = vadd.f32 %v623, %v743
        %v779 = vadd.f32 %v626, %v746
        %v780 = vadd.f32 %v628, %v748
        %v781 = vadd.f32 %v631, %v751
        %v782 = vadd.f32 %v633, %v753
        %v783 = vadd.f32 %v636, %v756
        %v784 = vadd.f32 %v638, %v758
        %v785 = vadd.f32 %v641, %v761
        %v786 = vadd.f32 %v643, %v763
        %v787 = vadd.f32 %v646, %v766
        %v788 = vadd.f32 %v648, %v768
        %v789 = vadd.f32 %v651, %v771
        %v790 = vadd.f32 %v653, %v773
        %791 = vst [vmem:[#allocation2] sm:$0xff] %v775
        %792 = vst [vmem:[#allocation2 + $0x8] sm:$0xff] %v776
        %793 = vst [vmem:[#allocation2 + $0x10] sm:$0xff] %v777
        %794 = vst [vmem:[#allocation2 + $0x18] sm:$0xff] %v778
        %795 = vst [vmem:[#allocation2 + $0x20] sm:$0xff] %v779
        %796 = vst [vmem:[#allocation2 + $0x28] sm:$0xff] %v780
        %797 = vst [vmem:[#allocation2 + $0x30] sm:$0xff] %v781
        %798 = vst [vmem:[#allocation2 + $0x38] sm:$0xff] %v782
        %799 = vst [vmem:[#allocation2 + $0x40] sm:$0xff] %v783
        %800 = vst [vmem:[#allocation2 + $0x48] sm:$0xff] %v784
        %801 = vst [vmem:[#allocation2 + $0x50] sm:$0xff] %v785
        %802 = vst [vmem:[#allocation2 + $0x58] sm:$0xff] %v786
        %803 = vst [vmem:[#allocation2 + $0x60] sm:$0xff] %v787
        %804 = vst [vmem:[#allocation2 + $0x68] sm:$0xff] %v788
        %805 = vst [vmem:[#allocation2 + $0x70] sm:$0xff] %v789
        %806 = vst [vmem:[#allocation2 + $0x78] sm:$0xff] %v790
        %s807 = scalar_lea.vmem %s1, 64
        %v808 = vld [vmem:[%s807] sm:$0xf]
        %v809 = vld [vmem:[%s807 + $0x4] sm:$0xf]
        %v810 = vld [vmem:[%s807 + $0x8] sm:$0xf]
        %v811 = vld [vmem:[%s807 + $0xc] sm:$0xf]
        %v812 = vld [vmem:[%s807 + $0x10] sm:$0xf]
        %v813 = vld [vmem:[%s807 + $0x14] sm:$0xf]
        %v814 = vld [vmem:[%s807 + $0x18] sm:$0xf]
        %v815 = vld [vmem:[%s807 + $0x1c] sm:$0xf]
        %v816 = vld [vmem:[%s807 + $0x20] sm:$0xf]
        %v817 = vld [vmem:[%s807 + $0x24] sm:$0xf]
        %v818 = vld [vmem:[%s807 + $0x28] sm:$0xf]
        %v819 = vld [vmem:[%s807 + $0x2c] sm:$0xf]
        %v820 = vld [vmem:[%s807 + $0x30] sm:$0xf]
        %v821 = vld [vmem:[%s807 + $0x34] sm:$0xf]
        %v822 = vld [vmem:[%s807 + $0x38] sm:$0xf]
        %v823 = vld [vmem:[%s807 + $0x3c] sm:$0xf]
        %s824 = scalar_lea.vmem %s1, 256
        %v825 = vld [vmem:[%s824] sm:$0xf]
        %v826 = vld [vmem:[%s824 + $0x4] sm:$0xf]
        %v827 = vld [vmem:[%s824 + $0x8] sm:$0xf]
        %v828 = vld [vmem:[%s824 + $0xc] sm:$0xf]
        %v829 = vld [vmem:[%s824 + $0x10] sm:$0xf]
        %v830 = vld [vmem:[%s824 + $0x14] sm:$0xf]
        %v831 = vld [vmem:[%s824 + $0x18] sm:$0xf]
        %v832 = vld [vmem:[%s824 + $0x1c] sm:$0xf]
        %v833 = vld [vmem:[%s824 + $0x20] sm:$0xf]
        %v834 = vld [vmem:[%s824 + $0x24] sm:$0xf]
        %v835 = vld [vmem:[%s824 + $0x28] sm:$0xf]
        %v836 = vld [vmem:[%s824 + $0x2c] sm:$0xf]
        %v837 = vld [vmem:[%s824 + $0x30] sm:$0xf]
        %v838 = vld [vmem:[%s824 + $0x34] sm:$0xf]
        %v839 = vld [vmem:[%s824 + $0x38] sm:$0xf]
        %v840 = vld [vmem:[%s824 + $0x3c] sm:$0xf]
        %v857 = vunpack.c.l.b16 %v825
        %v858 = vunpack.c.l.b16 %v826
        %v859 = vunpack.c.l.b16 %v827
        %v860 = vunpack.c.l.b16 %v828
        %v861 = vunpack.c.l.b16 %v829
        %v862 = vunpack.c.l.b16 %v830
        %v863 = vunpack.c.l.b16 %v831
        %v864 = vunpack.c.l.b16 %v832
        %v865 = vunpack.c.l.b16 %v833
        %v866 = vunpack.c.l.b16 %v834
        %v867 = vunpack.c.l.b16 %v835
        %v868 = vunpack.c.l.b16 %v836
        %v869 = vunpack.c.l.b16 %v837
        %v870 = vunpack.c.l.b16 %v838
        %v871 = vunpack.c.l.b16 %v839
        %v872 = vunpack.c.l.b16 %v840
        %v873 = vpack.c.b16 %v858, %v857
        %v874 = vpack.c.b16 %v860, %v859
        %v875 = vpack.c.b16 %v862, %v861
        %v876 = vpack.c.b16 %v864, %v863
        %v877 = vpack.c.b16 %v866, %v865
        %v878 = vpack.c.b16 %v868, %v867
        %v879 = vpack.c.b16 %v870, %v869
        %v880 = vpack.c.b16 %v872, %v871
        %889 = vmatpush.bf16.msra.mxu0 %v880
        %890 = vmatpush.bf16.msra.mxu0 %v879
        %891 = vmatpush.bf16.msra.mxu0 %v878
        %892 = vmatpush.bf16.msra.mxu0 %v877
        %893 = vmatpush.bf16.msra.mxu0 %v876
        %894 = vmatpush.bf16.msra.mxu0 %v875
        %895 = vmatpush.bf16.msra.mxu0 %v874
        %896 = vmatpush.bf16.msra.mxu0 %v873
        %897 = vmatmul.bf16.gmra.mxu0 %v439
        %v898 = vpop.f32.mrf.mxu0
        %v899 = vadd.f32 0.0, %v898
        %v900 = vpop.f32.mrf.mxu0
        %v901 = vadd.f32 0.0, %v900
        %902 = vmatmul.bf16.gmra.mxu0 %v440
        %v903 = vpop.f32.mrf.mxu0
        %v904 = vadd.f32 0.0, %v903
        %v905 = vpop.f32.mrf.mxu0
        %v906 = vadd.f32 0.0, %v905
        %907 = vmatmul.bf16.gmra.mxu0 %v441
        %v908 = vpop.f32.mrf.mxu0
        %v909 = vadd.f32 0.0, %v908
        %v910 = vpop.f32.mrf.mxu0
        %v911 = vadd.f32 0.0, %v910
        %912 = vmatmul.bf16.gmra.mxu0 %v442
        %v913 = vpop.f32.mrf.mxu0
        %v914 = vadd.f32 0.0, %v913
        %v915 = vpop.f32.mrf.mxu0
        %v916 = vadd.f32 0.0, %v915
        %917 = vmatmul.bf16.gmra.mxu0 %v443
        %v918 = vpop.f32.mrf.mxu0
        %v919 = vadd.f32 0.0, %v918
        %v920 = vpop.f32.mrf.mxu0
        %v921 = vadd.f32 0.0, %v920
        %922 = vmatmul.bf16.gmra.mxu0 %v444
        %v923 = vpop.f32.mrf.mxu0
        %v924 = vadd.f32 0.0, %v923
        %v925 = vpop.f32.mrf.mxu0
        %v926 = vadd.f32 0.0, %v925
        %927 = vmatmul.bf16.gmra.mxu0 %v445
        %v928 = vpop.f32.mrf.mxu0
        %v929 = vadd.f32 0.0, %v928
        %v930 = vpop.f32.mrf.mxu0
        %v931 = vadd.f32 0.0, %v930
        %932 = vmatmul.bf16.gmra.mxu0 %v446
        %v933 = vpop.f32.mrf.mxu0
        %v934 = vadd.f32 0.0, %v933
        %v935 = vpop.f32.mrf.mxu0
        %v936 = vadd.f32 0.0, %v935
        %937 = vdwg.mxu0
        %v954 = vunpack.c.l.b16 %v808
        %v955 = vunpack.c.l.b16 %v809
        %v956 = vunpack.c.l.b16 %v810
        %v957 = vunpack.c.l.b16 %v811
        %v958 = vunpack.c.l.b16 %v812
        %v959 = vunpack.c.l.b16 %v813
        %v960 = vunpack.c.l.b16 %v814
        %v961 = vunpack.c.l.b16 %v815
        %v962 = vunpack.c.l.b16 %v816
        %v963 = vunpack.c.l.b16 %v817
        %v964 = vunpack.c.l.b16 %v818
        %v965 = vunpack.c.l.b16 %v819
        %v966 = vunpack.c.l.b16 %v820
        %v967 = vunpack.c.l.b16 %v821
        %v968 = vunpack.c.l.b16 %v822
        %v969 = vunpack.c.l.b16 %v823
        %v970 = vpack.c.b16 %v955, %v954
        %v971 = vpack.c.b16 %v957, %v956
        %v972 = vpack.c.b16 %v959, %v958
        %v973 = vpack.c.b16 %v961, %v960
        %v974 = vpack.c.b16 %v963, %v962
        %v975 = vpack.c.b16 %v965, %v964
        %v976 = vpack.c.b16 %v967, %v966
        %v977 = vpack.c.b16 %v969, %v968
        %986 = vmatpush.bf16.msra.mxu0 %v977
        %987 = vmatpush.bf16.msra.mxu0 %v976
        %988 = vmatpush.bf16.msra.mxu0 %v975
        %989 = vmatpush.bf16.msra.mxu0 %v974
        %990 = vmatpush.bf16.msra.mxu0 %v973
        %991 = vmatpush.bf16.msra.mxu0 %v972
        %992 = vmatpush.bf16.msra.mxu0 %v971
        %993 = vmatpush.bf16.msra.mxu0 %v970
        %994 = vmatmul.bf16.gmra.mxu0 %v556
        %v995 = vpop.f32.mrf.mxu0
        %v996 = vadd.f32 %v899, %v995
        %v997 = vpop.f32.mrf.mxu0
        %v998 = vadd.f32 %v901, %v997
        %999 = vmatmul.bf16.gmra.mxu0 %v439
        %v1000 = vpop.f32.mrf.mxu0
        %v1001 = vadd.f32 %v904, %v1000
        %v1002 = vpop.f32.mrf.mxu0
        %v1003 = vadd.f32 %v906, %v1002
        %1004 = vmatmul.bf16.gmra.mxu0 %v440
        %v1005 = vpop.f32.mrf.mxu0
        %v1006 = vadd.f32 %v909, %v1005
        %v1007 = vpop.f32.mrf.mxu0
        %v1008 = vadd.f32 %v911, %v1007
        %1009 = vmatmul.bf16.gmra.mxu0 %v441
        %v1010 = vpop.f32.mrf.mxu0
        %v1011 = vadd.f32 %v914, %v1010
        %v1012 = vpop.f32.mrf.mxu0
        %v1013 = vadd.f32 %v916, %v1012
        %1014 = vmatmul.bf16.gmra.mxu0 %v442
        %v1015 = vpop.f32.mrf.mxu0
        %v1016 = vadd.f32 %v919, %v1015
        %v1017 = vpop.f32.mrf.mxu0
        %v1018 = vadd.f32 %v921, %v1017
        %1019 = vmatmul.bf16.gmra.mxu0 %v443
        %v1020 = vpop.f32.mrf.mxu0
        %v1021 = vadd.f32 %v924, %v1020
        %v1022 = vpop.f32.mrf.mxu0
        %v1023 = vadd.f32 %v926, %v1022
        %1024 = vmatmul.bf16.gmra.mxu0 %v444
        %v1025 = vpop.f32.mrf.mxu0
        %v1026 = vadd.f32 %v929, %v1025
        %v1027 = vpop.f32.mrf.mxu0
        %v1028 = vadd.f32 %v931, %v1027
        %1029 = vmatmul.bf16.gmra.mxu0 %v445
        %v1030 = vpop.f32.mrf.mxu0
        %v1031 = vadd.f32 %v934, %v1030
        %v1032 = vpop.f32.mrf.mxu0
        %v1033 = vadd.f32 %v936, %v1032
        %1034 = vdwg.mxu0
        %s1035 = scalar_lea.vmem %s1, 448
        %v1036 = vld [vmem:[%s1035] sm:$0xf]
        %v1037 = vld [vmem:[%s1035 + $0x4] sm:$0xf]
        %v1038 = vld [vmem:[%s1035 + $0x8] sm:$0xf]
        %v1039 = vld [vmem:[%s1035 + $0xc] sm:$0xf]
        %v1040 = vld [vmem:[%s1035 + $0x10] sm:$0xf]
        %v1041 = vld [vmem:[%s1035 + $0x14] sm:$0xf]
        %v1042 = vld [vmem:[%s1035 + $0x18] sm:$0xf]
        %v1043 = vld [vmem:[%s1035 + $0x1c] sm:$0xf]
        %v1044 = vld [vmem:[%s1035 + $0x20] sm:$0xf]
        %v1045 = vld [vmem:[%s1035 + $0x24] sm:$0xf]
        %v1046 = vld [vmem:[%s1035 + $0x28] sm:$0xf]
        %v1047 = vld [vmem:[%s1035 + $0x2c] sm:$0xf]
        %v1048 = vld [vmem:[%s1035 + $0x30] sm:$0xf]
        %v1049 = vld [vmem:[%s1035 + $0x34] sm:$0xf]
        %v1050 = vld [vmem:[%s1035 + $0x38] sm:$0xf]
        %v1051 = vld [vmem:[%s1035 + $0x3c] sm:$0xf]
        %v1068 = vunpack.c.l.b16 %v1036
        %v1069 = vunpack.c.l.b16 %v1037
        %v1070 = vunpack.c.l.b16 %v1038
        %v1071 = vunpack.c.l.b16 %v1039
        %v1072 = vunpack.c.l.b16 %v1040
        %v1073 = vunpack.c.l.b16 %v1041
        %v1074 = vunpack.c.l.b16 %v1042
        %v1075 = vunpack.c.l.b16 %v1043
        %v1076 = vunpack.c.l.b16 %v1044
        %v1077 = vunpack.c.l.b16 %v1045
        %v1078 = vunpack.c.l.b16 %v1046
        %v1079 = vunpack.c.l.b16 %v1047
        %v1080 = vunpack.c.l.b16 %v1048
        %v1081 = vunpack.c.l.b16 %v1049
        %v1082 = vunpack.c.l.b16 %v1050
        %v1083 = vunpack.c.l.b16 %v1051
        %v1084 = vpack.c.b16 %v1069, %v1068
        %v1085 = vpack.c.b16 %v1071, %v1070
        %v1086 = vpack.c.b16 %v1073, %v1072
        %v1087 = vpack.c.b16 %v1075, %v1074
        %v1088 = vpack.c.b16 %v1077, %v1076
        %v1089 = vpack.c.b16 %v1079, %v1078
        %v1090 = vpack.c.b16 %v1081, %v1080
        %v1091 = vpack.c.b16 %v1083, %v1082
        %1100 = vmatpush.bf16.msra.mxu0 %v1091
        %1101 = vmatpush.bf16.msra.mxu0 %v1090
        %1102 = vmatpush.bf16.msra.mxu0 %v1089
        %1103 = vmatpush.bf16.msra.mxu0 %v1088
        %1104 = vmatpush.bf16.msra.mxu0 %v1087
        %1105 = vmatpush.bf16.msra.mxu0 %v1086
        %1106 = vmatpush.bf16.msra.mxu0 %v1085
        %1107 = vmatpush.bf16.msra.mxu0 %v1084
        %1108 = vmatmul.bf16.gmra.mxu0 %v440
        %v1109 = vpop.f32.mrf.mxu0
        %v1110 = vadd.f32 0.0, %v1109
        %v1111 = vpop.f32.mrf.mxu0
        %v1112 = vadd.f32 0.0, %v1111
        %1113 = vmatmul.bf16.gmra.mxu0 %v441
        %v1114 = vpop.f32.mrf.mxu0
        %v1115 = vadd.f32 0.0, %v1114
        %v1116 = vpop.f32.mrf.mxu0
        %v1117 = vadd.f32 0.0, %v1116
        %1118 = vmatmul.bf16.gmra.mxu0 %v442
        %v1119 = vpop.f32.mrf.mxu0
        %v1120 = vadd.f32 0.0, %v1119
        %v1121 = vpop.f32.mrf.mxu0
        %v1122 = vadd.f32 0.0, %v1121
        %1123 = vmatmul.bf16.gmra.mxu0 %v443
        %v1124 = vpop.f32.mrf.mxu0
        %v1125 = vadd.f32 0.0, %v1124
        %v1126 = vpop.f32.mrf.mxu0
        %v1127 = vadd.f32 0.0, %v1126
        %1128 = vmatmul.bf16.gmra.mxu0 %v444
        %v1129 = vpop.f32.mrf.mxu0
        %v1130 = vadd.f32 0.0, %v1129
        %v1131 = vpop.f32.mrf.mxu0
        %v1132 = vadd.f32 0.0, %v1131
        %1133 = vmatmul.bf16.gmra.mxu0 %v445
        %v1134 = vpop.f32.mrf.mxu0
        %v1135 = vadd.f32 0.0, %v1134
        %v1136 = vpop.f32.mrf.mxu0
        %v1137 = vadd.f32 0.0, %v1136
        %1138 = vmatmul.bf16.gmra.mxu0 %v446
        %v1139 = vpop.f32.mrf.mxu0
        %v1140 = vadd.f32 0.0, %v1139
        %v1141 = vpop.f32.mrf.mxu0
        %v1142 = vadd.f32 0.0, %v1141
        %1143 = vmatmul.bf16.gmra.mxu0 %v676
        %v1144 = vpop.f32.mrf.mxu0
        %v1145 = vadd.f32 0.0, %v1144
        %v1146 = vpop.f32.mrf.mxu0
        %v1147 = vadd.f32 0.0, %v1146
        %1148 = vdwg.mxu0
        %v1149 = vadd.f32 %v996, %v1110
        %v1150 = vadd.f32 %v998, %v1112
        %v1151 = vadd.f32 %v1001, %v1115
        %v1152 = vadd.f32 %v1003, %v1117
        %v1153 = vadd.f32 %v1006, %v1120
        %v1154 = vadd.f32 %v1008, %v1122
        %v1155 = vadd.f32 %v1011, %v1125
        %v1156 = vadd.f32 %v1013, %v1127
        %v1157 = vadd.f32 %v1016, %v1130
        %v1158 = vadd.f32 %v1018, %v1132
        %v1159 = vadd.f32 %v1021, %v1135
        %v1160 = vadd.f32 %v1023, %v1137
        %v1161 = vadd.f32 %v1026, %v1140
        %v1162 = vadd.f32 %v1028, %v1142
        %v1163 = vadd.f32 %v1031, %v1145
        %v1164 = vadd.f32 %v1033, %v1147
        %v1165 = vld [vmem:[#allocation2] sm:$0xff]
        %v1166 = vld [vmem:[#allocation2 + $0x8] sm:$0xff]
        %v1167 = vld [vmem:[#allocation2 + $0x10] sm:$0xff]
        %v1168 = vld [vmem:[#allocation2 + $0x18] sm:$0xff]
        %v1169 = vld [vmem:[#allocation2 + $0x20] sm:$0xff]
        %v1170 = vld [vmem:[#allocation2 + $0x28] sm:$0xff]
        %v1171 = vld [vmem:[#allocation2 + $0x30] sm:$0xff]
        %v1172 = vld [vmem:[#allocation2 + $0x38] sm:$0xff]
        %v1173 = vld [vmem:[#allocation2 + $0x40] sm:$0xff]
        %v1174 = vld [vmem:[#allocation2 + $0x48] sm:$0xff]
        %v1175 = vld [vmem:[#allocation2 + $0x50] sm:$0xff]
        %v1176 = vld [vmem:[#allocation2 + $0x58] sm:$0xff]
        %v1177 = vld [vmem:[#allocation2 + $0x60] sm:$0xff]
        %v1178 = vld [vmem:[#allocation2 + $0x68] sm:$0xff]
        %v1179 = vld [vmem:[#allocation2 + $0x70] sm:$0xff]
        %v1180 = vld [vmem:[#allocation2 + $0x78] sm:$0x7f]
        %vm1197 = vcmask 1046528
        %v1198 = vrot.slane %v1149, 1
        %v1199 = vrot.slane %v1150, 1
        %v1200 = vsel %vm1197, %v1198, %v1199
        %v1201 = vrot.slane %v1151, 1
        %v1202 = vsel %vm1197, %v1199, %v1201
        %v1203 = vrot.slane %v1152, 1
        %v1204 = vsel %vm1197, %v1201, %v1203
        %v1205 = vrot.slane %v1153, 1
        %v1206 = vsel %vm1197, %v1203, %v1205
        %v1207 = vrot.slane %v1154, 1
        %v1208 = vsel %vm1197, %v1205, %v1207
        %v1209 = vrot.slane %v1155, 1
        %v1210 = vsel %vm1197, %v1207, %v1209
        %v1211 = vrot.slane %v1156, 1
        %v1212 = vsel %vm1197, %v1209, %v1211
        %v1213 = vrot.slane %v1157, 1
        %v1214 = vsel %vm1197, %v1211, %v1213
        %v1215 = vrot.slane %v1158, 1
        %v1216 = vsel %vm1197, %v1213, %v1215
        %v1217 = vrot.slane %v1159, 1
        %v1218 = vsel %vm1197, %v1215, %v1217
        %v1219 = vrot.slane %v1160, 1
        %v1220 = vsel %vm1197, %v1217, %v1219
        %v1221 = vrot.slane %v1161, 1
        %v1222 = vsel %vm1197, %v1219, %v1221
        %v1223 = vrot.slane %v1162, 1
        %v1224 = vsel %vm1197, %v1221, %v1223
        %v1225 = vrot.slane %v1163, 1
        %v1226 = vsel %vm1197, %v1223, %v1225
        %v1227 = vrot.slane %v1164, 1
        %v1228 = vsel %vm1197, %v1225, %v1227
        %v1245 = vadd.f32 %v1165, %v1200
        %v1246 = vadd.f32 %v1166, %v1202
        %v1247 = vadd.f32 %v1167, %v1204
        %v1248 = vadd.f32 %v1168, %v1206
        %v1249 = vadd.f32 %v1169, %v1208
        %v1250 = vadd.f32 %v1170, %v1210
        %v1251 = vadd.f32 %v1171, %v1212
        %v1252 = vadd.f32 %v1172, %v1214
        %v1253 = vadd.f32 %v1173, %v1216
        %v1254 = vadd.f32 %v1174, %v1218
        %v1255 = vadd.f32 %v1175, %v1220
        %v1256 = vadd.f32 %v1176, %v1222
        %v1257 = vadd.f32 %v1177, %v1224
        %v1258 = vadd.f32 %v1178, %v1226
        %v1259 = vadd.f32 %v1179, %v1228
        %v1260 = vadd.f32 %v1180, %v1227
        %1261 = vst [vmem:[#allocation2] sm:$0xff] %v1245
        %1262 = vst [vmem:[#allocation2 + $0x8] sm:$0xff] %v1246
        %1263 = vst [vmem:[#allocation2 + $0x10] sm:$0xff] %v1247
        %1264 = vst [vmem:[#allocation2 + $0x18] sm:$0xff] %v1248
        %1265 = vst [vmem:[#allocation2 + $0x20] sm:$0xff] %v1249
        %1266 = vst [vmem:[#allocation2 + $0x28] sm:$0xff] %v1250
        %1267 = vst [vmem:[#allocation2 + $0x30] sm:$0xff] %v1251
        %1268 = vst [vmem:[#allocation2 + $0x38] sm:$0xff] %v1252
        %1269 = vst [vmem:[#allocation2 + $0x40] sm:$0xff] %v1253
        %1270 = vst [vmem:[#allocation2 + $0x48] sm:$0xff] %v1254
        %1271 = vst [vmem:[#allocation2 + $0x50] sm:$0xff] %v1255
        %1272 = vst [vmem:[#allocation2 + $0x58] sm:$0xff] %v1256
        %1273 = vst [vmem:[#allocation2 + $0x60] sm:$0xff] %v1257
        %1274 = vst [vmem:[#allocation2 + $0x68] sm:$0xff] %v1258
        %1275 = vst [vmem:[#allocation2 + $0x70] sm:$0xff] %v1259
        %1276 = vst [vmem:[#allocation2 + $0x78] sm:$0x7f] %v1260
        %s1277 = scalar_lea.vmem %s1, 128
        %v1278 = vld [vmem:[%s1277] sm:$0xf]
        %v1279 = vld [vmem:[%s1277 + $0x4] sm:$0xf]
        %v1280 = vld [vmem:[%s1277 + $0x8] sm:$0xf]
        %v1281 = vld [vmem:[%s1277 + $0xc] sm:$0xf]
        %v1282 = vld [vmem:[%s1277 + $0x10] sm:$0xf]
        %v1283 = vld [vmem:[%s1277 + $0x14] sm:$0xf]
        %v1284 = vld [vmem:[%s1277 + $0x18] sm:$0xf]
        %v1285 = vld [vmem:[%s1277 + $0x1c] sm:$0xf]
        %v1286 = vld [vmem:[%s1277 + $0x20] sm:$0xf]
        %v1287 = vld [vmem:[%s1277 + $0x24] sm:$0xf]
        %v1288 = vld [vmem:[%s1277 + $0x28] sm:$0xf]
        %v1289 = vld [vmem:[%s1277 + $0x2c] sm:$0xf]
        %v1290 = vld [vmem:[%s1277 + $0x30] sm:$0xf]
        %v1291 = vld [vmem:[%s1277 + $0x34] sm:$0xf]
        %v1292 = vld [vmem:[%s1277 + $0x38] sm:$0xf]
        %v1293 = vld [vmem:[%s1277 + $0x3c] sm:$0xf]
        %s1294 = scalar_lea.vmem %s1, 320
        %v1295 = vld [vmem:[%s1294] sm:$0xf]
        %v1296 = vld [vmem:[%s1294 + $0x4] sm:$0xf]
        %v1297 = vld [vmem:[%s1294 + $0x8] sm:$0xf]
        %v1298 = vld [vmem:[%s1294 + $0xc] sm:$0xf]
        %v1299 = vld [vmem:[%s1294 + $0x10] sm:$0xf]
        %v1300 = vld [vmem:[%s1294 + $0x14] sm:$0xf]
        %v1301 = vld [vmem:[%s1294 + $0x18] sm:$0xf]
        %v1302 = vld [vmem:[%s1294 + $0x1c] sm:$0xf]
        %v1303 = vld [vmem:[%s1294 + $0x20] sm:$0xf]
        %v1304 = vld [vmem:[%s1294 + $0x24] sm:$0xf]
        %v1305 = vld [vmem:[%s1294 + $0x28] sm:$0xf]
        %v1306 = vld [vmem:[%s1294 + $0x2c] sm:$0xf]
        %v1307 = vld [vmem:[%s1294 + $0x30] sm:$0xf]
        %v1308 = vld [vmem:[%s1294 + $0x34] sm:$0xf]
        %v1309 = vld [vmem:[%s1294 + $0x38] sm:$0xf]
        %v1310 = vld [vmem:[%s1294 + $0x3c] sm:$0xf]
        %v1327 = vunpack.c.l.b16 %v1295
        %v1328 = vunpack.c.l.b16 %v1296
        %v1329 = vunpack.c.l.b16 %v1297
        %v1330 = vunpack.c.l.b16 %v1298
        %v1331 = vunpack.c.l.b16 %v1299
        %v1332 = vunpack.c.l.b16 %v1300
        %v1333 = vunpack.c.l.b16 %v1301
        %v1334 = vunpack.c.l.b16 %v1302
        %v1335 = vunpack.c.l.b16 %v1303
        %v1336 = vunpack.c.l.b16 %v1304
        %v1337 = vunpack.c.l.b16 %v1305
        %v1338 = vunpack.c.l.b16 %v1306
        %v1339 = vunpack.c.l.b16 %v1307
        %v1340 = vunpack.c.l.b16 %v1308
        %v1341 = vunpack.c.l.b16 %v1309
        %v1342 = vunpack.c.l.b16 %v1310
        %v1343 = vpack.c.b16 %v1328, %v1327
        %v1344 = vpack.c.b16 %v1330, %v1329
        %v1345 = vpack.c.b16 %v1332, %v1331
        %v1346 = vpack.c.b16 %v1334, %v1333
        %v1347 = vpack.c.b16 %v1336, %v1335
        %v1348 = vpack.c.b16 %v1338, %v1337
        %v1349 = vpack.c.b16 %v1340, %v1339
        %v1350 = vpack.c.b16 %v1342, %v1341
        %1359 = vmatpush.bf16.msra.mxu0 %v1350
        %1360 = vmatpush.bf16.msra.mxu0 %v1349
        %1361 = vmatpush.bf16.msra.mxu0 %v1348
        %1362 = vmatpush.bf16.msra.mxu0 %v1347
        %1363 = vmatpush.bf16.msra.mxu0 %v1346
        %1364 = vmatpush.bf16.msra.mxu0 %v1345
        %1365 = vmatpush.bf16.msra.mxu0 %v1344
        %1366 = vmatpush.bf16.msra.mxu0 %v1343
        %1367 = vmatmul.bf16.gmra.mxu0 %v439
        %v1368 = vpop.f32.mrf.mxu0
        %v1369 = vadd.f32 0.0, %v1368
        %v1370 = vpop.f32.mrf.mxu0
        %v1371 = vadd.f32 0.0, %v1370
        %1372 = vmatmul.bf16.gmra.mxu0 %v440
        %v1373 = vpop.f32.mrf.mxu0
        %v1374 = vadd.f32 0.0, %v1373
        %v1375 = vpop.f32.mrf.mxu0
        %v1376 = vadd.f32 0.0, %v1375
        %1377 = vmatmul.bf16.gmra.mxu0 %v441
        %v1378 = vpop.f32.mrf.mxu0
        %v1379 = vadd.f32 0.0, %v1378
        %v1380 = vpop.f32.mrf.mxu0
        %v1381 = vadd.f32 0.0, %v1380
        %1382 = vmatmul.bf16.gmra.mxu0 %v442
        %v1383 = vpop.f32.mrf.mxu0
        %v1384 = vadd.f32 0.0, %v1383
        %v1385 = vpop.f32.mrf.mxu0
        %v1386 = vadd.f32 0.0, %v1385
        %1387 = vmatmul.bf16.gmra.mxu0 %v443
        %v1388 = vpop.f32.mrf.mxu0
        %v1389 = vadd.f32 0.0, %v1388
        %v1390 = vpop.f32.mrf.mxu0
        %v1391 = vadd.f32 0.0, %v1390
        %1392 = vmatmul.bf16.gmra.mxu0 %v444
        %v1393 = vpop.f32.mrf.mxu0
        %v1394 = vadd.f32 0.0, %v1393
        %v1395 = vpop.f32.mrf.mxu0
        %v1396 = vadd.f32 0.0, %v1395
        %1397 = vmatmul.bf16.gmra.mxu0 %v445
        %v1398 = vpop.f32.mrf.mxu0
        %v1399 = vadd.f32 0.0, %v1398
        %v1400 = vpop.f32.mrf.mxu0
        %v1401 = vadd.f32 0.0, %v1400
        %1402 = vmatmul.bf16.gmra.mxu0 %v446
        %v1403 = vpop.f32.mrf.mxu0
        %v1404 = vadd.f32 0.0, %v1403
        %v1405 = vpop.f32.mrf.mxu0
        %v1406 = vadd.f32 0.0, %v1405
        %1407 = vdwg.mxu0
        %v1424 = vunpack.c.l.b16 %v1278
        %v1425 = vunpack.c.l.b16 %v1279
        %v1426 = vunpack.c.l.b16 %v1280
        %v1427 = vunpack.c.l.b16 %v1281
        %v1428 = vunpack.c.l.b16 %v1282
        %v1429 = vunpack.c.l.b16 %v1283
        %v1430 = vunpack.c.l.b16 %v1284
        %v1431 = vunpack.c.l.b16 %v1285
        %v1432 = vunpack.c.l.b16 %v1286
        %v1433 = vunpack.c.l.b16 %v1287
        %v1434 = vunpack.c.l.b16 %v1288
        %v1435 = vunpack.c.l.b16 %v1289
        %v1436 = vunpack.c.l.b16 %v1290
        %v1437 = vunpack.c.l.b16 %v1291
        %v1438 = vunpack.c.l.b16 %v1292
        %v1439 = vunpack.c.l.b16 %v1293
        %v1440 = vpack.c.b16 %v1425, %v1424
        %v1441 = vpack.c.b16 %v1427, %v1426
        %v1442 = vpack.c.b16 %v1429, %v1428
        %v1443 = vpack.c.b16 %v1431, %v1430
        %v1444 = vpack.c.b16 %v1433, %v1432
        %v1445 = vpack.c.b16 %v1435, %v1434
        %v1446 = vpack.c.b16 %v1437, %v1436
        %v1447 = vpack.c.b16 %v1439, %v1438
        %1456 = vmatpush.bf16.msra.mxu0 %v1447
        %1457 = vmatpush.bf16.msra.mxu0 %v1446
        %1458 = vmatpush.bf16.msra.mxu0 %v1445
        %1459 = vmatpush.bf16.msra.mxu0 %v1444
        %1460 = vmatpush.bf16.msra.mxu0 %v1443
        %1461 = vmatpush.bf16.msra.mxu0 %v1442
        %1462 = vmatpush.bf16.msra.mxu0 %v1441
        %1463 = vmatpush.bf16.msra.mxu0 %v1440
        %1464 = vmatmul.bf16.gmra.mxu0 %v556
        %v1465 = vpop.f32.mrf.mxu0
        %v1466 = vadd.f32 %v1369, %v1465
        %v1467 = vpop.f32.mrf.mxu0
        %v1468 = vadd.f32 %v1371, %v1467
        %1469 = vmatmul.bf16.gmra.mxu0 %v439
        %v1470 = vpop.f32.mrf.mxu0
        %v1471 = vadd.f32 %v1374, %v1470
        %v1472 = vpop.f32.mrf.mxu0
        %v1473 = vadd.f32 %v1376, %v1472
        %1474 = vmatmul.bf16.gmra.mxu0 %v440
        %v1475 = vpop.f32.mrf.mxu0
        %v1476 = vadd.f32 %v1379, %v1475
        %v1477 = vpop.f32.mrf.mxu0
        %v1478 = vadd.f32 %v1381, %v1477
        %1479 = vmatmul.bf16.gmra.mxu0 %v441
        %v1480 = vpop.f32.mrf.mxu0
        %v1481 = vadd.f32 %v1384, %v1480
        %v1482 = vpop.f32.mrf.mxu0
        %v1483 = vadd.f32 %v1386, %v1482
        %1484 = vmatmul.bf16.gmra.mxu0 %v442
        %v1485 = vpop.f32.mrf.mxu0
        %v1486 = vadd.f32 %v1389, %v1485
        %v1487 = vpop.f32.mrf.mxu0
        %v1488 = vadd.f32 %v1391, %v1487
        %1489 = vmatmul.bf16.gmra.mxu0 %v443
        %v1490 = vpop.f32.mrf.mxu0
        %v1491 = vadd.f32 %v1394, %v1490
        %v1492 = vpop.f32.mrf.mxu0
        %v1493 = vadd.f32 %v1396, %v1492
        %1494 = vmatmul.bf16.gmra.mxu0 %v444
        %v1495 = vpop.f32.mrf.mxu0
        %v1496 = vadd.f32 %v1399, %v1495
        %v1497 = vpop.f32.mrf.mxu0
        %v1498 = vadd.f32 %v1401, %v1497
        %1499 = vmatmul.bf16.gmra.mxu0 %v445
        %v1500 = vpop.f32.mrf.mxu0
        %v1501 = vadd.f32 %v1404, %v1500
        %v1502 = vpop.f32.mrf.mxu0
        %v1503 = vadd.f32 %v1406, %v1502
        %1504 = vdwg.mxu0
        %s1505 = scalar_lea.vmem %s1, 512
        %v1506 = vld [vmem:[%s1505] sm:$0xf]
        %v1507 = vld [vmem:[%s1505 + $0x4] sm:$0xf]
        %v1508 = vld [vmem:[%s1505 + $0x8] sm:$0xf]
        %v1509 = vld [vmem:[%s1505 + $0xc] sm:$0xf]
        %v1510 = vld [vmem:[%s1505 + $0x10] sm:$0xf]
        %v1511 = vld [vmem:[%s1505 + $0x14] sm:$0xf]
        %v1512 = vld [vmem:[%s1505 + $0x18] sm:$0xf]
        %v1513 = vld [vmem:[%s1505 + $0x1c] sm:$0xf]
        %v1514 = vld [vmem:[%s1505 + $0x20] sm:$0xf]
        %v1515 = vld [vmem:[%s1505 + $0x24] sm:$0xf]
        %v1516 = vld [vmem:[%s1505 + $0x28] sm:$0xf]
        %v1517 = vld [vmem:[%s1505 + $0x2c] sm:$0xf]
        %v1518 = vld [vmem:[%s1505 + $0x30] sm:$0xf]
        %v1519 = vld [vmem:[%s1505 + $0x34] sm:$0xf]
        %v1520 = vld [vmem:[%s1505 + $0x38] sm:$0xf]
        %v1521 = vld [vmem:[%s1505 + $0x3c] sm:$0xf]
        %v1538 = vunpack.c.l.b16 %v1506
        %v1539 = vunpack.c.l.b16 %v1507
        %v1540 = vunpack.c.l.b16 %v1508
        %v1541 = vunpack.c.l.b16 %v1509
        %v1542 = vunpack.c.l.b16 %v1510
        %v1543 = vunpack.c.l.b16 %v1511
        %v1544 = vunpack.c.l.b16 %v1512
        %v1545 = vunpack.c.l.b16 %v1513
        %v1546 = vunpack.c.l.b16 %v1514
        %v1547 = vunpack.c.l.b16 %v1515
        %v1548 = vunpack.c.l.b16 %v1516
        %v1549 = vunpack.c.l.b16 %v1517
        %v1550 = vunpack.c.l.b16 %v1518
        %v1551 = vunpack.c.l.b16 %v1519
        %v1552 = vunpack.c.l.b16 %v1520
        %v1553 = vunpack.c.l.b16 %v1521
        %v1554 = vpack.c.b16 %v1539, %v1538
        %v1555 = vpack.c.b16 %v1541, %v1540
        %v1556 = vpack.c.b16 %v1543, %v1542
        %v1557 = vpack.c.b16 %v1545, %v1544
        %v1558 = vpack.c.b16 %v1547, %v1546
        %v1559 = vpack.c.b16 %v1549, %v1548
        %v1560 = vpack.c.b16 %v1551, %v1550
        %v1561 = vpack.c.b16 %v1553, %v1552
        %1570 = vmatpush.bf16.msra.mxu0 %v1561
        %1571 = vmatpush.bf16.msra.mxu0 %v1560
        %1572 = vmatpush.bf16.msra.mxu0 %v1559
        %1573 = vmatpush.bf16.msra.mxu0 %v1558
        %1574 = vmatpush.bf16.msra.mxu0 %v1557
        %1575 = vmatpush.bf16.msra.mxu0 %v1556
        %1576 = vmatpush.bf16.msra.mxu0 %v1555
        %1577 = vmatpush.bf16.msra.mxu0 %v1554
        %1578 = vmatmul.bf16.gmra.mxu0 %v440
        %v1579 = vpop.f32.mrf.mxu0
        %v1580 = vadd.f32 0.0, %v1579
        %v1581 = vpop.f32.mrf.mxu0
        %v1582 = vadd.f32 0.0, %v1581
        %1583 = vmatmul.bf16.gmra.mxu0 %v441
        %v1584 = vpop.f32.mrf.mxu0
        %v1585 = vadd.f32 0.0, %v1584
        %v1586 = vpop.f32.mrf.mxu0
        %v1587 = vadd.f32 0.0, %v1586
        %1588 = vmatmul.bf16.gmra.mxu0 %v442
        %v1589 = vpop.f32.mrf.mxu0
        %v1590 = vadd.f32 0.0, %v1589
        %v1591 = vpop.f32.mrf.mxu0
        %v1592 = vadd.f32 0.0, %v1591
        %1593 = vmatmul.bf16.gmra.mxu0 %v443
        %v1594 = vpop.f32.mrf.mxu0
        %v1595 = vadd.f32 0.0, %v1594
        %v1596 = vpop.f32.mrf.mxu0
        %v1597 = vadd.f32 0.0, %v1596
        %1598 = vmatmul.bf16.gmra.mxu0 %v444
        %v1599 = vpop.f32.mrf.mxu0
        %v1600 = vadd.f32 0.0, %v1599
        %v1601 = vpop.f32.mrf.mxu0
        %v1602 = vadd.f32 0.0, %v1601
        %1603 = vmatmul.bf16.gmra.mxu0 %v445
        %v1604 = vpop.f32.mrf.mxu0
        %v1605 = vadd.f32 0.0, %v1604
        %v1606 = vpop.f32.mrf.mxu0
        %v1607 = vadd.f32 0.0, %v1606
        %1608 = vmatmul.bf16.gmra.mxu0 %v446
        %v1609 = vpop.f32.mrf.mxu0
        %v1610 = vadd.f32 0.0, %v1609
        %v1611 = vpop.f32.mrf.mxu0
        %v1612 = vadd.f32 0.0, %v1611
        %1613 = vmatmul.bf16.gmra.mxu0 %v676
        %v1614 = vpop.f32.mrf.mxu0
        %v1615 = vadd.f32 0.0, %v1614
        %v1616 = vpop.f32.mrf.mxu0
        %v1617 = vadd.f32 0.0, %v1616
        %1618 = vdwg.mxu0
        %v1619 = vadd.f32 %v1466, %v1580
        %v1620 = vadd.f32 %v1468, %v1582
        %v1621 = vadd.f32 %v1471, %v1585
        %v1622 = vadd.f32 %v1473, %v1587
        %v1623 = vadd.f32 %v1476, %v1590
        %v1624 = vadd.f32 %v1478, %v1592
        %v1625 = vadd.f32 %v1481, %v1595
        %v1626 = vadd.f32 %v1483, %v1597
        %v1627 = vadd.f32 %v1486, %v1600
        %v1628 = vadd.f32 %v1488, %v1602
        %v1629 = vadd.f32 %v1491, %v1605
        %v1630 = vadd.f32 %v1493, %v1607
        %v1631 = vadd.f32 %v1496, %v1610
        %v1632 = vadd.f32 %v1498, %v1612
        %v1633 = vadd.f32 %v1501, %v1615
        %v1634 = vadd.f32 %v1503, %v1617
        %v1635 = vld [vmem:[#allocation2] sm:$0xff]
        %v1636 = vld [vmem:[#allocation2 + $0x8] sm:$0xff]
        %v1637 = vld [vmem:[#allocation2 + $0x10] sm:$0xff]
        %v1638 = vld [vmem:[#allocation2 + $0x18] sm:$0xff]
        %v1639 = vld [vmem:[#allocation2 + $0x20] sm:$0xff]
        %v1640 = vld [vmem:[#allocation2 + $0x28] sm:$0xff]
        %v1641 = vld [vmem:[#allocation2 + $0x30] sm:$0xff]
        %v1642 = vld [vmem:[#allocation2 + $0x38] sm:$0xff]
        %v1643 = vld [vmem:[#allocation2 + $0x40] sm:$0xff]
        %v1644 = vld [vmem:[#allocation2 + $0x48] sm:$0xff]
        %v1645 = vld [vmem:[#allocation2 + $0x50] sm:$0xff]
        %v1646 = vld [vmem:[#allocation2 + $0x58] sm:$0xff]
        %v1647 = vld [vmem:[#allocation2 + $0x60] sm:$0xff]
        %v1648 = vld [vmem:[#allocation2 + $0x68] sm:$0xff]
        %v1649 = vld [vmem:[#allocation2 + $0x70] sm:$0xff]
        %v1650 = vld [vmem:[#allocation2 + $0x78] sm:$0x3f]
        %vm1667 = vcmask 1045504
        %v1668 = vrot.slane %v1619, 2
        %v1669 = vrot.slane %v1620, 2
        %v1670 = vsel %vm1667, %v1668, %v1669
        %v1671 = vrot.slane %v1621, 2
        %v1672 = vsel %vm1667, %v1669, %v1671
        %v1673 = vrot.slane %v1622, 2
        %v1674 = vsel %vm1667, %v1671, %v1673
        %v1675 = vrot.slane %v1623, 2
        %v1676 = vsel %vm1667, %v1673, %v1675
        %v1677 = vrot.slane %v1624, 2
        %v1678 = vsel %vm1667, %v1675, %v1677
        %v1679 = vrot.slane %v1625, 2
        %v1680 = vsel %vm1667, %v1677, %v1679
        %v1681 = vrot.slane %v1626, 2
        %v1682 = vsel %vm1667, %v1679, %v1681
        %v1683 = vrot.slane %v1627, 2
        %v1684 = vsel %vm1667, %v1681, %v1683
        %v1685 = vrot.slane %v1628, 2
        %v1686 = vsel %vm1667, %v1683, %v1685
        %v1687 = vrot.slane %v1629, 2
        %v1688 = vsel %vm1667, %v1685, %v1687
        %v1689 = vrot.slane %v1630, 2
        %v1690 = vsel %vm1667, %v1687, %v1689
        %v1691 = vrot.slane %v1631, 2
        %v1692 = vsel %vm1667, %v1689, %v1691
        %v1693 = vrot.slane %v1632, 2
        %v1694 = vsel %vm1667, %v1691, %v1693
        %v1695 = vrot.slane %v1633, 2
        %v1696 = vsel %vm1667, %v1693, %v1695
        %v1697 = vrot.slane %v1634, 2
        %v1698 = vsel %vm1667, %v1695, %v1697
        %v1715 = vadd.f32 %v1635, %v1670
        %v1716 = vadd.f32 %v1636, %v1672
        %v1717 = vadd.f32 %v1637, %v1674
        %v1718 = vadd.f32 %v1638, %v1676
        %v1719 = vadd.f32 %v1639, %v1678
        %v1720 = vadd.f32 %v1640, %v1680
        %v1721 = vadd.f32 %v1641, %v1682
        %v1722 = vadd.f32 %v1642, %v1684
        %v1723 = vadd.f32 %v1643, %v1686
        %v1724 = vadd.f32 %v1644, %v1688
        %v1725 = vadd.f32 %v1645, %v1690
        %v1726 = vadd.f32 %v1646, %v1692
        %v1727 = vadd.f32 %v1647, %v1694
        %v1728 = vadd.f32 %v1648, %v1696
        %v1729 = vadd.f32 %v1649, %v1698
        %v1730 = vadd.f32 %v1650, %v1697
        %1731 = vst [vmem:[#allocation2] sm:$0xff] %v1715
        %1732 = vst [vmem:[#allocation2 + $0x8] sm:$0xff] %v1716
        %1733 = vst [vmem:[#allocation2 + $0x10] sm:$0xff] %v1717
        %1734 = vst [vmem:[#allocation2 + $0x18] sm:$0xff] %v1718
        %1735 = vst [vmem:[#allocation2 + $0x20] sm:$0xff] %v1719
        %1736 = vst [vmem:[#allocation2 + $0x28] sm:$0xff] %v1720
        %1737 = vst [vmem:[#allocation2 + $0x30] sm:$0xff] %v1721
        %1738 = vst [vmem:[#allocation2 + $0x38] sm:$0xff] %v1722
        %1739 = vst [vmem:[#allocation2 + $0x40] sm:$0xff] %v1723
        %1740 = vst [vmem:[#allocation2 + $0x48] sm:$0xff] %v1724
        %1741 = vst [vmem:[#allocation2 + $0x50] sm:$0xff] %v1725
        %1742 = vst [vmem:[#allocation2 + $0x58] sm:$0xff] %v1726
        %1743 = vst [vmem:[#allocation2 + $0x60] sm:$0xff] %v1727
        %1744 = vst [vmem:[#allocation2 + $0x68] sm:$0xff] %v1728
        %1745 = vst [vmem:[#allocation2 + $0x70] sm:$0xff] %v1729
        %1746 = vst [vmem:[#allocation2 + $0x78] sm:$0x3f] %v1730
      $region44: #{exit_flow.5} parent=39 // pred_fallthru
        _
      %v1747 = vld [vmem:[#allocation2] sm:$0xff]
      %v1748 = vld [vmem:[#allocation2 + $0x8] sm:$0xff]
      %v1749 = vld [vmem:[#allocation2 + $0x10] sm:$0xff]
      %v1750 = vld [vmem:[#allocation2 + $0x18] sm:$0xff]
      %v1751 = vld [vmem:[#allocation2 + $0x20] sm:$0xff]
      %v1752 = vld [vmem:[#allocation2 + $0x28] sm:$0xff]
      %v1753 = vld [vmem:[#allocation2 + $0x30] sm:$0xff]
      %v1754 = vld [vmem:[#allocation2 + $0x38] sm:$0xff]
      %v1755 = vld [vmem:[#allocation2 + $0x40] sm:$0xff]
      %v1756 = vld [vmem:[#allocation2 + $0x48] sm:$0xff]
      %v1757 = vld [vmem:[#allocation2 + $0x50] sm:$0xff]
      %v1758 = vld [vmem:[#allocation2 + $0x58] sm:$0xff]
      %v1759 = vld [vmem:[#allocation2 + $0x60] sm:$0xff]
      %v1760 = vld [vmem:[#allocation2 + $0x68] sm:$0xff]
      %v1761 = vld [vmem:[#allocation2 + $0x70] sm:$0xff]
      %v1762 = vld [vmem:[#allocation2 + $0x78] sm:$0xff]
      %v1763 = vpack.c.bf16 %v1748, %v1747
      %v1764 = vpack.c.bf16 %v1750, %v1749
      %v1765 = vpack.c.bf16 %v1752, %v1751
      %v1766 = vpack.c.bf16 %v1754, %v1753
      %v1767 = vpack.c.bf16 %v1756, %v1755
      %v1768 = vpack.c.bf16 %v1758, %v1757
      %v1769 = vpack.c.bf16 %v1760, %v1759
      %v1770 = vpack.c.bf16 %v1762, %v1761
      %v1771 = vld [vmem:[%s275] sm:$0xf]
      %v1772 = vld [vmem:[%s275 + $0x4] sm:$0xf]
      %v1773 = vld [vmem:[%s275 + $0x8] sm:$0xf]
      %v1774 = vld [vmem:[%s275 + $0xc] sm:$0xf]
      %v1775 = vld [vmem:[%s275 + $0x10] sm:$0xf]
      %v1776 = vld [vmem:[%s275 + $0x14] sm:$0xf]
      %v1777 = vld [vmem:[%s275 + $0x18] sm:$0xf]
      %v1778 = vld [vmem:[%s275 + $0x1c] sm:$0xf]
      %v1779 = vld [vmem:[%s275 + $0x20] sm:$0xf]
      %v1780 = vld [vmem:[%s275 + $0x24] sm:$0xf]
      %v1781 = vld [vmem:[%s275 + $0x28] sm:$0xf]
      %v1782 = vld [vmem:[%s275 + $0x2c] sm:$0xf]
      %v1783 = vld [vmem:[%s275 + $0x30] sm:$0xf]
      %v1784 = vld [vmem:[%s275 + $0x34] sm:$0xf]
      %v1785 = vld [vmem:[%s275 + $0x38] sm:$0xf]
      %v1786 = vld [vmem:[%s275 + $0x3c] sm:$0xf]
      %v1803 = vunpack.c.l.b16 %v1771
      %v1804 = vunpack.c.l.b16 %v1772
      %v1805 = vunpack.c.l.b16 %v1773
      %v1806 = vunpack.c.l.b16 %v1774
      %v1807 = vunpack.c.l.b16 %v1775
      %v1808 = vunpack.c.l.b16 %v1776
      %v1809 = vunpack.c.l.b16 %v1777
      %v1810 = vunpack.c.l.b16 %v1778
      %v1811 = vunpack.c.l.b16 %v1779
      %v1812 = vunpack.c.l.b16 %v1780
      %v1813 = vunpack.c.l.b16 %v1781
      %v1814 = vunpack.c.l.b16 %v1782
      %v1815 = vunpack.c.l.b16 %v1783
      %v1816 = vunpack.c.l.b16 %v1784
      %v1817 = vunpack.c.l.b16 %v1785
      %v1818 = vunpack.c.l.b16 %v1786
      %v1819 = vpack.c.b16 %v1804, %v1803
      %v1820 = vpack.c.b16 %v1806, %v1805
      %v1821 = vpack.c.b16 %v1808, %v1807
      %v1822 = vpack.c.b16 %v1810, %v1809
      %v1823 = vpack.c.b16 %v1812, %v1811
      %v1824 = vpack.c.b16 %v1814, %v1813
      %v1825 = vpack.c.b16 %v1816, %v1815
      %v1826 = vpack.c.b16 %v1818, %v1817
      %1835 = vmatpush.bf16.msra.mxu0 %v1826
      %1836 = vmatpush.bf16.msra.mxu0 %v1825
      %1837 = vmatpush.bf16.msra.mxu0 %v1824
      %1838 = vmatpush.bf16.msra.mxu0 %v1823
      %1839 = vmatpush.bf16.msra.mxu0 %v1822
      %1840 = vmatpush.bf16.msra.mxu0 %v1821
      %1841 = vmatpush.bf16.msra.mxu0 %v1820
      %1842 = vmatpush.bf16.msra.mxu0 %v1819
      %1843 = vmatmul.bf16.gmra.mxu0 %v1763
      %v1844 = vpop.f32.mrf.mxu0
      %v1845 = vadd.f32 0.0, %v1844
      %v1846 = vpop.f32.mrf.mxu0
      %1847 = vmatmul.bf16.gmra.mxu0 %v1764
      %v1848 = vpop.f32.mrf.mxu0
      %v1849 = vadd.f32 0.0, %v1848
      %v1850 = vpop.f32.mrf.mxu0
      %1851 = vmatmul.bf16.gmra.mxu0 %v1765
      %v1852 = vpop.f32.mrf.mxu0
      %v1853 = vadd.f32 0.0, %v1852
      %v1854 = vpop.f32.mrf.mxu0
      %1855 = vmatmul.bf16.gmra.mxu0 %v1766
      %v1856 = vpop.f32.mrf.mxu0
      %v1857 = vadd.f32 0.0, %v1856
      %v1858 = vpop.f32.mrf.mxu0
      %1859 = vmatmul.bf16.gmra.mxu0 %v1767
      %v1860 = vpop.f32.mrf.mxu0
      %v1861 = vadd.f32 0.0, %v1860
      %v1862 = vpop.f32.mrf.mxu0
      %1863 = vmatmul.bf16.gmra.mxu0 %v1768
      %v1864 = vpop.f32.mrf.mxu0
      %v1865 = vadd.f32 0.0, %v1864
      %v1866 = vpop.f32.mrf.mxu0
      %1867 = vmatmul.bf16.gmra.mxu0 %v1769
      %v1868 = vpop.f32.mrf.mxu0
      %v1869 = vadd.f32 0.0, %v1868
      %v1870 = vpop.f32.mrf.mxu0
      %1871 = vmatmul.bf16.gmra.mxu0 %v1770
      %v1872 = vpop.f32.mrf.mxu0
      %v1873 = vadd.f32 0.0, %v1872
      %v1874 = vpop.f32.mrf.mxu0
      %1875 = vdwg.mxu0
      %v1876 = vld [vmem:[%s278] sm:$0x1]
      %v1878 = vperm.slane %v1876, 0
      %v1880 = vmul.f32 %v1845, %v1878
      %v1881 = vmul.f32 %v1849, %v1878
      %v1882 = vmul.f32 %v1853, %v1878
      %v1883 = vmul.f32 %v1857, %v1878
      %v1884 = vmul.f32 %v1861, %v1878
      %v1885 = vmul.f32 %v1865, %v1878
      %v1886 = vmul.f32 %v1869, %v1878
      %v1887 = vmul.f32 %v1873, %v1878
      %v1888 = vld [vmem:[%s281] sm:$0x1]
      %v1890 = vperm.slane %v1888, 0
      %v1892 = vadd.f32 %v1880, %v1890
      %v1893 = vadd.f32 %v1881, %v1890
      %v1894 = vadd.f32 %v1882, %v1890
      %v1895 = vadd.f32 %v1883, %v1890
      %v1896 = vadd.f32 %v1884, %v1890
      %v1897 = vadd.f32 %v1885, %v1890
      %v1898 = vadd.f32 %v1886, %v1890
      %v1899 = vadd.f32 %v1887, %v1890
      %v1900 = vpack.c.bf16 %v1892, %v1892
      %v1901 = vpack.c.bf16 %v1893, %v1893
      %v1902 = vpack.c.bf16 %v1894, %v1894
      %v1903 = vpack.c.bf16 %v1895, %v1895
      %v1904 = vpack.c.bf16 %v1896, %v1896
      %v1905 = vpack.c.bf16 %v1897, %v1897
      %v1906 = vpack.c.bf16 %v1898, %v1898
      %v1907 = vpack.c.bf16 %v1899, %v1899
      %1908 = vst [vmem:[%s289] sm:$0xf] %v1900
      %1909 = vst [vmem:[%s289 + $0x4] sm:$0xf] %v1901
      %1910 = vst [vmem:[%s289 + $0x8] sm:$0xf] %v1902
      %1911 = vst [vmem:[%s289 + $0xc] sm:$0xf] %v1903
      %1912 = vst [vmem:[%s289 + $0x10] sm:$0xf] %v1904
      %1913 = vst [vmem:[%s289 + $0x14] sm:$0xf] %v1905
      %1914 = vst [vmem:[%s289 + $0x18] sm:$0xf] %v1906
      %1915 = vst [vmem:[%s289 + $0x1c] sm:$0xf] %v1907
      %p1916 = scmp.lt.s32.totalorder %s20, 1
      %s1917 = scalar_select %p1916, %s20, 1
      %p1918 = scmp.lt.s32.totalorder %s21, 0
      %s1919 = scalar_select %p1918, %s21, 0
      %s1920 = smul.addr %s1917, 8
      %s1921 = sadd.s32 %s1919, %s1920
      %s1922 = smul.addr %s1921, 4
      %s1923 = scalar_lea.vmem %s5, %s1922
      // Predicated region
      $region45: #{exit_flow.5} parent=39 // pred_check
        %p1924 = pneg %p173
      $region46: #{exit_flow.5} parent=39 // pred_check_branch
        %1926 = sbr.rel (%p1924) target = $region48
      $region47: #{exit_flow.5} parent=39 // pred_region
        _
      $region48: #{exit_flow.5} parent=39 // pred_fallthru
        _
    $region40: #{exit_flow.5} parent=5 // pred_fallthru
      _
    %p1927 = scmp.le.s32.totalorder 2, %s11
    // Predicated region
    $region49: #{exit_flow.5} parent=5 // pred_check
      %p1928 = pneg %p1927
    $region50: #{exit_flow.5} parent=5 // pred_check_branch
      %1930 = sbr.rel (%p1928) target = $region52
    $region51: #{exit_flow.5} parent=5 // pred_region
      %s1931 = ssub.s32 %s11, 2
      // Predicated region
      $region53: #{exit_flow.5} parent=51 // pred_check
        %p1932 = pneg %p179
      $region54: #{exit_flow.5} parent=51 // pred_check_branch
        %1934 = sbr.rel (%p1932) target = $region56
      $region55: #{exit_flow.5} parent=51 // pred_region
        %p1935 = scmp.lt.s32.totalorder %s22, 1
        %s1936 = scalar_select %p1935, %s22, 1
        %p1937 = scmp.lt.s32.totalorder %s23, 0
        %s1938 = scalar_select %p1937, %s23, 0
        %s1939 = smul.addr %s1936, 8
        %s1940 = sadd.s32 %s1938, %s1939
        %s1941 = smul.addr %s1940, 4
        %s1942 = scalar_lea.vmem %s5, %s1941
      $region56: #{exit_flow.5} parent=51 // pred_fallthru
        _
    $region52: #{exit_flow.5} parent=5 // pred_fallthru
      _
  $region6: #{exit_flow.5} parent=0 // loop_footer
    %s15 = sadd.s32 1, %s11
  $region7: #{exit_flow.5} parent=0 // loop_footer_branch
    %10 = sbr.rel target = $region3
  $region8: #{exit_flow.5} parent=0 // loop_exit
    _

// kernel: exit_flow.8
$region0: #{exit_flow.8}
  #allocation0 [shape = 'u32[]', space=smem, size = 0x4, offset = 0x4, fixed_abs, tag = 'smem constant byte address 0x4 - core index']
  #allocation1 [shape = 'u32[72,128]{1,0:T(1,128)}', space=vmem, size = 0x9000, scoped, tag = 'internal scratch']
  #allocation2 [shape = 'f32[32,128]{1,0:T(8,128)}', space=vmem, size = 0x4000, scoped, tag = 'scratch operand']
  %s0 = inlined_call_operand.vmem [shape: bf16[2,6,8,128], index: 0, kind: input, shape index: {}]
  %s1 = inlined_call_operand.vmem [shape: bf16[3,3,128,128], index: 1, kind: input, shape index: {}]
  %s2 = inlined_call_operand.vmem [shape: bf16[128,128], index: 2, kind: input, shape index: {}]
  %s3 = inlined_call_operand.vmem [shape: f32[1,128], index: 3, kind: input, shape index: {}]
  %s4 = inlined_call_operand.vmem [shape: f32[1,128], index: 4, kind: input, shape index: {}]
  %s5 = inlined_call_operand.vmem [shape: bf16[2,4,4,128], index: 5, kind: output, shape index: {}]
  %s6 = sld [smem:[#allocation0]]
  $region57: #{exit_flow.8} parent=0
    _
  %s8 = ssub.s32 1, %s6
  %s9 = scalar_select 0, %s8, %s6
  loop: start=0, step=1, limit=4
  $region2: #{exit_flow.8} parent=0 // loop_pre_header
    _
  $region3: #{exit_flow.8} parent=0 // loop_header
    %s11 = sphi 0, %s15
    %p12 = scmp.ge.s32.totalorder %s11, 4
    %s18 = sphi 0, %s30
    %s19 = sphi 0, %s26
    %s20 = sphi 0, %s18
    %s21 = sphi 0, %s19
    %s22 = sphi 0, %s20
    %s23 = sphi 0, %s21
    %s33 = sphi 0, %s35
    %s36 = sphi 0, %s33
    %s37 = sphi 0, %s36
    %s53 = sphi 0, %s37
    %s57 = sphi 0, %s57
    %s59 = sphi 0, %s57
    %s60 = sphi 0, %s59
    %s74 = sphi 0, %s60
    %s80 = sphi 0, %s82
    %s83 = sphi 0, %s80
    %s84 = sphi 0, %s83
    %s100 = sphi 0, %s84
    %s106 = sphi 0, %s108
    %s109 = sphi 0, %s106
    %s110 = sphi 0, %s109
    %s126 = sphi 0, %s110
    %s132 = sphi 0, %s134
    %s135 = sphi 0, %s132
    %s136 = sphi 0, %s135
    %s152 = sphi 0, %s136
    %s160 = sphi 0, %s162
    %s163 = sphi 0, %s160
    %s164 = sphi 0, %s163
    %s180 = sphi 0, %s164
  $region4: #{exit_flow.8} parent=0 // loop_header_branch
    %14 = sbr.rel (%p12) target = $region8
  $region5: #{exit_flow.8} parent=0 // loop_body
    %s16 = ssub.s32 %s11, 1
    %s17 = ssub.s32 %s11, 2
    %s24 = sadd.s32 1, %s19
    %p25 = scmp.ge.s32.totalorder %s24, 1
    %s26 = scalar_select %p25, 0, %s24
    %s27 = sadd.s32 1, %s18
    %s28 = scalar_select %p25, %s27, %s18
    %p29 = scmp.ge.s32.totalorder %s28, 2
    %s30 = scalar_select %p29, 0, %s28
    %s31 = ssub.s32 %s18, %s30
    %p32 = scmp.eq.s32.totalorder %s31, 0
    %s34 = sadd.s32 %s33, 1
    %s35 = scalar_select %p32, %s33, %s34
    %p38 = pneg %p32
    %p39 = scmp.eq.s32.totalorder %s11, 1
    %p40 = por %p38, %p39
    %p41 = scmp.ne.s32.totalorder %s33, %s36
    %p42 = scmp.eq.s32.totalorder %s11, 0
    %p43 = por %p41, %p42
    %p44 = scmp.ne.s32.totalorder %s33, %s36
    %p45 = scmp.eq.s32.totalorder %s16, 1
    %p46 = por %p44, %p45
    %p47 = scmp.ne.s32.totalorder %s36, %s37
    %p48 = scmp.eq.s32.totalorder %s16, 0
    %p49 = por %p47, %p48
    %p50 = scmp.ne.s32.totalorder %s36, %s37
    %p51 = scmp.eq.s32.totalorder %s17, 1
    %p52 = por %p50, %p51
    %p54 = scmp.ne.s32.totalorder %s37, %s53
    %p55 = scmp.eq.s32.totalorder %s17, 0
    %p56 = por %p54, %p55
    %s58 = sadd.s32 %s57, 1
    %p61 = scmp.eq.s32.totalorder %s11, 1
    %p62 = scmp.ne.s32.totalorder %s57, %s59
    %p63 = scmp.eq.s32.totalorder %s11, 0
    %p64 = por %p62, %p63
    %p65 = scmp.ne.s32.totalorder %s57, %s59
    %p66 = scmp.eq.s32.totalorder %s16, 1
    %p67 = por %p65, %p66
    %p68 = scmp.ne.s32.totalorder %s59, %s60
    %p69 = scmp.eq.s32.totalorder %s16, 0
    %p70 = por %p68, %p69
    %p71 = scmp.ne.s32.totalorder %s59, %s60
    %p72 = scmp.eq.s32.totalorder %s17, 1
    %p73 = por %p71, %p72
    %p75 = scmp.ne.s32.totalorder %s60, %s74
    %p76 = scmp.eq.s32.totalorder %s17, 0
    %p77 = por %p75, %p76
    %s78 = ssub.s32 %s19, %s26
    %p79 = scmp.eq.s32.totalorder %s78, 0
    %s81 = sadd.s32 %s80, 1
    %s82 = scalar_select %p79, %s80, %s81
    %p85 = pneg %p79
    %p86 = scmp.eq.s32.totalorder %s11, 1
    %p87 = por %p85, %p86
    %p88 = scmp.ne.s32.totalorder %s80, %s83
    %p89 = scmp.eq.s32.totalorder %s11, 0
    %p90 = por %p88, %p89
    %p91 = scmp.ne.s32.totalorder %s80, %s83
    %p92 = scmp.eq.s32.totalorder %s16, 1
    %p93 = por %p91, %p92
    %p94 = scmp.ne.s32.totalorder %s83, %s84
    %p95 = scmp.eq.s32.totalorder %s16, 0
    %p96 = por %p94, %p95
    %p97 = scmp.ne.s32.totalorder %s83, %s84
    %p98 = scmp.eq.s32.totalorder %s17, 1
    %p99 = por %p97, %p98
    %p101 = scmp.ne.s32.totalorder %s84, %s100
    %p102 = scmp.eq.s32.totalorder %s17, 0
    %p103 = por %p101, %p102
    %s104 = ssub.s32 %s19, %s26
    %p105 = scmp.eq.s32.totalorder %s104, 0
    %s107 = sadd.s32 %s106, 1
    %s108 = scalar_select %p105, %s106, %s107
    %p111 = pneg %p105
    %p112 = scmp.eq.s32.totalorder %s11, 1
    %p113 = por %p111, %p112
    %p114 = scmp.ne.s32.totalorder %s106, %s109
    %p115 = scmp.eq.s32.totalorder %s11, 0
    %p116 = por %p114, %p115
    %p117 = scmp.ne.s32.totalorder %s106, %s109
    %p118 = scmp.eq.s32.totalorder %s16, 1
    %p119 = por %p117, %p118
    %p120 = scmp.ne.s32.totalorder %s109, %s110
    %p121 = scmp.eq.s32.totalorder %s16, 0
    %p122 = por %p120, %p121
    %p123 = scmp.ne.s32.totalorder %s109, %s110
    %p124 = scmp.eq.s32.totalorder %s17, 1
    %p125 = por %p123, %p124
    %p127 = scmp.ne.s32.totalorder %s110, %s126
    %p128 = scmp.eq.s32.totalorder %s17, 0
    %p129 = por %p127, %p128
    %s130 = ssub.s32 %s19, %s26
    %p131 = scmp.eq.s32.totalorder %s130, 0
    %s133 = sadd.s32 %s132, 1
    %s134 = scalar_select %p131, %s132, %s133
    %p137 = pneg %p131
    %p138 = scmp.eq.s32.totalorder %s11, 1
    %p139 = por %p137, %p138
    %p140 = scmp.ne.s32.totalorder %s132, %s135
    %p141 = scmp.eq.s32.totalorder %s11, 0
    %p142 = por %p140, %p141
    %p143 = scmp.ne.s32.totalorder %s132, %s135
    %p144 = scmp.eq.s32.totalorder %s16, 1
    %p145 = por %p143, %p144
    %p146 = scmp.ne.s32.totalorder %s135, %s136
    %p147 = scmp.eq.s32.totalorder %s16, 0
    %p148 = por %p146, %p147
    %p149 = scmp.ne.s32.totalorder %s135, %s136
    %p150 = scmp.eq.s32.totalorder %s17, 1
    %p151 = por %p149, %p150
    %p153 = scmp.ne.s32.totalorder %s136, %s152
    %p154 = scmp.eq.s32.totalorder %s17, 0
    %p155 = por %p153, %p154
    %s156 = ssub.s32 %s18, %s30
    %s157 = ssub.s32 %s19, %s26
    %s158 = sor.u32 %s156, %s157
    %p159 = scmp.eq.s32.totalorder %s158, 0
    %s161 = sadd.s32 %s160, 1
    %s162 = scalar_select %p159, %s160, %s161
    %p165 = pneg %p159
    %p166 = scmp.eq.s32.totalorder %s11, 1
    %p167 = por %p165, %p166
    %p168 = scmp.ne.s32.totalorder %s160, %s163
    %p169 = scmp.eq.s32.totalorder %s11, 0
    %p170 = por %p168, %p169
    %p171 = scmp.ne.s32.totalorder %s160, %s163
    %p172 = scmp.eq.s32.totalorder %s16, 1
    %p173 = por %p171, %p172
    %p174 = scmp.ne.s32.totalorder %s163, %s164
    %p175 = scmp.eq.s32.totalorder %s16, 0
    %p176 = por %p174, %p175
    %p177 = scmp.ne.s32.totalorder %s163, %s164
    %p178 = scmp.eq.s32.totalorder %s17, 1
    %p179 = por %p177, %p178
    %p181 = scmp.ne.s32.totalorder %s164, %s180
    %p182 = scmp.eq.s32.totalorder %s17, 0
    %p183 = por %p181, %p182
    %p184 = scmp.le.s32.totalorder 1, %s11
    %p185 = scmp.lt.s32.totalorder %s11, 3
    %p186 = pnand %p184, %p185
    %p187 = pneg %p186
    // Predicated region
    $region9: #{exit_flow.8} parent=5 // pred_check
      _
    $region10: #{exit_flow.8} parent=5 // pred_check_branch
      %189 = sbr.rel (%p186) target = $region12
    $region11: #{exit_flow.8} parent=5 // pred_region
      %s190 = ssub.s32 %s11, 1
      // Predicated region
      $region13: #{exit_flow.8} parent=11 // pred_check
        %p191 = pneg %p70
      $region14: #{exit_flow.8} parent=11 // pred_check_branch
        %193 = sbr.rel (%p191) target = $region16
      $region15: #{exit_flow.8} parent=11 // pred_region
        _
      $region16: #{exit_flow.8} parent=11 // pred_fallthru
        _
      // Predicated region
      $region17: #{exit_flow.8} parent=11 // pred_check
        %p194 = pneg %p96
      $region18: #{exit_flow.8} parent=11 // pred_check_branch
        %196 = sbr.rel (%p194) target = $region20
      $region19: #{exit_flow.8} parent=11 // pred_region
        %p197 = scmp.lt.s32.totalorder %s21, 0
        %s198 = scalar_select %p197, %s21, 0
        %s199 = smul.addr %s198, 4
        %s200 = scalar_lea.vmem %s2, %s199
      $region20: #{exit_flow.8} parent=11 // pred_fallthru
        _
      // Predicated region
      $region21: #{exit_flow.8} parent=11 // pred_check
        %p201 = pneg %p122
      $region22: #{exit_flow.8} parent=11 // pred_check_branch
        %203 = sbr.rel (%p201) target = $region24
      $region23: #{exit_flow.8} parent=11 // pred_region
        %p204 = scmp.lt.s32.totalorder %s21, 0
        %s205 = scalar_select %p204, %s21, 0
        %s206 = scalar_lea.vmem %s3, %s205
      $region24: #{exit_flow.8} parent=11 // pred_fallthru
        _
      // Predicated region
      $region25: #{exit_flow.8} parent=11 // pred_check
        %p207 = pneg %p148
      $region26: #{exit_flow.8} parent=11 // pred_check_branch
        %209 = sbr.rel (%p207) target = $region28
      $region27: #{exit_flow.8} parent=11 // pred_region
        %p210 = scmp.lt.s32.totalorder %s21, 0
        %s211 = scalar_select %p210, %s21, 0
        %s212 = scalar_lea.vmem %s4, %s211
      $region28: #{exit_flow.8} parent=11 // pred_fallthru
        _
    $region12: #{exit_flow.8} parent=5 // pred_fallthru
      _
    %p213 = scmp.lt.s32.totalorder %s11, 2
    // Predicated region
    $region29: #{exit_flow.8} parent=5 // pred_check
      %p214 = pneg %p213
    $region30: #{exit_flow.8} parent=5 // pred_check_branch
      %216 = sbr.rel (%p214) target = $region32
    $region31: #{exit_flow.8} parent=5 // pred_region
      // Predicated region
      $region33: #{exit_flow.8} parent=31 // pred_check
        %p217 = pneg %p43
      $region34: #{exit_flow.8} parent=31 // pred_check_branch
        %219 = sbr.rel (%p217) target = $region36
      $region35: #{exit_flow.8} parent=31 // pred_region
        %p220 = scmp.lt.s32.totalorder %s18, 1
        %s221 = scalar_select %p220, %s18, 1
        %s222 = smul.addr %s221, 6
        %s223 = smul.addr %s222, 4
        %s224 = scalar_lea.vmem %s0, %s223
      $region36: #{exit_flow.8} parent=31 // pred_fallthru
        _
    $region32: #{exit_flow.8} parent=5 // pred_fallthru
      _
    %p225 = scmp.le.s32.totalorder 1, %s11
    %p226 = scmp.lt.s32.totalorder %s11, 3
    %p227 = pnand %p225, %p226
    %p228 = pneg %p227
    // Predicated region
    $region37: #{exit_flow.8} parent=5 // pred_check
      _
    $region38: #{exit_flow.8} parent=5 // pred_check_branch
      %230 = sbr.rel (%p227) target = $region40
    $region39: #{exit_flow.8} parent=5 // pred_region
      %s231 = ssub.s32 %s11, 1
      %p232 = scmp.lt.s32.totalorder %s20, 1
      %s233 = scalar_select %p232, %s20, 1
      %s234 = smul.addr %s233, 6
      %s235 = smul.addr %s234, 4
      %s236 = scalar_lea.vmem %s0, %s235
      %p237 = pneg %p49
      %p238 = pneg %p46
      %p239 = pneg %p70
      %p240 = pneg %p67
      %p241 = scmp.lt.s32.totalorder %s21, 0
      %s242 = scalar_select %p241, %s21, 0
      %s243 = smul.addr %s242, 4
      %s244 = scalar_lea.vmem %s2, %s243
      %p245 = pneg %p96
      %p246 = pneg %p93
      %p247 = scmp.lt.s32.totalorder %s21, 0
      %s248 = scalar_select %p247, %s21, 0
      %s249 = scalar_lea.vmem %s3, %s248
      %p250 = pneg %p122
      %p251 = pneg %p119
      %p252 = scmp.lt.s32.totalorder %s21, 0
      %s253 = scalar_select %p252, %s21, 0
      %s254 = scalar_lea.vmem %s4, %s253
      %p255 = pneg %p148
      %p256 = pneg %p145
      %p257 = pneg %p176
      %p258 = pneg %p173
      %p259 = scmp.lt.s32.totalorder %s20, 1
      %s260 = scalar_select %p259, %s20, 1
      %p261 = scmp.lt.s32.totalorder %s21, 0
      %s262 = scalar_select %p261, %s21, 0
      %s263 = smul.addr %s260, 4
      %s264 = sadd.s32 %s262, %s263
      %s265 = smul.addr %s264, 2
      %s266 = scalar_lea.vmem %s5, %s265
      %p267 = scmp.lt.s32.totalorder %s20, 1
      %s268 = scalar_select %p267, %s20, 1
      %s269 = smul.addr %s268, 6
      %s270 = smul.addr %s269, 4
      %s271 = scalar_lea.vmem %s0, %s270
      %p272 = scmp.lt.s32.totalorder %s21, 0
      %s273 = scalar_select %p272, %s21, 0
      %s274 = smul.addr %s273, 4
      %s275 = scalar_lea.vmem %s2, %s274
      %p276 = scmp.lt.s32.totalorder %s21, 0
      %s277 = scalar_select %p276, %s21, 0
      %s278 = scalar_lea.vmem %s3, %s277
      %p279 = scmp.lt.s32.totalorder %s21, 0
      %s280 = scalar_select %p279, %s21, 0
      %s281 = scalar_lea.vmem %s4, %s280
      %p282 = scmp.lt.s32.totalorder %s20, 1
      %s283 = scalar_select %p282, %s20, 1
      %p284 = scmp.lt.s32.totalorder %s21, 0
      %s285 = scalar_select %p284, %s21, 0
      %s286 = smul.addr %s283, 4
      %s287 = sadd.s32 %s285, %s286
      %s288 = smul.addr %s287, 2
      %s289 = scalar_lea.vmem %s5, %s288
      %p290 = scmp.eq.s32.totalorder %s21, 0
      // Predicated region
      $region41: #{exit_flow.8} parent=39 // pred_check
        %p291 = pneg %p290
      $region42: #{exit_flow.8} parent=39 // pred_check_branch
        %293 = sbr.rel (%p291) target = $region44
      $region43: #{exit_flow.8} parent=39 // pred_region
        %v294 = vld [vmem:[%s271] sm:$0xf]
        %v295 = vld [vmem:[%s271 + $0x4] sm:$0xf]
        %v296 = vld [vmem:[%s271 + $0x8] sm:$0xf]
        %v297 = vld [vmem:[%s271 + $0xc] sm:$0xf]
        %v298 = vld [vmem:[%s271 + $0x10] sm:$0xf]
        %v299 = vld [vmem:[%s271 + $0x14] sm:$0xf]
        %v300 = vld [vmem:[%s1] sm:$0xf]
        %v301 = vld [vmem:[%s1 + $0x4] sm:$0xf]
        %v302 = vld [vmem:[%s1 + $0x8] sm:$0xf]
        %v303 = vld [vmem:[%s1 + $0xc] sm:$0xf]
        %v304 = vld [vmem:[%s1 + $0x10] sm:$0xf]
        %v305 = vld [vmem:[%s1 + $0x14] sm:$0xf]
        %v306 = vld [vmem:[%s1 + $0x18] sm:$0xf]
        %v307 = vld [vmem:[%s1 + $0x1c] sm:$0xf]
        %v308 = vld [vmem:[%s1 + $0x20] sm:$0xf]
        %v309 = vld [vmem:[%s1 + $0x24] sm:$0xf]
        %v310 = vld [vmem:[%s1 + $0x28] sm:$0xf]
        %v311 = vld [vmem:[%s1 + $0x2c] sm:$0xf]
        %v312 = vld [vmem:[%s1 + $0x30] sm:$0xf]
        %v313 = vld [vmem:[%s1 + $0x34] sm:$0xf]
        %v314 = vld [vmem:[%s1 + $0x38] sm:$0xf]
        %v315 = vld [vmem:[%s1 + $0x3c] sm:$0xf]
        %s316 = scalar_lea.vmem %s1, 192
        %v317 = vld [vmem:[%s316] sm:$0xf]
        %v318 = vld [vmem:[%s316 + $0x4] sm:$0xf]
        %v319 = vld [vmem:[%s316 + $0x8] sm:$0xf]
        %v320 = vld [vmem:[%s316 + $0xc] sm:$0xf]
        %v321 = vld [vmem:[%s316 + $0x10] sm:$0xf]
        %v322 = vld [vmem:[%s316 + $0x14] sm:$0xf]
        %v323 = vld [vmem:[%s316 + $0x18] sm:$0xf]
        %v324 = vld [vmem:[%s316 + $0x1c] sm:$0xf]
        %v325 = vld [vmem:[%s316 + $0x20] sm:$0xf]
        %v326 = vld [vmem:[%s316 + $0x24] sm:$0xf]
        %v327 = vld [vmem:[%s316 + $0x28] sm:$0xf]
        %v328 = vld [vmem:[%s316 + $0x2c] sm:$0xf]
        %v329 = vld [vmem:[%s316 + $0x30] sm:$0xf]
        %v330 = vld [vmem:[%s316 + $0x34] sm:$0xf]
        %v331 = vld [vmem:[%s316 + $0x38] sm:$0xf]
        %v332 = vld [vmem:[%s316 + $0x3c] sm:$0xf]
        %v337 = vunpack.c.l.b16 %v295
        %v338 = vunpack.c.l.b16 %v296
        %v339 = vunpack.c.l.b16 %v297
        %v340 = vunpack.c.l.b16 %v298
        %v341 = vpack.c.b16 %v338, %v337
        %v342 = vpack.c.b16 %v340, %v339
        %v361 = vunpack.c.l.b16 %v317
        %v362 = vunpack.c.l.b16 %v318
        %v363 = vunpack.c.l.b16 %v319
        %v364 = vunpack.c.l.b16 %v320
        %v365 = vunpack.c.l.b16 %v321
        %v366 = vunpack.c.l.b16 %v322
        %v367 = vunpack.c.l.b16 %v323
        %v368 = vunpack.c.l.b16 %v324
        %v369 = vunpack.c.l.b16 %v325
        %v370 = vunpack.c.l.b16 %v326
        %v371 = vunpack.c.l.b16 %v327
        %v372 = vunpack.c.l.b16 %v328
        %v373 = vunpack.c.l.b16 %v329
        %v374 = vunpack.c.l.b16 %v330
        %v375 = vunpack.c.l.b16 %v331
        %v376 = vunpack.c.l.b16 %v332
        %v377 = vpack.c.b16 %v362, %v361
        %v378 = vpack.c.b16 %v364, %v363
        %v379 = vpack.c.b16 %v366, %v365
        %v380 = vpack.c.b16 %v368, %v367
        %v381 = vpack.c.b16 %v370, %v369
        %v382 = vpack.c.b16 %v372, %v371
        %v383 = vpack.c.b16 %v374, %v373
        %v384 = vpack.c.b16 %v376, %v375
        %393 = vmatpush.bf16.msra.mxu0 %v384
        %394 = vmatpush.bf16.msra.mxu0 %v383
        %395 = vmatpush.bf16.msra.mxu0 %v382
        %396 = vmatpush.bf16.msra.mxu0 %v381
        %397 = vmatpush.bf16.msra.mxu0 %v380
        %398 = vmatpush.bf16.msra.mxu0 %v379
        %399 = vmatpush.bf16.msra.mxu0 %v378
        %400 = vmatpush.bf16.msra.mxu0 %v377
        %401 = vmatmul.bf16.gmra.mxu0 %v341
        %v402 = vpop.f32.mrf.mxu0
        %v403 = vadd.f32 0.0, %v402
        %v404 = vpop.f32.mrf.mxu0
        %v405 = vadd.f32 0.0, %v404
        %406 = vmatmul.bf16.gmra.mxu0 %v342
        %v407 = vpop.f32.mrf.mxu0
        %v408 = vadd.f32 0.0, %v407
        %v409 = vpop.f32.mrf.mxu0
        %v410 = vadd.f32 0.0, %v409
        %411 = vdwg.mxu0
        %v413 = vunpack.c.l.b16 %v294
        %v414 = vpack.c.b16 %v337, %v413
        %v415 = vpack.c.b16 %v339, %v338
        %v434 = vunpack.c.l.b16 %v300
        %v435 = vunpack.c.l.b16 %v301
        %v436 = vunpack.c.l.b16 %v302
        %v437 = vunpack.c.l.b16 %v303
        %v438 = vunpack.c.l.b16 %v304
        %v439 = vunpack.c.l.b16 %v305
        %v440 = vunpack.c.l.b16 %v306
        %v441 = vunpack.c.l.b16 %v307
        %v442 = vunpack.c.l.b16 %v308
        %v443 = vunpack.c.l.b16 %v309
        %v444 = vunpack.c.l.b16 %v310
        %v445 = vunpack.c.l.b16 %v311
        %v446 = vunpack.c.l.b16 %v312
        %v447 = vunpack.c.l.b16 %v313
        %v448 = vunpack.c.l.b16 %v314
        %v449 = vunpack.c.l.b16 %v315
        %v450 = vpack.c.b16 %v435, %v434
        %v451 = vpack.c.b16 %v437, %v436
        %v452 = vpack.c.b16 %v439, %v438
        %v453 = vpack.c.b16 %v441, %v440
        %v454 = vpack.c.b16 %v443, %v442
        %v455 = vpack.c.b16 %v445, %v444
        %v456 = vpack.c.b16 %v447, %v446
        %v457 = vpack.c.b16 %v449, %v448
        %466 = vmatpush.bf16.msra.mxu0 %v457
        %467 = vmatpush.bf16.msra.mxu0 %v456
        %468 = vmatpush.bf16.msra.mxu0 %v455
        %469 = vmatpush.bf16.msra.mxu0 %v454
        %470 = vmatpush.bf16.msra.mxu0 %v453
        %471 = vmatpush.bf16.msra.mxu0 %v452
        %472 = vmatpush.bf16.msra.mxu0 %v451
        %473 = vmatpush.bf16.msra.mxu0 %v450
        %474 = vmatmul.bf16.gmra.mxu0 %v414
        %v475 = vpop.f32.mrf.mxu0
        %v476 = vadd.f32 %v403, %v475
        %v477 = vpop.f32.mrf.mxu0
        %v478 = vadd.f32 %v405, %v477
        %479 = vmatmul.bf16.gmra.mxu0 %v415
        %v480 = vpop.f32.mrf.mxu0
        %v481 = vadd.f32 %v408, %v480
        %v482 = vpop.f32.mrf.mxu0
        %v483 = vadd.f32 %v410, %v482
        %484 = vdwg.mxu0
        %s485 = scalar_lea.vmem %s1, 384
        %v486 = vld [vmem:[%s485] sm:$0xf]
        %v487 = vld [vmem:[%s485 + $0x4] sm:$0xf]
        %v488 = vld [vmem:[%s485 + $0x8] sm:$0xf]
        %v489 = vld [vmem:[%s485 + $0xc] sm:$0xf]
        %v490 = vld [vmem:[%s485 + $0x10] sm:$0xf]
        %v491 = vld [vmem:[%s485 + $0x14] sm:$0xf]
        %v492 = vld [vmem:[%s485 + $0x18] sm:$0xf]
        %v493 = vld [vmem:[%s485 + $0x1c] sm:$0xf]
        %v494 = vld [vmem:[%s485 + $0x20] sm:$0xf]
        %v495 = vld [vmem:[%s485 + $0x24] sm:$0xf]
        %v496 = vld [vmem:[%s485 + $0x28] sm:$0xf]
        %v497 = vld [vmem:[%s485 + $0x2c] sm:$0xf]
        %v498 = vld [vmem:[%s485 + $0x30] sm:$0xf]
        %v499 = vld [vmem:[%s485 + $0x34] sm:$0xf]
        %v500 = vld [vmem:[%s485 + $0x38] sm:$0xf]
        %v501 = vld [vmem:[%s485 + $0x3c] sm:$0xf]
        %v503 = vunpack.c.l.b16 %v299
        %v504 = vpack.c.b16 %v503, %v340
        %v522 = vunpack.c.l.b16 %v486
        %v523 = vunpack.c.l.b16 %v487
        %v524 = vunpack.c.l.b16 %v488
        %v525 = vunpack.c.l.b16 %v489
        %v526 = vunpack.c.l.b16 %v490
        %v527 = vunpack.c.l.b16 %v491
        %v528 = vunpack.c.l.b16 %v492
        %v529 = vunpack.c.l.b16 %v493
        %v530 = vunpack.c.l.b16 %v494
        %v531 = vunpack.c.l.b16 %v495
        %v532 = vunpack.c.l.b16 %v496
        %v533 = vunpack.c.l.b16 %v497
        %v534 = vunpack.c.l.b16 %v498
        %v535 = vunpack.c.l.b16 %v499
        %v536 = vunpack.c.l.b16 %v500
        %v537 = vunpack.c.l.b16 %v501
        %v538 = vpack.c.b16 %v523, %v522
        %v539 = vpack.c.b16 %v525, %v524
        %v540 = vpack.c.b16 %v527, %v526
        %v541 = vpack.c.b16 %v529, %v528
        %v542 = vpack.c.b16 %v531, %v530
        %v543 = vpack.c.b16 %v533, %v532
        %v544 = vpack.c.b16 %v535, %v534
        %v545 = vpack.c.b16 %v537, %v536
        %554 = vmatpush.bf16.msra.mxu0 %v545
        %555 = vmatpush.bf16.msra.mxu0 %v544
        %556 = vmatpush.bf16.msra.mxu0 %v543
        %557 = vmatpush.bf16.msra.mxu0 %v542
        %558 = vmatpush.bf16.msra.mxu0 %v541
        %559 = vmatpush.bf16.msra.mxu0 %v540
        %560 = vmatpush.bf16.msra.mxu0 %v539
        %561 = vmatpush.bf16.msra.mxu0 %v538
        %562 = vmatmul.bf16.gmra.mxu0 %v415
        %v563 = vpop.f32.mrf.mxu0
        %v564 = vadd.f32 0.0, %v563
        %v565 = vpop.f32.mrf.mxu0
        %v566 = vadd.f32 0.0, %v565
        %567 = vmatmul.bf16.gmra.mxu0 %v504
        %v568 = vpop.f32.mrf.mxu0
        %v569 = vadd.f32 0.0, %v568
        %v570 = vpop.f32.mrf.mxu0
        %v571 = vadd.f32 0.0, %v570
        %572 = vdwg.mxu0
        %v573 = vadd.f32 %v476, %v564
        %v574 = vadd.f32 %v478, %v566
        %v575 = vadd.f32 %v481, %v569
        %v576 = vadd.f32 %v483, %v571
        %577 = vst [vmem:[#allocation2] sm:$0xff] %v573
        %578 = vst [vmem:[#allocation2 + $0x8] sm:$0xff] %v574
        %579 = vst [vmem:[#allocation2 + $0x10] sm:$0xff] %v575
        %580 = vst [vmem:[#allocation2 + $0x18] sm:$0xff] %v576
        %s581 = scalar_lea.vmem %s1, 64
        %v582 = vld [vmem:[%s581] sm:$0xf]
        %v583 = vld [vmem:[%s581 + $0x4] sm:$0xf]
        %v584 = vld [vmem:[%s581 + $0x8] sm:$0xf]
        %v585 = vld [vmem:[%s581 + $0xc] sm:$0xf]
        %v586 = vld [vmem:[%s581 + $0x10] sm:$0xf]
        %v587 = vld [vmem:[%s581 + $0x14] sm:$0xf]
        %v588 = vld [vmem:[%s581 + $0x18] sm:$0xf]
        %v589 = vld [vmem:[%s581 + $0x1c] sm:$0xf]
        %v590 = vld [vmem:[%s581 + $0x20] sm:$0xf]
        %v591 = vld [vmem:[%s581 + $0x24] sm:$0xf]
        %v592 = vld [vmem:[%s581 + $0x28] sm:$0xf]
        %v593 = vld [vmem:[%s581 + $0x2c] sm:$0xf]
        %v594 = vld [vmem:[%s581 + $0x30] sm:$0xf]
        %v595 = vld [vmem:[%s581 + $0x34] sm:$0xf]
        %v596 = vld [vmem:[%s581 + $0x38] sm:$0xf]
        %v597 = vld [vmem:[%s581 + $0x3c] sm:$0xf]
        %s598 = scalar_lea.vmem %s1, 256
        %v599 = vld [vmem:[%s598] sm:$0xf]
        %v600 = vld [vmem:[%s598 + $0x4] sm:$0xf]
        %v601 = vld [vmem:[%s598 + $0x8] sm:$0xf]
        %v602 = vld [vmem:[%s598 + $0xc] sm:$0xf]
        %v603 = vld [vmem:[%s598 + $0x10] sm:$0xf]
        %v604 = vld [vmem:[%s598 + $0x14] sm:$0xf]
        %v605 = vld [vmem:[%s598 + $0x18] sm:$0xf]
        %v606 = vld [vmem:[%s598 + $0x1c] sm:$0xf]
        %v607 = vld [vmem:[%s598 + $0x20] sm:$0xf]
        %v608 = vld [vmem:[%s598 + $0x24] sm:$0xf]
        %v609 = vld [vmem:[%s598 + $0x28] sm:$0xf]
        %v610 = vld [vmem:[%s598 + $0x2c] sm:$0xf]
        %v611 = vld [vmem:[%s598 + $0x30] sm:$0xf]
        %v612 = vld [vmem:[%s598 + $0x34] sm:$0xf]
        %v613 = vld [vmem:[%s598 + $0x38] sm:$0xf]
        %v614 = vld [vmem:[%s598 + $0x3c] sm:$0xf]
        %v631 = vunpack.c.l.b16 %v599
        %v632 = vunpack.c.l.b16 %v600
        %v633 = vunpack.c.l.b16 %v601
        %v634 = vunpack.c.l.b16 %v602
        %v635 = vunpack.c.l.b16 %v603
        %v636 = vunpack.c.l.b16 %v604
        %v637 = vunpack.c.l.b16 %v605
        %v638 = vunpack.c.l.b16 %v606
        %v639 = vunpack.c.l.b16 %v607
        %v640 = vunpack.c.l.b16 %v608
        %v641 = vunpack.c.l.b16 %v609
        %v642 = vunpack.c.l.b16 %v610
        %v643 = vunpack.c.l.b16 %v611
        %v644 = vunpack.c.l.b16 %v612
        %v645 = vunpack.c.l.b16 %v613
        %v646 = vunpack.c.l.b16 %v614
        %v647 = vpack.c.b16 %v632, %v631
        %v648 = vpack.c.b16 %v634, %v633
        %v649 = vpack.c.b16 %v636, %v635
        %v650 = vpack.c.b16 %v638, %v637
        %v651 = vpack.c.b16 %v640, %v639
        %v652 = vpack.c.b16 %v642, %v641
        %v653 = vpack.c.b16 %v644, %v643
        %v654 = vpack.c.b16 %v646, %v645
        %663 = vmatpush.bf16.msra.mxu0 %v654
        %664 = vmatpush.bf16.msra.mxu0 %v653
        %665 = vmatpush.bf16.msra.mxu0 %v652
        %666 = vmatpush.bf16.msra.mxu0 %v651
        %667 = vmatpush.bf16.msra.mxu0 %v650
        %668 = vmatpush.bf16.msra.mxu0 %v649
        %669 = vmatpush.bf16.msra.mxu0 %v648
        %670 = vmatpush.bf16.msra.mxu0 %v647
        %671 = vmatmul.bf16.gmra.mxu0 %v341
        %v672 = vpop.f32.mrf.mxu0
        %v673 = vadd.f32 0.0, %v672
        %v674 = vpop.f32.mrf.mxu0
        %v675 = vadd.f32 0.0, %v674
        %676 = vmatmul.bf16.gmra.mxu0 %v342
        %v677 = vpop.f32.mrf.mxu0
        %v678 = vadd.f32 0.0, %v677
        %v679 = vpop.f32.mrf.mxu0
        %v680 = vadd.f32 0.0, %v679
        %681 = vdwg.mxu0
        %v698 = vunpack.c.l.b16 %v582
        %v699 = vunpack.c.l.b16 %v583
        %v700 = vunpack.c.l.b16 %v584
        %v701 = vunpack.c.l.b16 %v585
        %v702 = vunpack.c.l.b16 %v586
        %v703 = vunpack.c.l.b16 %v587
        %v704 = vunpack.c.l.b16 %v588
        %v705 = vunpack.c.l.b16 %v589
        %v706 = vunpack.c.l.b16 %v590
        %v707 = vunpack.c.l.b16 %v591
        %v708 = vunpack.c.l.b16 %v592
        %v709 = vunpack.c.l.b16 %v593
        %v710 = vunpack.c.l.b16 %v594
        %v711 = vunpack.c.l.b16 %v595
        %v712 = vunpack.c.l.b16 %v596
        %v713 = vunpack.c.l.b16 %v597
        %v714 = vpack.c.b16 %v699, %v698
        %v715 = vpack.c.b16 %v701, %v700
        %v716 = vpack.c.b16 %v703, %v702
        %v717 = vpack.c.b16 %v705, %v704
        %v718 = vpack.c.b16 %v707, %v706
        %v719 = vpack.c.b16 %v709, %v708
        %v720 = vpack.c.b16 %v711, %v710
        %v721 = vpack.c.b16 %v713, %v712
        %730 = vmatpush.bf16.msra.mxu0 %v721
        %731 = vmatpush.bf16.msra.mxu0 %v720
        %732 = vmatpush.bf16.msra.mxu0 %v719
        %733 = vmatpush.bf16.msra.mxu0 %v718
        %734 = vmatpush.bf16.msra.mxu0 %v717
        %735 = vmatpush.bf16.msra.mxu0 %v716
        %736 = vmatpush.bf16.msra.mxu0 %v715
        %737 = vmatpush.bf16.msra.mxu0 %v714
        %738 = vmatmul.bf16.gmra.mxu0 %v414
        %v739 = vpop.f32.mrf.mxu0
        %v740 = vadd.f32 %v673, %v739
        %v741 = vpop.f32.mrf.mxu0
        %v742 = vadd.f32 %v675, %v741
        %743 = vmatmul.bf16.gmra.mxu0 %v415
        %v744 = vpop.f32.mrf.mxu0
        %v745 = vadd.f32 %v678, %v744
        %v746 = vpop.f32.mrf.mxu0
        %v747 = vadd.f32 %v680, %v746
        %748 = vdwg.mxu0
        %s749 = scalar_lea.vmem %s1, 448
        %v750 = vld [vmem:[%s749] sm:$0xf]
        %v751 = vld [vmem:[%s749 + $0x4] sm:$0xf]
        %v752 = vld [vmem:[%s749 + $0x8] sm:$0xf]
        %v753 = vld [vmem:[%s749 + $0xc] sm:$0xf]
        %v754 = vld [vmem:[%s749 + $0x10] sm:$0xf]
        %v755 = vld [vmem:[%s749 + $0x14] sm:$0xf]
        %v756 = vld [vmem:[%s749 + $0x18] sm:$0xf]
        %v757 = vld [vmem:[%s749 + $0x1c] sm:$0xf]
        %v758 = vld [vmem:[%s749 + $0x20] sm:$0xf]
        %v759 = vld [vmem:[%s749 + $0x24] sm:$0xf]
        %v760 = vld [vmem:[%s749 + $0x28] sm:$0xf]
        %v761 = vld [vmem:[%s749 + $0x2c] sm:$0xf]
        %v762 = vld [vmem:[%s749 + $0x30] sm:$0xf]
        %v763 = vld [vmem:[%s749 + $0x34] sm:$0xf]
        %v764 = vld [vmem:[%s749 + $0x38] sm:$0xf]
        %v765 = vld [vmem:[%s749 + $0x3c] sm:$0xf]
        %v782 = vunpack.c.l.b16 %v750
        %v783 = vunpack.c.l.b16 %v751
        %v784 = vunpack.c.l.b16 %v752
        %v785 = vunpack.c.l.b16 %v753
        %v786 = vunpack.c.l.b16 %v754
        %v787 = vunpack.c.l.b16 %v755
        %v788 = vunpack.c.l.b16 %v756
        %v789 = vunpack.c.l.b16 %v757
        %v790 = vunpack.c.l.b16 %v758
        %v791 = vunpack.c.l.b16 %v759
        %v792 = vunpack.c.l.b16 %v760
        %v793 = vunpack.c.l.b16 %v761
        %v794 = vunpack.c.l.b16 %v762
        %v795 = vunpack.c.l.b16 %v763
        %v796 = vunpack.c.l.b16 %v764
        %v797 = vunpack.c.l.b16 %v765
        %v798 = vpack.c.b16 %v783, %v782
        %v799 = vpack.c.b16 %v785, %v784
        %v800 = vpack.c.b16 %v787, %v786
        %v801 = vpack.c.b16 %v789, %v788
        %v802 = vpack.c.b16 %v791, %v790
        %v803 = vpack.c.b16 %v793, %v792
        %v804 = vpack.c.b16 %v795, %v794
        %v805 = vpack.c.b16 %v797, %v796
        %814 = vmatpush.bf16.msra.mxu0 %v805
        %815 = vmatpush.bf16.msra.mxu0 %v804
        %816 = vmatpush.bf16.msra.mxu0 %v803
        %817 = vmatpush.bf16.msra.mxu0 %v802
        %818 = vmatpush.bf16.msra.mxu0 %v801
        %819 = vmatpush.bf16.msra.mxu0 %v800
        %820 = vmatpush.bf16.msra.mxu0 %v799
        %821 = vmatpush.bf16.msra.mxu0 %v798
        %822 = vmatmul.bf16.gmra.mxu0 %v415
        %v823 = vpop.f32.mrf.mxu0
        %v824 = vadd.f32 0.0, %v823
        %v825 = vpop.f32.mrf.mxu0
        %v826 = vadd.f32 0.0, %v825
        %827 = vmatmul.bf16.gmra.mxu0 %v504
        %v828 = vpop.f32.mrf.mxu0
        %v829 = vadd.f32 0.0, %v828
        %v830 = vpop.f32.mrf.mxu0
        %v831 = vadd.f32 0.0, %v830
        %832 = vdwg.mxu0
        %v833 = vadd.f32 %v740, %v824
        %v834 = vadd.f32 %v742, %v826
        %v835 = vadd.f32 %v745, %v829
        %v836 = vadd.f32 %v747, %v831
        %v837 = vld [vmem:[#allocation2] sm:$0xff]
        %v838 = vld [vmem:[#allocation2 + $0x8] sm:$0xff]
        %v839 = vld [vmem:[#allocation2 + $0x10] sm:$0xff]
        %v840 = vld [vmem:[#allocation2 + $0x18] sm:$0x7f]
        %vm845 = vcmask 1046528
        %v846 = vrot.slane %v833, 1
        %v847 = vrot.slane %v834, 1
        %v848 = vsel %vm845, %v846, %v847
        %v849 = vrot.slane %v835, 1
        %v850 = vsel %vm845, %v847, %v849
        %v851 = vrot.slane %v836, 1
        %v852 = vsel %vm845, %v849, %v851
        %v857 = vadd.f32 %v837, %v848
        %v858 = vadd.f32 %v838, %v850
        %v859 = vadd.f32 %v839, %v852
        %v860 = vadd.f32 %v840, %v851
        %861 = vst [vmem:[#allocation2] sm:$0xff] %v857
        %862 = vst [vmem:[#allocation2 + $0x8] sm:$0xff] %v858
        %863 = vst [vmem:[#allocation2 + $0x10] sm:$0xff] %v859
        %864 = vst [vmem:[#allocation2 + $0x18] sm:$0x7f] %v860
        %s865 = scalar_lea.vmem %s1, 128
        %v866 = vld [vmem:[%s865] sm:$0xf]
        %v867 = vld [vmem:[%s865 + $0x4] sm:$0xf]
        %v868 = vld [vmem:[%s865 + $0x8] sm:$0xf]
        %v869 = vld [vmem:[%s865 + $0xc] sm:$0xf]
        %v870 = vld [vmem:[%s865 + $0x10] sm:$0xf]
        %v871 = vld [vmem:[%s865 + $0x14] sm:$0xf]
        %v872 = vld [vmem:[%s865 + $0x18] sm:$0xf]
        %v873 = vld [vmem:[%s865 + $0x1c] sm:$0xf]
        %v874 = vld [vmem:[%s865 + $0x20] sm:$0xf]
        %v875 = vld [vmem:[%s865 + $0x24] sm:$0xf]
        %v876 = vld [vmem:[%s865 + $0x28] sm:$0xf]
        %v877 = vld [vmem:[%s865 + $0x2c] sm:$0xf]
        %v878 = vld [vmem:[%s865 + $0x30] sm:$0xf]
        %v879 = vld [vmem:[%s865 + $0x34] sm:$0xf]
        %v880 = vld [vmem:[%s865 + $0x38] sm:$0xf]
        %v881 = vld [vmem:[%s865 + $0x3c] sm:$0xf]
        %s882 = scalar_lea.vmem %s1, 320
        %v883 = vld [vmem:[%s882] sm:$0xf]
        %v884 = vld [vmem:[%s882 + $0x4] sm:$0xf]
        %v885 = vld [vmem:[%s882 + $0x8] sm:$0xf]
        %v886 = vld [vmem:[%s882 + $0xc] sm:$0xf]
        %v887 = vld [vmem:[%s882 + $0x10] sm:$0xf]
        %v888 = vld [vmem:[%s882 + $0x14] sm:$0xf]
        %v889 = vld [vmem:[%s882 + $0x18] sm:$0xf]
        %v890 = vld [vmem:[%s882 + $0x1c] sm:$0xf]
        %v891 = vld [vmem:[%s882 + $0x20] sm:$0xf]
        %v892 = vld [vmem:[%s882 + $0x24] sm:$0xf]
        %v893 = vld [vmem:[%s882 + $0x28] sm:$0xf]
        %v894 = vld [vmem:[%s882 + $0x2c] sm:$0xf]
        %v895 = vld [vmem:[%s882 + $0x30] sm:$0xf]
        %v896 = vld [vmem:[%s882 + $0x34] sm:$0xf]
        %v897 = vld [vmem:[%s882 + $0x38] sm:$0xf]
        %v898 = vld [vmem:[%s882 + $0x3c] sm:$0xf]
        %v915 = vunpack.c.l.b16 %v883
        %v916 = vunpack.c.l.b16 %v884
        %v917 = vunpack.c.l.b16 %v885
        %v918 = vunpack.c.l.b16 %v886
        %v919 = vunpack.c.l.b16 %v887
        %v920 = vunpack.c.l.b16 %v888
        %v921 = vunpack.c.l.b16 %v889
        %v922 = vunpack.c.l.b16 %v890
        %v923 = vunpack.c.l.b16 %v891
        %v924 = vunpack.c.l.b16 %v892
        %v925 = vunpack.c.l.b16 %v893
        %v926 = vunpack.c.l.b16 %v894
        %v927 = vunpack.c.l.b16 %v895
        %v928 = vunpack.c.l.b16 %v896
        %v929 = vunpack.c.l.b16 %v897
        %v930 = vunpack.c.l.b16 %v898
        %v931 = vpack.c.b16 %v916, %v915
        %v932 = vpack.c.b16 %v918, %v917
        %v933 = vpack.c.b16 %v920, %v919
        %v934 = vpack.c.b16 %v922, %v921
        %v935 = vpack.c.b16 %v924, %v923
        %v936 = vpack.c.b16 %v926, %v925
        %v937 = vpack.c.b16 %v928, %v927
        %v938 = vpack.c.b16 %v930, %v929
        %947 = vmatpush.bf16.msra.mxu0 %v938
        %948 = vmatpush.bf16.msra.mxu0 %v937
        %949 = vmatpush.bf16.msra.mxu0 %v936
        %950 = vmatpush.bf16.msra.mxu0 %v935
        %951 = vmatpush.bf16.msra.mxu0 %v934
        %952 = vmatpush.bf16.msra.mxu0 %v933
        %953 = vmatpush.bf16.msra.mxu0 %v932
        %954 = vmatpush.bf16.msra.mxu0 %v931
        %955 = vmatmul.bf16.gmra.mxu0 %v341
        %v956 = vpop.f32.mrf.mxu0
        %v957 = vadd.f32 0.0, %v956
        %v958 = vpop.f32.mrf.mxu0
        %v959 = vadd.f32 0.0, %v958
        %960 = vmatmul.bf16.gmra.mxu0 %v342
        %v961 = vpop.f32.mrf.mxu0
        %v962 = vadd.f32 0.0, %v961
        %v963 = vpop.f32.mrf.mxu0
        %v964 = vadd.f32 0.0, %v963
        %965 = vdwg.mxu0
        %v982 = vunpack.c.l.b16 %v866
        %v983 = vunpack.c.l.b16 %v867
        %v984 = vunpack.c.l.b16 %v868
        %v985 = vunpack.c.l.b16 %v869
        %v986 = vunpack.c.l.b16 %v870
        %v987 = vunpack.c.l.b16 %v871
        %v988 = vunpack.c.l.b16 %v872
        %v989 = vunpack.c.l.b16 %v873
        %v990 = vunpack.c.l.b16 %v874
        %v991 = vunpack.c.l.b16 %v875
        %v992 = vunpack.c.l.b16 %v876
        %v993 = vunpack.c.l.b16 %v877
        %v994 = vunpack.c.l.b16 %v878
        %v995 = vunpack.c.l.b16 %v879
        %v996 = vunpack.c.l.b16 %v880
        %v997 = vunpack.c.l.b16 %v881
        %v998 = vpack.c.b16 %v983, %v982
        %v999 = vpack.c.b16 %v985, %v984
        %v1000 = vpack.c.b16 %v987, %v986
        %v1001 = vpack.c.b16 %v989, %v988
        %v1002 = vpack.c.b16 %v991, %v990
        %v1003 = vpack.c.b16 %v993, %v992
        %v1004 = vpack.c.b16 %v995, %v994
        %v1005 = vpack.c.b16 %v997, %v996
        %1014 = vmatpush.bf16.msra.mxu0 %v1005
        %1015 = vmatpush.bf16.msra.mxu0 %v1004
        %1016 = vmatpush.bf16.msra.mxu0 %v1003
        %1017 = vmatpush.bf16.msra.mxu0 %v1002
        %1018 = vmatpush.bf16.msra.mxu0 %v1001
        %1019 = vmatpush.bf16.msra.mxu0 %v1000
        %1020 = vmatpush.bf16.msra.mxu0 %v999
        %1021 = vmatpush.bf16.msra.mxu0 %v998
        %1022 = vmatmul.bf16.gmra.mxu0 %v414
        %v1023 = vpop.f32.mrf.mxu0
        %v1024 = vadd.f32 %v957, %v1023
        %v1025 = vpop.f32.mrf.mxu0
        %v1026 = vadd.f32 %v959, %v1025
        %1027 = vmatmul.bf16.gmra.mxu0 %v415
        %v1028 = vpop.f32.mrf.mxu0
        %v1029 = vadd.f32 %v962, %v1028
        %v1030 = vpop.f32.mrf.mxu0
        %v1031 = vadd.f32 %v964, %v1030
        %1032 = vdwg.mxu0
        %s1033 = scalar_lea.vmem %s1, 512
        %v1034 = vld [vmem:[%s1033] sm:$0xf]
        %v1035 = vld [vmem:[%s1033 + $0x4] sm:$0xf]
        %v1036 = vld [vmem:[%s1033 + $0x8] sm:$0xf]
        %v1037 = vld [vmem:[%s1033 + $0xc] sm:$0xf]
        %v1038 = vld [vmem:[%s1033 + $0x10] sm:$0xf]
        %v1039 = vld [vmem:[%s1033 + $0x14] sm:$0xf]
        %v1040 = vld [vmem:[%s1033 + $0x18] sm:$0xf]
        %v1041 = vld [vmem:[%s1033 + $0x1c] sm:$0xf]
        %v1042 = vld [vmem:[%s1033 + $0x20] sm:$0xf]
        %v1043 = vld [vmem:[%s1033 + $0x24] sm:$0xf]
        %v1044 = vld [vmem:[%s1033 + $0x28] sm:$0xf]
        %v1045 = vld [vmem:[%s1033 + $0x2c] sm:$0xf]
        %v1046 = vld [vmem:[%s1033 + $0x30] sm:$0xf]
        %v1047 = vld [vmem:[%s1033 + $0x34] sm:$0xf]
        %v1048 = vld [vmem:[%s1033 + $0x38] sm:$0xf]
        %v1049 = vld [vmem:[%s1033 + $0x3c] sm:$0xf]
        %v1066 = vunpack.c.l.b16 %v1034
        %v1067 = vunpack.c.l.b16 %v1035
        %v1068 = vunpack.c.l.b16 %v1036
        %v1069 = vunpack.c.l.b16 %v1037
        %v1070 = vunpack.c.l.b16 %v1038
        %v1071 = vunpack.c.l.b16 %v1039
        %v1072 = vunpack.c.l.b16 %v1040
        %v1073 = vunpack.c.l.b16 %v1041
        %v1074 = vunpack.c.l.b16 %v1042
        %v1075 = vunpack.c.l.b16 %v1043
        %v1076 = vunpack.c.l.b16 %v1044
        %v1077 = vunpack.c.l.b16 %v1045
        %v1078 = vunpack.c.l.b16 %v1046
        %v1079 = vunpack.c.l.b16 %v1047
        %v1080 = vunpack.c.l.b16 %v1048
        %v1081 = vunpack.c.l.b16 %v1049
        %v1082 = vpack.c.b16 %v1067, %v1066
        %v1083 = vpack.c.b16 %v1069, %v1068
        %v1084 = vpack.c.b16 %v1071, %v1070
        %v1085 = vpack.c.b16 %v1073, %v1072
        %v1086 = vpack.c.b16 %v1075, %v1074
        %v1087 = vpack.c.b16 %v1077, %v1076
        %v1088 = vpack.c.b16 %v1079, %v1078
        %v1089 = vpack.c.b16 %v1081, %v1080
        %1098 = vmatpush.bf16.msra.mxu0 %v1089
        %1099 = vmatpush.bf16.msra.mxu0 %v1088
        %1100 = vmatpush.bf16.msra.mxu0 %v1087
        %1101 = vmatpush.bf16.msra.mxu0 %v1086
        %1102 = vmatpush.bf16.msra.mxu0 %v1085
        %1103 = vmatpush.bf16.msra.mxu0 %v1084
        %1104 = vmatpush.bf16.msra.mxu0 %v1083
        %1105 = vmatpush.bf16.msra.mxu0 %v1082
        %1106 = vmatmul.bf16.gmra.mxu0 %v415
        %v1107 = vpop.f32.mrf.mxu0
        %v1108 = vadd.f32 0.0, %v1107
        %v1109 = vpop.f32.mrf.mxu0
        %v1110 = vadd.f32 0.0, %v1109
        %1111 = vmatmul.bf16.gmra.mxu0 %v504
        %v1112 = vpop.f32.mrf.mxu0
        %v1113 = vadd.f32 0.0, %v1112
        %v1114 = vpop.f32.mrf.mxu0
        %v1115 = vadd.f32 0.0, %v1114
        %1116 = vdwg.mxu0
        %v1117 = vadd.f32 %v1024, %v1108
        %v1118 = vadd.f32 %v1026, %v1110
        %v1119 = vadd.f32 %v1029, %v1113
        %v1120 = vadd.f32 %v1031, %v1115
        %v1121 = vld [vmem:[#allocation2] sm:$0xff]
        %v1122 = vld [vmem:[#allocation2 + $0x8] sm:$0xff]
        %v1123 = vld [vmem:[#allocation2 + $0x10] sm:$0xff]
        %v1124 = vld [vmem:[#allocation2 + $0x18] sm:$0x3f]
        %vm1129 = vcmask 1045504
        %v1130 = vrot.slane %v1117, 2
        %v1131 = vrot.slane %v1118, 2
        %v1132 = vsel %vm1129, %v1130, %v1131
        %v1133 = vrot.slane %v1119, 2
        %v1134 = vsel %vm1129, %v1131, %v1133
        %v1135 = vrot.slane %v1120, 2
        %v1136 = vsel %vm1129, %v1133, %v1135
        %v1141 = vadd.f32 %v1121, %v1132
        %v1142 = vadd.f32 %v1122, %v1134
        %v1143 = vadd.f32 %v1123, %v1136
        %v1144 = vadd.f32 %v1124, %v1135
        %1145 = vst [vmem:[#allocation2] sm:$0xff] %v1141
        %1146 = vst [vmem:[#allocation2 + $0x8] sm:$0xff] %v1142
        %1147 = vst [vmem:[#allocation2 + $0x10] sm:$0xff] %v1143
        %1148 = vst [vmem:[#allocation2 + $0x18] sm:$0x3f] %v1144
      $region44: #{exit_flow.8} parent=39 // pred_fallthru
        _
      %v1149 = vld [vmem:[#allocation2] sm:$0xff]
      %v1150 = vld [vmem:[#allocation2 + $0x8] sm:$0xff]
      %v1151 = vld [vmem:[#allocation2 + $0x10] sm:$0xff]
      %v1152 = vld [vmem:[#allocation2 + $0x18] sm:$0xff]
      %v1153 = vpack.c.bf16 %v1150, %v1149
      %v1154 = vpack.c.bf16 %v1152, %v1151
      %v1155 = vld [vmem:[%s275] sm:$0xf]
      %v1156 = vld [vmem:[%s275 + $0x4] sm:$0xf]
      %v1157 = vld [vmem:[%s275 + $0x8] sm:$0xf]
      %v1158 = vld [vmem:[%s275 + $0xc] sm:$0xf]
      %v1159 = vld [vmem:[%s275 + $0x10] sm:$0xf]
      %v1160 = vld [vmem:[%s275 + $0x14] sm:$0xf]
      %v1161 = vld [vmem:[%s275 + $0x18] sm:$0xf]
      %v1162 = vld [vmem:[%s275 + $0x1c] sm:$0xf]
      %v1163 = vld [vmem:[%s275 + $0x20] sm:$0xf]
      %v1164 = vld [vmem:[%s275 + $0x24] sm:$0xf]
      %v1165 = vld [vmem:[%s275 + $0x28] sm:$0xf]
      %v1166 = vld [vmem:[%s275 + $0x2c] sm:$0xf]
      %v1167 = vld [vmem:[%s275 + $0x30] sm:$0xf]
      %v1168 = vld [vmem:[%s275 + $0x34] sm:$0xf]
      %v1169 = vld [vmem:[%s275 + $0x38] sm:$0xf]
      %v1170 = vld [vmem:[%s275 + $0x3c] sm:$0xf]
      %v1187 = vunpack.c.l.b16 %v1155
      %v1188 = vunpack.c.l.b16 %v1156
      %v1189 = vunpack.c.l.b16 %v1157
      %v1190 = vunpack.c.l.b16 %v1158
      %v1191 = vunpack.c.l.b16 %v1159
      %v1192 = vunpack.c.l.b16 %v1160
      %v1193 = vunpack.c.l.b16 %v1161
      %v1194 = vunpack.c.l.b16 %v1162
      %v1195 = vunpack.c.l.b16 %v1163
      %v1196 = vunpack.c.l.b16 %v1164
      %v1197 = vunpack.c.l.b16 %v1165
      %v1198 = vunpack.c.l.b16 %v1166
      %v1199 = vunpack.c.l.b16 %v1167
      %v1200 = vunpack.c.l.b16 %v1168
      %v1201 = vunpack.c.l.b16 %v1169
      %v1202 = vunpack.c.l.b16 %v1170
      %v1203 = vpack.c.b16 %v1188, %v1187
      %v1204 = vpack.c.b16 %v1190, %v1189
      %v1205 = vpack.c.b16 %v1192, %v1191
      %v1206 = vpack.c.b16 %v1194, %v1193
      %v1207 = vpack.c.b16 %v1196, %v1195
      %v1208 = vpack.c.b16 %v1198, %v1197
      %v1209 = vpack.c.b16 %v1200, %v1199
      %v1210 = vpack.c.b16 %v1202, %v1201
      %1219 = vmatpush.bf16.msra.mxu0 %v1210
      %1220 = vmatpush.bf16.msra.mxu0 %v1209
      %1221 = vmatpush.bf16.msra.mxu0 %v1208
      %1222 = vmatpush.bf16.msra.mxu0 %v1207
      %1223 = vmatpush.bf16.msra.mxu0 %v1206
      %1224 = vmatpush.bf16.msra.mxu0 %v1205
      %1225 = vmatpush.bf16.msra.mxu0 %v1204
      %1226 = vmatpush.bf16.msra.mxu0 %v1203
      %1227 = vmatmul.bf16.gmra.mxu0 %v1153
      %v1228 = vpop.f32.mrf.mxu0
      %v1229 = vadd.f32 0.0, %v1228
      %v1230 = vpop.f32.mrf.mxu0
      %v1231 = vadd.f32 0.0, %v1230
      %1232 = vmatmul.bf16.gmra.mxu0 %v1154
      %v1233 = vpop.f32.mrf.mxu0
      %v1234 = vadd.f32 0.0, %v1233
      %v1235 = vpop.f32.mrf.mxu0
      %v1236 = vadd.f32 0.0, %v1235
      %1237 = vdwg.mxu0
      %v1238 = vld [vmem:[%s278] sm:$0x1]
      %v1240 = vperm.slane %v1238, 0
      %v1242 = vmul.f32 %v1229, %v1240
      %v1243 = vmul.f32 %v1231, %v1240
      %v1244 = vmul.f32 %v1234, %v1240
      %v1245 = vmul.f32 %v1236, %v1240
      %v1246 = vld [vmem:[%s281] sm:$0x1]
      %v1248 = vperm.slane %v1246, 0
      %v1250 = vadd.f32 %v1242, %v1248
      %v1251 = vadd.f32 %v1243, %v1248
      %v1252 = vadd.f32 %v1244, %v1248
      %v1253 = vadd.f32 %v1245, %v1248
      %v1254 = vmax.f32 %v1250, 0.0
      %v1255 = vmax.f32 %v1251, 0.0
      %v1256 = vmax.f32 %v1252, 0.0
      %v1257 = vmax.f32 %v1253, 0.0
      %v1258 = vpack.c.bf16 %v1254, %v1254
      %v1259 = vpack.c.bf16 %v1255, %v1255
      %v1260 = vpack.c.bf16 %v1256, %v1256
      %v1261 = vpack.c.bf16 %v1257, %v1257
      %1262 = vst [vmem:[%s289] sm:$0x3] %v1258
      %1263 = vst [vmem:[%s289 + $0x2] sm:$0x3] %v1259
      %1264 = vst [vmem:[%s289 + $0x4] sm:$0x3] %v1260
      %1265 = vst [vmem:[%s289 + $0x6] sm:$0x3] %v1261
      %p1266 = scmp.lt.s32.totalorder %s20, 1
      %s1267 = scalar_select %p1266, %s20, 1
      %p1268 = scmp.lt.s32.totalorder %s21, 0
      %s1269 = scalar_select %p1268, %s21, 0
      %s1270 = smul.addr %s1267, 4
      %s1271 = sadd.s32 %s1269, %s1270
      %s1272 = smul.addr %s1271, 2
      %s1273 = scalar_lea.vmem %s5, %s1272
      // Predicated region
      $region45: #{exit_flow.8} parent=39 // pred_check
        %p1274 = pneg %p173
      $region46: #{exit_flow.8} parent=39 // pred_check_branch
        %1276 = sbr.rel (%p1274) target = $region48
      $region47: #{exit_flow.8} parent=39 // pred_region
        _
      $region48: #{exit_flow.8} parent=39 // pred_fallthru
        _
    $region40: #{exit_flow.8} parent=5 // pred_fallthru
      _
    %p1277 = scmp.le.s32.totalorder 2, %s11
    // Predicated region
    $region49: #{exit_flow.8} parent=5 // pred_check
      %p1278 = pneg %p1277
    $region50: #{exit_flow.8} parent=5 // pred_check_branch
      %1280 = sbr.rel (%p1278) target = $region52
    $region51: #{exit_flow.8} parent=5 // pred_region
      %s1281 = ssub.s32 %s11, 2
      // Predicated region
      $region53: #{exit_flow.8} parent=51 // pred_check
        %p1282 = pneg %p179
      $region54: #{exit_flow.8} parent=51 // pred_check_branch
        %1284 = sbr.rel (%p1282) target = $region56
      $region55: #{exit_flow.8} parent=51 // pred_region
        %p1285 = scmp.lt.s32.totalorder %s22, 1
        %s1286 = scalar_select %p1285, %s22, 1
        %p1287 = scmp.lt.s32.totalorder %s23, 0
        %s1288 = scalar_select %p1287, %s23, 0
        %s1289 = smul.addr %s1286, 4
        %s1290 = sadd.s32 %s1288, %s1289
        %s1291 = smul.addr %s1290, 2
        %s1292 = scalar_lea.vmem %s5, %s1291
      $region56: #{exit_flow.8} parent=51 // pred_fallthru
        _
    $region52: #{exit_flow.8} parent=5 // pred_fallthru
      _
  $region6: #{exit_flow.8} parent=0 // loop_footer
    %s15 = sadd.s32 1, %s11
  $region7: #{exit_flow.8} parent=0 // loop_footer_branch
    %10 = sbr.rel target = $region3
  $region8: #{exit_flow.8} parent=0 // loop_exit
    _

// kernel: exit_flow.9
$region0: #{exit_flow.9}
  #allocation0 [shape = 'u32[]', space=smem, size = 0x4, offset = 0x4, fixed_abs, tag = 'smem constant byte address 0x4 - core index']
  #allocation1 [shape = 'u32[72,128]{1,0:T(1,128)}', space=vmem, size = 0x9000, scoped, tag = 'internal scratch']
  #allocation2 [shape = 'f32[32,128]{1,0:T(8,128)}', space=vmem, size = 0x4000, scoped, tag = 'scratch operand']
  %s0 = inlined_call_operand.vmem [shape: bf16[2,6,8,128], index: 0, kind: input, shape index: {}]
  %s1 = inlined_call_operand.vmem [shape: bf16[3,3,128,128], index: 1, kind: input, shape index: {}]
  %s2 = inlined_call_operand.vmem [shape: bf16[128,128], index: 2, kind: input, shape index: {}]
  %s3 = inlined_call_operand.vmem [shape: f32[1,128], index: 3, kind: input, shape index: {}]
  %s4 = inlined_call_operand.vmem [shape: f32[1,128], index: 4, kind: input, shape index: {}]
  %s5 = inlined_call_operand.vmem [shape: f32[2,1,128], index: 5, kind: output, shape index: {}]
  %s6 = sld [smem:[#allocation0]]
  $region57: #{exit_flow.9} parent=0
    _
  %s8 = ssub.s32 1, %s6
  %s9 = scalar_select 0, %s8, %s6
  loop: start=0, step=1, limit=4
  $region2: #{exit_flow.9} parent=0 // loop_pre_header
    _
  $region3: #{exit_flow.9} parent=0 // loop_header
    %s11 = sphi 0, %s15
    %p12 = scmp.ge.s32.totalorder %s11, 4
    %s18 = sphi 0, %s30
    %s19 = sphi 0, %s26
    %s20 = sphi 0, %s18
    %s21 = sphi 0, %s19
    %s22 = sphi 0, %s20
    %s23 = sphi 0, %s21
    %s33 = sphi 0, %s35
    %s36 = sphi 0, %s33
    %s37 = sphi 0, %s36
    %s53 = sphi 0, %s37
    %s57 = sphi 0, %s57
    %s59 = sphi 0, %s57
    %s60 = sphi 0, %s59
    %s74 = sphi 0, %s60
    %s80 = sphi 0, %s82
    %s83 = sphi 0, %s80
    %s84 = sphi 0, %s83
    %s100 = sphi 0, %s84
    %s106 = sphi 0, %s108
    %s109 = sphi 0, %s106
    %s110 = sphi 0, %s109
    %s126 = sphi 0, %s110
    %s132 = sphi 0, %s134
    %s135 = sphi 0, %s132
    %s136 = sphi 0, %s135
    %s152 = sphi 0, %s136
    %s160 = sphi 0, %s162
    %s163 = sphi 0, %s160
    %s164 = sphi 0, %s163
    %s180 = sphi 0, %s164
  $region4: #{exit_flow.9} parent=0 // loop_header_branch
    %14 = sbr.rel (%p12) target = $region8
  $region5: #{exit_flow.9} parent=0 // loop_body
    %s16 = ssub.s32 %s11, 1
    %s17 = ssub.s32 %s11, 2
    %s24 = sadd.s32 1, %s19
    %p25 = scmp.ge.s32.totalorder %s24, 1
    %s26 = scalar_select %p25, 0, %s24
    %s27 = sadd.s32 1, %s18
    %s28 = scalar_select %p25, %s27, %s18
    %p29 = scmp.ge.s32.totalorder %s28, 2
    %s30 = scalar_select %p29, 0, %s28
    %s31 = ssub.s32 %s18, %s30
    %p32 = scmp.eq.s32.totalorder %s31, 0
    %s34 = sadd.s32 %s33, 1
    %s35 = scalar_select %p32, %s33, %s34
    %p38 = pneg %p32
    %p39 = scmp.eq.s32.totalorder %s11, 1
    %p40 = por %p38, %p39
    %p41 = scmp.ne.s32.totalorder %s33, %s36
    %p42 = scmp.eq.s32.totalorder %s11, 0
    %p43 = por %p41, %p42
    %p44 = scmp.ne.s32.totalorder %s33, %s36
    %p45 = scmp.eq.s32.totalorder %s16, 1
    %p46 = por %p44, %p45
    %p47 = scmp.ne.s32.totalorder %s36, %s37
    %p48 = scmp.eq.s32.totalorder %s16, 0
    %p49 = por %p47, %p48
    %p50 = scmp.ne.s32.totalorder %s36, %s37
    %p51 = scmp.eq.s32.totalorder %s17, 1
    %p52 = por %p50, %p51
    %p54 = scmp.ne.s32.totalorder %s37, %s53
    %p55 = scmp.eq.s32.totalorder %s17, 0
    %p56 = por %p54, %p55
    %s58 = sadd.s32 %s57, 1
    %p61 = scmp.eq.s32.totalorder %s11, 1
    %p62 = scmp.ne.s32.totalorder %s57, %s59
    %p63 = scmp.eq.s32.totalorder %s11, 0
    %p64 = por %p62, %p63
    %p65 = scmp.ne.s32.totalorder %s57, %s59
    %p66 = scmp.eq.s32.totalorder %s16, 1
    %p67 = por %p65, %p66
    %p68 = scmp.ne.s32.totalorder %s59, %s60
    %p69 = scmp.eq.s32.totalorder %s16, 0
    %p70 = por %p68, %p69
    %p71 = scmp.ne.s32.totalorder %s59, %s60
    %p72 = scmp.eq.s32.totalorder %s17, 1
    %p73 = por %p71, %p72
    %p75 = scmp.ne.s32.totalorder %s60, %s74
    %p76 = scmp.eq.s32.totalorder %s17, 0
    %p77 = por %p75, %p76
    %s78 = ssub.s32 %s19, %s26
    %p79 = scmp.eq.s32.totalorder %s78, 0
    %s81 = sadd.s32 %s80, 1
    %s82 = scalar_select %p79, %s80, %s81
    %p85 = pneg %p79
    %p86 = scmp.eq.s32.totalorder %s11, 1
    %p87 = por %p85, %p86
    %p88 = scmp.ne.s32.totalorder %s80, %s83
    %p89 = scmp.eq.s32.totalorder %s11, 0
    %p90 = por %p88, %p89
    %p91 = scmp.ne.s32.totalorder %s80, %s83
    %p92 = scmp.eq.s32.totalorder %s16, 1
    %p93 = por %p91, %p92
    %p94 = scmp.ne.s32.totalorder %s83, %s84
    %p95 = scmp.eq.s32.totalorder %s16, 0
    %p96 = por %p94, %p95
    %p97 = scmp.ne.s32.totalorder %s83, %s84
    %p98 = scmp.eq.s32.totalorder %s17, 1
    %p99 = por %p97, %p98
    %p101 = scmp.ne.s32.totalorder %s84, %s100
    %p102 = scmp.eq.s32.totalorder %s17, 0
    %p103 = por %p101, %p102
    %s104 = ssub.s32 %s19, %s26
    %p105 = scmp.eq.s32.totalorder %s104, 0
    %s107 = sadd.s32 %s106, 1
    %s108 = scalar_select %p105, %s106, %s107
    %p111 = pneg %p105
    %p112 = scmp.eq.s32.totalorder %s11, 1
    %p113 = por %p111, %p112
    %p114 = scmp.ne.s32.totalorder %s106, %s109
    %p115 = scmp.eq.s32.totalorder %s11, 0
    %p116 = por %p114, %p115
    %p117 = scmp.ne.s32.totalorder %s106, %s109
    %p118 = scmp.eq.s32.totalorder %s16, 1
    %p119 = por %p117, %p118
    %p120 = scmp.ne.s32.totalorder %s109, %s110
    %p121 = scmp.eq.s32.totalorder %s16, 0
    %p122 = por %p120, %p121
    %p123 = scmp.ne.s32.totalorder %s109, %s110
    %p124 = scmp.eq.s32.totalorder %s17, 1
    %p125 = por %p123, %p124
    %p127 = scmp.ne.s32.totalorder %s110, %s126
    %p128 = scmp.eq.s32.totalorder %s17, 0
    %p129 = por %p127, %p128
    %s130 = ssub.s32 %s19, %s26
    %p131 = scmp.eq.s32.totalorder %s130, 0
    %s133 = sadd.s32 %s132, 1
    %s134 = scalar_select %p131, %s132, %s133
    %p137 = pneg %p131
    %p138 = scmp.eq.s32.totalorder %s11, 1
    %p139 = por %p137, %p138
    %p140 = scmp.ne.s32.totalorder %s132, %s135
    %p141 = scmp.eq.s32.totalorder %s11, 0
    %p142 = por %p140, %p141
    %p143 = scmp.ne.s32.totalorder %s132, %s135
    %p144 = scmp.eq.s32.totalorder %s16, 1
    %p145 = por %p143, %p144
    %p146 = scmp.ne.s32.totalorder %s135, %s136
    %p147 = scmp.eq.s32.totalorder %s16, 0
    %p148 = por %p146, %p147
    %p149 = scmp.ne.s32.totalorder %s135, %s136
    %p150 = scmp.eq.s32.totalorder %s17, 1
    %p151 = por %p149, %p150
    %p153 = scmp.ne.s32.totalorder %s136, %s152
    %p154 = scmp.eq.s32.totalorder %s17, 0
    %p155 = por %p153, %p154
    %s156 = ssub.s32 %s18, %s30
    %s157 = ssub.s32 %s19, %s26
    %s158 = sor.u32 %s156, %s157
    %p159 = scmp.eq.s32.totalorder %s158, 0
    %s161 = sadd.s32 %s160, 1
    %s162 = scalar_select %p159, %s160, %s161
    %p165 = pneg %p159
    %p166 = scmp.eq.s32.totalorder %s11, 1
    %p167 = por %p165, %p166
    %p168 = scmp.ne.s32.totalorder %s160, %s163
    %p169 = scmp.eq.s32.totalorder %s11, 0
    %p170 = por %p168, %p169
    %p171 = scmp.ne.s32.totalorder %s160, %s163
    %p172 = scmp.eq.s32.totalorder %s16, 1
    %p173 = por %p171, %p172
    %p174 = scmp.ne.s32.totalorder %s163, %s164
    %p175 = scmp.eq.s32.totalorder %s16, 0
    %p176 = por %p174, %p175
    %p177 = scmp.ne.s32.totalorder %s163, %s164
    %p178 = scmp.eq.s32.totalorder %s17, 1
    %p179 = por %p177, %p178
    %p181 = scmp.ne.s32.totalorder %s164, %s180
    %p182 = scmp.eq.s32.totalorder %s17, 0
    %p183 = por %p181, %p182
    %p184 = scmp.le.s32.totalorder 1, %s11
    %p185 = scmp.lt.s32.totalorder %s11, 3
    %p186 = pnand %p184, %p185
    %p187 = pneg %p186
    // Predicated region
    $region9: #{exit_flow.9} parent=5 // pred_check
      _
    $region10: #{exit_flow.9} parent=5 // pred_check_branch
      %189 = sbr.rel (%p186) target = $region12
    $region11: #{exit_flow.9} parent=5 // pred_region
      %s190 = ssub.s32 %s11, 1
      // Predicated region
      $region13: #{exit_flow.9} parent=11 // pred_check
        %p191 = pneg %p70
      $region14: #{exit_flow.9} parent=11 // pred_check_branch
        %193 = sbr.rel (%p191) target = $region16
      $region15: #{exit_flow.9} parent=11 // pred_region
        _
      $region16: #{exit_flow.9} parent=11 // pred_fallthru
        _
      // Predicated region
      $region17: #{exit_flow.9} parent=11 // pred_check
        %p194 = pneg %p96
      $region18: #{exit_flow.9} parent=11 // pred_check_branch
        %196 = sbr.rel (%p194) target = $region20
      $region19: #{exit_flow.9} parent=11 // pred_region
        %p197 = scmp.lt.s32.totalorder %s21, 0
        %s198 = scalar_select %p197, %s21, 0
        %s199 = smul.addr %s198, 4
        %s200 = scalar_lea.vmem %s2, %s199
      $region20: #{exit_flow.9} parent=11 // pred_fallthru
        _
      // Predicated region
      $region21: #{exit_flow.9} parent=11 // pred_check
        %p201 = pneg %p122
      $region22: #{exit_flow.9} parent=11 // pred_check_branch
        %203 = sbr.rel (%p201) target = $region24
      $region23: #{exit_flow.9} parent=11 // pred_region
        %p204 = scmp.lt.s32.totalorder %s21, 0
        %s205 = scalar_select %p204, %s21, 0
        %s206 = scalar_lea.vmem %s3, %s205
      $region24: #{exit_flow.9} parent=11 // pred_fallthru
        _
      // Predicated region
      $region25: #{exit_flow.9} parent=11 // pred_check
        %p207 = pneg %p148
      $region26: #{exit_flow.9} parent=11 // pred_check_branch
        %209 = sbr.rel (%p207) target = $region28
      $region27: #{exit_flow.9} parent=11 // pred_region
        %p210 = scmp.lt.s32.totalorder %s21, 0
        %s211 = scalar_select %p210, %s21, 0
        %s212 = scalar_lea.vmem %s4, %s211
      $region28: #{exit_flow.9} parent=11 // pred_fallthru
        _
    $region12: #{exit_flow.9} parent=5 // pred_fallthru
      _
    %p213 = scmp.lt.s32.totalorder %s11, 2
    // Predicated region
    $region29: #{exit_flow.9} parent=5 // pred_check
      %p214 = pneg %p213
    $region30: #{exit_flow.9} parent=5 // pred_check_branch
      %216 = sbr.rel (%p214) target = $region32
    $region31: #{exit_flow.9} parent=5 // pred_region
      // Predicated region
      $region33: #{exit_flow.9} parent=31 // pred_check
        %p217 = pneg %p43
      $region34: #{exit_flow.9} parent=31 // pred_check_branch
        %219 = sbr.rel (%p217) target = $region36
      $region35: #{exit_flow.9} parent=31 // pred_region
        %p220 = scmp.lt.s32.totalorder %s18, 1
        %s221 = scalar_select %p220, %s18, 1
        %s222 = smul.addr %s221, 6
        %s223 = smul.addr %s222, 4
        %s224 = scalar_lea.vmem %s0, %s223
      $region36: #{exit_flow.9} parent=31 // pred_fallthru
        _
    $region32: #{exit_flow.9} parent=5 // pred_fallthru
      _
    %p225 = scmp.le.s32.totalorder 1, %s11
    %p226 = scmp.lt.s32.totalorder %s11, 3
    %p227 = pnand %p225, %p226
    %p228 = pneg %p227
    // Predicated region
    $region37: #{exit_flow.9} parent=5 // pred_check
      _
    $region38: #{exit_flow.9} parent=5 // pred_check_branch
      %230 = sbr.rel (%p227) target = $region40
    $region39: #{exit_flow.9} parent=5 // pred_region
      %s231 = ssub.s32 %s11, 1
      %p232 = scmp.lt.s32.totalorder %s20, 1
      %s233 = scalar_select %p232, %s20, 1
      %s234 = smul.addr %s233, 6
      %s235 = smul.addr %s234, 4
      %s236 = scalar_lea.vmem %s0, %s235
      %p237 = pneg %p49
      %p238 = pneg %p46
      %p239 = pneg %p70
      %p240 = pneg %p67
      %p241 = scmp.lt.s32.totalorder %s21, 0
      %s242 = scalar_select %p241, %s21, 0
      %s243 = smul.addr %s242, 4
      %s244 = scalar_lea.vmem %s2, %s243
      %p245 = pneg %p96
      %p246 = pneg %p93
      %p247 = scmp.lt.s32.totalorder %s21, 0
      %s248 = scalar_select %p247, %s21, 0
      %s249 = scalar_lea.vmem %s3, %s248
      %p250 = pneg %p122
      %p251 = pneg %p119
      %p252 = scmp.lt.s32.totalorder %s21, 0
      %s253 = scalar_select %p252, %s21, 0
      %s254 = scalar_lea.vmem %s4, %s253
      %p255 = pneg %p148
      %p256 = pneg %p145
      %p257 = pneg %p176
      %p258 = pneg %p173
      %p259 = scmp.lt.s32.totalorder %s20, 1
      %s260 = scalar_select %p259, %s20, 1
      %p261 = scmp.lt.s32.totalorder %s21, 0
      %s262 = scalar_select %p261, %s21, 0
      %s263 = sadd.s32 %s262, %s260
      %s264 = scalar_lea.vmem %s5, %s263
      %p265 = scmp.lt.s32.totalorder %s20, 1
      %s266 = scalar_select %p265, %s20, 1
      %s267 = smul.addr %s266, 6
      %s268 = smul.addr %s267, 4
      %s269 = scalar_lea.vmem %s0, %s268
      %p270 = scmp.lt.s32.totalorder %s21, 0
      %s271 = scalar_select %p270, %s21, 0
      %s272 = smul.addr %s271, 4
      %s273 = scalar_lea.vmem %s2, %s272
      %p274 = scmp.lt.s32.totalorder %s21, 0
      %s275 = scalar_select %p274, %s21, 0
      %s276 = scalar_lea.vmem %s3, %s275
      %p277 = scmp.lt.s32.totalorder %s21, 0
      %s278 = scalar_select %p277, %s21, 0
      %s279 = scalar_lea.vmem %s4, %s278
      %p280 = scmp.lt.s32.totalorder %s20, 1
      %s281 = scalar_select %p280, %s20, 1
      %p282 = scmp.lt.s32.totalorder %s21, 0
      %s283 = scalar_select %p282, %s21, 0
      %s284 = sadd.s32 %s283, %s281
      %s285 = scalar_lea.vmem %s5, %s284
      %p286 = scmp.eq.s32.totalorder %s21, 0
      // Predicated region
      $region41: #{exit_flow.9} parent=39 // pred_check
        %p287 = pneg %p286
      $region42: #{exit_flow.9} parent=39 // pred_check_branch
        %289 = sbr.rel (%p287) target = $region44
      $region43: #{exit_flow.9} parent=39 // pred_region
        %v290 = vld [vmem:[%s269] sm:$0xf]
        %v291 = vld [vmem:[%s269 + $0x4] sm:$0xf]
        %v292 = vld [vmem:[%s269 + $0x8] sm:$0xf]
        %v293 = vld [vmem:[%s269 + $0xc] sm:$0xf]
        %v294 = vld [vmem:[%s269 + $0x10] sm:$0xf]
        %v295 = vld [vmem:[%s269 + $0x14] sm:$0xf]
        %v296 = vld [vmem:[%s1] sm:$0xf]
        %v297 = vld [vmem:[%s1 + $0x4] sm:$0xf]
        %v298 = vld [vmem:[%s1 + $0x8] sm:$0xf]
        %v299 = vld [vmem:[%s1 + $0xc] sm:$0xf]
        %v300 = vld [vmem:[%s1 + $0x10] sm:$0xf]
        %v301 = vld [vmem:[%s1 + $0x14] sm:$0xf]
        %v302 = vld [vmem:[%s1 + $0x18] sm:$0xf]
        %v303 = vld [vmem:[%s1 + $0x1c] sm:$0xf]
        %v304 = vld [vmem:[%s1 + $0x20] sm:$0xf]
        %v305 = vld [vmem:[%s1 + $0x24] sm:$0xf]
        %v306 = vld [vmem:[%s1 + $0x28] sm:$0xf]
        %v307 = vld [vmem:[%s1 + $0x2c] sm:$0xf]
        %v308 = vld [vmem:[%s1 + $0x30] sm:$0xf]
        %v309 = vld [vmem:[%s1 + $0x34] sm:$0xf]
        %v310 = vld [vmem:[%s1 + $0x38] sm:$0xf]
        %v311 = vld [vmem:[%s1 + $0x3c] sm:$0xf]
        %s312 = scalar_lea.vmem %s1, 192
        %v313 = vld [vmem:[%s312] sm:$0xf]
        %v314 = vld [vmem:[%s312 + $0x4] sm:$0xf]
        %v315 = vld [vmem:[%s312 + $0x8] sm:$0xf]
        %v316 = vld [vmem:[%s312 + $0xc] sm:$0xf]
        %v317 = vld [vmem:[%s312 + $0x10] sm:$0xf]
        %v318 = vld [vmem:[%s312 + $0x14] sm:$0xf]
        %v319 = vld [vmem:[%s312 + $0x18] sm:$0xf]
        %v320 = vld [vmem:[%s312 + $0x1c] sm:$0xf]
        %v321 = vld [vmem:[%s312 + $0x20] sm:$0xf]
        %v322 = vld [vmem:[%s312 + $0x24] sm:$0xf]
        %v323 = vld [vmem:[%s312 + $0x28] sm:$0xf]
        %v324 = vld [vmem:[%s312 + $0x2c] sm:$0xf]
        %v325 = vld [vmem:[%s312 + $0x30] sm:$0xf]
        %v326 = vld [vmem:[%s312 + $0x34] sm:$0xf]
        %v327 = vld [vmem:[%s312 + $0x38] sm:$0xf]
        %v328 = vld [vmem:[%s312 + $0x3c] sm:$0xf]
        %v333 = vunpack.c.l.b16 %v291
        %v334 = vunpack.c.l.b16 %v292
        %v335 = vunpack.c.l.b16 %v293
        %v336 = vunpack.c.l.b16 %v294
        %v337 = vpack.c.b16 %v334, %v333
        %v338 = vpack.c.b16 %v336, %v335
        %v357 = vunpack.c.l.b16 %v313
        %v358 = vunpack.c.l.b16 %v314
        %v359 = vunpack.c.l.b16 %v315
        %v360 = vunpack.c.l.b16 %v316
        %v361 = vunpack.c.l.b16 %v317
        %v362 = vunpack.c.l.b16 %v318
        %v363 = vunpack.c.l.b16 %v319
        %v364 = vunpack.c.l.b16 %v320
        %v365 = vunpack.c.l.b16 %v321
        %v366 = vunpack.c.l.b16 %v322
        %v367 = vunpack.c.l.b16 %v323
        %v368 = vunpack.c.l.b16 %v324
        %v369 = vunpack.c.l.b16 %v325
        %v370 = vunpack.c.l.b16 %v326
        %v371 = vunpack.c.l.b16 %v327
        %v372 = vunpack.c.l.b16 %v328
        %v373 = vpack.c.b16 %v358, %v357
        %v374 = vpack.c.b16 %v360, %v359
        %v375 = vpack.c.b16 %v362, %v361
        %v376 = vpack.c.b16 %v364, %v363
        %v377 = vpack.c.b16 %v366, %v365
        %v378 = vpack.c.b16 %v368, %v367
        %v379 = vpack.c.b16 %v370, %v369
        %v380 = vpack.c.b16 %v372, %v371
        %389 = vmatpush.bf16.msra.mxu0 %v380
        %390 = vmatpush.bf16.msra.mxu0 %v379
        %391 = vmatpush.bf16.msra.mxu0 %v378
        %392 = vmatpush.bf16.msra.mxu0 %v377
        %393 = vmatpush.bf16.msra.mxu0 %v376
        %394 = vmatpush.bf16.msra.mxu0 %v375
        %395 = vmatpush.bf16.msra.mxu0 %v374
        %396 = vmatpush.bf16.msra.mxu0 %v373
        %397 = vmatmul.bf16.gmra.mxu0 %v337
        %v398 = vpop.f32.mrf.mxu0
        %v399 = vadd.f32 0.0, %v398
        %v400 = vpop.f32.mrf.mxu0
        %v401 = vadd.f32 0.0, %v400
        %402 = vmatmul.bf16.gmra.mxu0 %v338
        %v403 = vpop.f32.mrf.mxu0
        %v404 = vadd.f32 0.0, %v403
        %v405 = vpop.f32.mrf.mxu0
        %v406 = vadd.f32 0.0, %v405
        %407 = vdwg.mxu0
        %v409 = vunpack.c.l.b16 %v290
        %v410 = vpack.c.b16 %v333, %v409
        %v411 = vpack.c.b16 %v335, %v334
        %v430 = vunpack.c.l.b16 %v296
        %v431 = vunpack.c.l.b16 %v297
        %v432 = vunpack.c.l.b16 %v298
        %v433 = vunpack.c.l.b16 %v299
        %v434 = vunpack.c.l.b16 %v300
        %v435 = vunpack.c.l.b16 %v301
        %v436 = vunpack.c.l.b16 %v302
        %v437 = vunpack.c.l.b16 %v303
        %v438 = vunpack.c.l.b16 %v304
        %v439 = vunpack.c.l.b16 %v305
        %v440 = vunpack.c.l.b16 %v306
        %v441 = vunpack.c.l.b16 %v307
        %v442 = vunpack.c.l.b16 %v308
        %v443 = vunpack.c.l.b16 %v309
        %v444 = vunpack.c.l.b16 %v310
        %v445 = vunpack.c.l.b16 %v311
        %v446 = vpack.c.b16 %v431, %v430
        %v447 = vpack.c.b16 %v433, %v432
        %v448 = vpack.c.b16 %v435, %v434
        %v449 = vpack.c.b16 %v437, %v436
        %v450 = vpack.c.b16 %v439, %v438
        %v451 = vpack.c.b16 %v441, %v440
        %v452 = vpack.c.b16 %v443, %v442
        %v453 = vpack.c.b16 %v445, %v444
        %462 = vmatpush.bf16.msra.mxu0 %v453
        %463 = vmatpush.bf16.msra.mxu0 %v452
        %464 = vmatpush.bf16.msra.mxu0 %v451
        %465 = vmatpush.bf16.msra.mxu0 %v450
        %466 = vmatpush.bf16.msra.mxu0 %v449
        %467 = vmatpush.bf16.msra.mxu0 %v448
        %468 = vmatpush.bf16.msra.mxu0 %v447
        %469 = vmatpush.bf16.msra.mxu0 %v446
        %470 = vmatmul.bf16.gmra.mxu0 %v410
        %v471 = vpop.f32.mrf.mxu0
        %v472 = vadd.f32 %v399, %v471
        %v473 = vpop.f32.mrf.mxu0
        %v474 = vadd.f32 %v401, %v473
        %475 = vmatmul.bf16.gmra.mxu0 %v411
        %v476 = vpop.f32.mrf.mxu0
        %v477 = vadd.f32 %v404, %v476
        %v478 = vpop.f32.mrf.mxu0
        %v479 = vadd.f32 %v406, %v478
        %480 = vdwg.mxu0
        %s481 = scalar_lea.vmem %s1, 384
        %v482 = vld [vmem:[%s481] sm:$0xf]
        %v483 = vld [vmem:[%s481 + $0x4] sm:$0xf]
        %v484 = vld [vmem:[%s481 + $0x8] sm:$0xf]
        %v485 = vld [vmem:[%s481 + $0xc] sm:$0xf]
        %v486 = vld [vmem:[%s481 + $0x10] sm:$0xf]
        %v487 = vld [vmem:[%s481 + $0x14] sm:$0xf]
        %v488 = vld [vmem:[%s481 + $0x18] sm:$0xf]
        %v489 = vld [vmem:[%s481 + $0x1c] sm:$0xf]
        %v490 = vld [vmem:[%s481 + $0x20] sm:$0xf]
        %v491 = vld [vmem:[%s481 + $0x24] sm:$0xf]
        %v492 = vld [vmem:[%s481 + $0x28] sm:$0xf]
        %v493 = vld [vmem:[%s481 + $0x2c] sm:$0xf]
        %v494 = vld [vmem:[%s481 + $0x30] sm:$0xf]
        %v495 = vld [vmem:[%s481 + $0x34] sm:$0xf]
        %v496 = vld [vmem:[%s481 + $0x38] sm:$0xf]
        %v497 = vld [vmem:[%s481 + $0x3c] sm:$0xf]
        %v499 = vunpack.c.l.b16 %v295
        %v500 = vpack.c.b16 %v499, %v336
        %v518 = vunpack.c.l.b16 %v482
        %v519 = vunpack.c.l.b16 %v483
        %v520 = vunpack.c.l.b16 %v484
        %v521 = vunpack.c.l.b16 %v485
        %v522 = vunpack.c.l.b16 %v486
        %v523 = vunpack.c.l.b16 %v487
        %v524 = vunpack.c.l.b16 %v488
        %v525 = vunpack.c.l.b16 %v489
        %v526 = vunpack.c.l.b16 %v490
        %v527 = vunpack.c.l.b16 %v491
        %v528 = vunpack.c.l.b16 %v492
        %v529 = vunpack.c.l.b16 %v493
        %v530 = vunpack.c.l.b16 %v494
        %v531 = vunpack.c.l.b16 %v495
        %v532 = vunpack.c.l.b16 %v496
        %v533 = vunpack.c.l.b16 %v497
        %v534 = vpack.c.b16 %v519, %v518
        %v535 = vpack.c.b16 %v521, %v520
        %v536 = vpack.c.b16 %v523, %v522
        %v537 = vpack.c.b16 %v525, %v524
        %v538 = vpack.c.b16 %v527, %v526
        %v539 = vpack.c.b16 %v529, %v528
        %v540 = vpack.c.b16 %v531, %v530
        %v541 = vpack.c.b16 %v533, %v532
        %550 = vmatpush.bf16.msra.mxu0 %v541
        %551 = vmatpush.bf16.msra.mxu0 %v540
        %552 = vmatpush.bf16.msra.mxu0 %v539
        %553 = vmatpush.bf16.msra.mxu0 %v538
        %554 = vmatpush.bf16.msra.mxu0 %v537
        %555 = vmatpush.bf16.msra.mxu0 %v536
        %556 = vmatpush.bf16.msra.mxu0 %v535
        %557 = vmatpush.bf16.msra.mxu0 %v534
        %558 = vmatmul.bf16.gmra.mxu0 %v411
        %v559 = vpop.f32.mrf.mxu0
        %v560 = vadd.f32 0.0, %v559
        %v561 = vpop.f32.mrf.mxu0
        %v562 = vadd.f32 0.0, %v561
        %563 = vmatmul.bf16.gmra.mxu0 %v500
        %v564 = vpop.f32.mrf.mxu0
        %v565 = vadd.f32 0.0, %v564
        %v566 = vpop.f32.mrf.mxu0
        %v567 = vadd.f32 0.0, %v566
        %568 = vdwg.mxu0
        %v569 = vadd.f32 %v472, %v560
        %v570 = vadd.f32 %v474, %v562
        %v571 = vadd.f32 %v477, %v565
        %v572 = vadd.f32 %v479, %v567
        %573 = vst [vmem:[#allocation2] sm:$0xff] %v569
        %574 = vst [vmem:[#allocation2 + $0x8] sm:$0xff] %v570
        %575 = vst [vmem:[#allocation2 + $0x10] sm:$0xff] %v571
        %576 = vst [vmem:[#allocation2 + $0x18] sm:$0xff] %v572
        %s577 = scalar_lea.vmem %s1, 64
        %v578 = vld [vmem:[%s577] sm:$0xf]
        %v579 = vld [vmem:[%s577 + $0x4] sm:$0xf]
        %v580 = vld [vmem:[%s577 + $0x8] sm:$0xf]
        %v581 = vld [vmem:[%s577 + $0xc] sm:$0xf]
        %v582 = vld [vmem:[%s577 + $0x10] sm:$0xf]
        %v583 = vld [vmem:[%s577 + $0x14] sm:$0xf]
        %v584 = vld [vmem:[%s577 + $0x18] sm:$0xf]
        %v585 = vld [vmem:[%s577 + $0x1c] sm:$0xf]
        %v586 = vld [vmem:[%s577 + $0x20] sm:$0xf]
        %v587 = vld [vmem:[%s577 + $0x24] sm:$0xf]
        %v588 = vld [vmem:[%s577 + $0x28] sm:$0xf]
        %v589 = vld [vmem:[%s577 + $0x2c] sm:$0xf]
        %v590 = vld [vmem:[%s577 + $0x30] sm:$0xf]
        %v591 = vld [vmem:[%s577 + $0x34] sm:$0xf]
        %v592 = vld [vmem:[%s577 + $0x38] sm:$0xf]
        %v593 = vld [vmem:[%s577 + $0x3c] sm:$0xf]
        %s594 = scalar_lea.vmem %s1, 256
        %v595 = vld [vmem:[%s594] sm:$0xf]
        %v596 = vld [vmem:[%s594 + $0x4] sm:$0xf]
        %v597 = vld [vmem:[%s594 + $0x8] sm:$0xf]
        %v598 = vld [vmem:[%s594 + $0xc] sm:$0xf]
        %v599 = vld [vmem:[%s594 + $0x10] sm:$0xf]
        %v600 = vld [vmem:[%s594 + $0x14] sm:$0xf]
        %v601 = vld [vmem:[%s594 + $0x18] sm:$0xf]
        %v602 = vld [vmem:[%s594 + $0x1c] sm:$0xf]
        %v603 = vld [vmem:[%s594 + $0x20] sm:$0xf]
        %v604 = vld [vmem:[%s594 + $0x24] sm:$0xf]
        %v605 = vld [vmem:[%s594 + $0x28] sm:$0xf]
        %v606 = vld [vmem:[%s594 + $0x2c] sm:$0xf]
        %v607 = vld [vmem:[%s594 + $0x30] sm:$0xf]
        %v608 = vld [vmem:[%s594 + $0x34] sm:$0xf]
        %v609 = vld [vmem:[%s594 + $0x38] sm:$0xf]
        %v610 = vld [vmem:[%s594 + $0x3c] sm:$0xf]
        %v627 = vunpack.c.l.b16 %v595
        %v628 = vunpack.c.l.b16 %v596
        %v629 = vunpack.c.l.b16 %v597
        %v630 = vunpack.c.l.b16 %v598
        %v631 = vunpack.c.l.b16 %v599
        %v632 = vunpack.c.l.b16 %v600
        %v633 = vunpack.c.l.b16 %v601
        %v634 = vunpack.c.l.b16 %v602
        %v635 = vunpack.c.l.b16 %v603
        %v636 = vunpack.c.l.b16 %v604
        %v637 = vunpack.c.l.b16 %v605
        %v638 = vunpack.c.l.b16 %v606
        %v639 = vunpack.c.l.b16 %v607
        %v640 = vunpack.c.l.b16 %v608
        %v641 = vunpack.c.l.b16 %v609
        %v642 = vunpack.c.l.b16 %v610
        %v643 = vpack.c.b16 %v628, %v627
        %v644 = vpack.c.b16 %v630, %v629
        %v645 = vpack.c.b16 %v632, %v631
        %v646 = vpack.c.b16 %v634, %v633
        %v647 = vpack.c.b16 %v636, %v635
        %v648 = vpack.c.b16 %v638, %v637
        %v649 = vpack.c.b16 %v640, %v639
        %v650 = vpack.c.b16 %v642, %v641
        %659 = vmatpush.bf16.msra.mxu0 %v650
        %660 = vmatpush.bf16.msra.mxu0 %v649
        %661 = vmatpush.bf16.msra.mxu0 %v648
        %662 = vmatpush.bf16.msra.mxu0 %v647
        %663 = vmatpush.bf16.msra.mxu0 %v646
        %664 = vmatpush.bf16.msra.mxu0 %v645
        %665 = vmatpush.bf16.msra.mxu0 %v644
        %666 = vmatpush.bf16.msra.mxu0 %v643
        %667 = vmatmul.bf16.gmra.mxu0 %v337
        %v668 = vpop.f32.mrf.mxu0
        %v669 = vadd.f32 0.0, %v668
        %v670 = vpop.f32.mrf.mxu0
        %v671 = vadd.f32 0.0, %v670
        %672 = vmatmul.bf16.gmra.mxu0 %v338
        %v673 = vpop.f32.mrf.mxu0
        %v674 = vadd.f32 0.0, %v673
        %v675 = vpop.f32.mrf.mxu0
        %v676 = vadd.f32 0.0, %v675
        %677 = vdwg.mxu0
        %v694 = vunpack.c.l.b16 %v578
        %v695 = vunpack.c.l.b16 %v579
        %v696 = vunpack.c.l.b16 %v580
        %v697 = vunpack.c.l.b16 %v581
        %v698 = vunpack.c.l.b16 %v582
        %v699 = vunpack.c.l.b16 %v583
        %v700 = vunpack.c.l.b16 %v584
        %v701 = vunpack.c.l.b16 %v585
        %v702 = vunpack.c.l.b16 %v586
        %v703 = vunpack.c.l.b16 %v587
        %v704 = vunpack.c.l.b16 %v588
        %v705 = vunpack.c.l.b16 %v589
        %v706 = vunpack.c.l.b16 %v590
        %v707 = vunpack.c.l.b16 %v591
        %v708 = vunpack.c.l.b16 %v592
        %v709 = vunpack.c.l.b16 %v593
        %v710 = vpack.c.b16 %v695, %v694
        %v711 = vpack.c.b16 %v697, %v696
        %v712 = vpack.c.b16 %v699, %v698
        %v713 = vpack.c.b16 %v701, %v700
        %v714 = vpack.c.b16 %v703, %v702
        %v715 = vpack.c.b16 %v705, %v704
        %v716 = vpack.c.b16 %v707, %v706
        %v717 = vpack.c.b16 %v709, %v708
        %726 = vmatpush.bf16.msra.mxu0 %v717
        %727 = vmatpush.bf16.msra.mxu0 %v716
        %728 = vmatpush.bf16.msra.mxu0 %v715
        %729 = vmatpush.bf16.msra.mxu0 %v714
        %730 = vmatpush.bf16.msra.mxu0 %v713
        %731 = vmatpush.bf16.msra.mxu0 %v712
        %732 = vmatpush.bf16.msra.mxu0 %v711
        %733 = vmatpush.bf16.msra.mxu0 %v710
        %734 = vmatmul.bf16.gmra.mxu0 %v410
        %v735 = vpop.f32.mrf.mxu0
        %v736 = vadd.f32 %v669, %v735
        %v737 = vpop.f32.mrf.mxu0
        %v738 = vadd.f32 %v671, %v737
        %739 = vmatmul.bf16.gmra.mxu0 %v411
        %v740 = vpop.f32.mrf.mxu0
        %v741 = vadd.f32 %v674, %v740
        %v742 = vpop.f32.mrf.mxu0
        %v743 = vadd.f32 %v676, %v742
        %744 = vdwg.mxu0
        %s745 = scalar_lea.vmem %s1, 448
        %v746 = vld [vmem:[%s745] sm:$0xf]
        %v747 = vld [vmem:[%s745 + $0x4] sm:$0xf]
        %v748 = vld [vmem:[%s745 + $0x8] sm:$0xf]
        %v749 = vld [vmem:[%s745 + $0xc] sm:$0xf]
        %v750 = vld [vmem:[%s745 + $0x10] sm:$0xf]
        %v751 = vld [vmem:[%s745 + $0x14] sm:$0xf]
        %v752 = vld [vmem:[%s745 + $0x18] sm:$0xf]
        %v753 = vld [vmem:[%s745 + $0x1c] sm:$0xf]
        %v754 = vld [vmem:[%s745 + $0x20] sm:$0xf]
        %v755 = vld [vmem:[%s745 + $0x24] sm:$0xf]
        %v756 = vld [vmem:[%s745 + $0x28] sm:$0xf]
        %v757 = vld [vmem:[%s745 + $0x2c] sm:$0xf]
        %v758 = vld [vmem:[%s745 + $0x30] sm:$0xf]
        %v759 = vld [vmem:[%s745 + $0x34] sm:$0xf]
        %v760 = vld [vmem:[%s745 + $0x38] sm:$0xf]
        %v761 = vld [vmem:[%s745 + $0x3c] sm:$0xf]
        %v778 = vunpack.c.l.b16 %v746
        %v779 = vunpack.c.l.b16 %v747
        %v780 = vunpack.c.l.b16 %v748
        %v781 = vunpack.c.l.b16 %v749
        %v782 = vunpack.c.l.b16 %v750
        %v783 = vunpack.c.l.b16 %v751
        %v784 = vunpack.c.l.b16 %v752
        %v785 = vunpack.c.l.b16 %v753
        %v786 = vunpack.c.l.b16 %v754
        %v787 = vunpack.c.l.b16 %v755
        %v788 = vunpack.c.l.b16 %v756
        %v789 = vunpack.c.l.b16 %v757
        %v790 = vunpack.c.l.b16 %v758
        %v791 = vunpack.c.l.b16 %v759
        %v792 = vunpack.c.l.b16 %v760
        %v793 = vunpack.c.l.b16 %v761
        %v794 = vpack.c.b16 %v779, %v778
        %v795 = vpack.c.b16 %v781, %v780
        %v796 = vpack.c.b16 %v783, %v782
        %v797 = vpack.c.b16 %v785, %v784
        %v798 = vpack.c.b16 %v787, %v786
        %v799 = vpack.c.b16 %v789, %v788
        %v800 = vpack.c.b16 %v791, %v790
        %v801 = vpack.c.b16 %v793, %v792
        %810 = vmatpush.bf16.msra.mxu0 %v801
        %811 = vmatpush.bf16.msra.mxu0 %v800
        %812 = vmatpush.bf16.msra.mxu0 %v799
        %813 = vmatpush.bf16.msra.mxu0 %v798
        %814 = vmatpush.bf16.msra.mxu0 %v797
        %815 = vmatpush.bf16.msra.mxu0 %v796
        %816 = vmatpush.bf16.msra.mxu0 %v795
        %817 = vmatpush.bf16.msra.mxu0 %v794
        %818 = vmatmul.bf16.gmra.mxu0 %v411
        %v819 = vpop.f32.mrf.mxu0
        %v820 = vadd.f32 0.0, %v819
        %v821 = vpop.f32.mrf.mxu0
        %v822 = vadd.f32 0.0, %v821
        %823 = vmatmul.bf16.gmra.mxu0 %v500
        %v824 = vpop.f32.mrf.mxu0
        %v825 = vadd.f32 0.0, %v824
        %v826 = vpop.f32.mrf.mxu0
        %v827 = vadd.f32 0.0, %v826
        %828 = vdwg.mxu0
        %v829 = vadd.f32 %v736, %v820
        %v830 = vadd.f32 %v738, %v822
        %v831 = vadd.f32 %v741, %v825
        %v832 = vadd.f32 %v743, %v827
        %v833 = vld [vmem:[#allocation2] sm:$0xff]
        %v834 = vld [vmem:[#allocation2 + $0x8] sm:$0xff]
        %v835 = vld [vmem:[#allocation2 + $0x10] sm:$0xff]
        %v836 = vld [vmem:[#allocation2 + $0x18] sm:$0x7f]
        %vm841 = vcmask 1046528
        %v842 = vrot.slane %v829, 1
        %v843 = vrot.slane %v830, 1
        %v844 = vsel %vm841, %v842, %v843
        %v845 = vrot.slane %v831, 1
        %v846 = vsel %vm841, %v843, %v845
        %v847 = vrot.slane %v832, 1
        %v848 = vsel %vm841, %v845, %v847
        %v853 = vadd.f32 %v833, %v844
        %v854 = vadd.f32 %v834, %v846
        %v855 = vadd.f32 %v835, %v848
        %v856 = vadd.f32 %v836, %v847
        %857 = vst [vmem:[#allocation2] sm:$0xff] %v853
        %858 = vst [vmem:[#allocation2 + $0x8] sm:$0xff] %v854
        %859 = vst [vmem:[#allocation2 + $0x10] sm:$0xff] %v855
        %860 = vst [vmem:[#allocation2 + $0x18] sm:$0x7f] %v856
        %s861 = scalar_lea.vmem %s1, 128
        %v862 = vld [vmem:[%s861] sm:$0xf]
        %v863 = vld [vmem:[%s861 + $0x4] sm:$0xf]
        %v864 = vld [vmem:[%s861 + $0x8] sm:$0xf]
        %v865 = vld [vmem:[%s861 + $0xc] sm:$0xf]
        %v866 = vld [vmem:[%s861 + $0x10] sm:$0xf]
        %v867 = vld [vmem:[%s861 + $0x14] sm:$0xf]
        %v868 = vld [vmem:[%s861 + $0x18] sm:$0xf]
        %v869 = vld [vmem:[%s861 + $0x1c] sm:$0xf]
        %v870 = vld [vmem:[%s861 + $0x20] sm:$0xf]
        %v871 = vld [vmem:[%s861 + $0x24] sm:$0xf]
        %v872 = vld [vmem:[%s861 + $0x28] sm:$0xf]
        %v873 = vld [vmem:[%s861 + $0x2c] sm:$0xf]
        %v874 = vld [vmem:[%s861 + $0x30] sm:$0xf]
        %v875 = vld [vmem:[%s861 + $0x34] sm:$0xf]
        %v876 = vld [vmem:[%s861 + $0x38] sm:$0xf]
        %v877 = vld [vmem:[%s861 + $0x3c] sm:$0xf]
        %s878 = scalar_lea.vmem %s1, 320
        %v879 = vld [vmem:[%s878] sm:$0xf]
        %v880 = vld [vmem:[%s878 + $0x4] sm:$0xf]
        %v881 = vld [vmem:[%s878 + $0x8] sm:$0xf]
        %v882 = vld [vmem:[%s878 + $0xc] sm:$0xf]
        %v883 = vld [vmem:[%s878 + $0x10] sm:$0xf]
        %v884 = vld [vmem:[%s878 + $0x14] sm:$0xf]
        %v885 = vld [vmem:[%s878 + $0x18] sm:$0xf]
        %v886 = vld [vmem:[%s878 + $0x1c] sm:$0xf]
        %v887 = vld [vmem:[%s878 + $0x20] sm:$0xf]
        %v888 = vld [vmem:[%s878 + $0x24] sm:$0xf]
        %v889 = vld [vmem:[%s878 + $0x28] sm:$0xf]
        %v890 = vld [vmem:[%s878 + $0x2c] sm:$0xf]
        %v891 = vld [vmem:[%s878 + $0x30] sm:$0xf]
        %v892 = vld [vmem:[%s878 + $0x34] sm:$0xf]
        %v893 = vld [vmem:[%s878 + $0x38] sm:$0xf]
        %v894 = vld [vmem:[%s878 + $0x3c] sm:$0xf]
        %v911 = vunpack.c.l.b16 %v879
        %v912 = vunpack.c.l.b16 %v880
        %v913 = vunpack.c.l.b16 %v881
        %v914 = vunpack.c.l.b16 %v882
        %v915 = vunpack.c.l.b16 %v883
        %v916 = vunpack.c.l.b16 %v884
        %v917 = vunpack.c.l.b16 %v885
        %v918 = vunpack.c.l.b16 %v886
        %v919 = vunpack.c.l.b16 %v887
        %v920 = vunpack.c.l.b16 %v888
        %v921 = vunpack.c.l.b16 %v889
        %v922 = vunpack.c.l.b16 %v890
        %v923 = vunpack.c.l.b16 %v891
        %v924 = vunpack.c.l.b16 %v892
        %v925 = vunpack.c.l.b16 %v893
        %v926 = vunpack.c.l.b16 %v894
        %v927 = vpack.c.b16 %v912, %v911
        %v928 = vpack.c.b16 %v914, %v913
        %v929 = vpack.c.b16 %v916, %v915
        %v930 = vpack.c.b16 %v918, %v917
        %v931 = vpack.c.b16 %v920, %v919
        %v932 = vpack.c.b16 %v922, %v921
        %v933 = vpack.c.b16 %v924, %v923
        %v934 = vpack.c.b16 %v926, %v925
        %943 = vmatpush.bf16.msra.mxu0 %v934
        %944 = vmatpush.bf16.msra.mxu0 %v933
        %945 = vmatpush.bf16.msra.mxu0 %v932
        %946 = vmatpush.bf16.msra.mxu0 %v931
        %947 = vmatpush.bf16.msra.mxu0 %v930
        %948 = vmatpush.bf16.msra.mxu0 %v929
        %949 = vmatpush.bf16.msra.mxu0 %v928
        %950 = vmatpush.bf16.msra.mxu0 %v927
        %951 = vmatmul.bf16.gmra.mxu0 %v337
        %v952 = vpop.f32.mrf.mxu0
        %v953 = vadd.f32 0.0, %v952
        %v954 = vpop.f32.mrf.mxu0
        %v955 = vadd.f32 0.0, %v954
        %956 = vmatmul.bf16.gmra.mxu0 %v338
        %v957 = vpop.f32.mrf.mxu0
        %v958 = vadd.f32 0.0, %v957
        %v959 = vpop.f32.mrf.mxu0
        %v960 = vadd.f32 0.0, %v959
        %961 = vdwg.mxu0
        %v978 = vunpack.c.l.b16 %v862
        %v979 = vunpack.c.l.b16 %v863
        %v980 = vunpack.c.l.b16 %v864
        %v981 = vunpack.c.l.b16 %v865
        %v982 = vunpack.c.l.b16 %v866
        %v983 = vunpack.c.l.b16 %v867
        %v984 = vunpack.c.l.b16 %v868
        %v985 = vunpack.c.l.b16 %v869
        %v986 = vunpack.c.l.b16 %v870
        %v987 = vunpack.c.l.b16 %v871
        %v988 = vunpack.c.l.b16 %v872
        %v989 = vunpack.c.l.b16 %v873
        %v990 = vunpack.c.l.b16 %v874
        %v991 = vunpack.c.l.b16 %v875
        %v992 = vunpack.c.l.b16 %v876
        %v993 = vunpack.c.l.b16 %v877
        %v994 = vpack.c.b16 %v979, %v978
        %v995 = vpack.c.b16 %v981, %v980
        %v996 = vpack.c.b16 %v983, %v982
        %v997 = vpack.c.b16 %v985, %v984
        %v998 = vpack.c.b16 %v987, %v986
        %v999 = vpack.c.b16 %v989, %v988
        %v1000 = vpack.c.b16 %v991, %v990
        %v1001 = vpack.c.b16 %v993, %v992
        %1010 = vmatpush.bf16.msra.mxu0 %v1001
        %1011 = vmatpush.bf16.msra.mxu0 %v1000
        %1012 = vmatpush.bf16.msra.mxu0 %v999
        %1013 = vmatpush.bf16.msra.mxu0 %v998
        %1014 = vmatpush.bf16.msra.mxu0 %v997
        %1015 = vmatpush.bf16.msra.mxu0 %v996
        %1016 = vmatpush.bf16.msra.mxu0 %v995
        %1017 = vmatpush.bf16.msra.mxu0 %v994
        %1018 = vmatmul.bf16.gmra.mxu0 %v410
        %v1019 = vpop.f32.mrf.mxu0
        %v1020 = vadd.f32 %v953, %v1019
        %v1021 = vpop.f32.mrf.mxu0
        %v1022 = vadd.f32 %v955, %v1021
        %1023 = vmatmul.bf16.gmra.mxu0 %v411
        %v1024 = vpop.f32.mrf.mxu0
        %v1025 = vadd.f32 %v958, %v1024
        %v1026 = vpop.f32.mrf.mxu0
        %v1027 = vadd.f32 %v960, %v1026
        %1028 = vdwg.mxu0
        %s1029 = scalar_lea.vmem %s1, 512
        %v1030 = vld [vmem:[%s1029] sm:$0xf]
        %v1031 = vld [vmem:[%s1029 + $0x4] sm:$0xf]
        %v1032 = vld [vmem:[%s1029 + $0x8] sm:$0xf]
        %v1033 = vld [vmem:[%s1029 + $0xc] sm:$0xf]
        %v1034 = vld [vmem:[%s1029 + $0x10] sm:$0xf]
        %v1035 = vld [vmem:[%s1029 + $0x14] sm:$0xf]
        %v1036 = vld [vmem:[%s1029 + $0x18] sm:$0xf]
        %v1037 = vld [vmem:[%s1029 + $0x1c] sm:$0xf]
        %v1038 = vld [vmem:[%s1029 + $0x20] sm:$0xf]
        %v1039 = vld [vmem:[%s1029 + $0x24] sm:$0xf]
        %v1040 = vld [vmem:[%s1029 + $0x28] sm:$0xf]
        %v1041 = vld [vmem:[%s1029 + $0x2c] sm:$0xf]
        %v1042 = vld [vmem:[%s1029 + $0x30] sm:$0xf]
        %v1043 = vld [vmem:[%s1029 + $0x34] sm:$0xf]
        %v1044 = vld [vmem:[%s1029 + $0x38] sm:$0xf]
        %v1045 = vld [vmem:[%s1029 + $0x3c] sm:$0xf]
        %v1062 = vunpack.c.l.b16 %v1030
        %v1063 = vunpack.c.l.b16 %v1031
        %v1064 = vunpack.c.l.b16 %v1032
        %v1065 = vunpack.c.l.b16 %v1033
        %v1066 = vunpack.c.l.b16 %v1034
        %v1067 = vunpack.c.l.b16 %v1035
        %v1068 = vunpack.c.l.b16 %v1036
        %v1069 = vunpack.c.l.b16 %v1037
        %v1070 = vunpack.c.l.b16 %v1038
        %v1071 = vunpack.c.l.b16 %v1039
        %v1072 = vunpack.c.l.b16 %v1040
        %v1073 = vunpack.c.l.b16 %v1041
        %v1074 = vunpack.c.l.b16 %v1042
        %v1075 = vunpack.c.l.b16 %v1043
        %v1076 = vunpack.c.l.b16 %v1044
        %v1077 = vunpack.c.l.b16 %v1045
        %v1078 = vpack.c.b16 %v1063, %v1062
        %v1079 = vpack.c.b16 %v1065, %v1064
        %v1080 = vpack.c.b16 %v1067, %v1066
        %v1081 = vpack.c.b16 %v1069, %v1068
        %v1082 = vpack.c.b16 %v1071, %v1070
        %v1083 = vpack.c.b16 %v1073, %v1072
        %v1084 = vpack.c.b16 %v1075, %v1074
        %v1085 = vpack.c.b16 %v1077, %v1076
        %1094 = vmatpush.bf16.msra.mxu0 %v1085
        %1095 = vmatpush.bf16.msra.mxu0 %v1084
        %1096 = vmatpush.bf16.msra.mxu0 %v1083
        %1097 = vmatpush.bf16.msra.mxu0 %v1082
        %1098 = vmatpush.bf16.msra.mxu0 %v1081
        %1099 = vmatpush.bf16.msra.mxu0 %v1080
        %1100 = vmatpush.bf16.msra.mxu0 %v1079
        %1101 = vmatpush.bf16.msra.mxu0 %v1078
        %1102 = vmatmul.bf16.gmra.mxu0 %v411
        %v1103 = vpop.f32.mrf.mxu0
        %v1104 = vadd.f32 0.0, %v1103
        %v1105 = vpop.f32.mrf.mxu0
        %v1106 = vadd.f32 0.0, %v1105
        %1107 = vmatmul.bf16.gmra.mxu0 %v500
        %v1108 = vpop.f32.mrf.mxu0
        %v1109 = vadd.f32 0.0, %v1108
        %v1110 = vpop.f32.mrf.mxu0
        %v1111 = vadd.f32 0.0, %v1110
        %1112 = vdwg.mxu0
        %v1113 = vadd.f32 %v1020, %v1104
        %v1114 = vadd.f32 %v1022, %v1106
        %v1115 = vadd.f32 %v1025, %v1109
        %v1116 = vadd.f32 %v1027, %v1111
        %v1117 = vld [vmem:[#allocation2] sm:$0xff]
        %v1118 = vld [vmem:[#allocation2 + $0x8] sm:$0xff]
        %v1119 = vld [vmem:[#allocation2 + $0x10] sm:$0xff]
        %v1120 = vld [vmem:[#allocation2 + $0x18] sm:$0x3f]
        %vm1125 = vcmask 1045504
        %v1126 = vrot.slane %v1113, 2
        %v1127 = vrot.slane %v1114, 2
        %v1128 = vsel %vm1125, %v1126, %v1127
        %v1129 = vrot.slane %v1115, 2
        %v1130 = vsel %vm1125, %v1127, %v1129
        %v1131 = vrot.slane %v1116, 2
        %v1132 = vsel %vm1125, %v1129, %v1131
        %v1137 = vadd.f32 %v1117, %v1128
        %v1138 = vadd.f32 %v1118, %v1130
        %v1139 = vadd.f32 %v1119, %v1132
        %v1140 = vadd.f32 %v1120, %v1131
        %1141 = vst [vmem:[#allocation2] sm:$0xff] %v1137
        %1142 = vst [vmem:[#allocation2 + $0x8] sm:$0xff] %v1138
        %1143 = vst [vmem:[#allocation2 + $0x10] sm:$0xff] %v1139
        %1144 = vst [vmem:[#allocation2 + $0x18] sm:$0x3f] %v1140
      $region44: #{exit_flow.9} parent=39 // pred_fallthru
        _
      %v1145 = vld [vmem:[#allocation2] sm:$0xff]
      %v1146 = vld [vmem:[#allocation2 + $0x8] sm:$0xff]
      %v1147 = vld [vmem:[#allocation2 + $0x10] sm:$0xff]
      %v1148 = vld [vmem:[#allocation2 + $0x18] sm:$0xff]
      %v1149 = vpack.c.bf16 %v1146, %v1145
      %v1150 = vpack.c.bf16 %v1148, %v1147
      %v1151 = vld [vmem:[%s273] sm:$0xf]
      %v1152 = vld [vmem:[%s273 + $0x4] sm:$0xf]
      %v1153 = vld [vmem:[%s273 + $0x8] sm:$0xf]
      %v1154 = vld [vmem:[%s273 + $0xc] sm:$0xf]
      %v1155 = vld [vmem:[%s273 + $0x10] sm:$0xf]
      %v1156 = vld [vmem:[%s273 + $0x14] sm:$0xf]
      %v1157 = vld [vmem:[%s273 + $0x18] sm:$0xf]
      %v1158 = vld [vmem:[%s273 + $0x1c] sm:$0xf]
      %v1159 = vld [vmem:[%s273 + $0x20] sm:$0xf]
      %v1160 = vld [vmem:[%s273 + $0x24] sm:$0xf]
      %v1161 = vld [vmem:[%s273 + $0x28] sm:$0xf]
      %v1162 = vld [vmem:[%s273 + $0x2c] sm:$0xf]
      %v1163 = vld [vmem:[%s273 + $0x30] sm:$0xf]
      %v1164 = vld [vmem:[%s273 + $0x34] sm:$0xf]
      %v1165 = vld [vmem:[%s273 + $0x38] sm:$0xf]
      %v1166 = vld [vmem:[%s273 + $0x3c] sm:$0xf]
      %v1183 = vunpack.c.l.b16 %v1151
      %v1184 = vunpack.c.l.b16 %v1152
      %v1185 = vunpack.c.l.b16 %v1153
      %v1186 = vunpack.c.l.b16 %v1154
      %v1187 = vunpack.c.l.b16 %v1155
      %v1188 = vunpack.c.l.b16 %v1156
      %v1189 = vunpack.c.l.b16 %v1157
      %v1190 = vunpack.c.l.b16 %v1158
      %v1191 = vunpack.c.l.b16 %v1159
      %v1192 = vunpack.c.l.b16 %v1160
      %v1193 = vunpack.c.l.b16 %v1161
      %v1194 = vunpack.c.l.b16 %v1162
      %v1195 = vunpack.c.l.b16 %v1163
      %v1196 = vunpack.c.l.b16 %v1164
      %v1197 = vunpack.c.l.b16 %v1165
      %v1198 = vunpack.c.l.b16 %v1166
      %v1199 = vpack.c.b16 %v1184, %v1183
      %v1200 = vpack.c.b16 %v1186, %v1185
      %v1201 = vpack.c.b16 %v1188, %v1187
      %v1202 = vpack.c.b16 %v1190, %v1189
      %v1203 = vpack.c.b16 %v1192, %v1191
      %v1204 = vpack.c.b16 %v1194, %v1193
      %v1205 = vpack.c.b16 %v1196, %v1195
      %v1206 = vpack.c.b16 %v1198, %v1197
      %1215 = vmatpush.bf16.msra.mxu0 %v1206
      %1216 = vmatpush.bf16.msra.mxu0 %v1205
      %1217 = vmatpush.bf16.msra.mxu0 %v1204
      %1218 = vmatpush.bf16.msra.mxu0 %v1203
      %1219 = vmatpush.bf16.msra.mxu0 %v1202
      %1220 = vmatpush.bf16.msra.mxu0 %v1201
      %1221 = vmatpush.bf16.msra.mxu0 %v1200
      %1222 = vmatpush.bf16.msra.mxu0 %v1199
      %1223 = vmatmul.bf16.gmra.mxu0 %v1149
      %v1224 = vpop.f32.mrf.mxu0
      %v1225 = vadd.f32 0.0, %v1224
      %v1226 = vpop.f32.mrf.mxu0
      %v1227 = vadd.f32 0.0, %v1226
      %1228 = vmatmul.bf16.gmra.mxu0 %v1150
      %v1229 = vpop.f32.mrf.mxu0
      %v1230 = vadd.f32 0.0, %v1229
      %v1231 = vpop.f32.mrf.mxu0
      %v1232 = vadd.f32 0.0, %v1231
      %1233 = vdwg.mxu0
      %v1234 = vld [vmem:[%s276] sm:$0x1]
      %v1236 = vperm.slane %v1234, 0
      %v1238 = vmul.f32 %v1225, %v1236
      %v1239 = vmul.f32 %v1227, %v1236
      %v1240 = vmul.f32 %v1230, %v1236
      %v1241 = vmul.f32 %v1232, %v1236
      %v1242 = vld [vmem:[%s279] sm:$0x1]
      %v1244 = vperm.slane %v1242, 0
      %v1246 = vadd.f32 %v1238, %v1244
      %v1247 = vadd.f32 %v1239, %v1244
      %v1248 = vadd.f32 %v1240, %v1244
      %v1249 = vadd.f32 %v1241, %v1244
      %v1250 = vmax.f32 %v1246, 0.0
      %v1251 = vmax.f32 %v1247, 0.0
      %v1252 = vmax.f32 %v1248, 0.0
      %v1253 = vmax.f32 %v1249, 0.0
      %vm1254 = vcmask 1043456
      %v1255 = vsel %vm1254, %v1250, 0.0
      %v1256 = vsel %vm1254, %v1251, 0.0
      %v1257 = vadd.f32 %v1255, %v1256
      %v1258 = vsel %vm1254, %v1252, 0.0
      %v1259 = vadd.f32 %v1257, %v1258
      %v1260 = vsel %vm1254, %v1253, 0.0
      %v1261 = vadd.f32 %v1259, %v1260
      %v1262 = vrot.slane %v1261, 4
      %v1263 = vadd.f32 %v1261, %v1262
      %v1264 = vrot.slane %v1263, 2
      %v1265 = vadd.f32 %v1263, %v1264
      %v1266 = vrot.slane %v1265, 1
      %v1267 = vadd.f32 %v1265, %v1266
      %v1268 = vmul.f32 %v1267, 0.0625
      %1269 = vst [vmem:[%s285] sm:$0x1] %v1268
      %p1270 = scmp.lt.s32.totalorder %s20, 1
      %s1271 = scalar_select %p1270, %s20, 1
      %p1272 = scmp.lt.s32.totalorder %s21, 0
      %s1273 = scalar_select %p1272, %s21, 0
      %s1274 = sadd.s32 %s1273, %s1271
      %s1275 = scalar_lea.vmem %s5, %s1274
      // Predicated region
      $region45: #{exit_flow.9} parent=39 // pred_check
        %p1276 = pneg %p173
      $region46: #{exit_flow.9} parent=39 // pred_check_branch
        %1278 = sbr.rel (%p1276) target = $region48
      $region47: #{exit_flow.9} parent=39 // pred_region
        _
      $region48: #{exit_flow.9} parent=39 // pred_fallthru
        _
    $region40: #{exit_flow.9} parent=5 // pred_fallthru
      _
    %p1279 = scmp.le.s32.totalorder 2, %s11
    // Predicated region
    $region49: #{exit_flow.9} parent=5 // pred_check
      %p1280 = pneg %p1279
    $region50: #{exit_flow.9} parent=5 // pred_check_branch
      %1282 = sbr.rel (%p1280) target = $region52
    $region51: #{exit_flow.9} parent=5 // pred_region
      %s1283 = ssub.s32 %s11, 2
      // Predicated region
      $region53: #{exit_flow.9} parent=51 // pred_check
        %p1284 = pneg %p179
      $region54: #{exit_flow.9} parent=51 // pred_check_branch
        %1286 = sbr.rel (%p1284) target = $region56
      $region55: #{exit_flow.9} parent=51 // pred_region
        %p1287 = scmp.lt.s32.totalorder %s22, 1
        %s1288 = scalar_select %p1287, %s22, 1
        %p1289 = scmp.lt.s32.totalorder %s23, 0
        %s1290 = scalar_select %p1289, %s23, 0
        %s1291 = sadd.s32 %s1290, %s1288
        %s1292 = scalar_lea.vmem %s5, %s1291
      $region56: #{exit_flow.9} parent=51 // pred_fallthru
        _
    $region52: #{exit_flow.9} parent=5 // pred_fallthru
      _
  $region6: #{exit_flow.9} parent=0 // loop_footer
    %s15 = sadd.s32 1, %s11
  $region7: #{exit_flow.9} parent=0 // loop_footer_branch
    %10 = sbr.rel target = $region3
  $region8: #{exit_flow.9} parent=0 // loop_exit
    _

</llo_original>
